<compile_context>
chip_gen: v5e
topology: v5e:2x2
jax: 0.10.0
libtpu: 0.0.40
codegen_flags: <defaults>
</compile_context>

<pallas_src>
import numpy as np
import jax
import jax.numpy as jnp
from jax.experimental import pallas as pl
from jax.experimental.pallas import tpu as pltpu

TB = 8          # batch elements per grid step
SLOT_E = 6      # encoder rows per element (256 input positions each)
SLOT_D = 19     # decoder rows per element (1 latent position each: 3 zero-halo
                #   rows + 13 data rows + 3 zero-halo rows)

_ORDER = ("w1", "b1", "w2", "b2", "w3", "b3", "w4", "b4", "wmv", "bmv",
          "wt1", "bt1", "wt2", "bt2", "m2", "wt3", "bt3", "m3", "wt4", "bt4")


# ---------------------------------------------------------------------------
# Fused forward kernel (one grid step processes TB batch elements)
# ---------------------------------------------------------------------------
def _vae_kernel(x_ref, eps_ref,
                w1_ref, b1_ref, w2_ref, b2_ref, w3_ref, b3_ref,
                w4_ref, b4_ref, wmv_ref, bmv_ref,
                wt1_ref, bt1_ref, wt2_ref, bt2_ref, m2_ref,
                wt3_ref, bt3_ref, m3_ref, wt4_ref, bt4_ref,
                mv_ref, rec_ref):
    f32, bf16 = jnp.float32, jnp.bfloat16

    # Rows are (slot_row, element) ordered: row r = t*TB + e.
    def shift_up(a):            # row (t, e) <- row (t+1, e); wrap only hits garbage rows
        return jnp.concatenate([a[TB:], a[:TB]], axis=0)

    def shift_down(a, s):       # row (t, e) <- row (t-s, e); wrap brings zero halo rows
        return jnp.concatenate([a[-s * TB:], a[:-s * TB]], axis=0)

    def enc_layer(a, w_ref, b_ref):
        win = jnp.concatenate([a, shift_up(a)], axis=1)
        y = jnp.dot(win, w_ref[...], preferred_element_type=f32) + b_ref[...]
        return jnp.maximum(y, 0.0).astype(bf16)

    # ------------------- encoder: stride-4 convs as single matmuls -------------------
    a1 = enc_layer(x_ref[...], w1_ref, b1_ref)     # (6*TB, 512)  rows: 64 pos x 8 ch
    a2 = enc_layer(a1, w2_ref, b2_ref)             # (6*TB, 512)  rows: 16 pos x 32 ch
    a3 = enc_layer(a2, w3_ref, b3_ref)             # (6*TB, 256)  rows:  4 pos x 64 ch

    # conv4 has a single output position -> fold batch into M (rows t=0,1,2 per elem).
    h4 = jnp.concatenate([a3[0:TB], a3[TB:2 * TB], a3[2 * TB:3 * TB]], axis=1)  # (TB, 768)
    h4 = jnp.dot(h4, w4_ref[...], preferred_element_type=f32) + b4_ref[...]
    h4 = jnp.maximum(h4, 0.0).astype(bf16)         # (TB, 128)

    # ------------------- latent head: fused [fc_moy | fc_var] + reparametrize --------
    mv = jnp.dot(h4, wmv_ref[...], preferred_element_type=f32) + bmv_ref[...]   # (TB, 256)
    mv_ref[...] = mv
    moy, logvar = mv[:, 0:128], mv[:, 128:256]
    z = moy + eps_ref[...] * jnp.exp(0.5 * logvar)                               # (TB, 128)

    # ------------------- decoder: polyphase ConvTranspose1d (no interleave matmuls) --
    # convt1: input length 1 -> plain matmul, 13 positions x 64 ch in lanes.
    y1 = jnp.dot(z.astype(bf16), wt1_ref[...], preferred_element_type=f32) + bt1_ref[...]
    y1 = jnp.maximum(y1, 0.0).astype(bf16)         # (TB, 832)

    # Scatter to one-position-per-row layout with zero halos (static lane slices only).
    zrow = jnp.zeros((3 * TB, 64), bf16)
    Y1 = jnp.concatenate(
        [zrow] + [y1[:, 64 * j:64 * (j + 1)] for j in range(13)] + [zrow], axis=0)
    # (19*TB, 64): slot rows 0-2 zeros, 3-15 = convt1 positions 0-12, 16-18 zeros.

    def dec_layer(a, shifts, w_ref, b_ref, m_ref):
        win = jnp.concatenate([shift_down(a, s) for s in shifts] + [a], axis=1)
        y = jnp.dot(win, w_ref[...], preferred_element_type=f32) + b_ref[...]
        y = jnp.maximum(y, 0.0) * m_ref[...]       # mask invalid / out-of-range positions
        return y.astype(bf16)

    y2 = dec_layer(Y1, (3, 2, 1), wt2_ref, bt2_ref, m2_ref)   # (19*TB, 128)  4 pos x 32 ch
    y3 = dec_layer(y2, (1,), wt3_ref, bt3_ref, m3_ref)        # (19*TB, 128) 16 pos x 8 ch

    # convt4 (K=16, Cout=1) + sigmoid: row t = 64 consecutive output positions.
    win = jnp.concatenate([shift_down(y3, 1), y3], axis=1)    # (19*TB, 256)
    y4 = jnp.dot(win, wt4_ref[...], preferred_element_type=f32) + bt4_ref[...]
    rec_ref[...] = jax.nn.sigmoid(y4)                         # (19*TB, 64)


# ---------------------------------------------------------------------------
# One-time parameter preparation: scatter conv taps into dense matmul weights.
# ---------------------------------------------------------------------------
def prepare_params(params):
    P = {k: np.asarray(v, dtype=np.float32) for k, v in params.items()}
    bf16, f32 = jnp.bfloat16, jnp.float32
    out = {}

    def enc_weight(w, in_g, out_g):
        # stride-4 Conv1d; input rows hold in_g positions, output rows out_g positions.
        cout, cin, K = w.shape
        W = np.zeros((2 * in_g * cin, out_g * cout), np.float32)
        wt = np.transpose(w, (1, 0, 2))            # (cin, cout, K)
        for r in range(2):
            for q1 in range(in_g):
                base = (r * in_g + q1) * cin
                for q in range(out_g):
                    k = in_g * r + q1 - 4 * q
                    if 0 <= k < K:
                        W[base:base + cin, q * cout:(q + 1) * cout] = wt[:, :, k]
        return W

    out["w1"] = jnp.asarray(enc_weight(P["conv1_w"], 256, 64), bf16)    # (512, 512)
    out["b1"] = jnp.asarray(np.tile(P["conv1_b"], 64)[None, :], f32)
    out["w2"] = jnp.asarray(enc_weight(P["conv2_w"], 64, 16), bf16)     # (1024, 512)
    out["b2"] = jnp.asarray(np.tile(P["conv2_b"], 16)[None, :], f32)
    out["w3"] = jnp.asarray(enc_weight(P["conv3_w"], 16, 4), bf16)      # (1024, 256)
    out["b3"] = jnp.asarray(np.tile(P["conv3_b"], 4)[None, :], f32)

    w4 = np.zeros((768, 128), np.float32)                               # conv4 taps 0..10
    for m in range(3):
        for q in range(4):
            k = 4 * m + q
            if k < 11:
                w4[m * 256 + q * 64:m * 256 + (q + 1) * 64, :] = P["conv4_w"][:, :, k].T
    out["w4"] = jnp.asarray(w4, bf16)
    out["b4"] = jnp.asarray(P["conv4_b"][None, :], f32)

    out["wmv"] = jnp.asarray(
        np.concatenate([P["fc_moy_w"].T, P["fc_var_w"].T], axis=1), bf16)   # (128, 256)
    out["bmv"] = jnp.asarray(
        np.concatenate([P["fc_moy_b"], P["fc_var_b"]])[None, :], f32)

    out["wt1"] = jnp.asarray(
        np.transpose(P["convt1_w"], (0, 2, 1)).reshape(128, 13 * 64), bf16)  # (128, 832)
    out["bt1"] = jnp.asarray(np.tile(P["convt1_b"], 13)[None, :], f32)

    wt2 = np.zeros((256, 128), np.float32)       # window piece s -> input position j-3+s
    for s in range(4):
        for p in range(4):
            k = 12 + p - 4 * s
            if 0 <= k <= 12:
                wt2[s * 64:(s + 1) * 64, p * 32:(p + 1) * 32] = P["convt2_w"][:, :, k]
    out["wt2"] = jnp.asarray(wt2, bf16)
    out["bt2"] = jnp.asarray(np.tile(P["convt2_b"], 4)[None, :], f32)

    wt3 = np.zeros((256, 128), np.float32)       # window piece w -> phase-row j-1+w
    for w in range(2):
        for p in range(4):
            for r in range(16):
                k = r + 16 - 16 * w - 4 * p
                if 0 <= k <= 12:
                    wt3[w * 128 + p * 32:w * 128 + (p + 1) * 32,
                        r * 8:(r + 1) * 8] = P["convt3_w"][:, :, k]
    out["wt3"] = jnp.asarray(wt3, bf16)
    out["bt3"] = jnp.asarray(np.tile(P["convt3_b"], 16)[None, :], f32)

    wt4 = np.zeros((256, 64), np.float32)
    for w in range(2):
        for q in range(16):
            for r in range(64):
                k = r + 64 - 64 * w - 4 * q
                if 0 <= k <= 15:
                    wt4[w * 128 + q * 8:w * 128 + (q + 1) * 8, r] = P["convt4_w"][:, 0, k]
    out["wt4"] = jnp.asarray(wt4, bf16)
    out["bt4"] = jnp.asarray(np.tile(P["convt4_b"], 64)[None, :], f32)

    def dec_mask(last_row_lanes):                # zero halo rows / nonexistent positions
        m = np.zeros((SLOT_D * TB, 128), np.float32)
        for t in range(3, SLOT_D):
            lanes = 128 if t < SLOT_D - 1 else last_row_lanes
            m[t * TB:(t + 1) * TB, :lanes] = 1.0
        return m

    out["m2"] = jnp.asarray(dec_mask(32), f32)    # convt2: keep positions 0..60
    out["m3"] = jnp.asarray(dec_mask(104), f32)   # convt3: keep positions 0..252
    return out


# ---------------------------------------------------------------------------
# Forward pass (matches VAEMediumLow.forward)
# ---------------------------------------------------------------------------
def vae_forward(prep, states, eps_key):
    x = states.astype(jnp.float32).reshape(-1, 1024)
    B = x.shape[0]
    NB = (B + TB - 1) // TB
    Bp = NB * TB

    # Input layout: pad to 1536 positions, (slot_row-major, element-minor) per block.
    xp = jnp.zeros((Bp, SLOT_E * 256), jnp.float32).at[:B, :1024].set(x)
    xe = (xp.reshape(NB, TB, SLOT_E, 256)
            .transpose(0, 2, 1, 3)
            .reshape(NB * SLOT_E * TB, 256)
            .astype(jnp.bfloat16))

    # TODO(synk): eps (torch.randn_like) is drawn with jax.random in glue for
    # determinism rather than with the on-chip pltpu PRNG.
    eps = jax.random.normal(eps_key, (Bp, 128), dtype=jnp.float32)

    shared = [prep[k] for k in _ORDER]
    in_specs = ([pl.BlockSpec((SLOT_E * TB, 256), lambda i: (i, 0)),
                 pl.BlockSpec((TB, 128), lambda i: (i, 0))]
                + [pl.BlockSpec(a.shape, lambda i: (0, 0)) for a in shared])
    out_specs = [pl.BlockSpec((TB, 256), lambda i: (i, 0)),
                 pl.BlockSpec((SLOT_D * TB, 64), lambda i: (i, 0))]
    out_shape = [jax.ShapeDtypeStruct((Bp, 256), jnp.float32),
                 jax.ShapeDtypeStruct((NB * SLOT_D * TB, 64), jnp.float32)]

    mv, rec = pl.pallas_call(
        _vae_kernel,
        out_shape=out_shape,
        grid_spec=pltpu.PrefetchScalarGridSpec(
            num_scalar_prefetch=0,
            grid=(NB,),
            in_specs=in_specs,
            out_specs=out_specs),
        compiler_params=pltpu.CompilerParams(
            dimension_semantics=("parallel",),
            vmem_limit_bytes=32 * 1024 * 1024),
    )(xe, eps, *shared)

    moy = mv[:B, 0:128]
    logvar = mv[:B, 128:256]
    recon = (rec.reshape(NB, SLOT_D, TB, 64)
                .transpose(0, 2, 1, 3)[:, :, 3:3 + 16, :]
                .reshape(Bp, 1024)[:B])
    return recon, moy, logvar


_vae_forward_jit = jax.jit(vae_forward)


# ---------------------------------------------------------------------------
# Parameters (deterministic, PyTorch-style uniform init; synthetic weights)
# ---------------------------------------------------------------------------
def init_params(key):
    params = {}

    def add(name, k, w_shape, b_shape, fan_in):
        k1, k2 = jax.random.split(k)
        bound = 1.0 / (fan_in ** 0.5)
        params[name + "_w"] = jax.random.uniform(k1, w_shape, jnp.float32, -bound, bound)
        params[name + "_b"] = jax.random.uniform(k2, b_shape, jnp.float32, -bound, bound)

    keys = jax.random.split(key, 10)
    add("conv1", keys[0], (8, 1, 11), (8,), 1 * 11)
    add("conv2", keys[1], (32, 8, 11), (32,), 8 * 11)
    add("conv3", keys[2], (64, 32, 11), (64,), 32 * 11)
    add("conv4", keys[3], (128, 64, 11), (128,), 64 * 11)
    add("fc_moy", keys[4], (128, 128), (128,), 128)
    add("fc_var", keys[5], (128, 128), (128,), 128)
    add("convt1", keys[6], (128, 64, 13), (64,), 64 * 13)
    add("convt2", keys[7], (64, 32, 13), (32,), 32 * 13)
    add("convt3", keys[8], (32, 8, 13), (8,), 8 * 13)
    add("convt4", keys[9], (8, 1, 16), (1,), 1 * 16)
    return params


if __name__ == "__main__":
    B = 2
    states = jax.random.normal(jax.random.PRNGKey(0), (B, 1024), dtype=jnp.float32)
    params = init_params(jax.random.PRNGKey(1))
    prep = prepare_params(params)                 # one-time weight re-layout / bf16 cast

    recon, moy, logvar = _vae_forward_jit(prep, states, jax.random.PRNGKey(2))
    jax.block_until_ready((recon, moy, logvar))

    assert recon.shape == (B, 1024), recon.shape
    assert moy.shape == (B, 128) and logvar.shape == (B, 128)
    assert bool(jnp.all(jnp.isfinite(recon)))
    assert bool(jnp.all(jnp.isfinite(moy))) and bool(jnp.all(jnp.isfinite(logvar)))
    assert bool(jnp.all((recon >= 0.0) & (recon <= 1.0)))   # sigmoid output
    print("KERNEL_OK")
</pallas_src>

<mosaic_0001>
module attributes {stable_mosaic.version = 11 : i64} {
  func.func @_vae_kernel(%arg0: i32, %arg1: memref<48x256xbf16, #tpu.memory_space<vmem>>, %arg2: memref<8x128xf32, #tpu.memory_space<vmem>>, %arg3: memref<512x512xbf16, #tpu.memory_space<vmem>>, %arg4: memref<1x512xf32, #tpu.memory_space<vmem>>, %arg5: memref<1024x512xbf16, #tpu.memory_space<vmem>>, %arg6: memref<1x512xf32, #tpu.memory_space<vmem>>, %arg7: memref<1024x256xbf16, #tpu.memory_space<vmem>>, %arg8: memref<1x256xf32, #tpu.memory_space<vmem>>, %arg9: memref<768x128xbf16, #tpu.memory_space<vmem>>, %arg10: memref<1x128xf32, #tpu.memory_space<vmem>>, %arg11: memref<128x256xbf16, #tpu.memory_space<vmem>>, %arg12: memref<1x256xf32, #tpu.memory_space<vmem>>, %arg13: memref<128x832xbf16, #tpu.memory_space<vmem>>, %arg14: memref<1x832xf32, #tpu.memory_space<vmem>>, %arg15: memref<256x128xbf16, #tpu.memory_space<vmem>>, %arg16: memref<1x128xf32, #tpu.memory_space<vmem>>, %arg17: memref<152x128xf32, #tpu.memory_space<vmem>>, %arg18: memref<256x128xbf16, #tpu.memory_space<vmem>>, %arg19: memref<1x128xf32, #tpu.memory_space<vmem>>, %arg20: memref<152x128xf32, #tpu.memory_space<vmem>>, %arg21: memref<256x64xbf16, #tpu.memory_space<vmem>>, %arg22: memref<1x64xf32, #tpu.memory_space<vmem>>, %arg23: memref<8x256xf32, #tpu.memory_space<vmem>>, %arg24: memref<152x64xf32, #tpu.memory_space<vmem>>) attributes {dimension_semantics = [#tpu.dimension_semantics<parallel>], iteration_bounds = array<i64: 1>, scalar_prefetch = 0 : i64, scratch_operands = 0 : i64, tpu.core_type = #tpu.core_type<tc>, window_params = [{transform_indices = @transform_0, window_bounds = array<i64: 48, 256>}, {transform_indices = @transform_1, window_bounds = array<i64: 8, 128>}, {pipeline_mode = #tpu.pipeline_mode<synchronous>, transform_indices = @transform_2, window_bounds = array<i64: 512, 512>}, {pipeline_mode = #tpu.pipeline_mode<synchronous>, transform_indices = @transform_3, window_bounds = array<i64: 1, 512>}, {pipeline_mode = #tpu.pipeline_mode<synchronous>, transform_indices = @transform_4, window_bounds = array<i64: 1024, 512>}, {pipeline_mode = #tpu.pipeline_mode<synchronous>, transform_indices = @transform_5, window_bounds = array<i64: 1, 512>}, {pipeline_mode = #tpu.pipeline_mode<synchronous>, transform_indices = @transform_6, window_bounds = array<i64: 1024, 256>}, {pipeline_mode = #tpu.pipeline_mode<synchronous>, transform_indices = @transform_7, window_bounds = array<i64: 1, 256>}, {pipeline_mode = #tpu.pipeline_mode<synchronous>, transform_indices = @transform_8, window_bounds = array<i64: 768, 128>}, {pipeline_mode = #tpu.pipeline_mode<synchronous>, transform_indices = @transform_9, window_bounds = array<i64: 1, 128>}, {pipeline_mode = #tpu.pipeline_mode<synchronous>, transform_indices = @transform_10, window_bounds = array<i64: 128, 256>}, {pipeline_mode = #tpu.pipeline_mode<synchronous>, transform_indices = @transform_11, window_bounds = array<i64: 1, 256>}, {pipeline_mode = #tpu.pipeline_mode<synchronous>, transform_indices = @transform_12, window_bounds = array<i64: 128, 832>}, {pipeline_mode = #tpu.pipeline_mode<synchronous>, transform_indices = @transform_13, window_bounds = array<i64: 1, 832>}, {pipeline_mode = #tpu.pipeline_mode<synchronous>, transform_indices = @transform_14, window_bounds = array<i64: 256, 128>}, {pipeline_mode = #tpu.pipeline_mode<synchronous>, transform_indices = @transform_15, window_bounds = array<i64: 1, 128>}, {pipeline_mode = #tpu.pipeline_mode<synchronous>, transform_indices = @transform_16, window_bounds = array<i64: 152, 128>}, {pipeline_mode = #tpu.pipeline_mode<synchronous>, transform_indices = @transform_17, window_bounds = array<i64: 256, 128>}, {pipeline_mode = #tpu.pipeline_mode<synchronous>, transform_indices = @transform_18, window_bounds = array<i64: 1, 128>}, {pipeline_mode = #tpu.pipeline_mode<synchronous>, transform_indices = @transform_19, window_bounds = array<i64: 152, 128>}, {pipeline_mode = #tpu.pipeline_mode<synchronous>, transform_indices = @transform_20, window_bounds = array<i64: 256, 64>}, {pipeline_mode = #tpu.pipeline_mode<synchronous>, transform_indices = @transform_21, window_bounds = array<i64: 1, 64>}, {transform_indices = @transform_22, window_bounds = array<i64: 8, 256>}, {transform_indices = @transform_23, window_bounds = array<i64: 152, 64>}]} {
    %c0 = arith.constant 0 : index
    %c0_0 = arith.constant 0 : index
    %0 = vector.load %arg1[%c0, %c0_0] : memref<48x256xbf16, #tpu.memory_space<vmem>>, vector<48x256xbf16>
    %1 = vector.extract_strided_slice %0 {offsets = [8, 0], sizes = [40, 256], strides = [1, 1]} : vector<48x256xbf16> to vector<40x256xbf16>
    %2 = vector.extract_strided_slice %0 {offsets = [0, 0], sizes = [8, 256], strides = [1, 1]} : vector<48x256xbf16> to vector<8x256xbf16>
    %3 = tpu.concatenate %1, %2 in 0 : vector<40x256xbf16>, vector<8x256xbf16> -> vector<48x256xbf16>
    %4 = tpu.concatenate %0, %3 in 1 : vector<48x256xbf16>, vector<48x256xbf16> -> vector<48x512xbf16>
    %c0_1 = arith.constant 0 : index
    %c0_2 = arith.constant 0 : index
    %5 = vector.load %arg3[%c0_1, %c0_2] : memref<512x512xbf16, #tpu.memory_space<vmem>>, vector<512x512xbf16>
    %cst = arith.constant dense<0.000000e+00> : vector<48x512xf32>
    %6 = tpu.matmul %4, %5, %cst {dimension_numbers = #tpu.dot_dimension_numbers<[1], [0], [0], [1], [0, 0, 1, 1], [], []>} : vector<48x512xbf16>, vector<512x512xbf16>, vector<48x512xf32> -> vector<48x512xf32>
    %c0_3 = arith.constant 0 : index
    %c0_4 = arith.constant 0 : index
    %7 = vector.load %arg4[%c0_3, %c0_4] : memref<1x512xf32, #tpu.memory_space<vmem>>, vector<1x512xf32>
    %8 = vector.broadcast %7 : vector<1x512xf32> to vector<48x512xf32>
    %9 = arith.addf %6, %8 : vector<48x512xf32>
    %cst_5 = arith.constant 0.000000e+00 : f32
    %10 = vector.broadcast %cst_5 : f32 to vector<48x512xf32>
    %11 = arith.maximumf %9, %10 : vector<48x512xf32>
    %12 = arith.truncf %11 : vector<48x512xf32> to vector<48x512xbf16>
    %13 = vector.extract_strided_slice %12 {offsets = [8, 0], sizes = [40, 512], strides = [1, 1]} : vector<48x512xbf16> to vector<40x512xbf16>
    %14 = vector.extract_strided_slice %12 {offsets = [0, 0], sizes = [8, 512], strides = [1, 1]} : vector<48x512xbf16> to vector<8x512xbf16>
    %15 = tpu.concatenate %13, %14 in 0 : vector<40x512xbf16>, vector<8x512xbf16> -> vector<48x512xbf16>
    %16 = tpu.concatenate %12, %15 in 1 : vector<48x512xbf16>, vector<48x512xbf16> -> vector<48x1024xbf16>
    %c0_6 = arith.constant 0 : index
    %c0_7 = arith.constant 0 : index
    %17 = vector.load %arg5[%c0_6, %c0_7] : memref<1024x512xbf16, #tpu.memory_space<vmem>>, vector<1024x512xbf16>
    %cst_8 = arith.constant dense<0.000000e+00> : vector<48x512xf32>
    %18 = tpu.matmul %16, %17, %cst_8 {dimension_numbers = #tpu.dot_dimension_numbers<[1], [0], [0], [1], [0, 0, 1, 1], [], []>} : vector<48x1024xbf16>, vector<1024x512xbf16>, vector<48x512xf32> -> vector<48x512xf32>
    %c0_9 = arith.constant 0 : index
    %c0_10 = arith.constant 0 : index
    %19 = vector.load %arg6[%c0_9, %c0_10] : memref<1x512xf32, #tpu.memory_space<vmem>>, vector<1x512xf32>
    %20 = vector.broadcast %19 : vector<1x512xf32> to vector<48x512xf32>
    %21 = arith.addf %18, %20 : vector<48x512xf32>
    %cst_11 = arith.constant 0.000000e+00 : f32
    %22 = vector.broadcast %cst_11 : f32 to vector<48x512xf32>
    %23 = arith.maximumf %21, %22 : vector<48x512xf32>
    %24 = arith.truncf %23 : vector<48x512xf32> to vector<48x512xbf16>
    %25 = vector.extract_strided_slice %24 {offsets = [8, 0], sizes = [40, 512], strides = [1, 1]} : vector<48x512xbf16> to vector<40x512xbf16>
    %26 = vector.extract_strided_slice %24 {offsets = [0, 0], sizes = [8, 512], strides = [1, 1]} : vector<48x512xbf16> to vector<8x512xbf16>
    %27 = tpu.concatenate %25, %26 in 0 : vector<40x512xbf16>, vector<8x512xbf16> -> vector<48x512xbf16>
    %28 = tpu.concatenate %24, %27 in 1 : vector<48x512xbf16>, vector<48x512xbf16> -> vector<48x1024xbf16>
    %c0_12 = arith.constant 0 : index
    %c0_13 = arith.constant 0 : index
    %29 = vector.load %arg7[%c0_12, %c0_13] : memref<1024x256xbf16, #tpu.memory_space<vmem>>, vector<1024x256xbf16>
    %cst_14 = arith.constant dense<0.000000e+00> : vector<48x256xf32>
    %30 = tpu.matmul %28, %29, %cst_14 {dimension_numbers = #tpu.dot_dimension_numbers<[1], [0], [0], [1], [0, 0, 1, 1], [], []>} : vector<48x1024xbf16>, vector<1024x256xbf16>, vector<48x256xf32> -> vector<48x256xf32>
    %c0_15 = arith.constant 0 : index
    %c0_16 = arith.constant 0 : index
    %31 = vector.load %arg8[%c0_15, %c0_16] : memref<1x256xf32, #tpu.memory_space<vmem>>, vector<1x256xf32>
    %32 = vector.broadcast %31 : vector<1x256xf32> to vector<48x256xf32>
    %33 = arith.addf %30, %32 : vector<48x256xf32>
    %cst_17 = arith.constant 0.000000e+00 : f32
    %34 = vector.broadcast %cst_17 : f32 to vector<48x256xf32>
    %35 = arith.maximumf %33, %34 : vector<48x256xf32>
    %36 = arith.truncf %35 : vector<48x256xf32> to vector<48x256xbf16>
    %37 = vector.extract_strided_slice %36 {offsets = [0, 0], sizes = [8, 256], strides = [1, 1]} : vector<48x256xbf16> to vector<8x256xbf16>
    %38 = vector.extract_strided_slice %36 {offsets = [8, 0], sizes = [8, 256], strides = [1, 1]} : vector<48x256xbf16> to vector<8x256xbf16>
    %39 = vector.extract_strided_slice %36 {offsets = [16, 0], sizes = [8, 256], strides = [1, 1]} : vector<48x256xbf16> to vector<8x256xbf16>
    %40 = tpu.concatenate %37, %38, %39 in 1 : vector<8x256xbf16>, vector<8x256xbf16>, vector<8x256xbf16> -> vector<8x768xbf16>
    %c0_18 = arith.constant 0 : index
    %c0_19 = arith.constant 0 : index
    %41 = vector.load %arg9[%c0_18, %c0_19] : memref<768x128xbf16, #tpu.memory_space<vmem>>, vector<768x128xbf16>
    %cst_20 = arith.constant dense<0.000000e+00> : vector<8x128xf32>
    %42 = tpu.matmul %40, %41, %cst_20 {dimension_numbers = #tpu.dot_dimension_numbers<[1], [0], [0], [1], [0, 0, 1, 1], [], []>} : vector<8x768xbf16>, vector<768x128xbf16>, vector<8x128xf32> -> vector<8x128xf32>
    %c0_21 = arith.constant 0 : index
    %c0_22 = arith.constant 0 : index
    %43 = vector.load %arg10[%c0_21, %c0_22] : memref<1x128xf32, #tpu.memory_space<vmem>>, vector<1x128xf32>
    %44 = vector.broadcast %43 : vector<1x128xf32> to vector<8x128xf32>
    %45 = arith.addf %42, %44 : vector<8x128xf32>
    %cst_23 = arith.constant 0.000000e+00 : f32
    %46 = vector.broadcast %cst_23 : f32 to vector<8x128xf32>
    %47 = arith.maximumf %45, %46 : vector<8x128xf32>
    %48 = arith.truncf %47 : vector<8x128xf32> to vector<8x128xbf16>
    %c0_24 = arith.constant 0 : index
    %c0_25 = arith.constant 0 : index
    %49 = vector.load %arg11[%c0_24, %c0_25] : memref<128x256xbf16, #tpu.memory_space<vmem>>, vector<128x256xbf16>
    %cst_26 = arith.constant dense<0.000000e+00> : vector<8x256xf32>
    %50 = tpu.matmul %48, %49, %cst_26 {dimension_numbers = #tpu.dot_dimension_numbers<[1], [0], [0], [1], [0, 0, 1, 1], [], []>} : vector<8x128xbf16>, vector<128x256xbf16>, vector<8x256xf32> -> vector<8x256xf32>
    %c0_27 = arith.constant 0 : index
    %c0_28 = arith.constant 0 : index
    %51 = vector.load %arg12[%c0_27, %c0_28] : memref<1x256xf32, #tpu.memory_space<vmem>>, vector<1x256xf32>
    %52 = vector.broadcast %51 : vector<1x256xf32> to vector<8x256xf32>
    %53 = arith.addf %50, %52 : vector<8x256xf32>
    %c0_29 = arith.constant 0 : index
    %c0_30 = arith.constant 0 : index
    %54 = vector.load %arg23[%c0_29, %c0_30] : memref<8x256xf32, #tpu.memory_space<vmem>>, vector<8x256xf32>
    tpu.vector_store %arg23[%c0_29, %c0_30], %53 {strides = array<i32>} : memref<8x256xf32, #tpu.memory_space<vmem>>, vector<8x256xf32>,
    %55 = vector.extract_strided_slice %53 {offsets = [0, 0], sizes = [8, 128], strides = [1, 1]} : vector<8x256xf32> to vector<8x128xf32>
    %56 = vector.extract_strided_slice %53 {offsets = [0, 128], sizes = [8, 128], strides = [1, 1]} : vector<8x256xf32> to vector<8x128xf32>
    %c0_31 = arith.constant 0 : index
    %c0_32 = arith.constant 0 : index
    %57 = vector.load %arg2[%c0_31, %c0_32] : memref<8x128xf32, #tpu.memory_space<vmem>>, vector<8x128xf32>
    %cst_33 = arith.constant 5.000000e-01 : f32
    %58 = vector.broadcast %cst_33 : f32 to vector<8x128xf32>
    %59 = arith.mulf %58, %56 : vector<8x128xf32>
    %60 = math.exp %59 : vector<8x128xf32>
    %61 = arith.mulf %57, %60 : vector<8x128xf32>
    %62 = arith.addf %55, %61 : vector<8x128xf32>
    %63 = arith.truncf %62 : vector<8x128xf32> to vector<8x128xbf16>
    %c0_34 = arith.constant 0 : index
    %c0_35 = arith.constant 0 : index
    %64 = vector.load %arg13[%c0_34, %c0_35] : memref<128x832xbf16, #tpu.memory_space<vmem>>, vector<128x832xbf16>
    %cst_36 = arith.constant dense<0.000000e+00> : vector<8x832xf32>
    %65 = tpu.matmul %63, %64, %cst_36 {dimension_numbers = #tpu.dot_dimension_numbers<[1], [0], [0], [1], [0, 0, 1, 1], [], []>} : vector<8x128xbf16>, vector<128x832xbf16>, vector<8x832xf32> -> vector<8x832xf32>
    %c0_37 = arith.constant 0 : index
    %c0_38 = arith.constant 0 : index
    %66 = vector.load %arg14[%c0_37, %c0_38] : memref<1x832xf32, #tpu.memory_space<vmem>>, vector<1x832xf32>
    %67 = vector.broadcast %66 : vector<1x832xf32> to vector<8x832xf32>
    %68 = arith.addf %65, %67 : vector<8x832xf32>
    %cst_39 = arith.constant 0.000000e+00 : f32
    %69 = vector.broadcast %cst_39 : f32 to vector<8x832xf32>
    %70 = arith.maximumf %68, %69 : vector<8x832xf32>
    %71 = arith.truncf %70 : vector<8x832xf32> to vector<8x832xbf16>
    %cst_40 = arith.constant 0.000000e+00 : bf16
    %72 = vector.broadcast %cst_40 : bf16 to vector<24x64xbf16>
    %73 = vector.extract_strided_slice %71 {offsets = [0, 0], sizes = [8, 64], strides = [1, 1]} : vector<8x832xbf16> to vector<8x64xbf16>
    %74 = vector.extract_strided_slice %71 {offsets = [0, 64], sizes = [8, 64], strides = [1, 1]} : vector<8x832xbf16> to vector<8x64xbf16>
    %75 = vector.extract_strided_slice %71 {offsets = [0, 128], sizes = [8, 64], strides = [1, 1]} : vector<8x832xbf16> to vector<8x64xbf16>
    %76 = vector.extract_strided_slice %71 {offsets = [0, 192], sizes = [8, 64], strides = [1, 1]} : vector<8x832xbf16> to vector<8x64xbf16>
    %77 = vector.extract_strided_slice %71 {offsets = [0, 256], sizes = [8, 64], strides = [1, 1]} : vector<8x832xbf16> to vector<8x64xbf16>
    %78 = vector.extract_strided_slice %71 {offsets = [0, 320], sizes = [8, 64], strides = [1, 1]} : vector<8x832xbf16> to vector<8x64xbf16>
    %79 = vector.extract_strided_slice %71 {offsets = [0, 384], sizes = [8, 64], strides = [1, 1]} : vector<8x832xbf16> to vector<8x64xbf16>
    %80 = vector.extract_strided_slice %71 {offsets = [0, 448], sizes = [8, 64], strides = [1, 1]} : vector<8x832xbf16> to vector<8x64xbf16>
    %81 = vector.extract_strided_slice %71 {offsets = [0, 512], sizes = [8, 64], strides = [1, 1]} : vector<8x832xbf16> to vector<8x64xbf16>
    %82 = vector.extract_strided_slice %71 {offsets = [0, 576], sizes = [8, 64], strides = [1, 1]} : vector<8x832xbf16> to vector<8x64xbf16>
    %83 = vector.extract_strided_slice %71 {offsets = [0, 640], sizes = [8, 64], strides = [1, 1]} : vector<8x832xbf16> to vector<8x64xbf16>
    %84 = vector.extract_strided_slice %71 {offsets = [0, 704], sizes = [8, 64], strides = [1, 1]} : vector<8x832xbf16> to vector<8x64xbf16>
    %85 = vector.extract_strided_slice %71 {offsets = [0, 768], sizes = [8, 64], strides = [1, 1]} : vector<8x832xbf16> to vector<8x64xbf16>
    %86 = tpu.concatenate %72, %73, %74, %75, %76, %77, %78, %79, %80, %81, %82, %83, %84, %85, %72 in 0 : vector<24x64xbf16>, vector<8x64xbf16>, vector<8x64xbf16>, vector<8x64xbf16>, vector<8x64xbf16>, vector<8x64xbf16>, vector<8x64xbf16>, vector<8x64xbf16>, vector<8x64xbf16>, vector<8x64xbf16>, vector<8x64xbf16>, vector<8x64xbf16>, vector<8x64xbf16>, vector<8x64xbf16>, vector<24x64xbf16> -> vector<152x64xbf16>
    %87 = vector.extract_strided_slice %86 {offsets = [128, 0], sizes = [24, 64], strides = [1, 1]} : vector<152x64xbf16> to vector<24x64xbf16>
    %88 = vector.extract_strided_slice %86 {offsets = [0, 0], sizes = [128, 64], strides = [1, 1]} : vector<152x64xbf16> to vector<128x64xbf16>
    %89 = tpu.concatenate %87, %88 in 0 : vector<24x64xbf16>, vector<128x64xbf16> -> vector<152x64xbf16>
    %90 = vector.extract_strided_slice %86 {offsets = [136, 0], sizes = [16, 64], strides = [1, 1]} : vector<152x64xbf16> to vector<16x64xbf16>
    %91 = vector.extract_strided_slice %86 {offsets = [0, 0], sizes = [136, 64], strides = [1, 1]} : vector<152x64xbf16> to vector<136x64xbf16>
    %92 = tpu.concatenate %90, %91 in 0 : vector<16x64xbf16>, vector<136x64xbf16> -> vector<152x64xbf16>
    %93 = vector.extract_strided_slice %86 {offsets = [144, 0], sizes = [8, 64], strides = [1, 1]} : vector<152x64xbf16> to vector<8x64xbf16>
    %94 = vector.extract_strided_slice %86 {offsets = [0, 0], sizes = [144, 64], strides = [1, 1]} : vector<152x64xbf16> to vector<144x64xbf16>
    %95 = tpu.concatenate %93, %94 in 0 : vector<8x64xbf16>, vector<144x64xbf16> -> vector<152x64xbf16>
    %96 = tpu.concatenate %89, %92, %95, %86 in 1 : vector<152x64xbf16>, vector<152x64xbf16>, vector<152x64xbf16>, vector<152x64xbf16> -> vector<152x256xbf16>
    %c0_41 = arith.constant 0 : index
    %c0_42 = arith.constant 0 : index
    %97 = vector.load %arg15[%c0_41, %c0_42] : memref<256x128xbf16, #tpu.memory_space<vmem>>, vector<256x128xbf16>
    %cst_43 = arith.constant dense<0.000000e+00> : vector<152x128xf32>
    %98 = tpu.matmul %96, %97, %cst_43 {dimension_numbers = #tpu.dot_dimension_numbers<[1], [0], [0], [1], [0, 0, 1, 1], [], []>} : vector<152x256xbf16>, vector<256x128xbf16>, vector<152x128xf32> -> vector<152x128xf32>
    %c0_44 = arith.constant 0 : index
    %c0_45 = arith.constant 0 : index
    %99 = vector.load %arg16[%c0_44, %c0_45] : memref<1x128xf32, #tpu.memory_space<vmem>>, vector<1x128xf32>
    %100 = vector.broadcast %99 : vector<1x128xf32> to vector<152x128xf32>
    %101 = arith.addf %98, %100 : vector<152x128xf32>
    %cst_46 = arith.constant 0.000000e+00 : f32
    %102 = vector.broadcast %cst_46 : f32 to vector<152x128xf32>
    %103 = arith.maximumf %101, %102 : vector<152x128xf32>
    %c0_47 = arith.constant 0 : index
    %c0_48 = arith.constant 0 : index
    %104 = vector.load %arg17[%c0_47, %c0_48] : memref<152x128xf32, #tpu.memory_space<vmem>>, vector<152x128xf32>
    %105 = arith.mulf %103, %104 : vector<152x128xf32>
    %106 = arith.truncf %105 : vector<152x128xf32> to vector<152x128xbf16>
    %107 = vector.extract_strided_slice %106 {offsets = [144, 0], sizes = [8, 128], strides = [1, 1]} : vector<152x128xbf16> to vector<8x128xbf16>
    %108 = vector.extract_strided_slice %106 {offsets = [0, 0], sizes = [144, 128], strides = [1, 1]} : vector<152x128xbf16> to vector<144x128xbf16>
    %109 = tpu.concatenate %107, %108 in 0 : vector<8x128xbf16>, vector<144x128xbf16> -> vector<152x128xbf16>
    %110 = tpu.concatenate %109, %106 in 1 : vector<152x128xbf16>, vector<152x128xbf16> -> vector<152x256xbf16>
    %c0_49 = arith.constant 0 : index
    %c0_50 = arith.constant 0 : index
    %111 = vector.load %arg18[%c0_49, %c0_50] : memref<256x128xbf16, #tpu.memory_space<vmem>>, vector<256x128xbf16>
    %cst_51 = arith.constant dense<0.000000e+00> : vector<152x128xf32>
    %112 = tpu.matmul %110, %111, %cst_51 {dimension_numbers = #tpu.dot_dimension_numbers<[1], [0], [0], [1], [0, 0, 1, 1], [], []>} : vector<152x256xbf16>, vector<256x128xbf16>, vector<152x128xf32> -> vector<152x128xf32>
    %c0_52 = arith.constant 0 : index
    %c0_53 = arith.constant 0 : index
    %113 = vector.load %arg19[%c0_52, %c0_53] : memref<1x128xf32, #tpu.memory_space<vmem>>, vector<1x128xf32>
    %114 = vector.broadcast %113 : vector<1x128xf32> to vector<152x128xf32>
    %115 = arith.addf %112, %114 : vector<152x128xf32>
    %cst_54 = arith.constant 0.000000e+00 : f32
    %116 = vector.broadcast %cst_54 : f32 to vector<152x128xf32>
    %117 = arith.maximumf %115, %116 : vector<152x128xf32>
    %c0_55 = arith.constant 0 : index
    %c0_56 = arith.constant 0 : index
    %118 = vector.load %arg20[%c0_55, %c0_56] : memref<152x128xf32, #tpu.memory_space<vmem>>, vector<152x128xf32>
    %119 = arith.mulf %117, %118 : vector<152x128xf32>
    %120 = arith.truncf %119 : vector<152x128xf32> to vector<152x128xbf16>
    %121 = vector.extract_strided_slice %120 {offsets = [144, 0], sizes = [8, 128], strides = [1, 1]} : vector<152x128xbf16> to vector<8x128xbf16>
    %122 = vector.extract_strided_slice %120 {offsets = [0, 0], sizes = [144, 128], strides = [1, 1]} : vector<152x128xbf16> to vector<144x128xbf16>
    %123 = tpu.concatenate %121, %122 in 0 : vector<8x128xbf16>, vector<144x128xbf16> -> vector<152x128xbf16>
    %124 = tpu.concatenate %123, %120 in 1 : vector<152x128xbf16>, vector<152x128xbf16> -> vector<152x256xbf16>
    %c0_57 = arith.constant 0 : index
    %c0_58 = arith.constant 0 : index
    %125 = vector.load %arg21[%c0_57, %c0_58] : memref<256x64xbf16, #tpu.memory_space<vmem>>, vector<256x64xbf16>
    %cst_59 = arith.constant dense<0.000000e+00> : vector<152x64xf32>
    %126 = tpu.matmul %124, %125, %cst_59 {dimension_numbers = #tpu.dot_dimension_numbers<[1], [0], [0], [1], [0, 0, 1, 1], [], []>} : vector<152x256xbf16>, vector<256x64xbf16>, vector<152x64xf32> -> vector<152x64xf32>
    %c0_60 = arith.constant 0 : index
    %c0_61 = arith.constant 0 : index
    %127 = vector.load %arg22[%c0_60, %c0_61] : memref<1x64xf32, #tpu.memory_space<vmem>>, vector<1x64xf32>
    %128 = vector.broadcast %127 : vector<1x64xf32> to vector<152x64xf32>
    %129 = arith.addf %126, %128 : vector<152x64xf32>
    %130 = arith.negf %129 : vector<152x64xf32>
    %131 = math.exp %130 : vector<152x64xf32>
    %cst_62 = arith.constant 1.000000e+00 : f32
    %132 = vector.broadcast %cst_62 : f32 to vector<152x64xf32>
    %133 = arith.addf %132, %131 : vector<152x64xf32>
    %134 = arith.divf %132, %133 : vector<152x64xf32>
    %c0_63 = arith.constant 0 : index
    %c0_64 = arith.constant 0 : index
    %135 = vector.load %arg24[%c0_63, %c0_64] : memref<152x64xf32, #tpu.memory_space<vmem>>, vector<152x64xf32>
    tpu.vector_store %arg24[%c0_63, %c0_64], %134 {strides = array<i32>} : memref<152x64xf32, #tpu.memory_space<vmem>>, vector<152x64xf32>,
    return
  }
  func.func @transform_0(%arg0: i32) -> (i32, i32) {
    %c0_i32 = arith.constant 0 : i32
    %c0_i32_0 = arith.constant 0 : i32
    return %arg0, %c0_i32 : i32, i32
  }
  func.func @transform_1(%arg0: i32) -> (i32, i32) {
    %c0_i32 = arith.constant 0 : i32
    %c0_i32_0 = arith.constant 0 : i32
    return %arg0, %c0_i32 : i32, i32
  }
  func.func @transform_2(%arg0: i32) -> (i32, i32) {
    %c0_i32 = arith.constant 0 : i32
    %c0_i32_0 = arith.constant 0 : i32
    %c0_i32_1 = arith.constant 0 : i32
    return %c0_i32, %c0_i32_0 : i32, i32
  }
  func.func @transform_3(%arg0: i32) -> (i32, i32) {
    %c0_i32 = arith.constant 0 : i32
    %c0_i32_0 = arith.constant 0 : i32
    %c0_i32_1 = arith.constant 0 : i32
    return %c0_i32, %c0_i32_0 : i32, i32
  }
  func.func @transform_4(%arg0: i32) -> (i32, i32) {
    %c0_i32 = arith.constant 0 : i32
    %c0_i32_0 = arith.constant 0 : i32
    %c0_i32_1 = arith.constant 0 : i32
    return %c0_i32, %c0_i32_0 : i32, i32
  }
  func.func @transform_5(%arg0: i32) -> (i32, i32) {
    %c0_i32 = arith.constant 0 : i32
    %c0_i32_0 = arith.constant 0 : i32
    %c0_i32_1 = arith.constant 0 : i32
    return %c0_i32, %c0_i32_0 : i32, i32
  }
  func.func @transform_6(%arg0: i32) -> (i32, i32) {
    %c0_i32 = arith.constant 0 : i32
    %c0_i32_0 = arith.constant 0 : i32
    %c0_i32_1 = arith.constant 0 : i32
    return %c0_i32, %c0_i32_0 : i32, i32
  }
  func.func @transform_7(%arg0: i32) -> (i32, i32) {
    %c0_i32 = arith.constant 0 : i32
    %c0_i32_0 = arith.constant 0 : i32
    %c0_i32_1 = arith.constant 0 : i32
    return %c0_i32, %c0_i32_0 : i32, i32
  }
  func.func @transform_8(%arg0: i32) -> (i32, i32) {
    %c0_i32 = arith.constant 0 : i32
    %c0_i32_0 = arith.constant 0 : i32
    %c0_i32_1 = arith.constant 0 : i32
    return %c0_i32, %c0_i32_0 : i32, i32
  }
  func.func @transform_9(%arg0: i32) -> (i32, i32) {
    %c0_i32 = arith.constant 0 : i32
    %c0_i32_0 = arith.constant 0 : i32
    %c0_i32_1 = arith.constant 0 : i32
    return %c0_i32, %c0_i32_0 : i32, i32
  }
  func.func @transform_10(%arg0: i32) -> (i32, i32) {
    %c0_i32 = arith.constant 0 : i32
    %c0_i32_0 = arith.constant 0 : i32
    %c0_i32_1 = arith.constant 0 : i32
    return %c0_i32, %c0_i32_0 : i32, i32
  }
  func.func @transform_11(%arg0: i32) -> (i32, i32) {
    %c0_i32 = arith.constant 0 : i32
    %c0_i32_0 = arith.constant 0 : i32
    %c0_i32_1 = arith.constant 0 : i32
    return %c0_i32, %c0_i32_0 : i32, i32
  }
  func.func @transform_12(%arg0: i32) -> (i32, i32) {
    %c0_i32 = arith.constant 0 : i32
    %c0_i32_0 = arith.constant 0 : i32
    %c0_i32_1 = arith.constant 0 : i32
    return %c0_i32, %c0_i32_0 : i32, i32
  }
  func.func @transform_13(%arg0: i32) -> (i32, i32) {
    %c0_i32 = arith.constant 0 : i32
    %c0_i32_0 = arith.constant 0 : i32
    %c0_i32_1 = arith.constant 0 : i32
    return %c0_i32, %c0_i32_0 : i32, i32
  }
  func.func @transform_14(%arg0: i32) -> (i32, i32) {
    %c0_i32 = arith.constant 0 : i32
    %c0_i32_0 = arith.constant 0 : i32
    %c0_i32_1 = arith.constant 0 : i32
    return %c0_i32, %c0_i32_0 : i32, i32
  }
  func.func @transform_15(%arg0: i32) -> (i32, i32) {
    %c0_i32 = arith.constant 0 : i32
    %c0_i32_0 = arith.constant 0 : i32
    %c0_i32_1 = arith.constant 0 : i32
    return %c0_i32, %c0_i32_0 : i32, i32
  }
  func.func @transform_16(%arg0: i32) -> (i32, i32) {
    %c0_i32 = arith.constant 0 : i32
    %c0_i32_0 = arith.constant 0 : i32
    %c0_i32_1 = arith.constant 0 : i32
    return %c0_i32, %c0_i32_0 : i32, i32
  }
  func.func @transform_17(%arg0: i32) -> (i32, i32) {
    %c0_i32 = arith.constant 0 : i32
    %c0_i32_0 = arith.constant 0 : i32
    %c0_i32_1 = arith.constant 0 : i32
    return %c0_i32, %c0_i32_0 : i32, i32
  }
  func.func @transform_18(%arg0: i32) -> (i32, i32) {
    %c0_i32 = arith.constant 0 : i32
    %c0_i32_0 = arith.constant 0 : i32
    %c0_i32_1 = arith.constant 0 : i32
    return %c0_i32, %c0_i32_0 : i32, i32
  }
  func.func @transform_19(%arg0: i32) -> (i32, i32) {
    %c0_i32 = arith.constant 0 : i32
    %c0_i32_0 = arith.constant 0 : i32
    %c0_i32_1 = arith.constant 0 : i32
    return %c0_i32, %c0_i32_0 : i32, i32
  }
  func.func @transform_20(%arg0: i32) -> (i32, i32) {
    %c0_i32 = arith.constant 0 : i32
    %c0_i32_0 = arith.constant 0 : i32
    %c0_i32_1 = arith.constant 0 : i32
    return %c0_i32, %c0_i32_0 : i32, i32
  }
  func.func @transform_21(%arg0: i32) -> (i32, i32) {
    %c0_i32 = arith.constant 0 : i32
    %c0_i32_0 = arith.constant 0 : i32
    %c0_i32_1 = arith.constant 0 : i32
    return %c0_i32, %c0_i32_0 : i32, i32
  }
  func.func @transform_22(%arg0: i32) -> (i32, i32) {
    %c0_i32 = arith.constant 0 : i32
    %c0_i32_0 = arith.constant 0 : i32
    return %arg0, %c0_i32 : i32, i32
  }
  func.func @transform_23(%arg0: i32) -> (i32, i32) {
    %c0_i32 = arith.constant 0 : i32
    %c0_i32_0 = arith.constant 0 : i32
    return %arg0, %c0_i32 : i32, i32
  }
}

</mosaic_0001>

<llo_original>
// kernel: vae_forward.1
$region0: #{vae_forward.1}
  #allocation0 [shape = 'u32[]', space=smem, size = 0x4, offset = 0x4, fixed_abs, tag = 'smem constant byte address 0x4 - core index']
  #allocation1 [shape = 'u32[72,128]{1,0:T(1,128)}', space=vmem, size = 0x9000, scoped, tag = 'internal scratch']
  %s0 = inlined_call_operand.vmem [shape: bf16[48,256], index: 0, kind: input, shape index: {}]
  %s1 = inlined_call_operand.vmem [shape: f32[8,128], index: 1, kind: input, shape index: {}]
  %s2 = inlined_call_operand.vmem [shape: bf16[512,512], index: 2, kind: input, shape index: {}]
  %s3 = inlined_call_operand.vmem [shape: f32[1,512], index: 3, kind: input, shape index: {}]
  %s4 = inlined_call_operand.hbm [shape: bf16[1024,512], index: 4, kind: input, shape index: {}]
  %s5 = inlined_call_operand.vmem [shape: f32[1,512], index: 5, kind: input, shape index: {}]
  %s6 = inlined_call_operand.hbm [shape: bf16[1024,256], index: 6, kind: input, shape index: {}]
  %s7 = inlined_call_operand.vmem [shape: f32[1,256], index: 7, kind: input, shape index: {}]
  %s8 = inlined_call_operand.hbm [shape: bf16[768,128], index: 8, kind: input, shape index: {}]
  %s9 = inlined_call_operand.vmem [shape: f32[1,128], index: 9, kind: input, shape index: {}]
  %s10 = inlined_call_operand.hbm [shape: bf16[128,256], index: 10, kind: input, shape index: {}]
  %s11 = inlined_call_operand.vmem [shape: f32[1,256], index: 11, kind: input, shape index: {}]
  %s12 = inlined_call_operand.vmem [shape: bf16[128,832], index: 12, kind: input, shape index: {}]
  %s13 = inlined_call_operand.vmem [shape: f32[1,832], index: 13, kind: input, shape index: {}]
  %s14 = inlined_call_operand.hbm [shape: bf16[256,128], index: 14, kind: input, shape index: {}]
  %s15 = inlined_call_operand.vmem [shape: f32[1,128], index: 15, kind: input, shape index: {}]
  %s16 = inlined_call_operand.hbm [shape: f32[152,128], index: 16, kind: input, shape index: {}]
  %s17 = inlined_call_operand.hbm [shape: bf16[256,128], index: 17, kind: input, shape index: {}]
  %s18 = inlined_call_operand.vmem [shape: f32[1,128], index: 18, kind: input, shape index: {}]
  %s19 = inlined_call_operand.hbm [shape: f32[152,128], index: 19, kind: input, shape index: {}]
  %s20 = inlined_call_operand.vmem [shape: bf16[256,64], index: 20, kind: input, shape index: {}]
  %s21 = inlined_call_operand.vmem [shape: f32[1,64], index: 21, kind: input, shape index: {}]
  %s22 = inlined_call_operand.vmem [shape: f32[8,256], index: 22, kind: output, shape index: {0}]
  %s23 = inlined_call_operand.vmem [shape: f32[152,64], index: 23, kind: output, shape index: {1}]
  %24 = xla_tuple %s22, %s23
  %s25 = sld [smem:[#allocation0]]
  $region138: #{vae_forward.1} parent=0
    _
  %s27 = ssub.s32 1, %s25
  %s28 = scalar_select 0, %s27, %s25
  $region1: #{vae_forward.1} parent=0
    #allocation2 [shape = 'u8[1048576]{0}', space=vmem, size = 0x100000, scoped, tag = 'input window, operand 4, single buffered']
    #allocation3 [shape = 's32[1]{0}', space=sflag, size = 0x4, scoped, tag = 'scoped memory for vae_forward.1']
    #allocation4 [shape = 'u8[524288]{0}', space=vmem, size = 0x80000, scoped, tag = 'input window, operand 6, single buffered']
    #allocation5 [shape = 's32[1]{0}', space=sflag, size = 0x4, scoped, tag = 'scoped memory for vae_forward.1']
    #allocation6 [shape = 'u8[196608]{0}', space=vmem, size = 0x30000, scoped, tag = 'input window, operand 8, single buffered']
    #allocation7 [shape = 'u8[65536]{0}', space=vmem, size = 0x10000, scoped, tag = 'input window, operand 10, single buffered']
    #allocation8 [shape = 's32[1]{0}', space=sflag, size = 0x4, scoped, tag = 'scoped memory for vae_forward.1']
    #allocation9 [shape = 'u8[65536]{0}', space=vmem, size = 0x10000, scoped, tag = 'input window, operand 14, single buffered']
    #allocation10 [shape = 'u8[77824]{0}', space=vmem, size = 0x13000, scoped, tag = 'input window, operand 16, single buffered']
    #allocation11 [shape = 's32[1]{0}', space=sflag, size = 0x4, scoped, tag = 'scoped memory for vae_forward.1']
    #allocation12 [shape = 'u8[65536]{0}', space=vmem, size = 0x10000, scoped, tag = 'input window, operand 17, single buffered']
    #allocation13 [shape = 'u8[77824]{0}', space=vmem, size = 0x13000, scoped, tag = 'input window, operand 19, single buffered']
    #allocation14 [shape = 's32[1]{0}', space=sflag, size = 0x4, scoped, tag = 'scoped memory for vae_forward.1']
    %29 = vsyncpa [#allocation3], 0
    %30 = vsyncpa [#allocation5], 0
    %31 = vsyncpa [#allocation8], 0
    %32 = vsyncpa [#allocation11], 0
    %33 = vsyncpa [#allocation14], 0
    // Predicated region
    $region2: #{vae_forward.1} parent=1 // pred_check
      _
    $region3: #{vae_forward.1} parent=1 // pred_check_branch
      %35 = sbr.rel (0) target = $region5
    $region4: #{vae_forward.1} parent=1 // pred_region
      _
    $region5: #{vae_forward.1} parent=1 // pred_fallthru
      _
    // Predicated region
    $region6: #{vae_forward.1} parent=1 // pred_check
      _
    $region7: #{vae_forward.1} parent=1 // pred_check_branch
      %37 = sbr.rel (0) target = $region9
    $region8: #{vae_forward.1} parent=1 // pred_region
      _
    $region9: #{vae_forward.1} parent=1 // pred_fallthru
      _
    // Predicated region
    $region10: #{vae_forward.1} parent=1 // pred_check
      _
    $region11: #{vae_forward.1} parent=1 // pred_check_branch
      %39 = sbr.rel (0) target = $region13
    $region12: #{vae_forward.1} parent=1 // pred_region
      _
    $region13: #{vae_forward.1} parent=1 // pred_fallthru
      _
    // Predicated region
    $region14: #{vae_forward.1} parent=1 // pred_check
      _
    $region15: #{vae_forward.1} parent=1 // pred_check_branch
      %41 = sbr.rel (0) target = $region17
    $region16: #{vae_forward.1} parent=1 // pred_region
      _
    $region17: #{vae_forward.1} parent=1 // pred_fallthru
      _
    // Predicated region
    $region18: #{vae_forward.1} parent=1 // pred_check
      _
    $region19: #{vae_forward.1} parent=1 // pred_check_branch
      %43 = sbr.rel (0) target = $region21
    $region20: #{vae_forward.1} parent=1 // pred_region
      %45 = vsyncadd [#allocation3], 0
      %s46 = sshll.u32 %s4, 4
      %s47 = int_to_ptr.hbm [resolvable:$true] %s46
      %s48 = sshll.u32 [#allocation2], 4
      %s49 = int_to_ptr.vmem [resolvable:$true] %s48
      %54 = dma.hbm_to_vmem [thread:$0]  %s47, 32768, %s49, [#allocation3], 256, 256, 16
    $region21: #{vae_forward.1} parent=1 // pred_fallthru
      _
    // Predicated region
    $region22: #{vae_forward.1} parent=1 // pred_check
      _
    $region23: #{vae_forward.1} parent=1 // pred_check_branch
      %56 = sbr.rel (0) target = $region25
    $region24: #{vae_forward.1} parent=1 // pred_region
      _
    $region25: #{vae_forward.1} parent=1 // pred_fallthru
      _
    // Predicated region
    $region26: #{vae_forward.1} parent=1 // pred_check
      _
    $region27: #{vae_forward.1} parent=1 // pred_check_branch
      %58 = sbr.rel (0) target = $region29
    $region28: #{vae_forward.1} parent=1 // pred_region
      %60 = vsyncadd [#allocation5], 0
      %s61 = sshll.u32 %s6, 4
      %s62 = int_to_ptr.hbm [resolvable:$true] %s61
      %s63 = sshll.u32 [#allocation4], 4
      %s64 = int_to_ptr.vmem [resolvable:$true] %s63
      %69 = dma.hbm_to_vmem [thread:$0]  %s62, 16384, %s64, [#allocation5], 128, 128, 8
    $region29: #{vae_forward.1} parent=1 // pred_fallthru
      _
    // Predicated region
    $region30: #{vae_forward.1} parent=1 // pred_check
      _
    $region31: #{vae_forward.1} parent=1 // pred_check_branch
      %71 = sbr.rel (0) target = $region33
    $region32: #{vae_forward.1} parent=1 // pred_region
      _
    $region33: #{vae_forward.1} parent=1 // pred_fallthru
      _
    // Predicated region
    $region34: #{vae_forward.1} parent=1 // pred_check
      _
    $region35: #{vae_forward.1} parent=1 // pred_check_branch
      %73 = sbr.rel (0) target = $region37
    $region36: #{vae_forward.1} parent=1 // pred_region
      %75 = vsyncadd [#allocation5], 0
      %s76 = sshll.u32 %s8, 4
      %s77 = int_to_ptr.hbm [resolvable:$true] %s76
      %s78 = sshll.u32 [#allocation6], 4
      %s79 = int_to_ptr.vmem [resolvable:$true] %s78
      %84 = dma.hbm_to_vmem [thread:$0]  %s77, 6144, %s79, [#allocation5], 64, 64, 4
    $region37: #{vae_forward.1} parent=1 // pred_fallthru
      _
    // Predicated region
    $region38: #{vae_forward.1} parent=1 // pred_check
      _
    $region39: #{vae_forward.1} parent=1 // pred_check_branch
      %86 = sbr.rel (0) target = $region41
    $region40: #{vae_forward.1} parent=1 // pred_region
      _
    $region41: #{vae_forward.1} parent=1 // pred_fallthru
      _
    // Predicated region
    $region42: #{vae_forward.1} parent=1 // pred_check
      _
    $region43: #{vae_forward.1} parent=1 // pred_check_branch
      %88 = sbr.rel (0) target = $region45
    $region44: #{vae_forward.1} parent=1 // pred_region
      %90 = vsyncadd [#allocation8], 0
      %s91 = sshll.u32 %s10, 4
      %s92 = int_to_ptr.hbm [resolvable:$true] %s91
      %s93 = sshll.u32 [#allocation7], 4
      %s94 = int_to_ptr.vmem [resolvable:$true] %s93
      %99 = dma.hbm_to_vmem [thread:$0]  %s92, 2048, %s94, [#allocation8], 128, 128, 8
    $region45: #{vae_forward.1} parent=1 // pred_fallthru
      _
    // Predicated region
    $region46: #{vae_forward.1} parent=1 // pred_check
      _
    $region47: #{vae_forward.1} parent=1 // pred_check_branch
      %101 = sbr.rel (0) target = $region49
    $region48: #{vae_forward.1} parent=1 // pred_region
      _
    $region49: #{vae_forward.1} parent=1 // pred_fallthru
      _
    // Predicated region
    $region50: #{vae_forward.1} parent=1 // pred_check
      _
    $region51: #{vae_forward.1} parent=1 // pred_check_branch
      %103 = sbr.rel (0) target = $region53
    $region52: #{vae_forward.1} parent=1 // pred_region
      _
    $region53: #{vae_forward.1} parent=1 // pred_fallthru
      _
    // Predicated region
    $region54: #{vae_forward.1} parent=1 // pred_check
      _
    $region55: #{vae_forward.1} parent=1 // pred_check_branch
      %105 = sbr.rel (0) target = $region57
    $region56: #{vae_forward.1} parent=1 // pred_region
      _
    $region57: #{vae_forward.1} parent=1 // pred_fallthru
      _
    // Predicated region
    $region58: #{vae_forward.1} parent=1 // pred_check
      _
    $region59: #{vae_forward.1} parent=1 // pred_check_branch
      %107 = sbr.rel (0) target = $region61
    $region60: #{vae_forward.1} parent=1 // pred_region
      %109 = vsyncadd [#allocation8], 0
      %s110 = sshll.u32 %s14, 4
      %s111 = int_to_ptr.hbm [resolvable:$true] %s110
      %s112 = sshll.u32 [#allocation9], 4
      %s113 = int_to_ptr.vmem [resolvable:$true] %s112
      %118 = dma.hbm_to_vmem [thread:$0]  %s111, 2048, %s113, [#allocation8], 64, 64, 4
    $region61: #{vae_forward.1} parent=1 // pred_fallthru
      _
    // Predicated region
    $region62: #{vae_forward.1} parent=1 // pred_check
      _
    $region63: #{vae_forward.1} parent=1 // pred_check_branch
      %120 = sbr.rel (0) target = $region65
    $region64: #{vae_forward.1} parent=1 // pred_region
      _
    $region65: #{vae_forward.1} parent=1 // pred_fallthru
      _
    // Predicated region
    $region66: #{vae_forward.1} parent=1 // pred_check
      _
    $region67: #{vae_forward.1} parent=1 // pred_check_branch
      %122 = sbr.rel (0) target = $region69
    $region68: #{vae_forward.1} parent=1 // pred_region
      %124 = vsyncadd [#allocation11], 0
      %s125 = sshll.u32 %s16, 4
      %s126 = int_to_ptr.hbm [resolvable:$true] %s125
      %s127 = sshll.u32 [#allocation10], 4
      %s128 = int_to_ptr.vmem [resolvable:$true] %s127
      %133 = dma.hbm_to_vmem [thread:$0]  %s126, 2432, %s128, [#allocation11], 128, 128, 8
    $region69: #{vae_forward.1} parent=1 // pred_fallthru
      _
    // Predicated region
    $region70: #{vae_forward.1} parent=1 // pred_check
      _
    $region71: #{vae_forward.1} parent=1 // pred_check_branch
      %135 = sbr.rel (0) target = $region73
    $region72: #{vae_forward.1} parent=1 // pred_region
      %137 = vsyncadd [#allocation11], 0
      %s138 = sshll.u32 %s17, 4
      %s139 = int_to_ptr.hbm [resolvable:$true] %s138
      %s140 = sshll.u32 [#allocation12], 4
      %s141 = int_to_ptr.vmem [resolvable:$true] %s140
      %146 = dma.hbm_to_vmem [thread:$0]  %s139, 2048, %s141, [#allocation11], 64, 64, 4
    $region73: #{vae_forward.1} parent=1 // pred_fallthru
      _
    // Predicated region
    $region74: #{vae_forward.1} parent=1 // pred_check
      _
    $region75: #{vae_forward.1} parent=1 // pred_check_branch
      %148 = sbr.rel (0) target = $region77
    $region76: #{vae_forward.1} parent=1 // pred_region
      _
    $region77: #{vae_forward.1} parent=1 // pred_fallthru
      _
    // Predicated region
    $region78: #{vae_forward.1} parent=1 // pred_check
      _
    $region79: #{vae_forward.1} parent=1 // pred_check_branch
      %150 = sbr.rel (0) target = $region81
    $region80: #{vae_forward.1} parent=1 // pred_region
      %152 = vsyncadd [#allocation14], 0
      %s153 = sshll.u32 %s19, 4
      %s154 = int_to_ptr.hbm [resolvable:$true] %s153
      %s155 = sshll.u32 [#allocation13], 4
      %s156 = int_to_ptr.vmem [resolvable:$true] %s155
      %161 = dma.hbm_to_vmem [thread:$0]  %s154, 2432, %s156, [#allocation14], 128, 128, 8
    $region81: #{vae_forward.1} parent=1 // pred_fallthru
      _
    // Predicated region
    $region82: #{vae_forward.1} parent=1 // pred_check
      _
    $region83: #{vae_forward.1} parent=1 // pred_check_branch
      %163 = sbr.rel (0) target = $region85
    $region84: #{vae_forward.1} parent=1 // pred_region
      _
    $region85: #{vae_forward.1} parent=1 // pred_fallthru
      _
    // Predicated region
    $region86: #{vae_forward.1} parent=1 // pred_check
      _
    $region87: #{vae_forward.1} parent=1 // pred_check_branch
      %165 = sbr.rel (0) target = $region89
    $region88: #{vae_forward.1} parent=1 // pred_region
      _
    $region89: #{vae_forward.1} parent=1 // pred_fallthru
      _
    // Predicated region
    $region90: #{vae_forward.1} parent=1 // pred_check
      _
    $region91: #{vae_forward.1} parent=1 // pred_check_branch
      %167 = sbr.rel (0) target = $region93
    $region92: #{vae_forward.1} parent=1 // pred_region
      %169 = dma.done [#allocation3], 32768
    $region93: #{vae_forward.1} parent=1 // pred_fallthru
      _
    // Predicated region
    $region94: #{vae_forward.1} parent=1 // pred_check
      _
    $region95: #{vae_forward.1} parent=1 // pred_check_branch
      %171 = sbr.rel (0) target = $region97
    $region96: #{vae_forward.1} parent=1 // pred_region
      %173 = dma.done [#allocation5], 16384
    $region97: #{vae_forward.1} parent=1 // pred_fallthru
      _
    // Predicated region
    $region98: #{vae_forward.1} parent=1 // pred_check
      _
    $region99: #{vae_forward.1} parent=1 // pred_check_branch
      %175 = sbr.rel (0) target = $region101
    $region100: #{vae_forward.1} parent=1 // pred_region
      %177 = dma.done [#allocation5], 6144
    $region101: #{vae_forward.1} parent=1 // pred_fallthru
      _
    // Predicated region
    $region102: #{vae_forward.1} parent=1 // pred_check
      _
    $region103: #{vae_forward.1} parent=1 // pred_check_branch
      %179 = sbr.rel (0) target = $region105
    $region104: #{vae_forward.1} parent=1 // pred_region
      %181 = dma.done [#allocation8], 2048
    $region105: #{vae_forward.1} parent=1 // pred_fallthru
      _
    // Predicated region
    $region106: #{vae_forward.1} parent=1 // pred_check
      _
    $region107: #{vae_forward.1} parent=1 // pred_check_branch
      %183 = sbr.rel (0) target = $region109
    $region108: #{vae_forward.1} parent=1 // pred_region
      %185 = dma.done [#allocation8], 2048
    $region109: #{vae_forward.1} parent=1 // pred_fallthru
      _
    // Predicated region
    $region110: #{vae_forward.1} parent=1 // pred_check
      _
    $region111: #{vae_forward.1} parent=1 // pred_check_branch
      %187 = sbr.rel (0) target = $region113
    $region112: #{vae_forward.1} parent=1 // pred_region
      %189 = dma.done [#allocation11], 2432
    $region113: #{vae_forward.1} parent=1 // pred_fallthru
      _
    // Predicated region
    $region114: #{vae_forward.1} parent=1 // pred_check
      _
    $region115: #{vae_forward.1} parent=1 // pred_check_branch
      %191 = sbr.rel (0) target = $region117
    $region116: #{vae_forward.1} parent=1 // pred_region
      %193 = dma.done [#allocation11], 2048
    $region117: #{vae_forward.1} parent=1 // pred_fallthru
      _
    // Predicated region
    $region118: #{vae_forward.1} parent=1 // pred_check
      _
    $region119: #{vae_forward.1} parent=1 // pred_check_branch
      %195 = sbr.rel (0) target = $region121
    $region120: #{vae_forward.1} parent=1 // pred_region
      %197 = dma.done [#allocation14], 2432
    $region121: #{vae_forward.1} parent=1 // pred_fallthru
      _
    %v199 = vld [vmem:[%s0] sm:$0xff]
    %v200 = vld [vmem:[%s0 + $0x8] sm:$0xff]
    %v201 = vld [vmem:[%s0 + $0x10] sm:$0xff]
    %v202 = vld [vmem:[%s0 + $0x18] sm:$0xff]
    %v203 = vld [vmem:[%s0 + $0x20] sm:$0xff]
    %v204 = vld [vmem:[%s0 + $0x28] sm:$0xff]
    %v210 = vunpack.c.l.b16 %v200
    %v211 = vunpack.c.h.b16 %v200
    %v212 = vunpack.c.l.b16 %v201
    %v213 = vunpack.c.h.b16 %v201
    %v214 = vunpack.c.l.b16 %v202
    %v215 = vunpack.c.h.b16 %v202
    %v216 = vunpack.c.l.b16 %v203
    %v217 = vunpack.c.h.b16 %v203
    %v218 = vunpack.c.l.b16 %v204
    %v219 = vunpack.c.h.b16 %v204
    %v220 = vpack.c.b16 %v212, %v210
    %v221 = vpack.c.b16 %v213, %v211
    %v222 = vpack.c.b16 %v216, %v214
    %v223 = vpack.c.b16 %v217, %v215
    %v224 = vpack.c.b16 %v218, %v218
    %v225 = vpack.c.b16 %v219, %v219
    %v231 = vunpack.c.l.b16 %v199
    %v232 = vunpack.c.h.b16 %v199
    %v233 = vpack.c.b16 %v231, %v231
    %v234 = vpack.c.b16 %v232, %v232
    %vm235 = vcmask 1043456
    %v238 = vsel %vm235, %v224, %v233
    %v242 = vsel %vm235, %v225, %v234
    %v244 = vpack.c.b16 %v210, %v231
    %v245 = vpack.c.b16 %v211, %v232
    %v246 = vpack.c.b16 %v214, %v212
    %v247 = vpack.c.b16 %v215, %v213
    %v248 = vpack.c.b16 %v218, %v216
    %v249 = vpack.c.b16 %v219, %v217
    %v256 = vld [vmem:[%s2] sm:$0xff]
    %v257 = vld [vmem:[%s2 + $0x8] sm:$0xff]
    %v258 = vld [vmem:[%s2 + $0x10] sm:$0xff]
    %v259 = vld [vmem:[%s2 + $0x18] sm:$0xff]
    %v260 = vld [vmem:[%s2 + $0x20] sm:$0xff]
    %v261 = vld [vmem:[%s2 + $0x28] sm:$0xff]
    %v262 = vld [vmem:[%s2 + $0x30] sm:$0xff]
    %v263 = vld [vmem:[%s2 + $0x38] sm:$0xff]
    %v264 = vld [vmem:[%s2 + $0x40] sm:$0xff]
    %v265 = vld [vmem:[%s2 + $0x48] sm:$0xff]
    %v266 = vld [vmem:[%s2 + $0x50] sm:$0xff]
    %v267 = vld [vmem:[%s2 + $0x58] sm:$0xff]
    %v268 = vld [vmem:[%s2 + $0x60] sm:$0xff]
    %v269 = vld [vmem:[%s2 + $0x68] sm:$0xff]
    %v270 = vld [vmem:[%s2 + $0x70] sm:$0xff]
    %v271 = vld [vmem:[%s2 + $0x78] sm:$0xff]
    %v272 = vld [vmem:[%s2 + $0x80] sm:$0xff]
    %v273 = vld [vmem:[%s2 + $0x88] sm:$0xff]
    %v274 = vld [vmem:[%s2 + $0x90] sm:$0xff]
    %v275 = vld [vmem:[%s2 + $0x98] sm:$0xff]
    %v276 = vld [vmem:[%s2 + $0xa0] sm:$0xff]
    %v277 = vld [vmem:[%s2 + $0xa8] sm:$0xff]
    %v278 = vld [vmem:[%s2 + $0xb0] sm:$0xff]
    %v279 = vld [vmem:[%s2 + $0xb8] sm:$0xff]
    %v280 = vld [vmem:[%s2 + $0xc0] sm:$0xff]
    %v281 = vld [vmem:[%s2 + $0xc8] sm:$0xff]
    %v282 = vld [vmem:[%s2 + $0xd0] sm:$0xff]
    %v283 = vld [vmem:[%s2 + $0xd8] sm:$0xff]
    %v284 = vld [vmem:[%s2 + $0xe0] sm:$0xff]
    %v285 = vld [vmem:[%s2 + $0xe8] sm:$0xff]
    %v286 = vld [vmem:[%s2 + $0xf0] sm:$0xff]
    %v287 = vld [vmem:[%s2 + $0xf8] sm:$0xff]
    %v288 = vld [vmem:[%s2 + $0x100] sm:$0xff]
    %v289 = vld [vmem:[%s2 + $0x108] sm:$0xff]
    %v290 = vld [vmem:[%s2 + $0x110] sm:$0xff]
    %v291 = vld [vmem:[%s2 + $0x118] sm:$0xff]
    %v292 = vld [vmem:[%s2 + $0x120] sm:$0xff]
    %v293 = vld [vmem:[%s2 + $0x128] sm:$0xff]
    %v294 = vld [vmem:[%s2 + $0x130] sm:$0xff]
    %v295 = vld [vmem:[%s2 + $0x138] sm:$0xff]
    %v296 = vld [vmem:[%s2 + $0x140] sm:$0xff]
    %v297 = vld [vmem:[%s2 + $0x148] sm:$0xff]
    %v298 = vld [vmem:[%s2 + $0x150] sm:$0xff]
    %v299 = vld [vmem:[%s2 + $0x158] sm:$0xff]
    %v300 = vld [vmem:[%s2 + $0x160] sm:$0xff]
    %v301 = vld [vmem:[%s2 + $0x168] sm:$0xff]
    %v302 = vld [vmem:[%s2 + $0x170] sm:$0xff]
    %v303 = vld [vmem:[%s2 + $0x178] sm:$0xff]
    %v304 = vld [vmem:[%s2 + $0x180] sm:$0xff]
    %v305 = vld [vmem:[%s2 + $0x188] sm:$0xff]
    %v306 = vld [vmem:[%s2 + $0x190] sm:$0xff]
    %v307 = vld [vmem:[%s2 + $0x198] sm:$0xff]
    %v308 = vld [vmem:[%s2 + $0x1a0] sm:$0xff]
    %v309 = vld [vmem:[%s2 + $0x1a8] sm:$0xff]
    %v310 = vld [vmem:[%s2 + $0x1b0] sm:$0xff]
    %v311 = vld [vmem:[%s2 + $0x1b8] sm:$0xff]
    %v312 = vld [vmem:[%s2 + $0x1c0] sm:$0xff]
    %v313 = vld [vmem:[%s2 + $0x1c8] sm:$0xff]
    %v314 = vld [vmem:[%s2 + $0x1d0] sm:$0xff]
    %v315 = vld [vmem:[%s2 + $0x1d8] sm:$0xff]
    %v316 = vld [vmem:[%s2 + $0x1e0] sm:$0xff]
    %v317 = vld [vmem:[%s2 + $0x1e8] sm:$0xff]
    %v318 = vld [vmem:[%s2 + $0x1f0] sm:$0xff]
    %v319 = vld [vmem:[%s2 + $0x1f8] sm:$0xff]
    %v320 = vld [vmem:[%s2 + $0x200] sm:$0xff]
    %v321 = vld [vmem:[%s2 + $0x208] sm:$0xff]
    %v322 = vld [vmem:[%s2 + $0x210] sm:$0xff]
    %v323 = vld [vmem:[%s2 + $0x218] sm:$0xff]
    %v324 = vld [vmem:[%s2 + $0x220] sm:$0xff]
    %v325 = vld [vmem:[%s2 + $0x228] sm:$0xff]
    %v326 = vld [vmem:[%s2 + $0x230] sm:$0xff]
    %v327 = vld [vmem:[%s2 + $0x238] sm:$0xff]
    %v328 = vld [vmem:[%s2 + $0x240] sm:$0xff]
    %v329 = vld [vmem:[%s2 + $0x248] sm:$0xff]
    %v330 = vld [vmem:[%s2 + $0x250] sm:$0xff]
    %v331 = vld [vmem:[%s2 + $0x258] sm:$0xff]
    %v332 = vld [vmem:[%s2 + $0x260] sm:$0xff]
    %v333 = vld [vmem:[%s2 + $0x268] sm:$0xff]
    %v334 = vld [vmem:[%s2 + $0x270] sm:$0xff]
    %v335 = vld [vmem:[%s2 + $0x278] sm:$0xff]
    %v336 = vld [vmem:[%s2 + $0x280] sm:$0xff]
    %v337 = vld [vmem:[%s2 + $0x288] sm:$0xff]
    %v338 = vld [vmem:[%s2 + $0x290] sm:$0xff]
    %v339 = vld [vmem:[%s2 + $0x298] sm:$0xff]
    %v340 = vld [vmem:[%s2 + $0x2a0] sm:$0xff]
    %v341 = vld [vmem:[%s2 + $0x2a8] sm:$0xff]
    %v342 = vld [vmem:[%s2 + $0x2b0] sm:$0xff]
    %v343 = vld [vmem:[%s2 + $0x2b8] sm:$0xff]
    %v344 = vld [vmem:[%s2 + $0x2c0] sm:$0xff]
    %v345 = vld [vmem:[%s2 + $0x2c8] sm:$0xff]
    %v346 = vld [vmem:[%s2 + $0x2d0] sm:$0xff]
    %v347 = vld [vmem:[%s2 + $0x2d8] sm:$0xff]
    %v348 = vld [vmem:[%s2 + $0x2e0] sm:$0xff]
    %v349 = vld [vmem:[%s2 + $0x2e8] sm:$0xff]
    %v350 = vld [vmem:[%s2 + $0x2f0] sm:$0xff]
    %v351 = vld [vmem:[%s2 + $0x2f8] sm:$0xff]
    %v352 = vld [vmem:[%s2 + $0x300] sm:$0xff]
    %v353 = vld [vmem:[%s2 + $0x308] sm:$0xff]
    %v354 = vld [vmem:[%s2 + $0x310] sm:$0xff]
    %v355 = vld [vmem:[%s2 + $0x318] sm:$0xff]
    %v356 = vld [vmem:[%s2 + $0x320] sm:$0xff]
    %v357 = vld [vmem:[%s2 + $0x328] sm:$0xff]
    %v358 = vld [vmem:[%s2 + $0x330] sm:$0xff]
    %v359 = vld [vmem:[%s2 + $0x338] sm:$0xff]
    %v360 = vld [vmem:[%s2 + $0x340] sm:$0xff]
    %v361 = vld [vmem:[%s2 + $0x348] sm:$0xff]
    %v362 = vld [vmem:[%s2 + $0x350] sm:$0xff]
    %v363 = vld [vmem:[%s2 + $0x358] sm:$0xff]
    %v364 = vld [vmem:[%s2 + $0x360] sm:$0xff]
    %v365 = vld [vmem:[%s2 + $0x368] sm:$0xff]
    %v366 = vld [vmem:[%s2 + $0x370] sm:$0xff]
    %v367 = vld [vmem:[%s2 + $0x378] sm:$0xff]
    %v368 = vld [vmem:[%s2 + $0x380] sm:$0xff]
    %v369 = vld [vmem:[%s2 + $0x388] sm:$0xff]
    %v370 = vld [vmem:[%s2 + $0x390] sm:$0xff]
    %v371 = vld [vmem:[%s2 + $0x398] sm:$0xff]
    %v372 = vld [vmem:[%s2 + $0x3a0] sm:$0xff]
    %v373 = vld [vmem:[%s2 + $0x3a8] sm:$0xff]
    %v374 = vld [vmem:[%s2 + $0x3b0] sm:$0xff]
    %v375 = vld [vmem:[%s2 + $0x3b8] sm:$0xff]
    %v376 = vld [vmem:[%s2 + $0x3c0] sm:$0xff]
    %v377 = vld [vmem:[%s2 + $0x3c8] sm:$0xff]
    %v378 = vld [vmem:[%s2 + $0x3d0] sm:$0xff]
    %v379 = vld [vmem:[%s2 + $0x3d8] sm:$0xff]
    %v380 = vld [vmem:[%s2 + $0x3e0] sm:$0xff]
    %v381 = vld [vmem:[%s2 + $0x3e8] sm:$0xff]
    %v382 = vld [vmem:[%s2 + $0x3f0] sm:$0xff]
    %v383 = vld [vmem:[%s2 + $0x3f8] sm:$0xff]
    %v384 = vld [vmem:[%s3] sm:$0xf]
    %v386 = vperm.slane %v384, 0
    %v387 = vperm.slane %v384, 1
    %v388 = vperm.slane %v384, 2
    %v389 = vperm.slane %v384, 3
    %v522 = vunpack.c.l.b16 %v256
    %v523 = vunpack.c.h.b16 %v256
    %v524 = vunpack.c.l.b16 %v257
    %v525 = vunpack.c.h.b16 %v257
    %v526 = vunpack.c.l.b16 %v258
    %v527 = vunpack.c.h.b16 %v258
    %v528 = vunpack.c.l.b16 %v259
    %v529 = vunpack.c.h.b16 %v259
    %v530 = vunpack.c.l.b16 %v260
    %v531 = vunpack.c.h.b16 %v260
    %v532 = vunpack.c.l.b16 %v261
    %v533 = vunpack.c.h.b16 %v261
    %v534 = vunpack.c.l.b16 %v262
    %v535 = vunpack.c.h.b16 %v262
    %v536 = vunpack.c.l.b16 %v263
    %v537 = vunpack.c.h.b16 %v263
    %v538 = vunpack.c.l.b16 %v264
    %v539 = vunpack.c.h.b16 %v264
    %v540 = vunpack.c.l.b16 %v265
    %v541 = vunpack.c.h.b16 %v265
    %v542 = vunpack.c.l.b16 %v266
    %v543 = vunpack.c.h.b16 %v266
    %v544 = vunpack.c.l.b16 %v267
    %v545 = vunpack.c.h.b16 %v267
    %v546 = vunpack.c.l.b16 %v268
    %v547 = vunpack.c.h.b16 %v268
    %v548 = vunpack.c.l.b16 %v269
    %v549 = vunpack.c.h.b16 %v269
    %v550 = vunpack.c.l.b16 %v270
    %v551 = vunpack.c.h.b16 %v270
    %v552 = vunpack.c.l.b16 %v271
    %v553 = vunpack.c.h.b16 %v271
    %v554 = vunpack.c.l.b16 %v272
    %v555 = vunpack.c.h.b16 %v272
    %v556 = vunpack.c.l.b16 %v273
    %v557 = vunpack.c.h.b16 %v273
    %v558 = vunpack.c.l.b16 %v274
    %v559 = vunpack.c.h.b16 %v274
    %v560 = vunpack.c.l.b16 %v275
    %v561 = vunpack.c.h.b16 %v275
    %v562 = vunpack.c.l.b16 %v276
    %v563 = vunpack.c.h.b16 %v276
    %v564 = vunpack.c.l.b16 %v277
    %v565 = vunpack.c.h.b16 %v277
    %v566 = vunpack.c.l.b16 %v278
    %v567 = vunpack.c.h.b16 %v278
    %v568 = vunpack.c.l.b16 %v279
    %v569 = vunpack.c.h.b16 %v279
    %v570 = vunpack.c.l.b16 %v280
    %v571 = vunpack.c.h.b16 %v280
    %v572 = vunpack.c.l.b16 %v281
    %v573 = vunpack.c.h.b16 %v281
    %v574 = vunpack.c.l.b16 %v282
    %v575 = vunpack.c.h.b16 %v282
    %v576 = vunpack.c.l.b16 %v283
    %v577 = vunpack.c.h.b16 %v283
    %v578 = vunpack.c.l.b16 %v284
    %v579 = vunpack.c.h.b16 %v284
    %v580 = vunpack.c.l.b16 %v285
    %v581 = vunpack.c.h.b16 %v285
    %v582 = vunpack.c.l.b16 %v286
    %v583 = vunpack.c.h.b16 %v286
    %v584 = vunpack.c.l.b16 %v287
    %v585 = vunpack.c.h.b16 %v287
    %v586 = vunpack.c.l.b16 %v288
    %v587 = vunpack.c.h.b16 %v288
    %v588 = vunpack.c.l.b16 %v289
    %v589 = vunpack.c.h.b16 %v289
    %v590 = vunpack.c.l.b16 %v290
    %v591 = vunpack.c.h.b16 %v290
    %v592 = vunpack.c.l.b16 %v291
    %v593 = vunpack.c.h.b16 %v291
    %v594 = vunpack.c.l.b16 %v292
    %v595 = vunpack.c.h.b16 %v292
    %v596 = vunpack.c.l.b16 %v293
    %v597 = vunpack.c.h.b16 %v293
    %v598 = vunpack.c.l.b16 %v294
    %v599 = vunpack.c.h.b16 %v294
    %v600 = vunpack.c.l.b16 %v295
    %v601 = vunpack.c.h.b16 %v295
    %v602 = vunpack.c.l.b16 %v296
    %v603 = vunpack.c.h.b16 %v296
    %v604 = vunpack.c.l.b16 %v297
    %v605 = vunpack.c.h.b16 %v297
    %v606 = vunpack.c.l.b16 %v298
    %v607 = vunpack.c.h.b16 %v298
    %v608 = vunpack.c.l.b16 %v299
    %v609 = vunpack.c.h.b16 %v299
    %v610 = vunpack.c.l.b16 %v300
    %v611 = vunpack.c.h.b16 %v300
    %v612 = vunpack.c.l.b16 %v301
    %v613 = vunpack.c.h.b16 %v301
    %v614 = vunpack.c.l.b16 %v302
    %v615 = vunpack.c.h.b16 %v302
    %v616 = vunpack.c.l.b16 %v303
    %v617 = vunpack.c.h.b16 %v303
    %v618 = vunpack.c.l.b16 %v304
    %v619 = vunpack.c.h.b16 %v304
    %v620 = vunpack.c.l.b16 %v305
    %v621 = vunpack.c.h.b16 %v305
    %v622 = vunpack.c.l.b16 %v306
    %v623 = vunpack.c.h.b16 %v306
    %v624 = vunpack.c.l.b16 %v307
    %v625 = vunpack.c.h.b16 %v307
    %v626 = vunpack.c.l.b16 %v308
    %v627 = vunpack.c.h.b16 %v308
    %v628 = vunpack.c.l.b16 %v309
    %v629 = vunpack.c.h.b16 %v309
    %v630 = vunpack.c.l.b16 %v310
    %v631 = vunpack.c.h.b16 %v310
    %v632 = vunpack.c.l.b16 %v311
    %v633 = vunpack.c.h.b16 %v311
    %v634 = vunpack.c.l.b16 %v312
    %v635 = vunpack.c.h.b16 %v312
    %v636 = vunpack.c.l.b16 %v313
    %v637 = vunpack.c.h.b16 %v313
    %v638 = vunpack.c.l.b16 %v314
    %v639 = vunpack.c.h.b16 %v314
    %v640 = vunpack.c.l.b16 %v315
    %v641 = vunpack.c.h.b16 %v315
    %v642 = vunpack.c.l.b16 %v316
    %v643 = vunpack.c.h.b16 %v316
    %v644 = vunpack.c.l.b16 %v317
    %v645 = vunpack.c.h.b16 %v317
    %v646 = vunpack.c.l.b16 %v318
    %v647 = vunpack.c.h.b16 %v318
    %v648 = vunpack.c.l.b16 %v319
    %v649 = vunpack.c.h.b16 %v319
    %v650 = vunpack.c.l.b16 %v320
    %v651 = vunpack.c.h.b16 %v320
    %v652 = vunpack.c.l.b16 %v321
    %v653 = vunpack.c.h.b16 %v321
    %v654 = vunpack.c.l.b16 %v322
    %v655 = vunpack.c.h.b16 %v322
    %v656 = vunpack.c.l.b16 %v323
    %v657 = vunpack.c.h.b16 %v323
    %v658 = vunpack.c.l.b16 %v324
    %v659 = vunpack.c.h.b16 %v324
    %v660 = vunpack.c.l.b16 %v325
    %v661 = vunpack.c.h.b16 %v325
    %v662 = vunpack.c.l.b16 %v326
    %v663 = vunpack.c.h.b16 %v326
    %v664 = vunpack.c.l.b16 %v327
    %v665 = vunpack.c.h.b16 %v327
    %v666 = vunpack.c.l.b16 %v328
    %v667 = vunpack.c.h.b16 %v328
    %v668 = vunpack.c.l.b16 %v329
    %v669 = vunpack.c.h.b16 %v329
    %v670 = vunpack.c.l.b16 %v330
    %v671 = vunpack.c.h.b16 %v330
    %v672 = vunpack.c.l.b16 %v331
    %v673 = vunpack.c.h.b16 %v331
    %v674 = vunpack.c.l.b16 %v332
    %v675 = vunpack.c.h.b16 %v332
    %v676 = vunpack.c.l.b16 %v333
    %v677 = vunpack.c.h.b16 %v333
    %v678 = vunpack.c.l.b16 %v334
    %v679 = vunpack.c.h.b16 %v334
    %v680 = vunpack.c.l.b16 %v335
    %v681 = vunpack.c.h.b16 %v335
    %v682 = vunpack.c.l.b16 %v336
    %v683 = vunpack.c.h.b16 %v336
    %v684 = vunpack.c.l.b16 %v337
    %v685 = vunpack.c.h.b16 %v337
    %v686 = vunpack.c.l.b16 %v338
    %v687 = vunpack.c.h.b16 %v338
    %v688 = vunpack.c.l.b16 %v339
    %v689 = vunpack.c.h.b16 %v339
    %v690 = vunpack.c.l.b16 %v340
    %v691 = vunpack.c.h.b16 %v340
    %v692 = vunpack.c.l.b16 %v341
    %v693 = vunpack.c.h.b16 %v341
    %v694 = vunpack.c.l.b16 %v342
    %v695 = vunpack.c.h.b16 %v342
    %v696 = vunpack.c.l.b16 %v343
    %v697 = vunpack.c.h.b16 %v343
    %v698 = vunpack.c.l.b16 %v344
    %v699 = vunpack.c.h.b16 %v344
    %v700 = vunpack.c.l.b16 %v345
    %v701 = vunpack.c.h.b16 %v345
    %v702 = vunpack.c.l.b16 %v346
    %v703 = vunpack.c.h.b16 %v346
    %v704 = vunpack.c.l.b16 %v347
    %v705 = vunpack.c.h.b16 %v347
    %v706 = vunpack.c.l.b16 %v348
    %v707 = vunpack.c.h.b16 %v348
    %v708 = vunpack.c.l.b16 %v349
    %v709 = vunpack.c.h.b16 %v349
    %v710 = vunpack.c.l.b16 %v350
    %v711 = vunpack.c.h.b16 %v350
    %v712 = vunpack.c.l.b16 %v351
    %v713 = vunpack.c.h.b16 %v351
    %v714 = vunpack.c.l.b16 %v352
    %v715 = vunpack.c.h.b16 %v352
    %v716 = vunpack.c.l.b16 %v353
    %v717 = vunpack.c.h.b16 %v353
    %v718 = vunpack.c.l.b16 %v354
    %v719 = vunpack.c.h.b16 %v354
    %v720 = vunpack.c.l.b16 %v355
    %v721 = vunpack.c.h.b16 %v355
    %v722 = vunpack.c.l.b16 %v356
    %v723 = vunpack.c.h.b16 %v356
    %v724 = vunpack.c.l.b16 %v357
    %v725 = vunpack.c.h.b16 %v357
    %v726 = vunpack.c.l.b16 %v358
    %v727 = vunpack.c.h.b16 %v358
    %v728 = vunpack.c.l.b16 %v359
    %v729 = vunpack.c.h.b16 %v359
    %v730 = vunpack.c.l.b16 %v360
    %v731 = vunpack.c.h.b16 %v360
    %v732 = vunpack.c.l.b16 %v361
    %v733 = vunpack.c.h.b16 %v361
    %v734 = vunpack.c.l.b16 %v362
    %v735 = vunpack.c.h.b16 %v362
    %v736 = vunpack.c.l.b16 %v363
    %v737 = vunpack.c.h.b16 %v363
    %v738 = vunpack.c.l.b16 %v364
    %v739 = vunpack.c.h.b16 %v364
    %v740 = vunpack.c.l.b16 %v365
    %v741 = vunpack.c.h.b16 %v365
    %v742 = vunpack.c.l.b16 %v366
    %v743 = vunpack.c.h.b16 %v366
    %v744 = vunpack.c.l.b16 %v367
    %v745 = vunpack.c.h.b16 %v367
    %v746 = vunpack.c.l.b16 %v368
    %v747 = vunpack.c.h.b16 %v368
    %v748 = vunpack.c.l.b16 %v369
    %v749 = vunpack.c.h.b16 %v369
    %v750 = vunpack.c.l.b16 %v370
    %v751 = vunpack.c.h.b16 %v370
    %v752 = vunpack.c.l.b16 %v371
    %v753 = vunpack.c.h.b16 %v371
    %v754 = vunpack.c.l.b16 %v372
    %v755 = vunpack.c.h.b16 %v372
    %v756 = vunpack.c.l.b16 %v373
    %v757 = vunpack.c.h.b16 %v373
    %v758 = vunpack.c.l.b16 %v374
    %v759 = vunpack.c.h.b16 %v374
    %v760 = vunpack.c.l.b16 %v375
    %v761 = vunpack.c.h.b16 %v375
    %v762 = vunpack.c.l.b16 %v376
    %v763 = vunpack.c.h.b16 %v376
    %v764 = vunpack.c.l.b16 %v377
    %v765 = vunpack.c.h.b16 %v377
    %v766 = vunpack.c.l.b16 %v378
    %v767 = vunpack.c.h.b16 %v378
    %v768 = vunpack.c.l.b16 %v379
    %v769 = vunpack.c.h.b16 %v379
    %v770 = vunpack.c.l.b16 %v380
    %v771 = vunpack.c.h.b16 %v380
    %v772 = vunpack.c.l.b16 %v381
    %v773 = vunpack.c.h.b16 %v381
    %v774 = vunpack.c.l.b16 %v382
    %v775 = vunpack.c.h.b16 %v382
    %v776 = vunpack.c.l.b16 %v383
    %v777 = vunpack.c.h.b16 %v383
    %v778 = vpack.c.b16 %v526, %v522
    %v779 = vpack.c.b16 %v527, %v523
    %v780 = vpack.c.b16 %v528, %v524
    %v781 = vpack.c.b16 %v529, %v525
    %v782 = vpack.c.b16 %v534, %v530
    %v783 = vpack.c.b16 %v535, %v531
    %v784 = vpack.c.b16 %v536, %v532
    %v785 = vpack.c.b16 %v537, %v533
    %v786 = vpack.c.b16 %v542, %v538
    %v787 = vpack.c.b16 %v543, %v539
    %v788 = vpack.c.b16 %v544, %v540
    %v789 = vpack.c.b16 %v545, %v541
    %v790 = vpack.c.b16 %v550, %v546
    %v791 = vpack.c.b16 %v551, %v547
    %v792 = vpack.c.b16 %v552, %v548
    %v793 = vpack.c.b16 %v553, %v549
    %v794 = vpack.c.b16 %v558, %v554
    %v795 = vpack.c.b16 %v559, %v555
    %v796 = vpack.c.b16 %v560, %v556
    %v797 = vpack.c.b16 %v561, %v557
    %v798 = vpack.c.b16 %v566, %v562
    %v799 = vpack.c.b16 %v567, %v563
    %v800 = vpack.c.b16 %v568, %v564
    %v801 = vpack.c.b16 %v569, %v565
    %v802 = vpack.c.b16 %v574, %v570
    %v803 = vpack.c.b16 %v575, %v571
    %v804 = vpack.c.b16 %v576, %v572
    %v805 = vpack.c.b16 %v577, %v573
    %v806 = vpack.c.b16 %v582, %v578
    %v807 = vpack.c.b16 %v583, %v579
    %v808 = vpack.c.b16 %v584, %v580
    %v809 = vpack.c.b16 %v585, %v581
    %v810 = vpack.c.b16 %v590, %v586
    %v811 = vpack.c.b16 %v591, %v587
    %v812 = vpack.c.b16 %v592, %v588
    %v813 = vpack.c.b16 %v593, %v589
    %v814 = vpack.c.b16 %v598, %v594
    %v815 = vpack.c.b16 %v599, %v595
    %v816 = vpack.c.b16 %v600, %v596
    %v817 = vpack.c.b16 %v601, %v597
    %v818 = vpack.c.b16 %v606, %v602
    %v819 = vpack.c.b16 %v607, %v603
    %v820 = vpack.c.b16 %v608, %v604
    %v821 = vpack.c.b16 %v609, %v605
    %v822 = vpack.c.b16 %v614, %v610
    %v823 = vpack.c.b16 %v615, %v611
    %v824 = vpack.c.b16 %v616, %v612
    %v825 = vpack.c.b16 %v617, %v613
    %v826 = vpack.c.b16 %v622, %v618
    %v827 = vpack.c.b16 %v623, %v619
    %v828 = vpack.c.b16 %v624, %v620
    %v829 = vpack.c.b16 %v625, %v621
    %v830 = vpack.c.b16 %v630, %v626
    %v831 = vpack.c.b16 %v631, %v627
    %v832 = vpack.c.b16 %v632, %v628
    %v833 = vpack.c.b16 %v633, %v629
    %v834 = vpack.c.b16 %v638, %v634
    %v835 = vpack.c.b16 %v639, %v635
    %v836 = vpack.c.b16 %v640, %v636
    %v837 = vpack.c.b16 %v641, %v637
    %v838 = vpack.c.b16 %v646, %v642
    %v839 = vpack.c.b16 %v647, %v643
    %v840 = vpack.c.b16 %v648, %v644
    %v841 = vpack.c.b16 %v649, %v645
    %v842 = vpack.c.b16 %v654, %v650
    %v843 = vpack.c.b16 %v655, %v651
    %v844 = vpack.c.b16 %v656, %v652
    %v845 = vpack.c.b16 %v657, %v653
    %v846 = vpack.c.b16 %v662, %v658
    %v847 = vpack.c.b16 %v663, %v659
    %v848 = vpack.c.b16 %v664, %v660
    %v849 = vpack.c.b16 %v665, %v661
    %v850 = vpack.c.b16 %v670, %v666
    %v851 = vpack.c.b16 %v671, %v667
    %v852 = vpack.c.b16 %v672, %v668
    %v853 = vpack.c.b16 %v673, %v669
    %v854 = vpack.c.b16 %v678, %v674
    %v855 = vpack.c.b16 %v679, %v675
    %v856 = vpack.c.b16 %v680, %v676
    %v857 = vpack.c.b16 %v681, %v677
    %v858 = vpack.c.b16 %v686, %v682
    %v859 = vpack.c.b16 %v687, %v683
    %v860 = vpack.c.b16 %v688, %v684
    %v861 = vpack.c.b16 %v689, %v685
    %v862 = vpack.c.b16 %v694, %v690
    %v863 = vpack.c.b16 %v695, %v691
    %v864 = vpack.c.b16 %v696, %v692
    %v865 = vpack.c.b16 %v697, %v693
    %v866 = vpack.c.b16 %v702, %v698
    %v867 = vpack.c.b16 %v703, %v699
    %v868 = vpack.c.b16 %v704, %v700
    %v869 = vpack.c.b16 %v705, %v701
    %v870 = vpack.c.b16 %v710, %v706
    %v871 = vpack.c.b16 %v711, %v707
    %v872 = vpack.c.b16 %v712, %v708
    %v873 = vpack.c.b16 %v713, %v709
    %v874 = vpack.c.b16 %v718, %v714
    %v875 = vpack.c.b16 %v719, %v715
    %v876 = vpack.c.b16 %v720, %v716
    %v877 = vpack.c.b16 %v721, %v717
    %v878 = vpack.c.b16 %v726, %v722
    %v879 = vpack.c.b16 %v727, %v723
    %v880 = vpack.c.b16 %v728, %v724
    %v881 = vpack.c.b16 %v729, %v725
    %v882 = vpack.c.b16 %v734, %v730
    %v883 = vpack.c.b16 %v735, %v731
    %v884 = vpack.c.b16 %v736, %v732
    %v885 = vpack.c.b16 %v737, %v733
    %v886 = vpack.c.b16 %v742, %v738
    %v887 = vpack.c.b16 %v743, %v739
    %v888 = vpack.c.b16 %v744, %v740
    %v889 = vpack.c.b16 %v745, %v741
    %v890 = vpack.c.b16 %v750, %v746
    %v891 = vpack.c.b16 %v751, %v747
    %v892 = vpack.c.b16 %v752, %v748
    %v893 = vpack.c.b16 %v753, %v749
    %v894 = vpack.c.b16 %v758, %v754
    %v895 = vpack.c.b16 %v759, %v755
    %v896 = vpack.c.b16 %v760, %v756
    %v897 = vpack.c.b16 %v761, %v757
    %v898 = vpack.c.b16 %v766, %v762
    %v899 = vpack.c.b16 %v767, %v763
    %v900 = vpack.c.b16 %v768, %v764
    %v901 = vpack.c.b16 %v769, %v765
    %v902 = vpack.c.b16 %v774, %v770
    %v903 = vpack.c.b16 %v775, %v771
    %v904 = vpack.c.b16 %v776, %v772
    %v905 = vpack.c.b16 %v777, %v773
    %1034 = vmatpush.bf16.msra.mxu0 %v806
    %1035 = vmatpush.bf16.msra.mxu0 %v802
    %1036 = vmatpush.bf16.msra.mxu0 %v798
    %1037 = vmatpush.bf16.msra.mxu0 %v794
    %1038 = vmatpush.bf16.msra.mxu0 %v790
    %1039 = vmatpush.bf16.msra.mxu0 %v786
    %1040 = vmatpush.bf16.msra.mxu0 %v782
    %1041 = vmatpush.bf16.msra.mxu0 %v778
    %1042 = vmatmul.bf16.gmra.mxu0 %v244
    %v1043 = vpop.f32.mrf.mxu0
    %v1044 = vadd.f32 %v386, %v1043
    %v1045 = vpop.f32.mrf.mxu0
    %v1046 = vadd.f32 %v386, %v1045
    %1047 = vmatmul.bf16.gmra.mxu0 %v246
    %v1048 = vpop.f32.mrf.mxu0
    %v1049 = vadd.f32 %v386, %v1048
    %v1050 = vpop.f32.mrf.mxu0
    %v1051 = vadd.f32 %v386, %v1050
    %1052 = vmatmul.bf16.gmra.mxu0 %v248
    %v1053 = vpop.f32.mrf.mxu0
    %v1054 = vadd.f32 %v386, %v1053
    %v1055 = vpop.f32.mrf.mxu0
    %v1056 = vadd.f32 %v386, %v1055
    %1057 = vdwg.mxu0
    %1058 = vmatpush.bf16.msra.mxu0 %v838
    %1059 = vmatpush.bf16.msra.mxu0 %v834
    %1060 = vmatpush.bf16.msra.mxu0 %v830
    %1061 = vmatpush.bf16.msra.mxu0 %v826
    %1062 = vmatpush.bf16.msra.mxu0 %v822
    %1063 = vmatpush.bf16.msra.mxu0 %v818
    %1064 = vmatpush.bf16.msra.mxu0 %v814
    %1065 = vmatpush.bf16.msra.mxu0 %v810
    %1066 = vmatmul.bf16.gmra.mxu0 %v245
    %v1067 = vpop.f32.mrf.mxu0
    %v1068 = vadd.f32 %v1044, %v1067
    %v1069 = vpop.f32.mrf.mxu0
    %v1070 = vadd.f32 %v1046, %v1069
    %1071 = vmatmul.bf16.gmra.mxu0 %v247
    %v1072 = vpop.f32.mrf.mxu0
    %v1073 = vadd.f32 %v1049, %v1072
    %v1074 = vpop.f32.mrf.mxu0
    %v1075 = vadd.f32 %v1051, %v1074
    %1076 = vmatmul.bf16.gmra.mxu0 %v249
    %v1077 = vpop.f32.mrf.mxu0
    %v1078 = vadd.f32 %v1054, %v1077
    %v1079 = vpop.f32.mrf.mxu0
    %v1080 = vadd.f32 %v1056, %v1079
    %1081 = vdwg.mxu0
    %1082 = vmatpush.bf16.msra.mxu0 %v870
    %1083 = vmatpush.bf16.msra.mxu0 %v866
    %1084 = vmatpush.bf16.msra.mxu0 %v862
    %1085 = vmatpush.bf16.msra.mxu0 %v858
    %1086 = vmatpush.bf16.msra.mxu0 %v854
    %1087 = vmatpush.bf16.msra.mxu0 %v850
    %1088 = vmatpush.bf16.msra.mxu0 %v846
    %1089 = vmatpush.bf16.msra.mxu0 %v842
    %1090 = vmatmul.bf16.gmra.mxu0 %v220
    %v1091 = vpop.f32.mrf.mxu0
    %v1092 = vadd.f32 %v1068, %v1091
    %v1093 = vpop.f32.mrf.mxu0
    %v1094 = vadd.f32 %v1070, %v1093
    %1095 = vmatmul.bf16.gmra.mxu0 %v222
    %v1096 = vpop.f32.mrf.mxu0
    %v1097 = vadd.f32 %v1073, %v1096
    %v1098 = vpop.f32.mrf.mxu0
    %v1099 = vadd.f32 %v1075, %v1098
    %1100 = vmatmul.bf16.gmra.mxu0 %v238
    %v1101 = vpop.f32.mrf.mxu0
    %v1102 = vadd.f32 %v1078, %v1101
    %v1103 = vpop.f32.mrf.mxu0
    %v1104 = vadd.f32 %v1080, %v1103
    %1105 = vdwg.mxu0
    %1106 = vmatpush.bf16.msra.mxu0 %v902
    %1107 = vmatpush.bf16.msra.mxu0 %v898
    %1108 = vmatpush.bf16.msra.mxu0 %v894
    %1109 = vmatpush.bf16.msra.mxu0 %v890
    %1110 = vmatpush.bf16.msra.mxu0 %v886
    %1111 = vmatpush.bf16.msra.mxu0 %v882
    %1112 = vmatpush.bf16.msra.mxu0 %v878
    %1113 = vmatpush.bf16.msra.mxu0 %v874
    %1114 = vmatmul.bf16.gmra.mxu0 %v221
    %v1115 = vpop.f32.mrf.mxu0
    %v1116 = vadd.f32 %v1092, %v1115
    %v1117 = vpop.f32.mrf.mxu0
    %v1118 = vadd.f32 %v1094, %v1117
    %1119 = vmatmul.bf16.gmra.mxu0 %v223
    %v1120 = vpop.f32.mrf.mxu0
    %v1121 = vadd.f32 %v1097, %v1120
    %v1122 = vpop.f32.mrf.mxu0
    %v1123 = vadd.f32 %v1099, %v1122
    %1124 = vmatmul.bf16.gmra.mxu0 %v242
    %v1125 = vpop.f32.mrf.mxu0
    %v1126 = vadd.f32 %v1102, %v1125
    %v1127 = vpop.f32.mrf.mxu0
    %v1128 = vadd.f32 %v1104, %v1127
    %1129 = vdwg.mxu0
    %1130 = vmatpush.bf16.msra.mxu0 %v807
    %1131 = vmatpush.bf16.msra.mxu0 %v803
    %1132 = vmatpush.bf16.msra.mxu0 %v799
    %1133 = vmatpush.bf16.msra.mxu0 %v795
    %1134 = vmatpush.bf16.msra.mxu0 %v791
    %1135 = vmatpush.bf16.msra.mxu0 %v787
    %1136 = vmatpush.bf16.msra.mxu0 %v783
    %1137 = vmatpush.bf16.msra.mxu0 %v779
    %1138 = vmatmul.bf16.gmra.mxu0 %v244
    %v1139 = vpop.f32.mrf.mxu0
    %v1140 = vadd.f32 %v387, %v1139
    %v1141 = vpop.f32.mrf.mxu0
    %v1142 = vadd.f32 %v387, %v1141
    %1143 = vmatmul.bf16.gmra.mxu0 %v246
    %v1144 = vpop.f32.mrf.mxu0
    %v1145 = vadd.f32 %v387, %v1144
    %v1146 = vpop.f32.mrf.mxu0
    %v1147 = vadd.f32 %v387, %v1146
    %1148 = vmatmul.bf16.gmra.mxu0 %v248
    %v1149 = vpop.f32.mrf.mxu0
    %v1150 = vadd.f32 %v387, %v1149
    %v1151 = vpop.f32.mrf.mxu0
    %v1152 = vadd.f32 %v387, %v1151
    %1153 = vdwg.mxu0
    %1154 = vmatpush.bf16.msra.mxu0 %v839
    %1155 = vmatpush.bf16.msra.mxu0 %v835
    %1156 = vmatpush.bf16.msra.mxu0 %v831
    %1157 = vmatpush.bf16.msra.mxu0 %v827
    %1158 = vmatpush.bf16.msra.mxu0 %v823
    %1159 = vmatpush.bf16.msra.mxu0 %v819
    %1160 = vmatpush.bf16.msra.mxu0 %v815
    %1161 = vmatpush.bf16.msra.mxu0 %v811
    %1162 = vmatmul.bf16.gmra.mxu0 %v245
    %v1163 = vpop.f32.mrf.mxu0
    %v1164 = vadd.f32 %v1140, %v1163
    %v1165 = vpop.f32.mrf.mxu0
    %v1166 = vadd.f32 %v1142, %v1165
    %1167 = vmatmul.bf16.gmra.mxu0 %v247
    %v1168 = vpop.f32.mrf.mxu0
    %v1169 = vadd.f32 %v1145, %v1168
    %v1170 = vpop.f32.mrf.mxu0
    %v1171 = vadd.f32 %v1147, %v1170
    %1172 = vmatmul.bf16.gmra.mxu0 %v249
    %v1173 = vpop.f32.mrf.mxu0
    %v1174 = vadd.f32 %v1150, %v1173
    %v1175 = vpop.f32.mrf.mxu0
    %v1176 = vadd.f32 %v1152, %v1175
    %1177 = vdwg.mxu0
    %1178 = vmatpush.bf16.msra.mxu0 %v871
    %1179 = vmatpush.bf16.msra.mxu0 %v867
    %1180 = vmatpush.bf16.msra.mxu0 %v863
    %1181 = vmatpush.bf16.msra.mxu0 %v859
    %1182 = vmatpush.bf16.msra.mxu0 %v855
    %1183 = vmatpush.bf16.msra.mxu0 %v851
    %1184 = vmatpush.bf16.msra.mxu0 %v847
    %1185 = vmatpush.bf16.msra.mxu0 %v843
    %1186 = vmatmul.bf16.gmra.mxu0 %v220
    %v1187 = vpop.f32.mrf.mxu0
    %v1188 = vadd.f32 %v1164, %v1187
    %v1189 = vpop.f32.mrf.mxu0
    %v1190 = vadd.f32 %v1166, %v1189
    %1191 = vmatmul.bf16.gmra.mxu0 %v222
    %v1192 = vpop.f32.mrf.mxu0
    %v1193 = vadd.f32 %v1169, %v1192
    %v1194 = vpop.f32.mrf.mxu0
    %v1195 = vadd.f32 %v1171, %v1194
    %1196 = vmatmul.bf16.gmra.mxu0 %v238
    %v1197 = vpop.f32.mrf.mxu0
    %v1198 = vadd.f32 %v1174, %v1197
    %v1199 = vpop.f32.mrf.mxu0
    %v1200 = vadd.f32 %v1176, %v1199
    %1201 = vdwg.mxu0
    %1202 = vmatpush.bf16.msra.mxu0 %v903
    %1203 = vmatpush.bf16.msra.mxu0 %v899
    %1204 = vmatpush.bf16.msra.mxu0 %v895
    %1205 = vmatpush.bf16.msra.mxu0 %v891
    %1206 = vmatpush.bf16.msra.mxu0 %v887
    %1207 = vmatpush.bf16.msra.mxu0 %v883
    %1208 = vmatpush.bf16.msra.mxu0 %v879
    %1209 = vmatpush.bf16.msra.mxu0 %v875
    %1210 = vmatmul.bf16.gmra.mxu0 %v221
    %v1211 = vpop.f32.mrf.mxu0
    %v1212 = vadd.f32 %v1188, %v1211
    %v1213 = vpop.f32.mrf.mxu0
    %v1214 = vadd.f32 %v1190, %v1213
    %1215 = vmatmul.bf16.gmra.mxu0 %v223
    %v1216 = vpop.f32.mrf.mxu0
    %v1217 = vadd.f32 %v1193, %v1216
    %v1218 = vpop.f32.mrf.mxu0
    %v1219 = vadd.f32 %v1195, %v1218
    %1220 = vmatmul.bf16.gmra.mxu0 %v242
    %v1221 = vpop.f32.mrf.mxu0
    %v1222 = vadd.f32 %v1198, %v1221
    %v1223 = vpop.f32.mrf.mxu0
    %v1224 = vadd.f32 %v1200, %v1223
    %1225 = vdwg.mxu0
    %1226 = vmatpush.bf16.msra.mxu0 %v808
    %1227 = vmatpush.bf16.msra.mxu0 %v804
    %1228 = vmatpush.bf16.msra.mxu0 %v800
    %1229 = vmatpush.bf16.msra.mxu0 %v796
    %1230 = vmatpush.bf16.msra.mxu0 %v792
    %1231 = vmatpush.bf16.msra.mxu0 %v788
    %1232 = vmatpush.bf16.msra.mxu0 %v784
    %1233 = vmatpush.bf16.msra.mxu0 %v780
    %1234 = vmatmul.bf16.gmra.mxu0 %v244
    %v1235 = vpop.f32.mrf.mxu0
    %v1236 = vadd.f32 %v388, %v1235
    %v1237 = vpop.f32.mrf.mxu0
    %v1238 = vadd.f32 %v388, %v1237
    %1239 = vmatmul.bf16.gmra.mxu0 %v246
    %v1240 = vpop.f32.mrf.mxu0
    %v1241 = vadd.f32 %v388, %v1240
    %v1242 = vpop.f32.mrf.mxu0
    %v1243 = vadd.f32 %v388, %v1242
    %1244 = vmatmul.bf16.gmra.mxu0 %v248
    %v1245 = vpop.f32.mrf.mxu0
    %v1246 = vadd.f32 %v388, %v1245
    %v1247 = vpop.f32.mrf.mxu0
    %v1248 = vadd.f32 %v388, %v1247
    %1249 = vdwg.mxu0
    %1250 = vmatpush.bf16.msra.mxu0 %v840
    %1251 = vmatpush.bf16.msra.mxu0 %v836
    %1252 = vmatpush.bf16.msra.mxu0 %v832
    %1253 = vmatpush.bf16.msra.mxu0 %v828
    %1254 = vmatpush.bf16.msra.mxu0 %v824
    %1255 = vmatpush.bf16.msra.mxu0 %v820
    %1256 = vmatpush.bf16.msra.mxu0 %v816
    %1257 = vmatpush.bf16.msra.mxu0 %v812
    %1258 = vmatmul.bf16.gmra.mxu0 %v245
    %v1259 = vpop.f32.mrf.mxu0
    %v1260 = vadd.f32 %v1236, %v1259
    %v1261 = vpop.f32.mrf.mxu0
    %v1262 = vadd.f32 %v1238, %v1261
    %1263 = vmatmul.bf16.gmra.mxu0 %v247
    %v1264 = vpop.f32.mrf.mxu0
    %v1265 = vadd.f32 %v1241, %v1264
    %v1266 = vpop.f32.mrf.mxu0
    %v1267 = vadd.f32 %v1243, %v1266
    %1268 = vmatmul.bf16.gmra.mxu0 %v249
    %v1269 = vpop.f32.mrf.mxu0
    %v1270 = vadd.f32 %v1246, %v1269
    %v1271 = vpop.f32.mrf.mxu0
    %v1272 = vadd.f32 %v1248, %v1271
    %1273 = vdwg.mxu0
    %1274 = vmatpush.bf16.msra.mxu0 %v872
    %1275 = vmatpush.bf16.msra.mxu0 %v868
    %1276 = vmatpush.bf16.msra.mxu0 %v864
    %1277 = vmatpush.bf16.msra.mxu0 %v860
    %1278 = vmatpush.bf16.msra.mxu0 %v856
    %1279 = vmatpush.bf16.msra.mxu0 %v852
    %1280 = vmatpush.bf16.msra.mxu0 %v848
    %1281 = vmatpush.bf16.msra.mxu0 %v844
    %1282 = vmatmul.bf16.gmra.mxu0 %v220
    %v1283 = vpop.f32.mrf.mxu0
    %v1284 = vadd.f32 %v1260, %v1283
    %v1285 = vpop.f32.mrf.mxu0
    %v1286 = vadd.f32 %v1262, %v1285
    %1287 = vmatmul.bf16.gmra.mxu0 %v222
    %v1288 = vpop.f32.mrf.mxu0
    %v1289 = vadd.f32 %v1265, %v1288
    %v1290 = vpop.f32.mrf.mxu0
    %v1291 = vadd.f32 %v1267, %v1290
    %1292 = vmatmul.bf16.gmra.mxu0 %v238
    %v1293 = vpop.f32.mrf.mxu0
    %v1294 = vadd.f32 %v1270, %v1293
    %v1295 = vpop.f32.mrf.mxu0
    %v1296 = vadd.f32 %v1272, %v1295
    %1297 = vdwg.mxu0
    %1298 = vmatpush.bf16.msra.mxu0 %v904
    %1299 = vmatpush.bf16.msra.mxu0 %v900
    %1300 = vmatpush.bf16.msra.mxu0 %v896
    %1301 = vmatpush.bf16.msra.mxu0 %v892
    %1302 = vmatpush.bf16.msra.mxu0 %v888
    %1303 = vmatpush.bf16.msra.mxu0 %v884
    %1304 = vmatpush.bf16.msra.mxu0 %v880
    %1305 = vmatpush.bf16.msra.mxu0 %v876
    %1306 = vmatmul.bf16.gmra.mxu0 %v221
    %v1307 = vpop.f32.mrf.mxu0
    %v1308 = vadd.f32 %v1284, %v1307
    %v1309 = vpop.f32.mrf.mxu0
    %v1310 = vadd.f32 %v1286, %v1309
    %1311 = vmatmul.bf16.gmra.mxu0 %v223
    %v1312 = vpop.f32.mrf.mxu0
    %v1313 = vadd.f32 %v1289, %v1312
    %v1314 = vpop.f32.mrf.mxu0
    %v1315 = vadd.f32 %v1291, %v1314
    %1316 = vmatmul.bf16.gmra.mxu0 %v242
    %v1317 = vpop.f32.mrf.mxu0
    %v1318 = vadd.f32 %v1294, %v1317
    %v1319 = vpop.f32.mrf.mxu0
    %v1320 = vadd.f32 %v1296, %v1319
    %1321 = vdwg.mxu0
    %1322 = vmatpush.bf16.msra.mxu0 %v809
    %1323 = vmatpush.bf16.msra.mxu0 %v805
    %1324 = vmatpush.bf16.msra.mxu0 %v801
    %1325 = vmatpush.bf16.msra.mxu0 %v797
    %1326 = vmatpush.bf16.msra.mxu0 %v793
    %1327 = vmatpush.bf16.msra.mxu0 %v789
    %1328 = vmatpush.bf16.msra.mxu0 %v785
    %1329 = vmatpush.bf16.msra.mxu0 %v781
    %1330 = vmatmul.bf16.gmra.mxu0 %v244
    %v1331 = vpop.f32.mrf.mxu0
    %v1332 = vadd.f32 %v389, %v1331
    %v1333 = vpop.f32.mrf.mxu0
    %v1334 = vadd.f32 %v389, %v1333
    %1335 = vmatmul.bf16.gmra.mxu0 %v246
    %v1336 = vpop.f32.mrf.mxu0
    %v1337 = vadd.f32 %v389, %v1336
    %v1338 = vpop.f32.mrf.mxu0
    %v1339 = vadd.f32 %v389, %v1338
    %1340 = vmatmul.bf16.gmra.mxu0 %v248
    %v1341 = vpop.f32.mrf.mxu0
    %v1342 = vadd.f32 %v389, %v1341
    %v1343 = vpop.f32.mrf.mxu0
    %v1344 = vadd.f32 %v389, %v1343
    %1345 = vdwg.mxu0
    %1346 = vmatpush.bf16.msra.mxu0 %v841
    %1347 = vmatpush.bf16.msra.mxu0 %v837
    %1348 = vmatpush.bf16.msra.mxu0 %v833
    %1349 = vmatpush.bf16.msra.mxu0 %v829
    %1350 = vmatpush.bf16.msra.mxu0 %v825
    %1351 = vmatpush.bf16.msra.mxu0 %v821
    %1352 = vmatpush.bf16.msra.mxu0 %v817
    %1353 = vmatpush.bf16.msra.mxu0 %v813
    %1354 = vmatmul.bf16.gmra.mxu0 %v245
    %v1355 = vpop.f32.mrf.mxu0
    %v1356 = vadd.f32 %v1332, %v1355
    %v1357 = vpop.f32.mrf.mxu0
    %v1358 = vadd.f32 %v1334, %v1357
    %1359 = vmatmul.bf16.gmra.mxu0 %v247
    %v1360 = vpop.f32.mrf.mxu0
    %v1361 = vadd.f32 %v1337, %v1360
    %v1362 = vpop.f32.mrf.mxu0
    %v1363 = vadd.f32 %v1339, %v1362
    %1364 = vmatmul.bf16.gmra.mxu0 %v249
    %v1365 = vpop.f32.mrf.mxu0
    %v1366 = vadd.f32 %v1342, %v1365
    %v1367 = vpop.f32.mrf.mxu0
    %v1368 = vadd.f32 %v1344, %v1367
    %1369 = vdwg.mxu0
    %1370 = vmatpush.bf16.msra.mxu0 %v873
    %1371 = vmatpush.bf16.msra.mxu0 %v869
    %1372 = vmatpush.bf16.msra.mxu0 %v865
    %1373 = vmatpush.bf16.msra.mxu0 %v861
    %1374 = vmatpush.bf16.msra.mxu0 %v857
    %1375 = vmatpush.bf16.msra.mxu0 %v853
    %1376 = vmatpush.bf16.msra.mxu0 %v849
    %1377 = vmatpush.bf16.msra.mxu0 %v845
    %1378 = vmatmul.bf16.gmra.mxu0 %v220
    %v1379 = vpop.f32.mrf.mxu0
    %v1380 = vadd.f32 %v1356, %v1379
    %v1381 = vpop.f32.mrf.mxu0
    %v1382 = vadd.f32 %v1358, %v1381
    %1383 = vmatmul.bf16.gmra.mxu0 %v222
    %v1384 = vpop.f32.mrf.mxu0
    %v1385 = vadd.f32 %v1361, %v1384
    %v1386 = vpop.f32.mrf.mxu0
    %v1387 = vadd.f32 %v1363, %v1386
    %1388 = vmatmul.bf16.gmra.mxu0 %v238
    %v1389 = vpop.f32.mrf.mxu0
    %v1390 = vadd.f32 %v1366, %v1389
    %v1391 = vpop.f32.mrf.mxu0
    %v1392 = vadd.f32 %v1368, %v1391
    %1393 = vdwg.mxu0
    %1394 = vmatpush.bf16.msra.mxu0 %v905
    %1395 = vmatpush.bf16.msra.mxu0 %v901
    %1396 = vmatpush.bf16.msra.mxu0 %v897
    %1397 = vmatpush.bf16.msra.mxu0 %v893
    %1398 = vmatpush.bf16.msra.mxu0 %v889
    %1399 = vmatpush.bf16.msra.mxu0 %v885
    %1400 = vmatpush.bf16.msra.mxu0 %v881
    %1401 = vmatpush.bf16.msra.mxu0 %v877
    %1402 = vmatmul.bf16.gmra.mxu0 %v221
    %v1403 = vpop.f32.mrf.mxu0
    %v1404 = vadd.f32 %v1380, %v1403
    %v1405 = vpop.f32.mrf.mxu0
    %v1406 = vadd.f32 %v1382, %v1405
    %1407 = vmatmul.bf16.gmra.mxu0 %v223
    %v1408 = vpop.f32.mrf.mxu0
    %v1409 = vadd.f32 %v1385, %v1408
    %v1410 = vpop.f32.mrf.mxu0
    %v1411 = vadd.f32 %v1387, %v1410
    %1412 = vmatmul.bf16.gmra.mxu0 %v242
    %v1413 = vpop.f32.mrf.mxu0
    %v1414 = vadd.f32 %v1390, %v1413
    %v1415 = vpop.f32.mrf.mxu0
    %v1416 = vadd.f32 %v1392, %v1415
    %1417 = vdwg.mxu0
    %v1418 = vmax.f32 %v1116, 0.0
    %v1419 = vmax.f32 %v1212, 0.0
    %v1420 = vmax.f32 %v1308, 0.0
    %v1421 = vmax.f32 %v1404, 0.0
    %v1422 = vmax.f32 %v1118, 0.0
    %v1423 = vmax.f32 %v1214, 0.0
    %v1424 = vmax.f32 %v1310, 0.0
    %v1425 = vmax.f32 %v1406, 0.0
    %v1426 = vmax.f32 %v1121, 0.0
    %v1427 = vmax.f32 %v1217, 0.0
    %v1428 = vmax.f32 %v1313, 0.0
    %v1429 = vmax.f32 %v1409, 0.0
    %v1430 = vmax.f32 %v1123, 0.0
    %v1431 = vmax.f32 %v1219, 0.0
    %v1432 = vmax.f32 %v1315, 0.0
    %v1433 = vmax.f32 %v1411, 0.0
    %v1434 = vmax.f32 %v1126, 0.0
    %v1435 = vmax.f32 %v1222, 0.0
    %v1436 = vmax.f32 %v1318, 0.0
    %v1437 = vmax.f32 %v1414, 0.0
    %v1438 = vmax.f32 %v1128, 0.0
    %v1439 = vmax.f32 %v1224, 0.0
    %v1440 = vmax.f32 %v1320, 0.0
    %v1441 = vmax.f32 %v1416, 0.0
    %v1442 = vpack.c.bf16 %v1419, %v1418
    %v1443 = vpack.c.bf16 %v1421, %v1420
    %v1444 = vpack.c.bf16 %v1423, %v1422
    %v1445 = vpack.c.bf16 %v1425, %v1424
    %v1446 = vpack.c.bf16 %v1427, %v1426
    %v1447 = vpack.c.bf16 %v1429, %v1428
    %v1448 = vpack.c.bf16 %v1431, %v1430
    %v1449 = vpack.c.bf16 %v1433, %v1432
    %v1450 = vpack.c.bf16 %v1435, %v1434
    %v1451 = vpack.c.bf16 %v1437, %v1436
    %v1452 = vpack.c.bf16 %v1439, %v1438
    %v1453 = vpack.c.bf16 %v1441, %v1440
    %v1464 = vunpack.c.l.b16 %v1444
    %v1465 = vunpack.c.h.b16 %v1444
    %v1466 = vunpack.c.l.b16 %v1445
    %v1467 = vunpack.c.h.b16 %v1445
    %v1468 = vunpack.c.l.b16 %v1446
    %v1469 = vunpack.c.h.b16 %v1446
    %v1470 = vunpack.c.l.b16 %v1447
    %v1471 = vunpack.c.h.b16 %v1447
    %v1472 = vunpack.c.l.b16 %v1448
    %v1473 = vunpack.c.h.b16 %v1448
    %v1474 = vunpack.c.l.b16 %v1449
    %v1475 = vunpack.c.h.b16 %v1449
    %v1476 = vunpack.c.l.b16 %v1450
    %v1477 = vunpack.c.h.b16 %v1450
    %v1478 = vunpack.c.l.b16 %v1451
    %v1479 = vunpack.c.h.b16 %v1451
    %v1480 = vunpack.c.l.b16 %v1452
    %v1481 = vunpack.c.h.b16 %v1452
    %v1482 = vunpack.c.l.b16 %v1453
    %v1483 = vunpack.c.h.b16 %v1453
    %v1484 = vpack.c.b16 %v1468, %v1464
    %v1485 = vpack.c.b16 %v1469, %v1465
    %v1486 = vpack.c.b16 %v1470, %v1466
    %v1487 = vpack.c.b16 %v1471, %v1467
    %v1488 = vpack.c.b16 %v1476, %v1472
    %v1489 = vpack.c.b16 %v1477, %v1473
    %v1490 = vpack.c.b16 %v1478, %v1474
    %v1491 = vpack.c.b16 %v1479, %v1475
    %v1492 = vpack.c.b16 %v1480, %v1480
    %v1493 = vpack.c.b16 %v1481, %v1481
    %v1494 = vpack.c.b16 %v1482, %v1482
    %v1495 = vpack.c.b16 %v1483, %v1483
    %v1506 = vunpack.c.l.b16 %v1442
    %v1507 = vunpack.c.h.b16 %v1442
    %v1508 = vunpack.c.l.b16 %v1443
    %v1509 = vunpack.c.h.b16 %v1443
    %v1510 = vpack.c.b16 %v1506, %v1506
    %v1511 = vpack.c.b16 %v1507, %v1507
    %v1512 = vpack.c.b16 %v1508, %v1508
    %v1513 = vpack.c.b16 %v1509, %v1509
    %v1516 = vsel %vm235, %v1492, %v1510
    %v1520 = vsel %vm235, %v1493, %v1511
    %v1524 = vsel %vm235, %v1494, %v1512
    %v1528 = vsel %vm235, %v1495, %v1513
    %v1530 = vpack.c.b16 %v1464, %v1506
    %v1531 = vpack.c.b16 %v1465, %v1507
    %v1532 = vpack.c.b16 %v1466, %v1508
    %v1533 = vpack.c.b16 %v1467, %v1509
    %v1534 = vpack.c.b16 %v1472, %v1468
    %v1535 = vpack.c.b16 %v1473, %v1469
    %v1536 = vpack.c.b16 %v1474, %v1470
    %v1537 = vpack.c.b16 %v1475, %v1471
    %v1538 = vpack.c.b16 %v1480, %v1476
    %v1539 = vpack.c.b16 %v1481, %v1477
    %v1540 = vpack.c.b16 %v1482, %v1478
    %v1541 = vpack.c.b16 %v1483, %v1479
    %v1554 = vld [vmem:[#allocation2] sm:$0xff]
    %v1555 = vld [vmem:[#allocation2 + $0x8] sm:$0xff]
    %v1556 = vld [vmem:[#allocation2 + $0x10] sm:$0xff]
    %v1557 = vld [vmem:[#allocation2 + $0x18] sm:$0xff]
    %v1558 = vld [vmem:[#allocation2 + $0x20] sm:$0xff]
    %v1559 = vld [vmem:[#allocation2 + $0x28] sm:$0xff]
    %v1560 = vld [vmem:[#allocation2 + $0x30] sm:$0xff]
    %v1561 = vld [vmem:[#allocation2 + $0x38] sm:$0xff]
    %v1562 = vld [vmem:[#allocation2 + $0x40] sm:$0xff]
    %v1563 = vld [vmem:[#allocation2 + $0x48] sm:$0xff]
    %v1564 = vld [vmem:[#allocation2 + $0x50] sm:$0xff]
    %v1565 = vld [vmem:[#allocation2 + $0x58] sm:$0xff]
    %v1566 = vld [vmem:[#allocation2 + $0x60] sm:$0xff]
    %v1567 = vld [vmem:[#allocation2 + $0x68] sm:$0xff]
    %v1568 = vld [vmem:[#allocation2 + $0x70] sm:$0xff]
    %v1569 = vld [vmem:[#allocation2 + $0x78] sm:$0xff]
    %v1570 = vld [vmem:[#allocation2 + $0x80] sm:$0xff]
    %v1571 = vld [vmem:[#allocation2 + $0x88] sm:$0xff]
    %v1572 = vld [vmem:[#allocation2 + $0x90] sm:$0xff]
    %v1573 = vld [vmem:[#allocation2 + $0x98] sm:$0xff]
    %v1574 = vld [vmem:[#allocation2 + $0xa0] sm:$0xff]
    %v1575 = vld [vmem:[#allocation2 + $0xa8] sm:$0xff]
    %v1576 = vld [vmem:[#allocation2 + $0xb0] sm:$0xff]
    %v1577 = vld [vmem:[#allocation2 + $0xb8] sm:$0xff]
    %v1578 = vld [vmem:[#allocation2 + $0xc0] sm:$0xff]
    %v1579 = vld [vmem:[#allocation2 + $0xc8] sm:$0xff]
    %v1580 = vld [vmem:[#allocation2 + $0xd0] sm:$0xff]
    %v1581 = vld [vmem:[#allocation2 + $0xd8] sm:$0xff]
    %v1582 = vld [vmem:[#allocation2 + $0xe0] sm:$0xff]
    %v1583 = vld [vmem:[#allocation2 + $0xe8] sm:$0xff]
    %v1584 = vld [vmem:[#allocation2 + $0xf0] sm:$0xff]
    %v1585 = vld [vmem:[#allocation2 + $0xf8] sm:$0xff]
    %v1586 = vld [vmem:[#allocation2 + $0x100] sm:$0xff]
    %v1587 = vld [vmem:[#allocation2 + $0x108] sm:$0xff]
    %v1588 = vld [vmem:[#allocation2 + $0x110] sm:$0xff]
    %v1589 = vld [vmem:[#allocation2 + $0x118] sm:$0xff]
    %v1590 = vld [vmem:[#allocation2 + $0x120] sm:$0xff]
    %v1591 = vld [vmem:[#allocation2 + $0x128] sm:$0xff]
    %v1592 = vld [vmem:[#allocation2 + $0x130] sm:$0xff]
    %v1593 = vld [vmem:[#allocation2 + $0x138] sm:$0xff]
    %v1594 = vld [vmem:[#allocation2 + $0x140] sm:$0xff]
    %v1595 = vld [vmem:[#allocation2 + $0x148] sm:$0xff]
    %v1596 = vld [vmem:[#allocation2 + $0x150] sm:$0xff]
    %v1597 = vld [vmem:[#allocation2 + $0x158] sm:$0xff]
    %v1598 = vld [vmem:[#allocation2 + $0x160] sm:$0xff]
    %v1599 = vld [vmem:[#allocation2 + $0x168] sm:$0xff]
    %v1600 = vld [vmem:[#allocation2 + $0x170] sm:$0xff]
    %v1601 = vld [vmem:[#allocation2 + $0x178] sm:$0xff]
    %v1602 = vld [vmem:[#allocation2 + $0x180] sm:$0xff]
    %v1603 = vld [vmem:[#allocation2 + $0x188] sm:$0xff]
    %v1604 = vld [vmem:[#allocation2 + $0x190] sm:$0xff]
    %v1605 = vld [vmem:[#allocation2 + $0x198] sm:$0xff]
    %v1606 = vld [vmem:[#allocation2 + $0x1a0] sm:$0xff]
    %v1607 = vld [vmem:[#allocation2 + $0x1a8] sm:$0xff]
    %v1608 = vld [vmem:[#allocation2 + $0x1b0] sm:$0xff]
    %v1609 = vld [vmem:[#allocation2 + $0x1b8] sm:$0xff]
    %v1610 = vld [vmem:[#allocation2 + $0x1c0] sm:$0xff]
    %v1611 = vld [vmem:[#allocation2 + $0x1c8] sm:$0xff]
    %v1612 = vld [vmem:[#allocation2 + $0x1d0] sm:$0xff]
    %v1613 = vld [vmem:[#allocation2 + $0x1d8] sm:$0xff]
    %v1614 = vld [vmem:[#allocation2 + $0x1e0] sm:$0xff]
    %v1615 = vld [vmem:[#allocation2 + $0x1e8] sm:$0xff]
    %v1616 = vld [vmem:[#allocation2 + $0x1f0] sm:$0xff]
    %v1617 = vld [vmem:[#allocation2 + $0x1f8] sm:$0xff]
    %v1618 = vld [vmem:[#allocation2 + $0x200] sm:$0xff]
    %v1619 = vld [vmem:[#allocation2 + $0x208] sm:$0xff]
    %v1620 = vld [vmem:[#allocation2 + $0x210] sm:$0xff]
    %v1621 = vld [vmem:[#allocation2 + $0x218] sm:$0xff]
    %v1622 = vld [vmem:[#allocation2 + $0x220] sm:$0xff]
    %v1623 = vld [vmem:[#allocation2 + $0x228] sm:$0xff]
    %v1624 = vld [vmem:[#allocation2 + $0x230] sm:$0xff]
    %v1625 = vld [vmem:[#allocation2 + $0x238] sm:$0xff]
    %v1626 = vld [vmem:[#allocation2 + $0x240] sm:$0xff]
    %v1627 = vld [vmem:[#allocation2 + $0x248] sm:$0xff]
    %v1628 = vld [vmem:[#allocation2 + $0x250] sm:$0xff]
    %v1629 = vld [vmem:[#allocation2 + $0x258] sm:$0xff]
    %v1630 = vld [vmem:[#allocation2 + $0x260] sm:$0xff]
    %v1631 = vld [vmem:[#allocation2 + $0x268] sm:$0xff]
    %v1632 = vld [vmem:[#allocation2 + $0x270] sm:$0xff]
    %v1633 = vld [vmem:[#allocation2 + $0x278] sm:$0xff]
    %v1634 = vld [vmem:[#allocation2 + $0x280] sm:$0xff]
    %v1635 = vld [vmem:[#allocation2 + $0x288] sm:$0xff]
    %v1636 = vld [vmem:[#allocation2 + $0x290] sm:$0xff]
    %v1637 = vld [vmem:[#allocation2 + $0x298] sm:$0xff]
    %v1638 = vld [vmem:[#allocation2 + $0x2a0] sm:$0xff]
    %v1639 = vld [vmem:[#allocation2 + $0x2a8] sm:$0xff]
    %v1640 = vld [vmem:[#allocation2 + $0x2b0] sm:$0xff]
    %v1641 = vld [vmem:[#allocation2 + $0x2b8] sm:$0xff]
    %v1642 = vld [vmem:[#allocation2 + $0x2c0] sm:$0xff]
    %v1643 = vld [vmem:[#allocation2 + $0x2c8] sm:$0xff]
    %v1644 = vld [vmem:[#allocation2 + $0x2d0] sm:$0xff]
    %v1645 = vld [vmem:[#allocation2 + $0x2d8] sm:$0xff]
    %v1646 = vld [vmem:[#allocation2 + $0x2e0] sm:$0xff]
    %v1647 = vld [vmem:[#allocation2 + $0x2e8] sm:$0xff]
    %v1648 = vld [vmem:[#allocation2 + $0x2f0] sm:$0xff]
    %v1649 = vld [vmem:[#allocation2 + $0x2f8] sm:$0xff]
    %v1650 = vld [vmem:[#allocation2 + $0x300] sm:$0xff]
    %v1651 = vld [vmem:[#allocation2 + $0x308] sm:$0xff]
    %v1652 = vld [vmem:[#allocation2 + $0x310] sm:$0xff]
    %v1653 = vld [vmem:[#allocation2 + $0x318] sm:$0xff]
    %v1654 = vld [vmem:[#allocation2 + $0x320] sm:$0xff]
    %v1655 = vld [vmem:[#allocation2 + $0x328] sm:$0xff]
    %v1656 = vld [vmem:[#allocation2 + $0x330] sm:$0xff]
    %v1657 = vld [vmem:[#allocation2 + $0x338] sm:$0xff]
    %v1658 = vld [vmem:[#allocation2 + $0x340] sm:$0xff]
    %v1659 = vld [vmem:[#allocation2 + $0x348] sm:$0xff]
    %v1660 = vld [vmem:[#allocation2 + $0x350] sm:$0xff]
    %v1661 = vld [vmem:[#allocation2 + $0x358] sm:$0xff]
    %v1662 = vld [vmem:[#allocation2 + $0x360] sm:$0xff]
    %v1663 = vld [vmem:[#allocation2 + $0x368] sm:$0xff]
    %v1664 = vld [vmem:[#allocation2 + $0x370] sm:$0xff]
    %v1665 = vld [vmem:[#allocation2 + $0x378] sm:$0xff]
    %v1666 = vld [vmem:[#allocation2 + $0x380] sm:$0xff]
    %v1667 = vld [vmem:[#allocation2 + $0x388] sm:$0xff]
    %v1668 = vld [vmem:[#allocation2 + $0x390] sm:$0xff]
    %v1669 = vld [vmem:[#allocation2 + $0x398] sm:$0xff]
    %v1670 = vld [vmem:[#allocation2 + $0x3a0] sm:$0xff]
    %v1671 = vld [vmem:[#allocation2 + $0x3a8] sm:$0xff]
    %v1672 = vld [vmem:[#allocation2 + $0x3b0] sm:$0xff]
    %v1673 = vld [vmem:[#allocation2 + $0x3b8] sm:$0xff]
    %v1674 = vld [vmem:[#allocation2 + $0x3c0] sm:$0xff]
    %v1675 = vld [vmem:[#allocation2 + $0x3c8] sm:$0xff]
    %v1676 = vld [vmem:[#allocation2 + $0x3d0] sm:$0xff]
    %v1677 = vld [vmem:[#allocation2 + $0x3d8] sm:$0xff]
    %v1678 = vld [vmem:[#allocation2 + $0x3e0] sm:$0xff]
    %v1679 = vld [vmem:[#allocation2 + $0x3e8] sm:$0xff]
    %v1680 = vld [vmem:[#allocation2 + $0x3f0] sm:$0xff]
    %v1681 = vld [vmem:[#allocation2 + $0x3f8] sm:$0xff]
    %v1682 = vld [vmem:[#allocation2 + $0x400] sm:$0xff]
    %v1683 = vld [vmem:[#allocation2 + $0x408] sm:$0xff]
    %v1684 = vld [vmem:[#allocation2 + $0x410] sm:$0xff]
    %v1685 = vld [vmem:[#allocation2 + $0x418] sm:$0xff]
    %v1686 = vld [vmem:[#allocation2 + $0x420] sm:$0xff]
    %v1687 = vld [vmem:[#allocation2 + $0x428] sm:$0xff]
    %v1688 = vld [vmem:[#allocation2 + $0x430] sm:$0xff]
    %v1689 = vld [vmem:[#allocation2 + $0x438] sm:$0xff]
    %v1690 = vld [vmem:[#allocation2 + $0x440] sm:$0xff]
    %v1691 = vld [vmem:[#allocation2 + $0x448] sm:$0xff]
    %v1692 = vld [vmem:[#allocation2 + $0x450] sm:$0xff]
    %v1693 = vld [vmem:[#allocation2 + $0x458] sm:$0xff]
    %v1694 = vld [vmem:[#allocation2 + $0x460] sm:$0xff]
    %v1695 = vld [vmem:[#allocation2 + $0x468] sm:$0xff]
    %v1696 = vld [vmem:[#allocation2 + $0x470] sm:$0xff]
    %v1697 = vld [vmem:[#allocation2 + $0x478] sm:$0xff]
    %v1698 = vld [vmem:[#allocation2 + $0x480] sm:$0xff]
    %v1699 = vld [vmem:[#allocation2 + $0x488] sm:$0xff]
    %v1700 = vld [vmem:[#allocation2 + $0x490] sm:$0xff]
    %v1701 = vld [vmem:[#allocation2 + $0x498] sm:$0xff]
    %v1702 = vld [vmem:[#allocation2 + $0x4a0] sm:$0xff]
    %v1703 = vld [vmem:[#allocation2 + $0x4a8] sm:$0xff]
    %v1704 = vld [vmem:[#allocation2 + $0x4b0] sm:$0xff]
    %v1705 = vld [vmem:[#allocation2 + $0x4b8] sm:$0xff]
    %v1706 = vld [vmem:[#allocation2 + $0x4c0] sm:$0xff]
    %v1707 = vld [vmem:[#allocation2 + $0x4c8] sm:$0xff]
    %v1708 = vld [vmem:[#allocation2 + $0x4d0] sm:$0xff]
    %v1709 = vld [vmem:[#allocation2 + $0x4d8] sm:$0xff]
    %v1710 = vld [vmem:[#allocation2 + $0x4e0] sm:$0xff]
    %v1711 = vld [vmem:[#allocation2 + $0x4e8] sm:$0xff]
    %v1712 = vld [vmem:[#allocation2 + $0x4f0] sm:$0xff]
    %v1713 = vld [vmem:[#allocation2 + $0x4f8] sm:$0xff]
    %v1714 = vld [vmem:[#allocation2 + $0x500] sm:$0xff]
    %v1715 = vld [vmem:[#allocation2 + $0x508] sm:$0xff]
    %v1716 = vld [vmem:[#allocation2 + $0x510] sm:$0xff]
    %v1717 = vld [vmem:[#allocation2 + $0x518] sm:$0xff]
    %v1718 = vld [vmem:[#allocation2 + $0x520] sm:$0xff]
    %v1719 = vld [vmem:[#allocation2 + $0x528] sm:$0xff]
    %v1720 = vld [vmem:[#allocation2 + $0x530] sm:$0xff]
    %v1721 = vld [vmem:[#allocation2 + $0x538] sm:$0xff]
    %v1722 = vld [vmem:[#allocation2 + $0x540] sm:$0xff]
    %v1723 = vld [vmem:[#allocation2 + $0x548] sm:$0xff]
    %v1724 = vld [vmem:[#allocation2 + $0x550] sm:$0xff]
    %v1725 = vld [vmem:[#allocation2 + $0x558] sm:$0xff]
    %v1726 = vld [vmem:[#allocation2 + $0x560] sm:$0xff]
    %v1727 = vld [vmem:[#allocation2 + $0x568] sm:$0xff]
    %v1728 = vld [vmem:[#allocation2 + $0x570] sm:$0xff]
    %v1729 = vld [vmem:[#allocation2 + $0x578] sm:$0xff]
    %v1730 = vld [vmem:[#allocation2 + $0x580] sm:$0xff]
    %v1731 = vld [vmem:[#allocation2 + $0x588] sm:$0xff]
    %v1732 = vld [vmem:[#allocation2 + $0x590] sm:$0xff]
    %v1733 = vld [vmem:[#allocation2 + $0x598] sm:$0xff]
    %v1734 = vld [vmem:[#allocation2 + $0x5a0] sm:$0xff]
    %v1735 = vld [vmem:[#allocation2 + $0x5a8] sm:$0xff]
    %v1736 = vld [vmem:[#allocation2 + $0x5b0] sm:$0xff]
    %v1737 = vld [vmem:[#allocation2 + $0x5b8] sm:$0xff]
    %v1738 = vld [vmem:[#allocation2 + $0x5c0] sm:$0xff]
    %v1739 = vld [vmem:[#allocation2 + $0x5c8] sm:$0xff]
    %v1740 = vld [vmem:[#allocation2 + $0x5d0] sm:$0xff]
    %v1741 = vld [vmem:[#allocation2 + $0x5d8] sm:$0xff]
    %v1742 = vld [vmem:[#allocation2 + $0x5e0] sm:$0xff]
    %v1743 = vld [vmem:[#allocation2 + $0x5e8] sm:$0xff]
    %v1744 = vld [vmem:[#allocation2 + $0x5f0] sm:$0xff]
    %v1745 = vld [vmem:[#allocation2 + $0x5f8] sm:$0xff]
    %v1746 = vld [vmem:[#allocation2 + $0x600] sm:$0xff]
    %v1747 = vld [vmem:[#allocation2 + $0x608] sm:$0xff]
    %v1748 = vld [vmem:[#allocation2 + $0x610] sm:$0xff]
    %v1749 = vld [vmem:[#allocation2 + $0x618] sm:$0xff]
    %v1750 = vld [vmem:[#allocation2 + $0x620] sm:$0xff]
    %v1751 = vld [vmem:[#allocation2 + $0x628] sm:$0xff]
    %v1752 = vld [vmem:[#allocation2 + $0x630] sm:$0xff]
    %v1753 = vld [vmem:[#allocation2 + $0x638] sm:$0xff]
    %v1754 = vld [vmem:[#allocation2 + $0x640] sm:$0xff]
    %v1755 = vld [vmem:[#allocation2 + $0x648] sm:$0xff]
    %v1756 = vld [vmem:[#allocation2 + $0x650] sm:$0xff]
    %v1757 = vld [vmem:[#allocation2 + $0x658] sm:$0xff]
    %v1758 = vld [vmem:[#allocation2 + $0x660] sm:$0xff]
    %v1759 = vld [vmem:[#allocation2 + $0x668] sm:$0xff]
    %v1760 = vld [vmem:[#allocation2 + $0x670] sm:$0xff]
    %v1761 = vld [vmem:[#allocation2 + $0x678] sm:$0xff]
    %v1762 = vld [vmem:[#allocation2 + $0x680] sm:$0xff]
    %v1763 = vld [vmem:[#allocation2 + $0x688] sm:$0xff]
    %v1764 = vld [vmem:[#allocation2 + $0x690] sm:$0xff]
    %v1765 = vld [vmem:[#allocation2 + $0x698] sm:$0xff]
    %v1766 = vld [vmem:[#allocation2 + $0x6a0] sm:$0xff]
    %v1767 = vld [vmem:[#allocation2 + $0x6a8] sm:$0xff]
    %v1768 = vld [vmem:[#allocation2 + $0x6b0] sm:$0xff]
    %v1769 = vld [vmem:[#allocation2 + $0x6b8] sm:$0xff]
    %v1770 = vld [vmem:[#allocation2 + $0x6c0] sm:$0xff]
    %v1771 = vld [vmem:[#allocation2 + $0x6c8] sm:$0xff]
    %v1772 = vld [vmem:[#allocation2 + $0x6d0] sm:$0xff]
    %v1773 = vld [vmem:[#allocation2 + $0x6d8] sm:$0xff]
    %v1774 = vld [vmem:[#allocation2 + $0x6e0] sm:$0xff]
    %v1775 = vld [vmem:[#allocation2 + $0x6e8] sm:$0xff]
    %v1776 = vld [vmem:[#allocation2 + $0x6f0] sm:$0xff]
    %v1777 = vld [vmem:[#allocation2 + $0x6f8] sm:$0xff]
    %v1778 = vld [vmem:[#allocation2 + $0x700] sm:$0xff]
    %v1779 = vld [vmem:[#allocation2 + $0x708] sm:$0xff]
    %v1780 = vld [vmem:[#allocation2 + $0x710] sm:$0xff]
    %v1781 = vld [vmem:[#allocation2 + $0x718] sm:$0xff]
    %v1782 = vld [vmem:[#allocation2 + $0x720] sm:$0xff]
    %v1783 = vld [vmem:[#allocation2 + $0x728] sm:$0xff]
    %v1784 = vld [vmem:[#allocation2 + $0x730] sm:$0xff]
    %v1785 = vld [vmem:[#allocation2 + $0x738] sm:$0xff]
    %v1786 = vld [vmem:[#allocation2 + $0x740] sm:$0xff]
    %v1787 = vld [vmem:[#allocation2 + $0x748] sm:$0xff]
    %v1788 = vld [vmem:[#allocation2 + $0x750] sm:$0xff]
    %v1789 = vld [vmem:[#allocation2 + $0x758] sm:$0xff]
    %v1790 = vld [vmem:[#allocation2 + $0x760] sm:$0xff]
    %v1791 = vld [vmem:[#allocation2 + $0x768] sm:$0xff]
    %v1792 = vld [vmem:[#allocation2 + $0x770] sm:$0xff]
    %v1793 = vld [vmem:[#allocation2 + $0x778] sm:$0xff]
    %v1794 = vld [vmem:[#allocation2 + $0x780] sm:$0xff]
    %v1795 = vld [vmem:[#allocation2 + $0x788] sm:$0xff]
    %v1796 = vld [vmem:[#allocation2 + $0x790] sm:$0xff]
    %v1797 = vld [vmem:[#allocation2 + $0x798] sm:$0xff]
    %v1798 = vld [vmem:[#allocation2 + $0x7a0] sm:$0xff]
    %v1799 = vld [vmem:[#allocation2 + $0x7a8] sm:$0xff]
    %v1800 = vld [vmem:[#allocation2 + $0x7b0] sm:$0xff]
    %v1801 = vld [vmem:[#allocation2 + $0x7b8] sm:$0xff]
    %v1802 = vld [vmem:[#allocation2 + $0x7c0] sm:$0xff]
    %v1803 = vld [vmem:[#allocation2 + $0x7c8] sm:$0xff]
    %v1804 = vld [vmem:[#allocation2 + $0x7d0] sm:$0xff]
    %v1805 = vld [vmem:[#allocation2 + $0x7d8] sm:$0xff]
    %v1806 = vld [vmem:[#allocation2 + $0x7e0] sm:$0xff]
    %v1807 = vld [vmem:[#allocation2 + $0x7e8] sm:$0xff]
    %v1808 = vld [vmem:[#allocation2 + $0x7f0] sm:$0xff]
    %v1809 = vld [vmem:[#allocation2 + $0x7f8] sm:$0xff]
    %v1810 = vld [vmem:[%s5] sm:$0xf]
    %v1812 = vperm.slane %v1810, 0
    %v1813 = vperm.slane %v1810, 1
    %v1814 = vperm.slane %v1810, 2
    %v1815 = vperm.slane %v1810, 3
    %v2076 = vunpack.c.l.b16 %v1554
    %v2077 = vunpack.c.h.b16 %v1554
    %v2078 = vunpack.c.l.b16 %v1555
    %v2079 = vunpack.c.h.b16 %v1555
    %v2080 = vunpack.c.l.b16 %v1556
    %v2081 = vunpack.c.h.b16 %v1556
    %v2082 = vunpack.c.l.b16 %v1557
    %v2083 = vunpack.c.h.b16 %v1557
    %v2084 = vunpack.c.l.b16 %v1558
    %v2085 = vunpack.c.h.b16 %v1558
    %v2086 = vunpack.c.l.b16 %v1559
    %v2087 = vunpack.c.h.b16 %v1559
    %v2088 = vunpack.c.l.b16 %v1560
    %v2089 = vunpack.c.h.b16 %v1560
    %v2090 = vunpack.c.l.b16 %v1561
    %v2091 = vunpack.c.h.b16 %v1561
    %v2092 = vunpack.c.l.b16 %v1562
    %v2093 = vunpack.c.h.b16 %v1562
    %v2094 = vunpack.c.l.b16 %v1563
    %v2095 = vunpack.c.h.b16 %v1563
    %v2096 = vunpack.c.l.b16 %v1564
    %v2097 = vunpack.c.h.b16 %v1564
    %v2098 = vunpack.c.l.b16 %v1565
    %v2099 = vunpack.c.h.b16 %v1565
    %v2100 = vunpack.c.l.b16 %v1566
    %v2101 = vunpack.c.h.b16 %v1566
    %v2102 = vunpack.c.l.b16 %v1567
    %v2103 = vunpack.c.h.b16 %v1567
    %v2104 = vunpack.c.l.b16 %v1568
    %v2105 = vunpack.c.h.b16 %v1568
    %v2106 = vunpack.c.l.b16 %v1569
    %v2107 = vunpack.c.h.b16 %v1569
    %v2108 = vunpack.c.l.b16 %v1570
    %v2109 = vunpack.c.h.b16 %v1570
    %v2110 = vunpack.c.l.b16 %v1571
    %v2111 = vunpack.c.h.b16 %v1571
    %v2112 = vunpack.c.l.b16 %v1572
    %v2113 = vunpack.c.h.b16 %v1572
    %v2114 = vunpack.c.l.b16 %v1573
    %v2115 = vunpack.c.h.b16 %v1573
    %v2116 = vunpack.c.l.b16 %v1574
    %v2117 = vunpack.c.h.b16 %v1574
    %v2118 = vunpack.c.l.b16 %v1575
    %v2119 = vunpack.c.h.b16 %v1575
    %v2120 = vunpack.c.l.b16 %v1576
    %v2121 = vunpack.c.h.b16 %v1576
    %v2122 = vunpack.c.l.b16 %v1577
    %v2123 = vunpack.c.h.b16 %v1577
    %v2124 = vunpack.c.l.b16 %v1578
    %v2125 = vunpack.c.h.b16 %v1578
    %v2126 = vunpack.c.l.b16 %v1579
    %v2127 = vunpack.c.h.b16 %v1579
    %v2128 = vunpack.c.l.b16 %v1580
    %v2129 = vunpack.c.h.b16 %v1580
    %v2130 = vunpack.c.l.b16 %v1581
    %v2131 = vunpack.c.h.b16 %v1581
    %v2132 = vunpack.c.l.b16 %v1582
    %v2133 = vunpack.c.h.b16 %v1582
    %v2134 = vunpack.c.l.b16 %v1583
    %v2135 = vunpack.c.h.b16 %v1583
    %v2136 = vunpack.c.l.b16 %v1584
    %v2137 = vunpack.c.h.b16 %v1584
    %v2138 = vunpack.c.l.b16 %v1585
    %v2139 = vunpack.c.h.b16 %v1585
    %v2140 = vunpack.c.l.b16 %v1586
    %v2141 = vunpack.c.h.b16 %v1586
    %v2142 = vunpack.c.l.b16 %v1587
    %v2143 = vunpack.c.h.b16 %v1587
    %v2144 = vunpack.c.l.b16 %v1588
    %v2145 = vunpack.c.h.b16 %v1588
    %v2146 = vunpack.c.l.b16 %v1589
    %v2147 = vunpack.c.h.b16 %v1589
    %v2148 = vunpack.c.l.b16 %v1590
    %v2149 = vunpack.c.h.b16 %v1590
    %v2150 = vunpack.c.l.b16 %v1591
    %v2151 = vunpack.c.h.b16 %v1591
    %v2152 = vunpack.c.l.b16 %v1592
    %v2153 = vunpack.c.h.b16 %v1592
    %v2154 = vunpack.c.l.b16 %v1593
    %v2155 = vunpack.c.h.b16 %v1593
    %v2156 = vunpack.c.l.b16 %v1594
    %v2157 = vunpack.c.h.b16 %v1594
    %v2158 = vunpack.c.l.b16 %v1595
    %v2159 = vunpack.c.h.b16 %v1595
    %v2160 = vunpack.c.l.b16 %v1596
    %v2161 = vunpack.c.h.b16 %v1596
    %v2162 = vunpack.c.l.b16 %v1597
    %v2163 = vunpack.c.h.b16 %v1597
    %v2164 = vunpack.c.l.b16 %v1598
    %v2165 = vunpack.c.h.b16 %v1598
    %v2166 = vunpack.c.l.b16 %v1599
    %v2167 = vunpack.c.h.b16 %v1599
    %v2168 = vunpack.c.l.b16 %v1600
    %v2169 = vunpack.c.h.b16 %v1600
    %v2170 = vunpack.c.l.b16 %v1601
    %v2171 = vunpack.c.h.b16 %v1601
    %v2172 = vunpack.c.l.b16 %v1602
    %v2173 = vunpack.c.h.b16 %v1602
    %v2174 = vunpack.c.l.b16 %v1603
    %v2175 = vunpack.c.h.b16 %v1603
    %v2176 = vunpack.c.l.b16 %v1604
    %v2177 = vunpack.c.h.b16 %v1604
    %v2178 = vunpack.c.l.b16 %v1605
    %v2179 = vunpack.c.h.b16 %v1605
    %v2180 = vunpack.c.l.b16 %v1606
    %v2181 = vunpack.c.h.b16 %v1606
    %v2182 = vunpack.c.l.b16 %v1607
    %v2183 = vunpack.c.h.b16 %v1607
    %v2184 = vunpack.c.l.b16 %v1608
    %v2185 = vunpack.c.h.b16 %v1608
    %v2186 = vunpack.c.l.b16 %v1609
    %v2187 = vunpack.c.h.b16 %v1609
    %v2188 = vunpack.c.l.b16 %v1610
    %v2189 = vunpack.c.h.b16 %v1610
    %v2190 = vunpack.c.l.b16 %v1611
    %v2191 = vunpack.c.h.b16 %v1611
    %v2192 = vunpack.c.l.b16 %v1612
    %v2193 = vunpack.c.h.b16 %v1612
    %v2194 = vunpack.c.l.b16 %v1613
    %v2195 = vunpack.c.h.b16 %v1613
    %v2196 = vunpack.c.l.b16 %v1614
    %v2197 = vunpack.c.h.b16 %v1614
    %v2198 = vunpack.c.l.b16 %v1615
    %v2199 = vunpack.c.h.b16 %v1615
    %v2200 = vunpack.c.l.b16 %v1616
    %v2201 = vunpack.c.h.b16 %v1616
    %v2202 = vunpack.c.l.b16 %v1617
    %v2203 = vunpack.c.h.b16 %v1617
    %v2204 = vunpack.c.l.b16 %v1618
    %v2205 = vunpack.c.h.b16 %v1618
    %v2206 = vunpack.c.l.b16 %v1619
    %v2207 = vunpack.c.h.b16 %v1619
    %v2208 = vunpack.c.l.b16 %v1620
    %v2209 = vunpack.c.h.b16 %v1620
    %v2210 = vunpack.c.l.b16 %v1621
    %v2211 = vunpack.c.h.b16 %v1621
    %v2212 = vunpack.c.l.b16 %v1622
    %v2213 = vunpack.c.h.b16 %v1622
    %v2214 = vunpack.c.l.b16 %v1623
    %v2215 = vunpack.c.h.b16 %v1623
    %v2216 = vunpack.c.l.b16 %v1624
    %v2217 = vunpack.c.h.b16 %v1624
    %v2218 = vunpack.c.l.b16 %v1625
    %v2219 = vunpack.c.h.b16 %v1625
    %v2220 = vunpack.c.l.b16 %v1626
    %v2221 = vunpack.c.h.b16 %v1626
    %v2222 = vunpack.c.l.b16 %v1627
    %v2223 = vunpack.c.h.b16 %v1627
    %v2224 = vunpack.c.l.b16 %v1628
    %v2225 = vunpack.c.h.b16 %v1628
    %v2226 = vunpack.c.l.b16 %v1629
    %v2227 = vunpack.c.h.b16 %v1629
    %v2228 = vunpack.c.l.b16 %v1630
    %v2229 = vunpack.c.h.b16 %v1630
    %v2230 = vunpack.c.l.b16 %v1631
    %v2231 = vunpack.c.h.b16 %v1631
    %v2232 = vunpack.c.l.b16 %v1632
    %v2233 = vunpack.c.h.b16 %v1632
    %v2234 = vunpack.c.l.b16 %v1633
    %v2235 = vunpack.c.h.b16 %v1633
    %v2236 = vunpack.c.l.b16 %v1634
    %v2237 = vunpack.c.h.b16 %v1634
    %v2238 = vunpack.c.l.b16 %v1635
    %v2239 = vunpack.c.h.b16 %v1635
    %v2240 = vunpack.c.l.b16 %v1636
    %v2241 = vunpack.c.h.b16 %v1636
    %v2242 = vunpack.c.l.b16 %v1637
    %v2243 = vunpack.c.h.b16 %v1637
    %v2244 = vunpack.c.l.b16 %v1638
    %v2245 = vunpack.c.h.b16 %v1638
    %v2246 = vunpack.c.l.b16 %v1639
    %v2247 = vunpack.c.h.b16 %v1639
    %v2248 = vunpack.c.l.b16 %v1640
    %v2249 = vunpack.c.h.b16 %v1640
    %v2250 = vunpack.c.l.b16 %v1641
    %v2251 = vunpack.c.h.b16 %v1641
    %v2252 = vunpack.c.l.b16 %v1642
    %v2253 = vunpack.c.h.b16 %v1642
    %v2254 = vunpack.c.l.b16 %v1643
    %v2255 = vunpack.c.h.b16 %v1643
    %v2256 = vunpack.c.l.b16 %v1644
    %v2257 = vunpack.c.h.b16 %v1644
    %v2258 = vunpack.c.l.b16 %v1645
    %v2259 = vunpack.c.h.b16 %v1645
    %v2260 = vunpack.c.l.b16 %v1646
    %v2261 = vunpack.c.h.b16 %v1646
    %v2262 = vunpack.c.l.b16 %v1647
    %v2263 = vunpack.c.h.b16 %v1647
    %v2264 = vunpack.c.l.b16 %v1648
    %v2265 = vunpack.c.h.b16 %v1648
    %v2266 = vunpack.c.l.b16 %v1649
    %v2267 = vunpack.c.h.b16 %v1649
    %v2268 = vunpack.c.l.b16 %v1650
    %v2269 = vunpack.c.h.b16 %v1650
    %v2270 = vunpack.c.l.b16 %v1651
    %v2271 = vunpack.c.h.b16 %v1651
    %v2272 = vunpack.c.l.b16 %v1652
    %v2273 = vunpack.c.h.b16 %v1652
    %v2274 = vunpack.c.l.b16 %v1653
    %v2275 = vunpack.c.h.b16 %v1653
    %v2276 = vunpack.c.l.b16 %v1654
    %v2277 = vunpack.c.h.b16 %v1654
    %v2278 = vunpack.c.l.b16 %v1655
    %v2279 = vunpack.c.h.b16 %v1655
    %v2280 = vunpack.c.l.b16 %v1656
    %v2281 = vunpack.c.h.b16 %v1656
    %v2282 = vunpack.c.l.b16 %v1657
    %v2283 = vunpack.c.h.b16 %v1657
    %v2284 = vunpack.c.l.b16 %v1658
    %v2285 = vunpack.c.h.b16 %v1658
    %v2286 = vunpack.c.l.b16 %v1659
    %v2287 = vunpack.c.h.b16 %v1659
    %v2288 = vunpack.c.l.b16 %v1660
    %v2289 = vunpack.c.h.b16 %v1660
    %v2290 = vunpack.c.l.b16 %v1661
    %v2291 = vunpack.c.h.b16 %v1661
    %v2292 = vunpack.c.l.b16 %v1662
    %v2293 = vunpack.c.h.b16 %v1662
    %v2294 = vunpack.c.l.b16 %v1663
    %v2295 = vunpack.c.h.b16 %v1663
    %v2296 = vunpack.c.l.b16 %v1664
    %v2297 = vunpack.c.h.b16 %v1664
    %v2298 = vunpack.c.l.b16 %v1665
    %v2299 = vunpack.c.h.b16 %v1665
    %v2300 = vunpack.c.l.b16 %v1666
    %v2301 = vunpack.c.h.b16 %v1666
    %v2302 = vunpack.c.l.b16 %v1667
    %v2303 = vunpack.c.h.b16 %v1667
    %v2304 = vunpack.c.l.b16 %v1668
    %v2305 = vunpack.c.h.b16 %v1668
    %v2306 = vunpack.c.l.b16 %v1669
    %v2307 = vunpack.c.h.b16 %v1669
    %v2308 = vunpack.c.l.b16 %v1670
    %v2309 = vunpack.c.h.b16 %v1670
    %v2310 = vunpack.c.l.b16 %v1671
    %v2311 = vunpack.c.h.b16 %v1671
    %v2312 = vunpack.c.l.b16 %v1672
    %v2313 = vunpack.c.h.b16 %v1672
    %v2314 = vunpack.c.l.b16 %v1673
    %v2315 = vunpack.c.h.b16 %v1673
    %v2316 = vunpack.c.l.b16 %v1674
    %v2317 = vunpack.c.h.b16 %v1674
    %v2318 = vunpack.c.l.b16 %v1675
    %v2319 = vunpack.c.h.b16 %v1675
    %v2320 = vunpack.c.l.b16 %v1676
    %v2321 = vunpack.c.h.b16 %v1676
    %v2322 = vunpack.c.l.b16 %v1677
    %v2323 = vunpack.c.h.b16 %v1677
    %v2324 = vunpack.c.l.b16 %v1678
    %v2325 = vunpack.c.h.b16 %v1678
    %v2326 = vunpack.c.l.b16 %v1679
    %v2327 = vunpack.c.h.b16 %v1679
    %v2328 = vunpack.c.l.b16 %v1680
    %v2329 = vunpack.c.h.b16 %v1680
    %v2330 = vunpack.c.l.b16 %v1681
    %v2331 = vunpack.c.h.b16 %v1681
    %v2332 = vunpack.c.l.b16 %v1682
    %v2333 = vunpack.c.h.b16 %v1682
    %v2334 = vunpack.c.l.b16 %v1683
    %v2335 = vunpack.c.h.b16 %v1683
    %v2336 = vunpack.c.l.b16 %v1684
    %v2337 = vunpack.c.h.b16 %v1684
    %v2338 = vunpack.c.l.b16 %v1685
    %v2339 = vunpack.c.h.b16 %v1685
    %v2340 = vunpack.c.l.b16 %v1686
    %v2341 = vunpack.c.h.b16 %v1686
    %v2342 = vunpack.c.l.b16 %v1687
    %v2343 = vunpack.c.h.b16 %v1687
    %v2344 = vunpack.c.l.b16 %v1688
    %v2345 = vunpack.c.h.b16 %v1688
    %v2346 = vunpack.c.l.b16 %v1689
    %v2347 = vunpack.c.h.b16 %v1689
    %v2348 = vunpack.c.l.b16 %v1690
    %v2349 = vunpack.c.h.b16 %v1690
    %v2350 = vunpack.c.l.b16 %v1691
    %v2351 = vunpack.c.h.b16 %v1691
    %v2352 = vunpack.c.l.b16 %v1692
    %v2353 = vunpack.c.h.b16 %v1692
    %v2354 = vunpack.c.l.b16 %v1693
    %v2355 = vunpack.c.h.b16 %v1693
    %v2356 = vunpack.c.l.b16 %v1694
    %v2357 = vunpack.c.h.b16 %v1694
    %v2358 = vunpack.c.l.b16 %v1695
    %v2359 = vunpack.c.h.b16 %v1695
    %v2360 = vunpack.c.l.b16 %v1696
    %v2361 = vunpack.c.h.b16 %v1696
    %v2362 = vunpack.c.l.b16 %v1697
    %v2363 = vunpack.c.h.b16 %v1697
    %v2364 = vunpack.c.l.b16 %v1698
    %v2365 = vunpack.c.h.b16 %v1698
    %v2366 = vunpack.c.l.b16 %v1699
    %v2367 = vunpack.c.h.b16 %v1699
    %v2368 = vunpack.c.l.b16 %v1700
    %v2369 = vunpack.c.h.b16 %v1700
    %v2370 = vunpack.c.l.b16 %v1701
    %v2371 = vunpack.c.h.b16 %v1701
    %v2372 = vunpack.c.l.b16 %v1702
    %v2373 = vunpack.c.h.b16 %v1702
    %v2374 = vunpack.c.l.b16 %v1703
    %v2375 = vunpack.c.h.b16 %v1703
    %v2376 = vunpack.c.l.b16 %v1704
    %v2377 = vunpack.c.h.b16 %v1704
    %v2378 = vunpack.c.l.b16 %v1705
    %v2379 = vunpack.c.h.b16 %v1705
    %v2380 = vunpack.c.l.b16 %v1706
    %v2381 = vunpack.c.h.b16 %v1706
    %v2382 = vunpack.c.l.b16 %v1707
    %v2383 = vunpack.c.h.b16 %v1707
    %v2384 = vunpack.c.l.b16 %v1708
    %v2385 = vunpack.c.h.b16 %v1708
    %v2386 = vunpack.c.l.b16 %v1709
    %v2387 = vunpack.c.h.b16 %v1709
    %v2388 = vunpack.c.l.b16 %v1710
    %v2389 = vunpack.c.h.b16 %v1710
    %v2390 = vunpack.c.l.b16 %v1711
    %v2391 = vunpack.c.h.b16 %v1711
    %v2392 = vunpack.c.l.b16 %v1712
    %v2393 = vunpack.c.h.b16 %v1712
    %v2394 = vunpack.c.l.b16 %v1713
    %v2395 = vunpack.c.h.b16 %v1713
    %v2396 = vunpack.c.l.b16 %v1714
    %v2397 = vunpack.c.h.b16 %v1714
    %v2398 = vunpack.c.l.b16 %v1715
    %v2399 = vunpack.c.h.b16 %v1715
    %v2400 = vunpack.c.l.b16 %v1716
    %v2401 = vunpack.c.h.b16 %v1716
    %v2402 = vunpack.c.l.b16 %v1717
    %v2403 = vunpack.c.h.b16 %v1717
    %v2404 = vunpack.c.l.b16 %v1718
    %v2405 = vunpack.c.h.b16 %v1718
    %v2406 = vunpack.c.l.b16 %v1719
    %v2407 = vunpack.c.h.b16 %v1719
    %v2408 = vunpack.c.l.b16 %v1720
    %v2409 = vunpack.c.h.b16 %v1720
    %v2410 = vunpack.c.l.b16 %v1721
    %v2411 = vunpack.c.h.b16 %v1721
    %v2412 = vunpack.c.l.b16 %v1722
    %v2413 = vunpack.c.h.b16 %v1722
    %v2414 = vunpack.c.l.b16 %v1723
    %v2415 = vunpack.c.h.b16 %v1723
    %v2416 = vunpack.c.l.b16 %v1724
    %v2417 = vunpack.c.h.b16 %v1724
    %v2418 = vunpack.c.l.b16 %v1725
    %v2419 = vunpack.c.h.b16 %v1725
    %v2420 = vunpack.c.l.b16 %v1726
    %v2421 = vunpack.c.h.b16 %v1726
    %v2422 = vunpack.c.l.b16 %v1727
    %v2423 = vunpack.c.h.b16 %v1727
    %v2424 = vunpack.c.l.b16 %v1728
    %v2425 = vunpack.c.h.b16 %v1728
    %v2426 = vunpack.c.l.b16 %v1729
    %v2427 = vunpack.c.h.b16 %v1729
    %v2428 = vunpack.c.l.b16 %v1730
    %v2429 = vunpack.c.h.b16 %v1730
    %v2430 = vunpack.c.l.b16 %v1731
    %v2431 = vunpack.c.h.b16 %v1731
    %v2432 = vunpack.c.l.b16 %v1732
    %v2433 = vunpack.c.h.b16 %v1732
    %v2434 = vunpack.c.l.b16 %v1733
    %v2435 = vunpack.c.h.b16 %v1733
    %v2436 = vunpack.c.l.b16 %v1734
    %v2437 = vunpack.c.h.b16 %v1734
    %v2438 = vunpack.c.l.b16 %v1735
    %v2439 = vunpack.c.h.b16 %v1735
    %v2440 = vunpack.c.l.b16 %v1736
    %v2441 = vunpack.c.h.b16 %v1736
    %v2442 = vunpack.c.l.b16 %v1737
    %v2443 = vunpack.c.h.b16 %v1737
    %v2444 = vunpack.c.l.b16 %v1738
    %v2445 = vunpack.c.h.b16 %v1738
    %v2446 = vunpack.c.l.b16 %v1739
    %v2447 = vunpack.c.h.b16 %v1739
    %v2448 = vunpack.c.l.b16 %v1740
    %v2449 = vunpack.c.h.b16 %v1740
    %v2450 = vunpack.c.l.b16 %v1741
    %v2451 = vunpack.c.h.b16 %v1741
    %v2452 = vunpack.c.l.b16 %v1742
    %v2453 = vunpack.c.h.b16 %v1742
    %v2454 = vunpack.c.l.b16 %v1743
    %v2455 = vunpack.c.h.b16 %v1743
    %v2456 = vunpack.c.l.b16 %v1744
    %v2457 = vunpack.c.h.b16 %v1744
    %v2458 = vunpack.c.l.b16 %v1745
    %v2459 = vunpack.c.h.b16 %v1745
    %v2460 = vunpack.c.l.b16 %v1746
    %v2461 = vunpack.c.h.b16 %v1746
    %v2462 = vunpack.c.l.b16 %v1747
    %v2463 = vunpack.c.h.b16 %v1747
    %v2464 = vunpack.c.l.b16 %v1748
    %v2465 = vunpack.c.h.b16 %v1748
    %v2466 = vunpack.c.l.b16 %v1749
    %v2467 = vunpack.c.h.b16 %v1749
    %v2468 = vunpack.c.l.b16 %v1750
    %v2469 = vunpack.c.h.b16 %v1750
    %v2470 = vunpack.c.l.b16 %v1751
    %v2471 = vunpack.c.h.b16 %v1751
    %v2472 = vunpack.c.l.b16 %v1752
    %v2473 = vunpack.c.h.b16 %v1752
    %v2474 = vunpack.c.l.b16 %v1753
    %v2475 = vunpack.c.h.b16 %v1753
    %v2476 = vunpack.c.l.b16 %v1754
    %v2477 = vunpack.c.h.b16 %v1754
    %v2478 = vunpack.c.l.b16 %v1755
    %v2479 = vunpack.c.h.b16 %v1755
    %v2480 = vunpack.c.l.b16 %v1756
    %v2481 = vunpack.c.h.b16 %v1756
    %v2482 = vunpack.c.l.b16 %v1757
    %v2483 = vunpack.c.h.b16 %v1757
    %v2484 = vunpack.c.l.b16 %v1758
    %v2485 = vunpack.c.h.b16 %v1758
    %v2486 = vunpack.c.l.b16 %v1759
    %v2487 = vunpack.c.h.b16 %v1759
    %v2488 = vunpack.c.l.b16 %v1760
    %v2489 = vunpack.c.h.b16 %v1760
    %v2490 = vunpack.c.l.b16 %v1761
    %v2491 = vunpack.c.h.b16 %v1761
    %v2492 = vunpack.c.l.b16 %v1762
    %v2493 = vunpack.c.h.b16 %v1762
    %v2494 = vunpack.c.l.b16 %v1763
    %v2495 = vunpack.c.h.b16 %v1763
    %v2496 = vunpack.c.l.b16 %v1764
    %v2497 = vunpack.c.h.b16 %v1764
    %v2498 = vunpack.c.l.b16 %v1765
    %v2499 = vunpack.c.h.b16 %v1765
    %v2500 = vunpack.c.l.b16 %v1766
    %v2501 = vunpack.c.h.b16 %v1766
    %v2502 = vunpack.c.l.b16 %v1767
    %v2503 = vunpack.c.h.b16 %v1767
    %v2504 = vunpack.c.l.b16 %v1768
    %v2505 = vunpack.c.h.b16 %v1768
    %v2506 = vunpack.c.l.b16 %v1769
    %v2507 = vunpack.c.h.b16 %v1769
    %v2508 = vunpack.c.l.b16 %v1770
    %v2509 = vunpack.c.h.b16 %v1770
    %v2510 = vunpack.c.l.b16 %v1771
    %v2511 = vunpack.c.h.b16 %v1771
    %v2512 = vunpack.c.l.b16 %v1772
    %v2513 = vunpack.c.h.b16 %v1772
    %v2514 = vunpack.c.l.b16 %v1773
    %v2515 = vunpack.c.h.b16 %v1773
    %v2516 = vunpack.c.l.b16 %v1774
    %v2517 = vunpack.c.h.b16 %v1774
    %v2518 = vunpack.c.l.b16 %v1775
    %v2519 = vunpack.c.h.b16 %v1775
    %v2520 = vunpack.c.l.b16 %v1776
    %v2521 = vunpack.c.h.b16 %v1776
    %v2522 = vunpack.c.l.b16 %v1777
    %v2523 = vunpack.c.h.b16 %v1777
    %v2524 = vunpack.c.l.b16 %v1778
    %v2525 = vunpack.c.h.b16 %v1778
    %v2526 = vunpack.c.l.b16 %v1779
    %v2527 = vunpack.c.h.b16 %v1779
    %v2528 = vunpack.c.l.b16 %v1780
    %v2529 = vunpack.c.h.b16 %v1780
    %v2530 = vunpack.c.l.b16 %v1781
    %v2531 = vunpack.c.h.b16 %v1781
    %v2532 = vunpack.c.l.b16 %v1782
    %v2533 = vunpack.c.h.b16 %v1782
    %v2534 = vunpack.c.l.b16 %v1783
    %v2535 = vunpack.c.h.b16 %v1783
    %v2536 = vunpack.c.l.b16 %v1784
    %v2537 = vunpack.c.h.b16 %v1784
    %v2538 = vunpack.c.l.b16 %v1785
    %v2539 = vunpack.c.h.b16 %v1785
    %v2540 = vunpack.c.l.b16 %v1786
    %v2541 = vunpack.c.h.b16 %v1786
    %v2542 = vunpack.c.l.b16 %v1787
    %v2543 = vunpack.c.h.b16 %v1787
    %v2544 = vunpack.c.l.b16 %v1788
    %v2545 = vunpack.c.h.b16 %v1788
    %v2546 = vunpack.c.l.b16 %v1789
    %v2547 = vunpack.c.h.b16 %v1789
    %v2548 = vunpack.c.l.b16 %v1790
    %v2549 = vunpack.c.h.b16 %v1790
    %v2550 = vunpack.c.l.b16 %v1791
    %v2551 = vunpack.c.h.b16 %v1791
    %v2552 = vunpack.c.l.b16 %v1792
    %v2553 = vunpack.c.h.b16 %v1792
    %v2554 = vunpack.c.l.b16 %v1793
    %v2555 = vunpack.c.h.b16 %v1793
    %v2556 = vunpack.c.l.b16 %v1794
    %v2557 = vunpack.c.h.b16 %v1794
    %v2558 = vunpack.c.l.b16 %v1795
    %v2559 = vunpack.c.h.b16 %v1795
    %v2560 = vunpack.c.l.b16 %v1796
    %v2561 = vunpack.c.h.b16 %v1796
    %v2562 = vunpack.c.l.b16 %v1797
    %v2563 = vunpack.c.h.b16 %v1797
    %v2564 = vunpack.c.l.b16 %v1798
    %v2565 = vunpack.c.h.b16 %v1798
    %v2566 = vunpack.c.l.b16 %v1799
    %v2567 = vunpack.c.h.b16 %v1799
    %v2568 = vunpack.c.l.b16 %v1800
    %v2569 = vunpack.c.h.b16 %v1800
    %v2570 = vunpack.c.l.b16 %v1801
    %v2571 = vunpack.c.h.b16 %v1801
    %v2572 = vunpack.c.l.b16 %v1802
    %v2573 = vunpack.c.h.b16 %v1802
    %v2574 = vunpack.c.l.b16 %v1803
    %v2575 = vunpack.c.h.b16 %v1803
    %v2576 = vunpack.c.l.b16 %v1804
    %v2577 = vunpack.c.h.b16 %v1804
    %v2578 = vunpack.c.l.b16 %v1805
    %v2579 = vunpack.c.h.b16 %v1805
    %v2580 = vunpack.c.l.b16 %v1806
    %v2581 = vunpack.c.h.b16 %v1806
    %v2582 = vunpack.c.l.b16 %v1807
    %v2583 = vunpack.c.h.b16 %v1807
    %v2584 = vunpack.c.l.b16 %v1808
    %v2585 = vunpack.c.h.b16 %v1808
    %v2586 = vunpack.c.l.b16 %v1809
    %v2587 = vunpack.c.h.b16 %v1809
    %v2588 = vpack.c.b16 %v2080, %v2076
    %v2589 = vpack.c.b16 %v2081, %v2077
    %v2590 = vpack.c.b16 %v2082, %v2078
    %v2591 = vpack.c.b16 %v2083, %v2079
    %v2592 = vpack.c.b16 %v2088, %v2084
    %v2593 = vpack.c.b16 %v2089, %v2085
    %v2594 = vpack.c.b16 %v2090, %v2086
    %v2595 = vpack.c.b16 %v2091, %v2087
    %v2596 = vpack.c.b16 %v2096, %v2092
    %v2597 = vpack.c.b16 %v2097, %v2093
    %v2598 = vpack.c.b16 %v2098, %v2094
    %v2599 = vpack.c.b16 %v2099, %v2095
    %v2600 = vpack.c.b16 %v2104, %v2100
    %v2601 = vpack.c.b16 %v2105, %v2101
    %v2602 = vpack.c.b16 %v2106, %v2102
    %v2603 = vpack.c.b16 %v2107, %v2103
    %v2604 = vpack.c.b16 %v2112, %v2108
    %v2605 = vpack.c.b16 %v2113, %v2109
    %v2606 = vpack.c.b16 %v2114, %v2110
    %v2607 = vpack.c.b16 %v2115, %v2111
    %v2608 = vpack.c.b16 %v2120, %v2116
    %v2609 = vpack.c.b16 %v2121, %v2117
    %v2610 = vpack.c.b16 %v2122, %v2118
    %v2611 = vpack.c.b16 %v2123, %v2119
    %v2612 = vpack.c.b16 %v2128, %v2124
    %v2613 = vpack.c.b16 %v2129, %v2125
    %v2614 = vpack.c.b16 %v2130, %v2126
    %v2615 = vpack.c.b16 %v2131, %v2127
    %v2616 = vpack.c.b16 %v2136, %v2132
    %v2617 = vpack.c.b16 %v2137, %v2133
    %v2618 = vpack.c.b16 %v2138, %v2134
    %v2619 = vpack.c.b16 %v2139, %v2135
    %v2620 = vpack.c.b16 %v2144, %v2140
    %v2621 = vpack.c.b16 %v2145, %v2141
    %v2622 = vpack.c.b16 %v2146, %v2142
    %v2623 = vpack.c.b16 %v2147, %v2143
    %v2624 = vpack.c.b16 %v2152, %v2148
    %v2625 = vpack.c.b16 %v2153, %v2149
    %v2626 = vpack.c.b16 %v2154, %v2150
    %v2627 = vpack.c.b16 %v2155, %v2151
    %v2628 = vpack.c.b16 %v2160, %v2156
    %v2629 = vpack.c.b16 %v2161, %v2157
    %v2630 = vpack.c.b16 %v2162, %v2158
    %v2631 = vpack.c.b16 %v2163, %v2159
    %v2632 = vpack.c.b16 %v2168, %v2164
    %v2633 = vpack.c.b16 %v2169, %v2165
    %v2634 = vpack.c.b16 %v2170, %v2166
    %v2635 = vpack.c.b16 %v2171, %v2167
    %v2636 = vpack.c.b16 %v2176, %v2172
    %v2637 = vpack.c.b16 %v2177, %v2173
    %v2638 = vpack.c.b16 %v2178, %v2174
    %v2639 = vpack.c.b16 %v2179, %v2175
    %v2640 = vpack.c.b16 %v2184, %v2180
    %v2641 = vpack.c.b16 %v2185, %v2181
    %v2642 = vpack.c.b16 %v2186, %v2182
    %v2643 = vpack.c.b16 %v2187, %v2183
    %v2644 = vpack.c.b16 %v2192, %v2188
    %v2645 = vpack.c.b16 %v2193, %v2189
    %v2646 = vpack.c.b16 %v2194, %v2190
    %v2647 = vpack.c.b16 %v2195, %v2191
    %v2648 = vpack.c.b16 %v2200, %v2196
    %v2649 = vpack.c.b16 %v2201, %v2197
    %v2650 = vpack.c.b16 %v2202, %v2198
    %v2651 = vpack.c.b16 %v2203, %v2199
    %v2652 = vpack.c.b16 %v2208, %v2204
    %v2653 = vpack.c.b16 %v2209, %v2205
    %v2654 = vpack.c.b16 %v2210, %v2206
    %v2655 = vpack.c.b16 %v2211, %v2207
    %v2656 = vpack.c.b16 %v2216, %v2212
    %v2657 = vpack.c.b16 %v2217, %v2213
    %v2658 = vpack.c.b16 %v2218, %v2214
    %v2659 = vpack.c.b16 %v2219, %v2215
    %v2660 = vpack.c.b16 %v2224, %v2220
    %v2661 = vpack.c.b16 %v2225, %v2221
    %v2662 = vpack.c.b16 %v2226, %v2222
    %v2663 = vpack.c.b16 %v2227, %v2223
    %v2664 = vpack.c.b16 %v2232, %v2228
    %v2665 = vpack.c.b16 %v2233, %v2229
    %v2666 = vpack.c.b16 %v2234, %v2230
    %v2667 = vpack.c.b16 %v2235, %v2231
    %v2668 = vpack.c.b16 %v2240, %v2236
    %v2669 = vpack.c.b16 %v2241, %v2237
    %v2670 = vpack.c.b16 %v2242, %v2238
    %v2671 = vpack.c.b16 %v2243, %v2239
    %v2672 = vpack.c.b16 %v2248, %v2244
    %v2673 = vpack.c.b16 %v2249, %v2245
    %v2674 = vpack.c.b16 %v2250, %v2246
    %v2675 = vpack.c.b16 %v2251, %v2247
    %v2676 = vpack.c.b16 %v2256, %v2252
    %v2677 = vpack.c.b16 %v2257, %v2253
    %v2678 = vpack.c.b16 %v2258, %v2254
    %v2679 = vpack.c.b16 %v2259, %v2255
    %v2680 = vpack.c.b16 %v2264, %v2260
    %v2681 = vpack.c.b16 %v2265, %v2261
    %v2682 = vpack.c.b16 %v2266, %v2262
    %v2683 = vpack.c.b16 %v2267, %v2263
    %v2684 = vpack.c.b16 %v2272, %v2268
    %v2685 = vpack.c.b16 %v2273, %v2269
    %v2686 = vpack.c.b16 %v2274, %v2270
    %v2687 = vpack.c.b16 %v2275, %v2271
    %v2688 = vpack.c.b16 %v2280, %v2276
    %v2689 = vpack.c.b16 %v2281, %v2277
    %v2690 = vpack.c.b16 %v2282, %v2278
    %v2691 = vpack.c.b16 %v2283, %v2279
    %v2692 = vpack.c.b16 %v2288, %v2284
    %v2693 = vpack.c.b16 %v2289, %v2285
    %v2694 = vpack.c.b16 %v2290, %v2286
    %v2695 = vpack.c.b16 %v2291, %v2287
    %v2696 = vpack.c.b16 %v2296, %v2292
    %v2697 = vpack.c.b16 %v2297, %v2293
    %v2698 = vpack.c.b16 %v2298, %v2294
    %v2699 = vpack.c.b16 %v2299, %v2295
    %v2700 = vpack.c.b16 %v2304, %v2300
    %v2701 = vpack.c.b16 %v2305, %v2301
    %v2702 = vpack.c.b16 %v2306, %v2302
    %v2703 = vpack.c.b16 %v2307, %v2303
    %v2704 = vpack.c.b16 %v2312, %v2308
    %v2705 = vpack.c.b16 %v2313, %v2309
    %v2706 = vpack.c.b16 %v2314, %v2310
    %v2707 = vpack.c.b16 %v2315, %v2311
    %v2708 = vpack.c.b16 %v2320, %v2316
    %v2709 = vpack.c.b16 %v2321, %v2317
    %v2710 = vpack.c.b16 %v2322, %v2318
    %v2711 = vpack.c.b16 %v2323, %v2319
    %v2712 = vpack.c.b16 %v2328, %v2324
    %v2713 = vpack.c.b16 %v2329, %v2325
    %v2714 = vpack.c.b16 %v2330, %v2326
    %v2715 = vpack.c.b16 %v2331, %v2327
    %v2716 = vpack.c.b16 %v2336, %v2332
    %v2717 = vpack.c.b16 %v2337, %v2333
    %v2718 = vpack.c.b16 %v2338, %v2334
    %v2719 = vpack.c.b16 %v2339, %v2335
    %v2720 = vpack.c.b16 %v2344, %v2340
    %v2721 = vpack.c.b16 %v2345, %v2341
    %v2722 = vpack.c.b16 %v2346, %v2342
    %v2723 = vpack.c.b16 %v2347, %v2343
    %v2724 = vpack.c.b16 %v2352, %v2348
    %v2725 = vpack.c.b16 %v2353, %v2349
    %v2726 = vpack.c.b16 %v2354, %v2350
    %v2727 = vpack.c.b16 %v2355, %v2351
    %v2728 = vpack.c.b16 %v2360, %v2356
    %v2729 = vpack.c.b16 %v2361, %v2357
    %v2730 = vpack.c.b16 %v2362, %v2358
    %v2731 = vpack.c.b16 %v2363, %v2359
    %v2732 = vpack.c.b16 %v2368, %v2364
    %v2733 = vpack.c.b16 %v2369, %v2365
    %v2734 = vpack.c.b16 %v2370, %v2366
    %v2735 = vpack.c.b16 %v2371, %v2367
    %v2736 = vpack.c.b16 %v2376, %v2372
    %v2737 = vpack.c.b16 %v2377, %v2373
    %v2738 = vpack.c.b16 %v2378, %v2374
    %v2739 = vpack.c.b16 %v2379, %v2375
    %v2740 = vpack.c.b16 %v2384, %v2380
    %v2741 = vpack.c.b16 %v2385, %v2381
    %v2742 = vpack.c.b16 %v2386, %v2382
    %v2743 = vpack.c.b16 %v2387, %v2383
    %v2744 = vpack.c.b16 %v2392, %v2388
    %v2745 = vpack.c.b16 %v2393, %v2389
    %v2746 = vpack.c.b16 %v2394, %v2390
    %v2747 = vpack.c.b16 %v2395, %v2391
    %v2748 = vpack.c.b16 %v2400, %v2396
    %v2749 = vpack.c.b16 %v2401, %v2397
    %v2750 = vpack.c.b16 %v2402, %v2398
    %v2751 = vpack.c.b16 %v2403, %v2399
    %v2752 = vpack.c.b16 %v2408, %v2404
    %v2753 = vpack.c.b16 %v2409, %v2405
    %v2754 = vpack.c.b16 %v2410, %v2406
    %v2755 = vpack.c.b16 %v2411, %v2407
    %v2756 = vpack.c.b16 %v2416, %v2412
    %v2757 = vpack.c.b16 %v2417, %v2413
    %v2758 = vpack.c.b16 %v2418, %v2414
    %v2759 = vpack.c.b16 %v2419, %v2415
    %v2760 = vpack.c.b16 %v2424, %v2420
    %v2761 = vpack.c.b16 %v2425, %v2421
    %v2762 = vpack.c.b16 %v2426, %v2422
    %v2763 = vpack.c.b16 %v2427, %v2423
    %v2764 = vpack.c.b16 %v2432, %v2428
    %v2765 = vpack.c.b16 %v2433, %v2429
    %v2766 = vpack.c.b16 %v2434, %v2430
    %v2767 = vpack.c.b16 %v2435, %v2431
    %v2768 = vpack.c.b16 %v2440, %v2436
    %v2769 = vpack.c.b16 %v2441, %v2437
    %v2770 = vpack.c.b16 %v2442, %v2438
    %v2771 = vpack.c.b16 %v2443, %v2439
    %v2772 = vpack.c.b16 %v2448, %v2444
    %v2773 = vpack.c.b16 %v2449, %v2445
    %v2774 = vpack.c.b16 %v2450, %v2446
    %v2775 = vpack.c.b16 %v2451, %v2447
    %v2776 = vpack.c.b16 %v2456, %v2452
    %v2777 = vpack.c.b16 %v2457, %v2453
    %v2778 = vpack.c.b16 %v2458, %v2454
    %v2779 = vpack.c.b16 %v2459, %v2455
    %v2780 = vpack.c.b16 %v2464, %v2460
    %v2781 = vpack.c.b16 %v2465, %v2461
    %v2782 = vpack.c.b16 %v2466, %v2462
    %v2783 = vpack.c.b16 %v2467, %v2463
    %v2784 = vpack.c.b16 %v2472, %v2468
    %v2785 = vpack.c.b16 %v2473, %v2469
    %v2786 = vpack.c.b16 %v2474, %v2470
    %v2787 = vpack.c.b16 %v2475, %v2471
    %v2788 = vpack.c.b16 %v2480, %v2476
    %v2789 = vpack.c.b16 %v2481, %v2477
    %v2790 = vpack.c.b16 %v2482, %v2478
    %v2791 = vpack.c.b16 %v2483, %v2479
    %v2792 = vpack.c.b16 %v2488, %v2484
    %v2793 = vpack.c.b16 %v2489, %v2485
    %v2794 = vpack.c.b16 %v2490, %v2486
    %v2795 = vpack.c.b16 %v2491, %v2487
    %v2796 = vpack.c.b16 %v2496, %v2492
    %v2797 = vpack.c.b16 %v2497, %v2493
    %v2798 = vpack.c.b16 %v2498, %v2494
    %v2799 = vpack.c.b16 %v2499, %v2495
    %v2800 = vpack.c.b16 %v2504, %v2500
    %v2801 = vpack.c.b16 %v2505, %v2501
    %v2802 = vpack.c.b16 %v2506, %v2502
    %v2803 = vpack.c.b16 %v2507, %v2503
    %v2804 = vpack.c.b16 %v2512, %v2508
    %v2805 = vpack.c.b16 %v2513, %v2509
    %v2806 = vpack.c.b16 %v2514, %v2510
    %v2807 = vpack.c.b16 %v2515, %v2511
    %v2808 = vpack.c.b16 %v2520, %v2516
    %v2809 = vpack.c.b16 %v2521, %v2517
    %v2810 = vpack.c.b16 %v2522, %v2518
    %v2811 = vpack.c.b16 %v2523, %v2519
    %v2812 = vpack.c.b16 %v2528, %v2524
    %v2813 = vpack.c.b16 %v2529, %v2525
    %v2814 = vpack.c.b16 %v2530, %v2526
    %v2815 = vpack.c.b16 %v2531, %v2527
    %v2816 = vpack.c.b16 %v2536, %v2532
    %v2817 = vpack.c.b16 %v2537, %v2533
    %v2818 = vpack.c.b16 %v2538, %v2534
    %v2819 = vpack.c.b16 %v2539, %v2535
    %v2820 = vpack.c.b16 %v2544, %v2540
    %v2821 = vpack.c.b16 %v2545, %v2541
    %v2822 = vpack.c.b16 %v2546, %v2542
    %v2823 = vpack.c.b16 %v2547, %v2543
    %v2824 = vpack.c.b16 %v2552, %v2548
    %v2825 = vpack.c.b16 %v2553, %v2549
    %v2826 = vpack.c.b16 %v2554, %v2550
    %v2827 = vpack.c.b16 %v2555, %v2551
    %v2828 = vpack.c.b16 %v2560, %v2556
    %v2829 = vpack.c.b16 %v2561, %v2557
    %v2830 = vpack.c.b16 %v2562, %v2558
    %v2831 = vpack.c.b16 %v2563, %v2559
    %v2832 = vpack.c.b16 %v2568, %v2564
    %v2833 = vpack.c.b16 %v2569, %v2565
    %v2834 = vpack.c.b16 %v2570, %v2566
    %v2835 = vpack.c.b16 %v2571, %v2567
    %v2836 = vpack.c.b16 %v2576, %v2572
    %v2837 = vpack.c.b16 %v2577, %v2573
    %v2838 = vpack.c.b16 %v2578, %v2574
    %v2839 = vpack.c.b16 %v2579, %v2575
    %v2840 = vpack.c.b16 %v2584, %v2580
    %v2841 = vpack.c.b16 %v2585, %v2581
    %v2842 = vpack.c.b16 %v2586, %v2582
    %v2843 = vpack.c.b16 %v2587, %v2583
    %3100 = vmatpush.bf16.msra.mxu0 %v2616
    %3101 = vmatpush.bf16.msra.mxu0 %v2612
    %3102 = vmatpush.bf16.msra.mxu0 %v2608
    %3103 = vmatpush.bf16.msra.mxu0 %v2604
    %3104 = vmatpush.bf16.msra.mxu0 %v2600
    %3105 = vmatpush.bf16.msra.mxu0 %v2596
    %3106 = vmatpush.bf16.msra.mxu0 %v2592
    %3107 = vmatpush.bf16.msra.mxu0 %v2588
    %3108 = vmatmul.bf16.gmra.mxu0 %v1530
    %v3109 = vpop.f32.mrf.mxu0
    %v3110 = vadd.f32 %v1812, %v3109
    %v3111 = vpop.f32.mrf.mxu0
    %v3112 = vadd.f32 %v1812, %v3111
    %3113 = vmatmul.bf16.gmra.mxu0 %v1534
    %v3114 = vpop.f32.mrf.mxu0
    %v3115 = vadd.f32 %v1812, %v3114
    %v3116 = vpop.f32.mrf.mxu0
    %v3117 = vadd.f32 %v1812, %v3116
    %3118 = vmatmul.bf16.gmra.mxu0 %v1538
    %v3119 = vpop.f32.mrf.mxu0
    %v3120 = vadd.f32 %v1812, %v3119
    %v3121 = vpop.f32.mrf.mxu0
    %v3122 = vadd.f32 %v1812, %v3121
    %3123 = vdwg.mxu0
    %3124 = vmatpush.bf16.msra.mxu0 %v2648
    %3125 = vmatpush.bf16.msra.mxu0 %v2644
    %3126 = vmatpush.bf16.msra.mxu0 %v2640
    %3127 = vmatpush.bf16.msra.mxu0 %v2636
    %3128 = vmatpush.bf16.msra.mxu0 %v2632
    %3129 = vmatpush.bf16.msra.mxu0 %v2628
    %3130 = vmatpush.bf16.msra.mxu0 %v2624
    %3131 = vmatpush.bf16.msra.mxu0 %v2620
    %3132 = vmatmul.bf16.gmra.mxu0 %v1531
    %v3133 = vpop.f32.mrf.mxu0
    %v3134 = vadd.f32 %v3110, %v3133
    %v3135 = vpop.f32.mrf.mxu0
    %v3136 = vadd.f32 %v3112, %v3135
    %3137 = vmatmul.bf16.gmra.mxu0 %v1535
    %v3138 = vpop.f32.mrf.mxu0
    %v3139 = vadd.f32 %v3115, %v3138
    %v3140 = vpop.f32.mrf.mxu0
    %v3141 = vadd.f32 %v3117, %v3140
    %3142 = vmatmul.bf16.gmra.mxu0 %v1539
    %v3143 = vpop.f32.mrf.mxu0
    %v3144 = vadd.f32 %v3120, %v3143
    %v3145 = vpop.f32.mrf.mxu0
    %v3146 = vadd.f32 %v3122, %v3145
    %3147 = vdwg.mxu0
    %3148 = vmatpush.bf16.msra.mxu0 %v2680
    %3149 = vmatpush.bf16.msra.mxu0 %v2676
    %3150 = vmatpush.bf16.msra.mxu0 %v2672
    %3151 = vmatpush.bf16.msra.mxu0 %v2668
    %3152 = vmatpush.bf16.msra.mxu0 %v2664
    %3153 = vmatpush.bf16.msra.mxu0 %v2660
    %3154 = vmatpush.bf16.msra.mxu0 %v2656
    %3155 = vmatpush.bf16.msra.mxu0 %v2652
    %3156 = vmatmul.bf16.gmra.mxu0 %v1532
    %v3157 = vpop.f32.mrf.mxu0
    %v3158 = vadd.f32 %v3134, %v3157
    %v3159 = vpop.f32.mrf.mxu0
    %v3160 = vadd.f32 %v3136, %v3159
    %3161 = vmatmul.bf16.gmra.mxu0 %v1536
    %v3162 = vpop.f32.mrf.mxu0
    %v3163 = vadd.f32 %v3139, %v3162
    %v3164 = vpop.f32.mrf.mxu0
    %v3165 = vadd.f32 %v3141, %v3164
    %3166 = vmatmul.bf16.gmra.mxu0 %v1540
    %v3167 = vpop.f32.mrf.mxu0
    %v3168 = vadd.f32 %v3144, %v3167
    %v3169 = vpop.f32.mrf.mxu0
    %v3170 = vadd.f32 %v3146, %v3169
    %3171 = vdwg.mxu0
    %3172 = vmatpush.bf16.msra.mxu0 %v2712
    %3173 = vmatpush.bf16.msra.mxu0 %v2708
    %3174 = vmatpush.bf16.msra.mxu0 %v2704
    %3175 = vmatpush.bf16.msra.mxu0 %v2700
    %3176 = vmatpush.bf16.msra.mxu0 %v2696
    %3177 = vmatpush.bf16.msra.mxu0 %v2692
    %3178 = vmatpush.bf16.msra.mxu0 %v2688
    %3179 = vmatpush.bf16.msra.mxu0 %v2684
    %3180 = vmatmul.bf16.gmra.mxu0 %v1533
    %v3181 = vpop.f32.mrf.mxu0
    %v3182 = vadd.f32 %v3158, %v3181
    %v3183 = vpop.f32.mrf.mxu0
    %v3184 = vadd.f32 %v3160, %v3183
    %3185 = vmatmul.bf16.gmra.mxu0 %v1537
    %v3186 = vpop.f32.mrf.mxu0
    %v3187 = vadd.f32 %v3163, %v3186
    %v3188 = vpop.f32.mrf.mxu0
    %v3189 = vadd.f32 %v3165, %v3188
    %3190 = vmatmul.bf16.gmra.mxu0 %v1541
    %v3191 = vpop.f32.mrf.mxu0
    %v3192 = vadd.f32 %v3168, %v3191
    %v3193 = vpop.f32.mrf.mxu0
    %v3194 = vadd.f32 %v3170, %v3193
    %3195 = vdwg.mxu0
    %3196 = vmatpush.bf16.msra.mxu0 %v2744
    %3197 = vmatpush.bf16.msra.mxu0 %v2740
    %3198 = vmatpush.bf16.msra.mxu0 %v2736
    %3199 = vmatpush.bf16.msra.mxu0 %v2732
    %3200 = vmatpush.bf16.msra.mxu0 %v2728
    %3201 = vmatpush.bf16.msra.mxu0 %v2724
    %3202 = vmatpush.bf16.msra.mxu0 %v2720
    %3203 = vmatpush.bf16.msra.mxu0 %v2716
    %3204 = vmatmul.bf16.gmra.mxu0 %v1484
    %v3205 = vpop.f32.mrf.mxu0
    %v3206 = vadd.f32 %v3182, %v3205
    %v3207 = vpop.f32.mrf.mxu0
    %v3208 = vadd.f32 %v3184, %v3207
    %3209 = vmatmul.bf16.gmra.mxu0 %v1488
    %v3210 = vpop.f32.mrf.mxu0
    %v3211 = vadd.f32 %v3187, %v3210
    %v3212 = vpop.f32.mrf.mxu0
    %v3213 = vadd.f32 %v3189, %v3212
    %3214 = vmatmul.bf16.gmra.mxu0 %v1516
    %v3215 = vpop.f32.mrf.mxu0
    %v3216 = vadd.f32 %v3192, %v3215
    %v3217 = vpop.f32.mrf.mxu0
    %v3218 = vadd.f32 %v3194, %v3217
    %3219 = vdwg.mxu0
    %3220 = vmatpush.bf16.msra.mxu0 %v2776
    %3221 = vmatpush.bf16.msra.mxu0 %v2772
    %3222 = vmatpush.bf16.msra.mxu0 %v2768
    %3223 = vmatpush.bf16.msra.mxu0 %v2764
    %3224 = vmatpush.bf16.msra.mxu0 %v2760
    %3225 = vmatpush.bf16.msra.mxu0 %v2756
    %3226 = vmatpush.bf16.msra.mxu0 %v2752
    %3227 = vmatpush.bf16.msra.mxu0 %v2748
    %3228 = vmatmul.bf16.gmra.mxu0 %v1485
    %v3229 = vpop.f32.mrf.mxu0
    %v3230 = vadd.f32 %v3206, %v3229
    %v3231 = vpop.f32.mrf.mxu0
    %v3232 = vadd.f32 %v3208, %v3231
    %3233 = vmatmul.bf16.gmra.mxu0 %v1489
    %v3234 = vpop.f32.mrf.mxu0
    %v3235 = vadd.f32 %v3211, %v3234
    %v3236 = vpop.f32.mrf.mxu0
    %v3237 = vadd.f32 %v3213, %v3236
    %3238 = vmatmul.bf16.gmra.mxu0 %v1520
    %v3239 = vpop.f32.mrf.mxu0
    %v3240 = vadd.f32 %v3216, %v3239
    %v3241 = vpop.f32.mrf.mxu0
    %v3242 = vadd.f32 %v3218, %v3241
    %3243 = vdwg.mxu0
    %3244 = vmatpush.bf16.msra.mxu0 %v2808
    %3245 = vmatpush.bf16.msra.mxu0 %v2804
    %3246 = vmatpush.bf16.msra.mxu0 %v2800
    %3247 = vmatpush.bf16.msra.mxu0 %v2796
    %3248 = vmatpush.bf16.msra.mxu0 %v2792
    %3249 = vmatpush.bf16.msra.mxu0 %v2788
    %3250 = vmatpush.bf16.msra.mxu0 %v2784
    %3251 = vmatpush.bf16.msra.mxu0 %v2780
    %3252 = vmatmul.bf16.gmra.mxu0 %v1486
    %v3253 = vpop.f32.mrf.mxu0
    %v3254 = vadd.f32 %v3230, %v3253
    %v3255 = vpop.f32.mrf.mxu0
    %v3256 = vadd.f32 %v3232, %v3255
    %3257 = vmatmul.bf16.gmra.mxu0 %v1490
    %v3258 = vpop.f32.mrf.mxu0
    %v3259 = vadd.f32 %v3235, %v3258
    %v3260 = vpop.f32.mrf.mxu0
    %v3261 = vadd.f32 %v3237, %v3260
    %3262 = vmatmul.bf16.gmra.mxu0 %v1524
    %v3263 = vpop.f32.mrf.mxu0
    %v3264 = vadd.f32 %v3240, %v3263
    %v3265 = vpop.f32.mrf.mxu0
    %v3266 = vadd.f32 %v3242, %v3265
    %3267 = vdwg.mxu0
    %3268 = vmatpush.bf16.msra.mxu0 %v2840
    %3269 = vmatpush.bf16.msra.mxu0 %v2836
    %3270 = vmatpush.bf16.msra.mxu0 %v2832
    %3271 = vmatpush.bf16.msra.mxu0 %v2828
    %3272 = vmatpush.bf16.msra.mxu0 %v2824
    %3273 = vmatpush.bf16.msra.mxu0 %v2820
    %3274 = vmatpush.bf16.msra.mxu0 %v2816
    %3275 = vmatpush.bf16.msra.mxu0 %v2812
    %3276 = vmatmul.bf16.gmra.mxu0 %v1487
    %v3277 = vpop.f32.mrf.mxu0
    %v3278 = vadd.f32 %v3254, %v3277
    %v3279 = vpop.f32.mrf.mxu0
    %v3280 = vadd.f32 %v3256, %v3279
    %3281 = vmatmul.bf16.gmra.mxu0 %v1491
    %v3282 = vpop.f32.mrf.mxu0
    %v3283 = vadd.f32 %v3259, %v3282
    %v3284 = vpop.f32.mrf.mxu0
    %v3285 = vadd.f32 %v3261, %v3284
    %3286 = vmatmul.bf16.gmra.mxu0 %v1528
    %v3287 = vpop.f32.mrf.mxu0
    %v3288 = vadd.f32 %v3264, %v3287
    %v3289 = vpop.f32.mrf.mxu0
    %v3290 = vadd.f32 %v3266, %v3289
    %3291 = vdwg.mxu0
    %3292 = vmatpush.bf16.msra.mxu0 %v2617
    %3293 = vmatpush.bf16.msra.mxu0 %v2613
    %3294 = vmatpush.bf16.msra.mxu0 %v2609
    %3295 = vmatpush.bf16.msra.mxu0 %v2605
    %3296 = vmatpush.bf16.msra.mxu0 %v2601
    %3297 = vmatpush.bf16.msra.mxu0 %v2597
    %3298 = vmatpush.bf16.msra.mxu0 %v2593
    %3299 = vmatpush.bf16.msra.mxu0 %v2589
    %3300 = vmatmul.bf16.gmra.mxu0 %v1530
    %v3301 = vpop.f32.mrf.mxu0
    %v3302 = vadd.f32 %v1813, %v3301
    %v3303 = vpop.f32.mrf.mxu0
    %v3304 = vadd.f32 %v1813, %v3303
    %3305 = vmatmul.bf16.gmra.mxu0 %v1534
    %v3306 = vpop.f32.mrf.mxu0
    %v3307 = vadd.f32 %v1813, %v3306
    %v3308 = vpop.f32.mrf.mxu0
    %v3309 = vadd.f32 %v1813, %v3308
    %3310 = vmatmul.bf16.gmra.mxu0 %v1538
    %v3311 = vpop.f32.mrf.mxu0
    %v3312 = vadd.f32 %v1813, %v3311
    %v3313 = vpop.f32.mrf.mxu0
    %v3314 = vadd.f32 %v1813, %v3313
    %3315 = vdwg.mxu0
    %3316 = vmatpush.bf16.msra.mxu0 %v2649
    %3317 = vmatpush.bf16.msra.mxu0 %v2645
    %3318 = vmatpush.bf16.msra.mxu0 %v2641
    %3319 = vmatpush.bf16.msra.mxu0 %v2637
    %3320 = vmatpush.bf16.msra.mxu0 %v2633
    %3321 = vmatpush.bf16.msra.mxu0 %v2629
    %3322 = vmatpush.bf16.msra.mxu0 %v2625
    %3323 = vmatpush.bf16.msra.mxu0 %v2621
    %3324 = vmatmul.bf16.gmra.mxu0 %v1531
    %v3325 = vpop.f32.mrf.mxu0
    %v3326 = vadd.f32 %v3302, %v3325
    %v3327 = vpop.f32.mrf.mxu0
    %v3328 = vadd.f32 %v3304, %v3327
    %3329 = vmatmul.bf16.gmra.mxu0 %v1535
    %v3330 = vpop.f32.mrf.mxu0
    %v3331 = vadd.f32 %v3307, %v3330
    %v3332 = vpop.f32.mrf.mxu0
    %v3333 = vadd.f32 %v3309, %v3332
    %3334 = vmatmul.bf16.gmra.mxu0 %v1539
    %v3335 = vpop.f32.mrf.mxu0
    %v3336 = vadd.f32 %v3312, %v3335
    %v3337 = vpop.f32.mrf.mxu0
    %v3338 = vadd.f32 %v3314, %v3337
    %3339 = vdwg.mxu0
    %3340 = vmatpush.bf16.msra.mxu0 %v2681
    %3341 = vmatpush.bf16.msra.mxu0 %v2677
    %3342 = vmatpush.bf16.msra.mxu0 %v2673
    %3343 = vmatpush.bf16.msra.mxu0 %v2669
    %3344 = vmatpush.bf16.msra.mxu0 %v2665
    %3345 = vmatpush.bf16.msra.mxu0 %v2661
    %3346 = vmatpush.bf16.msra.mxu0 %v2657
    %3347 = vmatpush.bf16.msra.mxu0 %v2653
    %3348 = vmatmul.bf16.gmra.mxu0 %v1532
    %v3349 = vpop.f32.mrf.mxu0
    %v3350 = vadd.f32 %v3326, %v3349
    %v3351 = vpop.f32.mrf.mxu0
    %v3352 = vadd.f32 %v3328, %v3351
    %3353 = vmatmul.bf16.gmra.mxu0 %v1536
    %v3354 = vpop.f32.mrf.mxu0
    %v3355 = vadd.f32 %v3331, %v3354
    %v3356 = vpop.f32.mrf.mxu0
    %v3357 = vadd.f32 %v3333, %v3356
    %3358 = vmatmul.bf16.gmra.mxu0 %v1540
    %v3359 = vpop.f32.mrf.mxu0
    %v3360 = vadd.f32 %v3336, %v3359
    %v3361 = vpop.f32.mrf.mxu0
    %v3362 = vadd.f32 %v3338, %v3361
    %3363 = vdwg.mxu0
    %3364 = vmatpush.bf16.msra.mxu0 %v2713
    %3365 = vmatpush.bf16.msra.mxu0 %v2709
    %3366 = vmatpush.bf16.msra.mxu0 %v2705
    %3367 = vmatpush.bf16.msra.mxu0 %v2701
    %3368 = vmatpush.bf16.msra.mxu0 %v2697
    %3369 = vmatpush.bf16.msra.mxu0 %v2693
    %3370 = vmatpush.bf16.msra.mxu0 %v2689
    %3371 = vmatpush.bf16.msra.mxu0 %v2685
    %3372 = vmatmul.bf16.gmra.mxu0 %v1533
    %v3373 = vpop.f32.mrf.mxu0
    %v3374 = vadd.f32 %v3350, %v3373
    %v3375 = vpop.f32.mrf.mxu0
    %v3376 = vadd.f32 %v3352, %v3375
    %3377 = vmatmul.bf16.gmra.mxu0 %v1537
    %v3378 = vpop.f32.mrf.mxu0
    %v3379 = vadd.f32 %v3355, %v3378
    %v3380 = vpop.f32.mrf.mxu0
    %v3381 = vadd.f32 %v3357, %v3380
    %3382 = vmatmul.bf16.gmra.mxu0 %v1541
    %v3383 = vpop.f32.mrf.mxu0
    %v3384 = vadd.f32 %v3360, %v3383
    %v3385 = vpop.f32.mrf.mxu0
    %v3386 = vadd.f32 %v3362, %v3385
    %3387 = vdwg.mxu0
    %3388 = vmatpush.bf16.msra.mxu0 %v2745
    %3389 = vmatpush.bf16.msra.mxu0 %v2741
    %3390 = vmatpush.bf16.msra.mxu0 %v2737
    %3391 = vmatpush.bf16.msra.mxu0 %v2733
    %3392 = vmatpush.bf16.msra.mxu0 %v2729
    %3393 = vmatpush.bf16.msra.mxu0 %v2725
    %3394 = vmatpush.bf16.msra.mxu0 %v2721
    %3395 = vmatpush.bf16.msra.mxu0 %v2717
    %3396 = vmatmul.bf16.gmra.mxu0 %v1484
    %v3397 = vpop.f32.mrf.mxu0
    %v3398 = vadd.f32 %v3374, %v3397
    %v3399 = vpop.f32.mrf.mxu0
    %v3400 = vadd.f32 %v3376, %v3399
    %3401 = vmatmul.bf16.gmra.mxu0 %v1488
    %v3402 = vpop.f32.mrf.mxu0
    %v3403 = vadd.f32 %v3379, %v3402
    %v3404 = vpop.f32.mrf.mxu0
    %v3405 = vadd.f32 %v3381, %v3404
    %3406 = vmatmul.bf16.gmra.mxu0 %v1516
    %v3407 = vpop.f32.mrf.mxu0
    %v3408 = vadd.f32 %v3384, %v3407
    %v3409 = vpop.f32.mrf.mxu0
    %v3410 = vadd.f32 %v3386, %v3409
    %3411 = vdwg.mxu0
    %3412 = vmatpush.bf16.msra.mxu0 %v2777
    %3413 = vmatpush.bf16.msra.mxu0 %v2773
    %3414 = vmatpush.bf16.msra.mxu0 %v2769
    %3415 = vmatpush.bf16.msra.mxu0 %v2765
    %3416 = vmatpush.bf16.msra.mxu0 %v2761
    %3417 = vmatpush.bf16.msra.mxu0 %v2757
    %3418 = vmatpush.bf16.msra.mxu0 %v2753
    %3419 = vmatpush.bf16.msra.mxu0 %v2749
    %3420 = vmatmul.bf16.gmra.mxu0 %v1485
    %v3421 = vpop.f32.mrf.mxu0
    %v3422 = vadd.f32 %v3398, %v3421
    %v3423 = vpop.f32.mrf.mxu0
    %v3424 = vadd.f32 %v3400, %v3423
    %3425 = vmatmul.bf16.gmra.mxu0 %v1489
    %v3426 = vpop.f32.mrf.mxu0
    %v3427 = vadd.f32 %v3403, %v3426
    %v3428 = vpop.f32.mrf.mxu0
    %v3429 = vadd.f32 %v3405, %v3428
    %3430 = vmatmul.bf16.gmra.mxu0 %v1520
    %v3431 = vpop.f32.mrf.mxu0
    %v3432 = vadd.f32 %v3408, %v3431
    %v3433 = vpop.f32.mrf.mxu0
    %v3434 = vadd.f32 %v3410, %v3433
    %3435 = vdwg.mxu0
    %3436 = vmatpush.bf16.msra.mxu0 %v2809
    %3437 = vmatpush.bf16.msra.mxu0 %v2805
    %3438 = vmatpush.bf16.msra.mxu0 %v2801
    %3439 = vmatpush.bf16.msra.mxu0 %v2797
    %3440 = vmatpush.bf16.msra.mxu0 %v2793
    %3441 = vmatpush.bf16.msra.mxu0 %v2789
    %3442 = vmatpush.bf16.msra.mxu0 %v2785
    %3443 = vmatpush.bf16.msra.mxu0 %v2781
    %3444 = vmatmul.bf16.gmra.mxu0 %v1486
    %v3445 = vpop.f32.mrf.mxu0
    %v3446 = vadd.f32 %v3422, %v3445
    %v3447 = vpop.f32.mrf.mxu0
    %v3448 = vadd.f32 %v3424, %v3447
    %3449 = vmatmul.bf16.gmra.mxu0 %v1490
    %v3450 = vpop.f32.mrf.mxu0
    %v3451 = vadd.f32 %v3427, %v3450
    %v3452 = vpop.f32.mrf.mxu0
    %v3453 = vadd.f32 %v3429, %v3452
    %3454 = vmatmul.bf16.gmra.mxu0 %v1524
    %v3455 = vpop.f32.mrf.mxu0
    %v3456 = vadd.f32 %v3432, %v3455
    %v3457 = vpop.f32.mrf.mxu0
    %v3458 = vadd.f32 %v3434, %v3457
    %3459 = vdwg.mxu0
    %3460 = vmatpush.bf16.msra.mxu0 %v2841
    %3461 = vmatpush.bf16.msra.mxu0 %v2837
    %3462 = vmatpush.bf16.msra.mxu0 %v2833
    %3463 = vmatpush.bf16.msra.mxu0 %v2829
    %3464 = vmatpush.bf16.msra.mxu0 %v2825
    %3465 = vmatpush.bf16.msra.mxu0 %v2821
    %3466 = vmatpush.bf16.msra.mxu0 %v2817
    %3467 = vmatpush.bf16.msra.mxu0 %v2813
    %3468 = vmatmul.bf16.gmra.mxu0 %v1487
    %v3469 = vpop.f32.mrf.mxu0
    %v3470 = vadd.f32 %v3446, %v3469
    %v3471 = vpop.f32.mrf.mxu0
    %v3472 = vadd.f32 %v3448, %v3471
    %3473 = vmatmul.bf16.gmra.mxu0 %v1491
    %v3474 = vpop.f32.mrf.mxu0
    %v3475 = vadd.f32 %v3451, %v3474
    %v3476 = vpop.f32.mrf.mxu0
    %v3477 = vadd.f32 %v3453, %v3476
    %3478 = vmatmul.bf16.gmra.mxu0 %v1528
    %v3479 = vpop.f32.mrf.mxu0
    %v3480 = vadd.f32 %v3456, %v3479
    %v3481 = vpop.f32.mrf.mxu0
    %v3482 = vadd.f32 %v3458, %v3481
    %3483 = vdwg.mxu0
    %3484 = vmatpush.bf16.msra.mxu0 %v2618
    %3485 = vmatpush.bf16.msra.mxu0 %v2614
    %3486 = vmatpush.bf16.msra.mxu0 %v2610
    %3487 = vmatpush.bf16.msra.mxu0 %v2606
    %3488 = vmatpush.bf16.msra.mxu0 %v2602
    %3489 = vmatpush.bf16.msra.mxu0 %v2598
    %3490 = vmatpush.bf16.msra.mxu0 %v2594
    %3491 = vmatpush.bf16.msra.mxu0 %v2590
    %3492 = vmatmul.bf16.gmra.mxu0 %v1530
    %v3493 = vpop.f32.mrf.mxu0
    %v3494 = vadd.f32 %v1814, %v3493
    %v3495 = vpop.f32.mrf.mxu0
    %v3496 = vadd.f32 %v1814, %v3495
    %3497 = vmatmul.bf16.gmra.mxu0 %v1534
    %v3498 = vpop.f32.mrf.mxu0
    %v3499 = vadd.f32 %v1814, %v3498
    %v3500 = vpop.f32.mrf.mxu0
    %v3501 = vadd.f32 %v1814, %v3500
    %3502 = vmatmul.bf16.gmra.mxu0 %v1538
    %v3503 = vpop.f32.mrf.mxu0
    %v3504 = vadd.f32 %v1814, %v3503
    %v3505 = vpop.f32.mrf.mxu0
    %v3506 = vadd.f32 %v1814, %v3505
    %3507 = vdwg.mxu0
    %3508 = vmatpush.bf16.msra.mxu0 %v2650
    %3509 = vmatpush.bf16.msra.mxu0 %v2646
    %3510 = vmatpush.bf16.msra.mxu0 %v2642
    %3511 = vmatpush.bf16.msra.mxu0 %v2638
    %3512 = vmatpush.bf16.msra.mxu0 %v2634
    %3513 = vmatpush.bf16.msra.mxu0 %v2630
    %3514 = vmatpush.bf16.msra.mxu0 %v2626
    %3515 = vmatpush.bf16.msra.mxu0 %v2622
    %3516 = vmatmul.bf16.gmra.mxu0 %v1531
    %v3517 = vpop.f32.mrf.mxu0
    %v3518 = vadd.f32 %v3494, %v3517
    %v3519 = vpop.f32.mrf.mxu0
    %v3520 = vadd.f32 %v3496, %v3519
    %3521 = vmatmul.bf16.gmra.mxu0 %v1535
    %v3522 = vpop.f32.mrf.mxu0
    %v3523 = vadd.f32 %v3499, %v3522
    %v3524 = vpop.f32.mrf.mxu0
    %v3525 = vadd.f32 %v3501, %v3524
    %3526 = vmatmul.bf16.gmra.mxu0 %v1539
    %v3527 = vpop.f32.mrf.mxu0
    %v3528 = vadd.f32 %v3504, %v3527
    %v3529 = vpop.f32.mrf.mxu0
    %v3530 = vadd.f32 %v3506, %v3529
    %3531 = vdwg.mxu0
    %3532 = vmatpush.bf16.msra.mxu0 %v2682
    %3533 = vmatpush.bf16.msra.mxu0 %v2678
    %3534 = vmatpush.bf16.msra.mxu0 %v2674
    %3535 = vmatpush.bf16.msra.mxu0 %v2670
    %3536 = vmatpush.bf16.msra.mxu0 %v2666
    %3537 = vmatpush.bf16.msra.mxu0 %v2662
    %3538 = vmatpush.bf16.msra.mxu0 %v2658
    %3539 = vmatpush.bf16.msra.mxu0 %v2654
    %3540 = vmatmul.bf16.gmra.mxu0 %v1532
    %v3541 = vpop.f32.mrf.mxu0
    %v3542 = vadd.f32 %v3518, %v3541
    %v3543 = vpop.f32.mrf.mxu0
    %v3544 = vadd.f32 %v3520, %v3543
    %3545 = vmatmul.bf16.gmra.mxu0 %v1536
    %v3546 = vpop.f32.mrf.mxu0
    %v3547 = vadd.f32 %v3523, %v3546
    %v3548 = vpop.f32.mrf.mxu0
    %v3549 = vadd.f32 %v3525, %v3548
    %3550 = vmatmul.bf16.gmra.mxu0 %v1540
    %v3551 = vpop.f32.mrf.mxu0
    %v3552 = vadd.f32 %v3528, %v3551
    %v3553 = vpop.f32.mrf.mxu0
    %v3554 = vadd.f32 %v3530, %v3553
    %3555 = vdwg.mxu0
    %3556 = vmatpush.bf16.msra.mxu0 %v2714
    %3557 = vmatpush.bf16.msra.mxu0 %v2710
    %3558 = vmatpush.bf16.msra.mxu0 %v2706
    %3559 = vmatpush.bf16.msra.mxu0 %v2702
    %3560 = vmatpush.bf16.msra.mxu0 %v2698
    %3561 = vmatpush.bf16.msra.mxu0 %v2694
    %3562 = vmatpush.bf16.msra.mxu0 %v2690
    %3563 = vmatpush.bf16.msra.mxu0 %v2686
    %3564 = vmatmul.bf16.gmra.mxu0 %v1533
    %v3565 = vpop.f32.mrf.mxu0
    %v3566 = vadd.f32 %v3542, %v3565
    %v3567 = vpop.f32.mrf.mxu0
    %v3568 = vadd.f32 %v3544, %v3567
    %3569 = vmatmul.bf16.gmra.mxu0 %v1537
    %v3570 = vpop.f32.mrf.mxu0
    %v3571 = vadd.f32 %v3547, %v3570
    %v3572 = vpop.f32.mrf.mxu0
    %v3573 = vadd.f32 %v3549, %v3572
    %3574 = vmatmul.bf16.gmra.mxu0 %v1541
    %v3575 = vpop.f32.mrf.mxu0
    %v3576 = vadd.f32 %v3552, %v3575
    %v3577 = vpop.f32.mrf.mxu0
    %v3578 = vadd.f32 %v3554, %v3577
    %3579 = vdwg.mxu0
    %3580 = vmatpush.bf16.msra.mxu0 %v2746
    %3581 = vmatpush.bf16.msra.mxu0 %v2742
    %3582 = vmatpush.bf16.msra.mxu0 %v2738
    %3583 = vmatpush.bf16.msra.mxu0 %v2734
    %3584 = vmatpush.bf16.msra.mxu0 %v2730
    %3585 = vmatpush.bf16.msra.mxu0 %v2726
    %3586 = vmatpush.bf16.msra.mxu0 %v2722
    %3587 = vmatpush.bf16.msra.mxu0 %v2718
    %3588 = vmatmul.bf16.gmra.mxu0 %v1484
    %v3589 = vpop.f32.mrf.mxu0
    %v3590 = vadd.f32 %v3566, %v3589
    %v3591 = vpop.f32.mrf.mxu0
    %v3592 = vadd.f32 %v3568, %v3591
    %3593 = vmatmul.bf16.gmra.mxu0 %v1488
    %v3594 = vpop.f32.mrf.mxu0
    %v3595 = vadd.f32 %v3571, %v3594
    %v3596 = vpop.f32.mrf.mxu0
    %v3597 = vadd.f32 %v3573, %v3596
    %3598 = vmatmul.bf16.gmra.mxu0 %v1516
    %v3599 = vpop.f32.mrf.mxu0
    %v3600 = vadd.f32 %v3576, %v3599
    %v3601 = vpop.f32.mrf.mxu0
    %v3602 = vadd.f32 %v3578, %v3601
    %3603 = vdwg.mxu0
    %3604 = vmatpush.bf16.msra.mxu0 %v2778
    %3605 = vmatpush.bf16.msra.mxu0 %v2774
    %3606 = vmatpush.bf16.msra.mxu0 %v2770
    %3607 = vmatpush.bf16.msra.mxu0 %v2766
    %3608 = vmatpush.bf16.msra.mxu0 %v2762
    %3609 = vmatpush.bf16.msra.mxu0 %v2758
    %3610 = vmatpush.bf16.msra.mxu0 %v2754
    %3611 = vmatpush.bf16.msra.mxu0 %v2750
    %3612 = vmatmul.bf16.gmra.mxu0 %v1485
    %v3613 = vpop.f32.mrf.mxu0
    %v3614 = vadd.f32 %v3590, %v3613
    %v3615 = vpop.f32.mrf.mxu0
    %v3616 = vadd.f32 %v3592, %v3615
    %3617 = vmatmul.bf16.gmra.mxu0 %v1489
    %v3618 = vpop.f32.mrf.mxu0
    %v3619 = vadd.f32 %v3595, %v3618
    %v3620 = vpop.f32.mrf.mxu0
    %v3621 = vadd.f32 %v3597, %v3620
    %3622 = vmatmul.bf16.gmra.mxu0 %v1520
    %v3623 = vpop.f32.mrf.mxu0
    %v3624 = vadd.f32 %v3600, %v3623
    %v3625 = vpop.f32.mrf.mxu0
    %v3626 = vadd.f32 %v3602, %v3625
    %3627 = vdwg.mxu0
    %3628 = vmatpush.bf16.msra.mxu0 %v2810
    %3629 = vmatpush.bf16.msra.mxu0 %v2806
    %3630 = vmatpush.bf16.msra.mxu0 %v2802
    %3631 = vmatpush.bf16.msra.mxu0 %v2798
    %3632 = vmatpush.bf16.msra.mxu0 %v2794
    %3633 = vmatpush.bf16.msra.mxu0 %v2790
    %3634 = vmatpush.bf16.msra.mxu0 %v2786
    %3635 = vmatpush.bf16.msra.mxu0 %v2782
    %3636 = vmatmul.bf16.gmra.mxu0 %v1486
    %v3637 = vpop.f32.mrf.mxu0
    %v3638 = vadd.f32 %v3614, %v3637
    %v3639 = vpop.f32.mrf.mxu0
    %v3640 = vadd.f32 %v3616, %v3639
    %3641 = vmatmul.bf16.gmra.mxu0 %v1490
    %v3642 = vpop.f32.mrf.mxu0
    %v3643 = vadd.f32 %v3619, %v3642
    %v3644 = vpop.f32.mrf.mxu0
    %v3645 = vadd.f32 %v3621, %v3644
    %3646 = vmatmul.bf16.gmra.mxu0 %v1524
    %v3647 = vpop.f32.mrf.mxu0
    %v3648 = vadd.f32 %v3624, %v3647
    %v3649 = vpop.f32.mrf.mxu0
    %v3650 = vadd.f32 %v3626, %v3649
    %3651 = vdwg.mxu0
    %3652 = vmatpush.bf16.msra.mxu0 %v2842
    %3653 = vmatpush.bf16.msra.mxu0 %v2838
    %3654 = vmatpush.bf16.msra.mxu0 %v2834
    %3655 = vmatpush.bf16.msra.mxu0 %v2830
    %3656 = vmatpush.bf16.msra.mxu0 %v2826
    %3657 = vmatpush.bf16.msra.mxu0 %v2822
    %3658 = vmatpush.bf16.msra.mxu0 %v2818
    %3659 = vmatpush.bf16.msra.mxu0 %v2814
    %3660 = vmatmul.bf16.gmra.mxu0 %v1487
    %v3661 = vpop.f32.mrf.mxu0
    %v3662 = vadd.f32 %v3638, %v3661
    %v3663 = vpop.f32.mrf.mxu0
    %v3664 = vadd.f32 %v3640, %v3663
    %3665 = vmatmul.bf16.gmra.mxu0 %v1491
    %v3666 = vpop.f32.mrf.mxu0
    %v3667 = vadd.f32 %v3643, %v3666
    %v3668 = vpop.f32.mrf.mxu0
    %v3669 = vadd.f32 %v3645, %v3668
    %3670 = vmatmul.bf16.gmra.mxu0 %v1528
    %v3671 = vpop.f32.mrf.mxu0
    %v3672 = vadd.f32 %v3648, %v3671
    %v3673 = vpop.f32.mrf.mxu0
    %v3674 = vadd.f32 %v3650, %v3673
    %3675 = vdwg.mxu0
    %3676 = vmatpush.bf16.msra.mxu0 %v2619
    %3677 = vmatpush.bf16.msra.mxu0 %v2615
    %3678 = vmatpush.bf16.msra.mxu0 %v2611
    %3679 = vmatpush.bf16.msra.mxu0 %v2607
    %3680 = vmatpush.bf16.msra.mxu0 %v2603
    %3681 = vmatpush.bf16.msra.mxu0 %v2599
    %3682 = vmatpush.bf16.msra.mxu0 %v2595
    %3683 = vmatpush.bf16.msra.mxu0 %v2591
    %3684 = vmatmul.bf16.gmra.mxu0 %v1530
    %v3685 = vpop.f32.mrf.mxu0
    %v3686 = vadd.f32 %v1815, %v3685
    %v3687 = vpop.f32.mrf.mxu0
    %v3688 = vadd.f32 %v1815, %v3687
    %3689 = vmatmul.bf16.gmra.mxu0 %v1534
    %v3690 = vpop.f32.mrf.mxu0
    %v3691 = vadd.f32 %v1815, %v3690
    %v3692 = vpop.f32.mrf.mxu0
    %v3693 = vadd.f32 %v1815, %v3692
    %3694 = vmatmul.bf16.gmra.mxu0 %v1538
    %v3695 = vpop.f32.mrf.mxu0
    %v3696 = vadd.f32 %v1815, %v3695
    %v3697 = vpop.f32.mrf.mxu0
    %v3698 = vadd.f32 %v1815, %v3697
    %3699 = vdwg.mxu0
    %3700 = vmatpush.bf16.msra.mxu0 %v2651
    %3701 = vmatpush.bf16.msra.mxu0 %v2647
    %3702 = vmatpush.bf16.msra.mxu0 %v2643
    %3703 = vmatpush.bf16.msra.mxu0 %v2639
    %3704 = vmatpush.bf16.msra.mxu0 %v2635
    %3705 = vmatpush.bf16.msra.mxu0 %v2631
    %3706 = vmatpush.bf16.msra.mxu0 %v2627
    %3707 = vmatpush.bf16.msra.mxu0 %v2623
    %3708 = vmatmul.bf16.gmra.mxu0 %v1531
    %v3709 = vpop.f32.mrf.mxu0
    %v3710 = vadd.f32 %v3686, %v3709
    %v3711 = vpop.f32.mrf.mxu0
    %v3712 = vadd.f32 %v3688, %v3711
    %3713 = vmatmul.bf16.gmra.mxu0 %v1535
    %v3714 = vpop.f32.mrf.mxu0
    %v3715 = vadd.f32 %v3691, %v3714
    %v3716 = vpop.f32.mrf.mxu0
    %v3717 = vadd.f32 %v3693, %v3716
    %3718 = vmatmul.bf16.gmra.mxu0 %v1539
    %v3719 = vpop.f32.mrf.mxu0
    %v3720 = vadd.f32 %v3696, %v3719
    %v3721 = vpop.f32.mrf.mxu0
    %v3722 = vadd.f32 %v3698, %v3721
    %3723 = vdwg.mxu0
    %3724 = vmatpush.bf16.msra.mxu0 %v2683
    %3725 = vmatpush.bf16.msra.mxu0 %v2679
    %3726 = vmatpush.bf16.msra.mxu0 %v2675
    %3727 = vmatpush.bf16.msra.mxu0 %v2671
    %3728 = vmatpush.bf16.msra.mxu0 %v2667
    %3729 = vmatpush.bf16.msra.mxu0 %v2663
    %3730 = vmatpush.bf16.msra.mxu0 %v2659
    %3731 = vmatpush.bf16.msra.mxu0 %v2655
    %3732 = vmatmul.bf16.gmra.mxu0 %v1532
    %v3733 = vpop.f32.mrf.mxu0
    %v3734 = vadd.f32 %v3710, %v3733
    %v3735 = vpop.f32.mrf.mxu0
    %v3736 = vadd.f32 %v3712, %v3735
    %3737 = vmatmul.bf16.gmra.mxu0 %v1536
    %v3738 = vpop.f32.mrf.mxu0
    %v3739 = vadd.f32 %v3715, %v3738
    %v3740 = vpop.f32.mrf.mxu0
    %v3741 = vadd.f32 %v3717, %v3740
    %3742 = vmatmul.bf16.gmra.mxu0 %v1540
    %v3743 = vpop.f32.mrf.mxu0
    %v3744 = vadd.f32 %v3720, %v3743
    %v3745 = vpop.f32.mrf.mxu0
    %v3746 = vadd.f32 %v3722, %v3745
    %3747 = vdwg.mxu0
    %3748 = vmatpush.bf16.msra.mxu0 %v2715
    %3749 = vmatpush.bf16.msra.mxu0 %v2711
    %3750 = vmatpush.bf16.msra.mxu0 %v2707
    %3751 = vmatpush.bf16.msra.mxu0 %v2703
    %3752 = vmatpush.bf16.msra.mxu0 %v2699
    %3753 = vmatpush.bf16.msra.mxu0 %v2695
    %3754 = vmatpush.bf16.msra.mxu0 %v2691
    %3755 = vmatpush.bf16.msra.mxu0 %v2687
    %3756 = vmatmul.bf16.gmra.mxu0 %v1533
    %v3757 = vpop.f32.mrf.mxu0
    %v3758 = vadd.f32 %v3734, %v3757
    %v3759 = vpop.f32.mrf.mxu0
    %v3760 = vadd.f32 %v3736, %v3759
    %3761 = vmatmul.bf16.gmra.mxu0 %v1537
    %v3762 = vpop.f32.mrf.mxu0
    %v3763 = vadd.f32 %v3739, %v3762
    %v3764 = vpop.f32.mrf.mxu0
    %v3765 = vadd.f32 %v3741, %v3764
    %3766 = vmatmul.bf16.gmra.mxu0 %v1541
    %v3767 = vpop.f32.mrf.mxu0
    %v3768 = vadd.f32 %v3744, %v3767
    %v3769 = vpop.f32.mrf.mxu0
    %v3770 = vadd.f32 %v3746, %v3769
    %3771 = vdwg.mxu0
    %3772 = vmatpush.bf16.msra.mxu0 %v2747
    %3773 = vmatpush.bf16.msra.mxu0 %v2743
    %3774 = vmatpush.bf16.msra.mxu0 %v2739
    %3775 = vmatpush.bf16.msra.mxu0 %v2735
    %3776 = vmatpush.bf16.msra.mxu0 %v2731
    %3777 = vmatpush.bf16.msra.mxu0 %v2727
    %3778 = vmatpush.bf16.msra.mxu0 %v2723
    %3779 = vmatpush.bf16.msra.mxu0 %v2719
    %3780 = vmatmul.bf16.gmra.mxu0 %v1484
    %v3781 = vpop.f32.mrf.mxu0
    %v3782 = vadd.f32 %v3758, %v3781
    %v3783 = vpop.f32.mrf.mxu0
    %v3784 = vadd.f32 %v3760, %v3783
    %3785 = vmatmul.bf16.gmra.mxu0 %v1488
    %v3786 = vpop.f32.mrf.mxu0
    %v3787 = vadd.f32 %v3763, %v3786
    %v3788 = vpop.f32.mrf.mxu0
    %v3789 = vadd.f32 %v3765, %v3788
    %3790 = vmatmul.bf16.gmra.mxu0 %v1516
    %v3791 = vpop.f32.mrf.mxu0
    %v3792 = vadd.f32 %v3768, %v3791
    %v3793 = vpop.f32.mrf.mxu0
    %v3794 = vadd.f32 %v3770, %v3793
    %3795 = vdwg.mxu0
    %3796 = vmatpush.bf16.msra.mxu0 %v2779
    %3797 = vmatpush.bf16.msra.mxu0 %v2775
    %3798 = vmatpush.bf16.msra.mxu0 %v2771
    %3799 = vmatpush.bf16.msra.mxu0 %v2767
    %3800 = vmatpush.bf16.msra.mxu0 %v2763
    %3801 = vmatpush.bf16.msra.mxu0 %v2759
    %3802 = vmatpush.bf16.msra.mxu0 %v2755
    %3803 = vmatpush.bf16.msra.mxu0 %v2751
    %3804 = vmatmul.bf16.gmra.mxu0 %v1485
    %v3805 = vpop.f32.mrf.mxu0
    %v3806 = vadd.f32 %v3782, %v3805
    %v3807 = vpop.f32.mrf.mxu0
    %v3808 = vadd.f32 %v3784, %v3807
    %3809 = vmatmul.bf16.gmra.mxu0 %v1489
    %v3810 = vpop.f32.mrf.mxu0
    %v3811 = vadd.f32 %v3787, %v3810
    %v3812 = vpop.f32.mrf.mxu0
    %v3813 = vadd.f32 %v3789, %v3812
    %3814 = vmatmul.bf16.gmra.mxu0 %v1520
    %v3815 = vpop.f32.mrf.mxu0
    %v3816 = vadd.f32 %v3792, %v3815
    %v3817 = vpop.f32.mrf.mxu0
    %v3818 = vadd.f32 %v3794, %v3817
    %3819 = vdwg.mxu0
    %3820 = vmatpush.bf16.msra.mxu0 %v2811
    %3821 = vmatpush.bf16.msra.mxu0 %v2807
    %3822 = vmatpush.bf16.msra.mxu0 %v2803
    %3823 = vmatpush.bf16.msra.mxu0 %v2799
    %3824 = vmatpush.bf16.msra.mxu0 %v2795
    %3825 = vmatpush.bf16.msra.mxu0 %v2791
    %3826 = vmatpush.bf16.msra.mxu0 %v2787
    %3827 = vmatpush.bf16.msra.mxu0 %v2783
    %3828 = vmatmul.bf16.gmra.mxu0 %v1486
    %v3829 = vpop.f32.mrf.mxu0
    %v3830 = vadd.f32 %v3806, %v3829
    %v3831 = vpop.f32.mrf.mxu0
    %v3832 = vadd.f32 %v3808, %v3831
    %3833 = vmatmul.bf16.gmra.mxu0 %v1490
    %v3834 = vpop.f32.mrf.mxu0
    %v3835 = vadd.f32 %v3811, %v3834
    %v3836 = vpop.f32.mrf.mxu0
    %v3837 = vadd.f32 %v3813, %v3836
    %3838 = vmatmul.bf16.gmra.mxu0 %v1524
    %v3839 = vpop.f32.mrf.mxu0
    %v3840 = vadd.f32 %v3816, %v3839
    %v3841 = vpop.f32.mrf.mxu0
    %v3842 = vadd.f32 %v3818, %v3841
    %3843 = vdwg.mxu0
    %3844 = vmatpush.bf16.msra.mxu0 %v2843
    %3845 = vmatpush.bf16.msra.mxu0 %v2839
    %3846 = vmatpush.bf16.msra.mxu0 %v2835
    %3847 = vmatpush.bf16.msra.mxu0 %v2831
    %3848 = vmatpush.bf16.msra.mxu0 %v2827
    %3849 = vmatpush.bf16.msra.mxu0 %v2823
    %3850 = vmatpush.bf16.msra.mxu0 %v2819
    %3851 = vmatpush.bf16.msra.mxu0 %v2815
    %3852 = vmatmul.bf16.gmra.mxu0 %v1487
    %v3853 = vpop.f32.mrf.mxu0
    %v3854 = vadd.f32 %v3830, %v3853
    %v3855 = vpop.f32.mrf.mxu0
    %v3856 = vadd.f32 %v3832, %v3855
    %3857 = vmatmul.bf16.gmra.mxu0 %v1491
    %v3858 = vpop.f32.mrf.mxu0
    %v3859 = vadd.f32 %v3835, %v3858
    %v3860 = vpop.f32.mrf.mxu0
    %v3861 = vadd.f32 %v3837, %v3860
    %3862 = vmatmul.bf16.gmra.mxu0 %v1528
    %v3863 = vpop.f32.mrf.mxu0
    %v3864 = vadd.f32 %v3840, %v3863
    %v3865 = vpop.f32.mrf.mxu0
    %v3866 = vadd.f32 %v3842, %v3865
    %3867 = vdwg.mxu0
    %v3868 = vmax.f32 %v3278, 0.0
    %v3869 = vmax.f32 %v3470, 0.0
    %v3870 = vmax.f32 %v3662, 0.0
    %v3871 = vmax.f32 %v3854, 0.0
    %v3872 = vmax.f32 %v3280, 0.0
    %v3873 = vmax.f32 %v3472, 0.0
    %v3874 = vmax.f32 %v3664, 0.0
    %v3875 = vmax.f32 %v3856, 0.0
    %v3876 = vmax.f32 %v3283, 0.0
    %v3877 = vmax.f32 %v3475, 0.0
    %v3878 = vmax.f32 %v3667, 0.0
    %v3879 = vmax.f32 %v3859, 0.0
    %v3880 = vmax.f32 %v3285, 0.0
    %v3881 = vmax.f32 %v3477, 0.0
    %v3882 = vmax.f32 %v3669, 0.0
    %v3883 = vmax.f32 %v3861, 0.0
    %v3884 = vmax.f32 %v3288, 0.0
    %v3885 = vmax.f32 %v3480, 0.0
    %v3886 = vmax.f32 %v3672, 0.0
    %v3887 = vmax.f32 %v3864, 0.0
    %v3888 = vmax.f32 %v3290, 0.0
    %v3889 = vmax.f32 %v3482, 0.0
    %v3890 = vmax.f32 %v3674, 0.0
    %v3891 = vmax.f32 %v3866, 0.0
    %v3892 = vpack.c.bf16 %v3869, %v3868
    %v3893 = vpack.c.bf16 %v3871, %v3870
    %v3894 = vpack.c.bf16 %v3873, %v3872
    %v3895 = vpack.c.bf16 %v3875, %v3874
    %v3896 = vpack.c.bf16 %v3877, %v3876
    %v3897 = vpack.c.bf16 %v3879, %v3878
    %v3898 = vpack.c.bf16 %v3881, %v3880
    %v3899 = vpack.c.bf16 %v3883, %v3882
    %v3900 = vpack.c.bf16 %v3885, %v3884
    %v3901 = vpack.c.bf16 %v3887, %v3886
    %v3902 = vpack.c.bf16 %v3889, %v3888
    %v3903 = vpack.c.bf16 %v3891, %v3890
    %v3914 = vunpack.c.l.b16 %v3894
    %v3915 = vunpack.c.h.b16 %v3894
    %v3916 = vunpack.c.l.b16 %v3895
    %v3917 = vunpack.c.h.b16 %v3895
    %v3918 = vunpack.c.l.b16 %v3896
    %v3919 = vunpack.c.h.b16 %v3896
    %v3920 = vunpack.c.l.b16 %v3897
    %v3921 = vunpack.c.h.b16 %v3897
    %v3922 = vunpack.c.l.b16 %v3898
    %v3923 = vunpack.c.h.b16 %v3898
    %v3924 = vunpack.c.l.b16 %v3899
    %v3925 = vunpack.c.h.b16 %v3899
    %v3926 = vunpack.c.l.b16 %v3900
    %v3927 = vunpack.c.h.b16 %v3900
    %v3928 = vunpack.c.l.b16 %v3901
    %v3929 = vunpack.c.h.b16 %v3901
    %v3930 = vunpack.c.l.b16 %v3902
    %v3931 = vunpack.c.h.b16 %v3902
    %v3932 = vunpack.c.l.b16 %v3903
    %v3933 = vunpack.c.h.b16 %v3903
    %v3934 = vpack.c.b16 %v3918, %v3914
    %v3935 = vpack.c.b16 %v3919, %v3915
    %v3936 = vpack.c.b16 %v3920, %v3916
    %v3937 = vpack.c.b16 %v3921, %v3917
    %v3938 = vpack.c.b16 %v3926, %v3922
    %v3939 = vpack.c.b16 %v3927, %v3923
    %v3940 = vpack.c.b16 %v3928, %v3924
    %v3941 = vpack.c.b16 %v3929, %v3925
    %v3942 = vpack.c.b16 %v3930, %v3930
    %v3943 = vpack.c.b16 %v3931, %v3931
    %v3944 = vpack.c.b16 %v3932, %v3932
    %v3945 = vpack.c.b16 %v3933, %v3933
    %v3956 = vunpack.c.l.b16 %v3892
    %v3957 = vunpack.c.h.b16 %v3892
    %v3958 = vunpack.c.l.b16 %v3893
    %v3959 = vunpack.c.h.b16 %v3893
    %v3960 = vpack.c.b16 %v3956, %v3956
    %v3961 = vpack.c.b16 %v3957, %v3957
    %v3962 = vpack.c.b16 %v3958, %v3958
    %v3963 = vpack.c.b16 %v3959, %v3959
    %v3966 = vsel %vm235, %v3942, %v3960
    %v3970 = vsel %vm235, %v3943, %v3961
    %v3974 = vsel %vm235, %v3944, %v3962
    %v3978 = vsel %vm235, %v3945, %v3963
    %v3980 = vpack.c.b16 %v3914, %v3956
    %v3981 = vpack.c.b16 %v3915, %v3957
    %v3982 = vpack.c.b16 %v3916, %v3958
    %v3983 = vpack.c.b16 %v3917, %v3959
    %v3984 = vpack.c.b16 %v3922, %v3918
    %v3985 = vpack.c.b16 %v3923, %v3919
    %v3986 = vpack.c.b16 %v3924, %v3920
    %v3987 = vpack.c.b16 %v3925, %v3921
    %v3988 = vpack.c.b16 %v3930, %v3926
    %v3989 = vpack.c.b16 %v3931, %v3927
    %v3990 = vpack.c.b16 %v3932, %v3928
    %v3991 = vpack.c.b16 %v3933, %v3929
    %v4004 = vld [vmem:[#allocation4] sm:$0xff]
    %v4005 = vld [vmem:[#allocation4 + $0x8] sm:$0xff]
    %v4006 = vld [vmem:[#allocation4 + $0x10] sm:$0xff]
    %v4007 = vld [vmem:[#allocation4 + $0x18] sm:$0xff]
    %v4008 = vld [vmem:[#allocation4 + $0x20] sm:$0xff]
    %v4009 = vld [vmem:[#allocation4 + $0x28] sm:$0xff]
    %v4010 = vld [vmem:[#allocation4 + $0x30] sm:$0xff]
    %v4011 = vld [vmem:[#allocation4 + $0x38] sm:$0xff]
    %v4012 = vld [vmem:[#allocation4 + $0x40] sm:$0xff]
    %v4013 = vld [vmem:[#allocation4 + $0x48] sm:$0xff]
    %v4014 = vld [vmem:[#allocation4 + $0x50] sm:$0xff]
    %v4015 = vld [vmem:[#allocation4 + $0x58] sm:$0xff]
    %v4016 = vld [vmem:[#allocation4 + $0x60] sm:$0xff]
    %v4017 = vld [vmem:[#allocation4 + $0x68] sm:$0xff]
    %v4018 = vld [vmem:[#allocation4 + $0x70] sm:$0xff]
    %v4019 = vld [vmem:[#allocation4 + $0x78] sm:$0xff]
    %v4020 = vld [vmem:[#allocation4 + $0x80] sm:$0xff]
    %v4021 = vld [vmem:[#allocation4 + $0x88] sm:$0xff]
    %v4022 = vld [vmem:[#allocation4 + $0x90] sm:$0xff]
    %v4023 = vld [vmem:[#allocation4 + $0x98] sm:$0xff]
    %v4024 = vld [vmem:[#allocation4 + $0xa0] sm:$0xff]
    %v4025 = vld [vmem:[#allocation4 + $0xa8] sm:$0xff]
    %v4026 = vld [vmem:[#allocation4 + $0xb0] sm:$0xff]
    %v4027 = vld [vmem:[#allocation4 + $0xb8] sm:$0xff]
    %v4028 = vld [vmem:[#allocation4 + $0xc0] sm:$0xff]
    %v4029 = vld [vmem:[#allocation4 + $0xc8] sm:$0xff]
    %v4030 = vld [vmem:[#allocation4 + $0xd0] sm:$0xff]
    %v4031 = vld [vmem:[#allocation4 + $0xd8] sm:$0xff]
    %v4032 = vld [vmem:[#allocation4 + $0xe0] sm:$0xff]
    %v4033 = vld [vmem:[#allocation4 + $0xe8] sm:$0xff]
    %v4034 = vld [vmem:[#allocation4 + $0xf0] sm:$0xff]
    %v4035 = vld [vmem:[#allocation4 + $0xf8] sm:$0xff]
    %v4036 = vld [vmem:[#allocation4 + $0x100] sm:$0xff]
    %v4037 = vld [vmem:[#allocation4 + $0x108] sm:$0xff]
    %v4038 = vld [vmem:[#allocation4 + $0x110] sm:$0xff]
    %v4039 = vld [vmem:[#allocation4 + $0x118] sm:$0xff]
    %v4040 = vld [vmem:[#allocation4 + $0x120] sm:$0xff]
    %v4041 = vld [vmem:[#allocation4 + $0x128] sm:$0xff]
    %v4042 = vld [vmem:[#allocation4 + $0x130] sm:$0xff]
    %v4043 = vld [vmem:[#allocation4 + $0x138] sm:$0xff]
    %v4044 = vld [vmem:[#allocation4 + $0x140] sm:$0xff]
    %v4045 = vld [vmem:[#allocation4 + $0x148] sm:$0xff]
    %v4046 = vld [vmem:[#allocation4 + $0x150] sm:$0xff]
    %v4047 = vld [vmem:[#allocation4 + $0x158] sm:$0xff]
    %v4048 = vld [vmem:[#allocation4 + $0x160] sm:$0xff]
    %v4049 = vld [vmem:[#allocation4 + $0x168] sm:$0xff]
    %v4050 = vld [vmem:[#allocation4 + $0x170] sm:$0xff]
    %v4051 = vld [vmem:[#allocation4 + $0x178] sm:$0xff]
    %v4052 = vld [vmem:[#allocation4 + $0x180] sm:$0xff]
    %v4053 = vld [vmem:[#allocation4 + $0x188] sm:$0xff]
    %v4054 = vld [vmem:[#allocation4 + $0x190] sm:$0xff]
    %v4055 = vld [vmem:[#allocation4 + $0x198] sm:$0xff]
    %v4056 = vld [vmem:[#allocation4 + $0x1a0] sm:$0xff]
    %v4057 = vld [vmem:[#allocation4 + $0x1a8] sm:$0xff]
    %v4058 = vld [vmem:[#allocation4 + $0x1b0] sm:$0xff]
    %v4059 = vld [vmem:[#allocation4 + $0x1b8] sm:$0xff]
    %v4060 = vld [vmem:[#allocation4 + $0x1c0] sm:$0xff]
    %v4061 = vld [vmem:[#allocation4 + $0x1c8] sm:$0xff]
    %v4062 = vld [vmem:[#allocation4 + $0x1d0] sm:$0xff]
    %v4063 = vld [vmem:[#allocation4 + $0x1d8] sm:$0xff]
    %v4064 = vld [vmem:[#allocation4 + $0x1e0] sm:$0xff]
    %v4065 = vld [vmem:[#allocation4 + $0x1e8] sm:$0xff]
    %v4066 = vld [vmem:[#allocation4 + $0x1f0] sm:$0xff]
    %v4067 = vld [vmem:[#allocation4 + $0x1f8] sm:$0xff]
    %v4068 = vld [vmem:[#allocation4 + $0x200] sm:$0xff]
    %v4069 = vld [vmem:[#allocation4 + $0x208] sm:$0xff]
    %v4070 = vld [vmem:[#allocation4 + $0x210] sm:$0xff]
    %v4071 = vld [vmem:[#allocation4 + $0x218] sm:$0xff]
    %v4072 = vld [vmem:[#allocation4 + $0x220] sm:$0xff]
    %v4073 = vld [vmem:[#allocation4 + $0x228] sm:$0xff]
    %v4074 = vld [vmem:[#allocation4 + $0x230] sm:$0xff]
    %v4075 = vld [vmem:[#allocation4 + $0x238] sm:$0xff]
    %v4076 = vld [vmem:[#allocation4 + $0x240] sm:$0xff]
    %v4077 = vld [vmem:[#allocation4 + $0x248] sm:$0xff]
    %v4078 = vld [vmem:[#allocation4 + $0x250] sm:$0xff]
    %v4079 = vld [vmem:[#allocation4 + $0x258] sm:$0xff]
    %v4080 = vld [vmem:[#allocation4 + $0x260] sm:$0xff]
    %v4081 = vld [vmem:[#allocation4 + $0x268] sm:$0xff]
    %v4082 = vld [vmem:[#allocation4 + $0x270] sm:$0xff]
    %v4083 = vld [vmem:[#allocation4 + $0x278] sm:$0xff]
    %v4084 = vld [vmem:[#allocation4 + $0x280] sm:$0xff]
    %v4085 = vld [vmem:[#allocation4 + $0x288] sm:$0xff]
    %v4086 = vld [vmem:[#allocation4 + $0x290] sm:$0xff]
    %v4087 = vld [vmem:[#allocation4 + $0x298] sm:$0xff]
    %v4088 = vld [vmem:[#allocation4 + $0x2a0] sm:$0xff]
    %v4089 = vld [vmem:[#allocation4 + $0x2a8] sm:$0xff]
    %v4090 = vld [vmem:[#allocation4 + $0x2b0] sm:$0xff]
    %v4091 = vld [vmem:[#allocation4 + $0x2b8] sm:$0xff]
    %v4092 = vld [vmem:[#allocation4 + $0x2c0] sm:$0xff]
    %v4093 = vld [vmem:[#allocation4 + $0x2c8] sm:$0xff]
    %v4094 = vld [vmem:[#allocation4 + $0x2d0] sm:$0xff]
    %v4095 = vld [vmem:[#allocation4 + $0x2d8] sm:$0xff]
    %v4096 = vld [vmem:[#allocation4 + $0x2e0] sm:$0xff]
    %v4097 = vld [vmem:[#allocation4 + $0x2e8] sm:$0xff]
    %v4098 = vld [vmem:[#allocation4 + $0x2f0] sm:$0xff]
    %v4099 = vld [vmem:[#allocation4 + $0x2f8] sm:$0xff]
    %v4100 = vld [vmem:[#allocation4 + $0x300] sm:$0xff]
    %v4101 = vld [vmem:[#allocation4 + $0x308] sm:$0xff]
    %v4102 = vld [vmem:[#allocation4 + $0x310] sm:$0xff]
    %v4103 = vld [vmem:[#allocation4 + $0x318] sm:$0xff]
    %v4104 = vld [vmem:[#allocation4 + $0x320] sm:$0xff]
    %v4105 = vld [vmem:[#allocation4 + $0x328] sm:$0xff]
    %v4106 = vld [vmem:[#allocation4 + $0x330] sm:$0xff]
    %v4107 = vld [vmem:[#allocation4 + $0x338] sm:$0xff]
    %v4108 = vld [vmem:[#allocation4 + $0x340] sm:$0xff]
    %v4109 = vld [vmem:[#allocation4 + $0x348] sm:$0xff]
    %v4110 = vld [vmem:[#allocation4 + $0x350] sm:$0xff]
    %v4111 = vld [vmem:[#allocation4 + $0x358] sm:$0xff]
    %v4112 = vld [vmem:[#allocation4 + $0x360] sm:$0xff]
    %v4113 = vld [vmem:[#allocation4 + $0x368] sm:$0xff]
    %v4114 = vld [vmem:[#allocation4 + $0x370] sm:$0xff]
    %v4115 = vld [vmem:[#allocation4 + $0x378] sm:$0xff]
    %v4116 = vld [vmem:[#allocation4 + $0x380] sm:$0xff]
    %v4117 = vld [vmem:[#allocation4 + $0x388] sm:$0xff]
    %v4118 = vld [vmem:[#allocation4 + $0x390] sm:$0xff]
    %v4119 = vld [vmem:[#allocation4 + $0x398] sm:$0xff]
    %v4120 = vld [vmem:[#allocation4 + $0x3a0] sm:$0xff]
    %v4121 = vld [vmem:[#allocation4 + $0x3a8] sm:$0xff]
    %v4122 = vld [vmem:[#allocation4 + $0x3b0] sm:$0xff]
    %v4123 = vld [vmem:[#allocation4 + $0x3b8] sm:$0xff]
    %v4124 = vld [vmem:[#allocation4 + $0x3c0] sm:$0xff]
    %v4125 = vld [vmem:[#allocation4 + $0x3c8] sm:$0xff]
    %v4126 = vld [vmem:[#allocation4 + $0x3d0] sm:$0xff]
    %v4127 = vld [vmem:[#allocation4 + $0x3d8] sm:$0xff]
    %v4128 = vld [vmem:[#allocation4 + $0x3e0] sm:$0xff]
    %v4129 = vld [vmem:[#allocation4 + $0x3e8] sm:$0xff]
    %v4130 = vld [vmem:[#allocation4 + $0x3f0] sm:$0xff]
    %v4131 = vld [vmem:[#allocation4 + $0x3f8] sm:$0xff]
    %v4132 = vld [vmem:[%s7] sm:$0x3]
    %v4134 = vperm.slane %v4132, 0
    %v4135 = vperm.slane %v4132, 1
    %v4266 = vunpack.c.l.b16 %v4004
    %v4267 = vunpack.c.h.b16 %v4004
    %v4268 = vunpack.c.l.b16 %v4005
    %v4269 = vunpack.c.h.b16 %v4005
    %v4270 = vunpack.c.l.b16 %v4006
    %v4271 = vunpack.c.h.b16 %v4006
    %v4272 = vunpack.c.l.b16 %v4007
    %v4273 = vunpack.c.h.b16 %v4007
    %v4274 = vunpack.c.l.b16 %v4008
    %v4275 = vunpack.c.h.b16 %v4008
    %v4276 = vunpack.c.l.b16 %v4009
    %v4277 = vunpack.c.h.b16 %v4009
    %v4278 = vunpack.c.l.b16 %v4010
    %v4279 = vunpack.c.h.b16 %v4010
    %v4280 = vunpack.c.l.b16 %v4011
    %v4281 = vunpack.c.h.b16 %v4011
    %v4282 = vunpack.c.l.b16 %v4012
    %v4283 = vunpack.c.h.b16 %v4012
    %v4284 = vunpack.c.l.b16 %v4013
    %v4285 = vunpack.c.h.b16 %v4013
    %v4286 = vunpack.c.l.b16 %v4014
    %v4287 = vunpack.c.h.b16 %v4014
    %v4288 = vunpack.c.l.b16 %v4015
    %v4289 = vunpack.c.h.b16 %v4015
    %v4290 = vunpack.c.l.b16 %v4016
    %v4291 = vunpack.c.h.b16 %v4016
    %v4292 = vunpack.c.l.b16 %v4017
    %v4293 = vunpack.c.h.b16 %v4017
    %v4294 = vunpack.c.l.b16 %v4018
    %v4295 = vunpack.c.h.b16 %v4018
    %v4296 = vunpack.c.l.b16 %v4019
    %v4297 = vunpack.c.h.b16 %v4019
    %v4298 = vunpack.c.l.b16 %v4020
    %v4299 = vunpack.c.h.b16 %v4020
    %v4300 = vunpack.c.l.b16 %v4021
    %v4301 = vunpack.c.h.b16 %v4021
    %v4302 = vunpack.c.l.b16 %v4022
    %v4303 = vunpack.c.h.b16 %v4022
    %v4304 = vunpack.c.l.b16 %v4023
    %v4305 = vunpack.c.h.b16 %v4023
    %v4306 = vunpack.c.l.b16 %v4024
    %v4307 = vunpack.c.h.b16 %v4024
    %v4308 = vunpack.c.l.b16 %v4025
    %v4309 = vunpack.c.h.b16 %v4025
    %v4310 = vunpack.c.l.b16 %v4026
    %v4311 = vunpack.c.h.b16 %v4026
    %v4312 = vunpack.c.l.b16 %v4027
    %v4313 = vunpack.c.h.b16 %v4027
    %v4314 = vunpack.c.l.b16 %v4028
    %v4315 = vunpack.c.h.b16 %v4028
    %v4316 = vunpack.c.l.b16 %v4029
    %v4317 = vunpack.c.h.b16 %v4029
    %v4318 = vunpack.c.l.b16 %v4030
    %v4319 = vunpack.c.h.b16 %v4030
    %v4320 = vunpack.c.l.b16 %v4031
    %v4321 = vunpack.c.h.b16 %v4031
    %v4322 = vunpack.c.l.b16 %v4032
    %v4323 = vunpack.c.h.b16 %v4032
    %v4324 = vunpack.c.l.b16 %v4033
    %v4325 = vunpack.c.h.b16 %v4033
    %v4326 = vunpack.c.l.b16 %v4034
    %v4327 = vunpack.c.h.b16 %v4034
    %v4328 = vunpack.c.l.b16 %v4035
    %v4329 = vunpack.c.h.b16 %v4035
    %v4330 = vunpack.c.l.b16 %v4036
    %v4331 = vunpack.c.h.b16 %v4036
    %v4332 = vunpack.c.l.b16 %v4037
    %v4333 = vunpack.c.h.b16 %v4037
    %v4334 = vunpack.c.l.b16 %v4038
    %v4335 = vunpack.c.h.b16 %v4038
    %v4336 = vunpack.c.l.b16 %v4039
    %v4337 = vunpack.c.h.b16 %v4039
    %v4338 = vunpack.c.l.b16 %v4040
    %v4339 = vunpack.c.h.b16 %v4040
    %v4340 = vunpack.c.l.b16 %v4041
    %v4341 = vunpack.c.h.b16 %v4041
    %v4342 = vunpack.c.l.b16 %v4042
    %v4343 = vunpack.c.h.b16 %v4042
    %v4344 = vunpack.c.l.b16 %v4043
    %v4345 = vunpack.c.h.b16 %v4043
    %v4346 = vunpack.c.l.b16 %v4044
    %v4347 = vunpack.c.h.b16 %v4044
    %v4348 = vunpack.c.l.b16 %v4045
    %v4349 = vunpack.c.h.b16 %v4045
    %v4350 = vunpack.c.l.b16 %v4046
    %v4351 = vunpack.c.h.b16 %v4046
    %v4352 = vunpack.c.l.b16 %v4047
    %v4353 = vunpack.c.h.b16 %v4047
    %v4354 = vunpack.c.l.b16 %v4048
    %v4355 = vunpack.c.h.b16 %v4048
    %v4356 = vunpack.c.l.b16 %v4049
    %v4357 = vunpack.c.h.b16 %v4049
    %v4358 = vunpack.c.l.b16 %v4050
    %v4359 = vunpack.c.h.b16 %v4050
    %v4360 = vunpack.c.l.b16 %v4051
    %v4361 = vunpack.c.h.b16 %v4051
    %v4362 = vunpack.c.l.b16 %v4052
    %v4363 = vunpack.c.h.b16 %v4052
    %v4364 = vunpack.c.l.b16 %v4053
    %v4365 = vunpack.c.h.b16 %v4053
    %v4366 = vunpack.c.l.b16 %v4054
    %v4367 = vunpack.c.h.b16 %v4054
    %v4368 = vunpack.c.l.b16 %v4055
    %v4369 = vunpack.c.h.b16 %v4055
    %v4370 = vunpack.c.l.b16 %v4056
    %v4371 = vunpack.c.h.b16 %v4056
    %v4372 = vunpack.c.l.b16 %v4057
    %v4373 = vunpack.c.h.b16 %v4057
    %v4374 = vunpack.c.l.b16 %v4058
    %v4375 = vunpack.c.h.b16 %v4058
    %v4376 = vunpack.c.l.b16 %v4059
    %v4377 = vunpack.c.h.b16 %v4059
    %v4378 = vunpack.c.l.b16 %v4060
    %v4379 = vunpack.c.h.b16 %v4060
    %v4380 = vunpack.c.l.b16 %v4061
    %v4381 = vunpack.c.h.b16 %v4061
    %v4382 = vunpack.c.l.b16 %v4062
    %v4383 = vunpack.c.h.b16 %v4062
    %v4384 = vunpack.c.l.b16 %v4063
    %v4385 = vunpack.c.h.b16 %v4063
    %v4386 = vunpack.c.l.b16 %v4064
    %v4387 = vunpack.c.h.b16 %v4064
    %v4388 = vunpack.c.l.b16 %v4065
    %v4389 = vunpack.c.h.b16 %v4065
    %v4390 = vunpack.c.l.b16 %v4066
    %v4391 = vunpack.c.h.b16 %v4066
    %v4392 = vunpack.c.l.b16 %v4067
    %v4393 = vunpack.c.h.b16 %v4067
    %v4394 = vunpack.c.l.b16 %v4068
    %v4395 = vunpack.c.h.b16 %v4068
    %v4396 = vunpack.c.l.b16 %v4069
    %v4397 = vunpack.c.h.b16 %v4069
    %v4398 = vunpack.c.l.b16 %v4070
    %v4399 = vunpack.c.h.b16 %v4070
    %v4400 = vunpack.c.l.b16 %v4071
    %v4401 = vunpack.c.h.b16 %v4071
    %v4402 = vunpack.c.l.b16 %v4072
    %v4403 = vunpack.c.h.b16 %v4072
    %v4404 = vunpack.c.l.b16 %v4073
    %v4405 = vunpack.c.h.b16 %v4073
    %v4406 = vunpack.c.l.b16 %v4074
    %v4407 = vunpack.c.h.b16 %v4074
    %v4408 = vunpack.c.l.b16 %v4075
    %v4409 = vunpack.c.h.b16 %v4075
    %v4410 = vunpack.c.l.b16 %v4076
    %v4411 = vunpack.c.h.b16 %v4076
    %v4412 = vunpack.c.l.b16 %v4077
    %v4413 = vunpack.c.h.b16 %v4077
    %v4414 = vunpack.c.l.b16 %v4078
    %v4415 = vunpack.c.h.b16 %v4078
    %v4416 = vunpack.c.l.b16 %v4079
    %v4417 = vunpack.c.h.b16 %v4079
    %v4418 = vunpack.c.l.b16 %v4080
    %v4419 = vunpack.c.h.b16 %v4080
    %v4420 = vunpack.c.l.b16 %v4081
    %v4421 = vunpack.c.h.b16 %v4081
    %v4422 = vunpack.c.l.b16 %v4082
    %v4423 = vunpack.c.h.b16 %v4082
    %v4424 = vunpack.c.l.b16 %v4083
    %v4425 = vunpack.c.h.b16 %v4083
    %v4426 = vunpack.c.l.b16 %v4084
    %v4427 = vunpack.c.h.b16 %v4084
    %v4428 = vunpack.c.l.b16 %v4085
    %v4429 = vunpack.c.h.b16 %v4085
    %v4430 = vunpack.c.l.b16 %v4086
    %v4431 = vunpack.c.h.b16 %v4086
    %v4432 = vunpack.c.l.b16 %v4087
    %v4433 = vunpack.c.h.b16 %v4087
    %v4434 = vunpack.c.l.b16 %v4088
    %v4435 = vunpack.c.h.b16 %v4088
    %v4436 = vunpack.c.l.b16 %v4089
    %v4437 = vunpack.c.h.b16 %v4089
    %v4438 = vunpack.c.l.b16 %v4090
    %v4439 = vunpack.c.h.b16 %v4090
    %v4440 = vunpack.c.l.b16 %v4091
    %v4441 = vunpack.c.h.b16 %v4091
    %v4442 = vunpack.c.l.b16 %v4092
    %v4443 = vunpack.c.h.b16 %v4092
    %v4444 = vunpack.c.l.b16 %v4093
    %v4445 = vunpack.c.h.b16 %v4093
    %v4446 = vunpack.c.l.b16 %v4094
    %v4447 = vunpack.c.h.b16 %v4094
    %v4448 = vunpack.c.l.b16 %v4095
    %v4449 = vunpack.c.h.b16 %v4095
    %v4450 = vunpack.c.l.b16 %v4096
    %v4451 = vunpack.c.h.b16 %v4096
    %v4452 = vunpack.c.l.b16 %v4097
    %v4453 = vunpack.c.h.b16 %v4097
    %v4454 = vunpack.c.l.b16 %v4098
    %v4455 = vunpack.c.h.b16 %v4098
    %v4456 = vunpack.c.l.b16 %v4099
    %v4457 = vunpack.c.h.b16 %v4099
    %v4458 = vunpack.c.l.b16 %v4100
    %v4459 = vunpack.c.h.b16 %v4100
    %v4460 = vunpack.c.l.b16 %v4101
    %v4461 = vunpack.c.h.b16 %v4101
    %v4462 = vunpack.c.l.b16 %v4102
    %v4463 = vunpack.c.h.b16 %v4102
    %v4464 = vunpack.c.l.b16 %v4103
    %v4465 = vunpack.c.h.b16 %v4103
    %v4466 = vunpack.c.l.b16 %v4104
    %v4467 = vunpack.c.h.b16 %v4104
    %v4468 = vunpack.c.l.b16 %v4105
    %v4469 = vunpack.c.h.b16 %v4105
    %v4470 = vunpack.c.l.b16 %v4106
    %v4471 = vunpack.c.h.b16 %v4106
    %v4472 = vunpack.c.l.b16 %v4107
    %v4473 = vunpack.c.h.b16 %v4107
    %v4474 = vunpack.c.l.b16 %v4108
    %v4475 = vunpack.c.h.b16 %v4108
    %v4476 = vunpack.c.l.b16 %v4109
    %v4477 = vunpack.c.h.b16 %v4109
    %v4478 = vunpack.c.l.b16 %v4110
    %v4479 = vunpack.c.h.b16 %v4110
    %v4480 = vunpack.c.l.b16 %v4111
    %v4481 = vunpack.c.h.b16 %v4111
    %v4482 = vunpack.c.l.b16 %v4112
    %v4483 = vunpack.c.h.b16 %v4112
    %v4484 = vunpack.c.l.b16 %v4113
    %v4485 = vunpack.c.h.b16 %v4113
    %v4486 = vunpack.c.l.b16 %v4114
    %v4487 = vunpack.c.h.b16 %v4114
    %v4488 = vunpack.c.l.b16 %v4115
    %v4489 = vunpack.c.h.b16 %v4115
    %v4490 = vunpack.c.l.b16 %v4116
    %v4491 = vunpack.c.h.b16 %v4116
    %v4492 = vunpack.c.l.b16 %v4117
    %v4493 = vunpack.c.h.b16 %v4117
    %v4494 = vunpack.c.l.b16 %v4118
    %v4495 = vunpack.c.h.b16 %v4118
    %v4496 = vunpack.c.l.b16 %v4119
    %v4497 = vunpack.c.h.b16 %v4119
    %v4498 = vunpack.c.l.b16 %v4120
    %v4499 = vunpack.c.h.b16 %v4120
    %v4500 = vunpack.c.l.b16 %v4121
    %v4501 = vunpack.c.h.b16 %v4121
    %v4502 = vunpack.c.l.b16 %v4122
    %v4503 = vunpack.c.h.b16 %v4122
    %v4504 = vunpack.c.l.b16 %v4123
    %v4505 = vunpack.c.h.b16 %v4123
    %v4506 = vunpack.c.l.b16 %v4124
    %v4507 = vunpack.c.h.b16 %v4124
    %v4508 = vunpack.c.l.b16 %v4125
    %v4509 = vunpack.c.h.b16 %v4125
    %v4510 = vunpack.c.l.b16 %v4126
    %v4511 = vunpack.c.h.b16 %v4126
    %v4512 = vunpack.c.l.b16 %v4127
    %v4513 = vunpack.c.h.b16 %v4127
    %v4514 = vunpack.c.l.b16 %v4128
    %v4515 = vunpack.c.h.b16 %v4128
    %v4516 = vunpack.c.l.b16 %v4129
    %v4517 = vunpack.c.h.b16 %v4129
    %v4518 = vunpack.c.l.b16 %v4130
    %v4519 = vunpack.c.h.b16 %v4130
    %v4520 = vunpack.c.l.b16 %v4131
    %v4521 = vunpack.c.h.b16 %v4131
    %v4522 = vpack.c.b16 %v4268, %v4266
    %v4523 = vpack.c.b16 %v4269, %v4267
    %v4524 = vpack.c.b16 %v4272, %v4270
    %v4525 = vpack.c.b16 %v4273, %v4271
    %v4526 = vpack.c.b16 %v4276, %v4274
    %v4527 = vpack.c.b16 %v4277, %v4275
    %v4528 = vpack.c.b16 %v4280, %v4278
    %v4529 = vpack.c.b16 %v4281, %v4279
    %v4530 = vpack.c.b16 %v4284, %v4282
    %v4531 = vpack.c.b16 %v4285, %v4283
    %v4532 = vpack.c.b16 %v4288, %v4286
    %v4533 = vpack.c.b16 %v4289, %v4287
    %v4534 = vpack.c.b16 %v4292, %v4290
    %v4535 = vpack.c.b16 %v4293, %v4291
    %v4536 = vpack.c.b16 %v4296, %v4294
    %v4537 = vpack.c.b16 %v4297, %v4295
    %v4538 = vpack.c.b16 %v4300, %v4298
    %v4539 = vpack.c.b16 %v4301, %v4299
    %v4540 = vpack.c.b16 %v4304, %v4302
    %v4541 = vpack.c.b16 %v4305, %v4303
    %v4542 = vpack.c.b16 %v4308, %v4306
    %v4543 = vpack.c.b16 %v4309, %v4307
    %v4544 = vpack.c.b16 %v4312, %v4310
    %v4545 = vpack.c.b16 %v4313, %v4311
    %v4546 = vpack.c.b16 %v4316, %v4314
    %v4547 = vpack.c.b16 %v4317, %v4315
    %v4548 = vpack.c.b16 %v4320, %v4318
    %v4549 = vpack.c.b16 %v4321, %v4319
    %v4550 = vpack.c.b16 %v4324, %v4322
    %v4551 = vpack.c.b16 %v4325, %v4323
    %v4552 = vpack.c.b16 %v4328, %v4326
    %v4553 = vpack.c.b16 %v4329, %v4327
    %v4554 = vpack.c.b16 %v4332, %v4330
    %v4555 = vpack.c.b16 %v4333, %v4331
    %v4556 = vpack.c.b16 %v4336, %v4334
    %v4557 = vpack.c.b16 %v4337, %v4335
    %v4558 = vpack.c.b16 %v4340, %v4338
    %v4559 = vpack.c.b16 %v4341, %v4339
    %v4560 = vpack.c.b16 %v4344, %v4342
    %v4561 = vpack.c.b16 %v4345, %v4343
    %v4562 = vpack.c.b16 %v4348, %v4346
    %v4563 = vpack.c.b16 %v4349, %v4347
    %v4564 = vpack.c.b16 %v4352, %v4350
    %v4565 = vpack.c.b16 %v4353, %v4351
    %v4566 = vpack.c.b16 %v4356, %v4354
    %v4567 = vpack.c.b16 %v4357, %v4355
    %v4568 = vpack.c.b16 %v4360, %v4358
    %v4569 = vpack.c.b16 %v4361, %v4359
    %v4570 = vpack.c.b16 %v4364, %v4362
    %v4571 = vpack.c.b16 %v4365, %v4363
    %v4572 = vpack.c.b16 %v4368, %v4366
    %v4573 = vpack.c.b16 %v4369, %v4367
    %v4574 = vpack.c.b16 %v4372, %v4370
    %v4575 = vpack.c.b16 %v4373, %v4371
    %v4576 = vpack.c.b16 %v4376, %v4374
    %v4577 = vpack.c.b16 %v4377, %v4375
    %v4578 = vpack.c.b16 %v4380, %v4378
    %v4579 = vpack.c.b16 %v4381, %v4379
    %v4580 = vpack.c.b16 %v4384, %v4382
    %v4581 = vpack.c.b16 %v4385, %v4383
    %v4582 = vpack.c.b16 %v4388, %v4386
    %v4583 = vpack.c.b16 %v4389, %v4387
    %v4584 = vpack.c.b16 %v4392, %v4390
    %v4585 = vpack.c.b16 %v4393, %v4391
    %v4586 = vpack.c.b16 %v4396, %v4394
    %v4587 = vpack.c.b16 %v4397, %v4395
    %v4588 = vpack.c.b16 %v4400, %v4398
    %v4589 = vpack.c.b16 %v4401, %v4399
    %v4590 = vpack.c.b16 %v4404, %v4402
    %v4591 = vpack.c.b16 %v4405, %v4403
    %v4592 = vpack.c.b16 %v4408, %v4406
    %v4593 = vpack.c.b16 %v4409, %v4407
    %v4594 = vpack.c.b16 %v4412, %v4410
    %v4595 = vpack.c.b16 %v4413, %v4411
    %v4596 = vpack.c.b16 %v4416, %v4414
    %v4597 = vpack.c.b16 %v4417, %v4415
    %v4598 = vpack.c.b16 %v4420, %v4418
    %v4599 = vpack.c.b16 %v4421, %v4419
    %v4600 = vpack.c.b16 %v4424, %v4422
    %v4601 = vpack.c.b16 %v4425, %v4423
    %v4602 = vpack.c.b16 %v4428, %v4426
    %v4603 = vpack.c.b16 %v4429, %v4427
    %v4604 = vpack.c.b16 %v4432, %v4430
    %v4605 = vpack.c.b16 %v4433, %v4431
    %v4606 = vpack.c.b16 %v4436, %v4434
    %v4607 = vpack.c.b16 %v4437, %v4435
    %v4608 = vpack.c.b16 %v4440, %v4438
    %v4609 = vpack.c.b16 %v4441, %v4439
    %v4610 = vpack.c.b16 %v4444, %v4442
    %v4611 = vpack.c.b16 %v4445, %v4443
    %v4612 = vpack.c.b16 %v4448, %v4446
    %v4613 = vpack.c.b16 %v4449, %v4447
    %v4614 = vpack.c.b16 %v4452, %v4450
    %v4615 = vpack.c.b16 %v4453, %v4451
    %v4616 = vpack.c.b16 %v4456, %v4454
    %v4617 = vpack.c.b16 %v4457, %v4455
    %v4618 = vpack.c.b16 %v4460, %v4458
    %v4619 = vpack.c.b16 %v4461, %v4459
    %v4620 = vpack.c.b16 %v4464, %v4462
    %v4621 = vpack.c.b16 %v4465, %v4463
    %v4622 = vpack.c.b16 %v4468, %v4466
    %v4623 = vpack.c.b16 %v4469, %v4467
    %v4624 = vpack.c.b16 %v4472, %v4470
    %v4625 = vpack.c.b16 %v4473, %v4471
    %v4626 = vpack.c.b16 %v4476, %v4474
    %v4627 = vpack.c.b16 %v4477, %v4475
    %v4628 = vpack.c.b16 %v4480, %v4478
    %v4629 = vpack.c.b16 %v4481, %v4479
    %v4630 = vpack.c.b16 %v4484, %v4482
    %v4631 = vpack.c.b16 %v4485, %v4483
    %v4632 = vpack.c.b16 %v4488, %v4486
    %v4633 = vpack.c.b16 %v4489, %v4487
    %v4634 = vpack.c.b16 %v4492, %v4490
    %v4635 = vpack.c.b16 %v4493, %v4491
    %v4636 = vpack.c.b16 %v4496, %v4494
    %v4637 = vpack.c.b16 %v4497, %v4495
    %v4638 = vpack.c.b16 %v4500, %v4498
    %v4639 = vpack.c.b16 %v4501, %v4499
    %v4640 = vpack.c.b16 %v4504, %v4502
    %v4641 = vpack.c.b16 %v4505, %v4503
    %v4642 = vpack.c.b16 %v4508, %v4506
    %v4643 = vpack.c.b16 %v4509, %v4507
    %v4644 = vpack.c.b16 %v4512, %v4510
    %v4645 = vpack.c.b16 %v4513, %v4511
    %v4646 = vpack.c.b16 %v4516, %v4514
    %v4647 = vpack.c.b16 %v4517, %v4515
    %v4648 = vpack.c.b16 %v4520, %v4518
    %v4649 = vpack.c.b16 %v4521, %v4519
    %4778 = vmatpush.bf16.msra.mxu0 %v4536
    %4779 = vmatpush.bf16.msra.mxu0 %v4534
    %4780 = vmatpush.bf16.msra.mxu0 %v4532
    %4781 = vmatpush.bf16.msra.mxu0 %v4530
    %4782 = vmatpush.bf16.msra.mxu0 %v4528
    %4783 = vmatpush.bf16.msra.mxu0 %v4526
    %4784 = vmatpush.bf16.msra.mxu0 %v4524
    %4785 = vmatpush.bf16.msra.mxu0 %v4522
    %4786 = vmatmul.bf16.gmra.mxu0 %v3980
    %v4787 = vpop.f32.mrf.mxu0
    %v4788 = vadd.f32 %v4134, %v4787
    %v4789 = vpop.f32.mrf.mxu0
    %v4790 = vadd.f32 %v4134, %v4789
    %4791 = vmatmul.bf16.gmra.mxu0 %v3984
    %v4792 = vpop.f32.mrf.mxu0
    %v4793 = vadd.f32 %v4134, %v4792
    %v4794 = vpop.f32.mrf.mxu0
    %4795 = vmatmul.bf16.gmra.mxu0 %v3988
    %v4796 = vpop.f32.mrf.mxu0
    %v4797 = vpop.f32.mrf.mxu0
    %4798 = vdwg.mxu0
    %4799 = vmatpush.bf16.msra.mxu0 %v4552
    %4800 = vmatpush.bf16.msra.mxu0 %v4550
    %4801 = vmatpush.bf16.msra.mxu0 %v4548
    %4802 = vmatpush.bf16.msra.mxu0 %v4546
    %4803 = vmatpush.bf16.msra.mxu0 %v4544
    %4804 = vmatpush.bf16.msra.mxu0 %v4542
    %4805 = vmatpush.bf16.msra.mxu0 %v4540
    %4806 = vmatpush.bf16.msra.mxu0 %v4538
    %4807 = vmatmul.bf16.gmra.mxu0 %v3981
    %v4808 = vpop.f32.mrf.mxu0
    %v4809 = vadd.f32 %v4788, %v4808
    %v4810 = vpop.f32.mrf.mxu0
    %v4811 = vadd.f32 %v4790, %v4810
    %4812 = vmatmul.bf16.gmra.mxu0 %v3985
    %v4813 = vpop.f32.mrf.mxu0
    %v4814 = vadd.f32 %v4793, %v4813
    %v4815 = vpop.f32.mrf.mxu0
    %4816 = vmatmul.bf16.gmra.mxu0 %v3989
    %v4817 = vpop.f32.mrf.mxu0
    %v4818 = vpop.f32.mrf.mxu0
    %4819 = vdwg.mxu0
    %4820 = vmatpush.bf16.msra.mxu0 %v4568
    %4821 = vmatpush.bf16.msra.mxu0 %v4566
    %4822 = vmatpush.bf16.msra.mxu0 %v4564
    %4823 = vmatpush.bf16.msra.mxu0 %v4562
    %4824 = vmatpush.bf16.msra.mxu0 %v4560
    %4825 = vmatpush.bf16.msra.mxu0 %v4558
    %4826 = vmatpush.bf16.msra.mxu0 %v4556
    %4827 = vmatpush.bf16.msra.mxu0 %v4554
    %4828 = vmatmul.bf16.gmra.mxu0 %v3982
    %v4829 = vpop.f32.mrf.mxu0
    %v4830 = vadd.f32 %v4809, %v4829
    %v4831 = vpop.f32.mrf.mxu0
    %v4832 = vadd.f32 %v4811, %v4831
    %4833 = vmatmul.bf16.gmra.mxu0 %v3986
    %v4834 = vpop.f32.mrf.mxu0
    %v4835 = vadd.f32 %v4814, %v4834
    %v4836 = vpop.f32.mrf.mxu0
    %4837 = vmatmul.bf16.gmra.mxu0 %v3990
    %v4838 = vpop.f32.mrf.mxu0
    %v4839 = vpop.f32.mrf.mxu0
    %4840 = vdwg.mxu0
    %4841 = vmatpush.bf16.msra.mxu0 %v4584
    %4842 = vmatpush.bf16.msra.mxu0 %v4582
    %4843 = vmatpush.bf16.msra.mxu0 %v4580
    %4844 = vmatpush.bf16.msra.mxu0 %v4578
    %4845 = vmatpush.bf16.msra.mxu0 %v4576
    %4846 = vmatpush.bf16.msra.mxu0 %v4574
    %4847 = vmatpush.bf16.msra.mxu0 %v4572
    %4848 = vmatpush.bf16.msra.mxu0 %v4570
    %4849 = vmatmul.bf16.gmra.mxu0 %v3983
    %v4850 = vpop.f32.mrf.mxu0
    %v4851 = vadd.f32 %v4830, %v4850
    %v4852 = vpop.f32.mrf.mxu0
    %v4853 = vadd.f32 %v4832, %v4852
    %4854 = vmatmul.bf16.gmra.mxu0 %v3987
    %v4855 = vpop.f32.mrf.mxu0
    %v4856 = vadd.f32 %v4835, %v4855
    %v4857 = vpop.f32.mrf.mxu0
    %4858 = vmatmul.bf16.gmra.mxu0 %v3991
    %v4859 = vpop.f32.mrf.mxu0
    %v4860 = vpop.f32.mrf.mxu0
    %4861 = vdwg.mxu0
    %4862 = vmatpush.bf16.msra.mxu0 %v4600
    %4863 = vmatpush.bf16.msra.mxu0 %v4598
    %4864 = vmatpush.bf16.msra.mxu0 %v4596
    %4865 = vmatpush.bf16.msra.mxu0 %v4594
    %4866 = vmatpush.bf16.msra.mxu0 %v4592
    %4867 = vmatpush.bf16.msra.mxu0 %v4590
    %4868 = vmatpush.bf16.msra.mxu0 %v4588
    %4869 = vmatpush.bf16.msra.mxu0 %v4586
    %4870 = vmatmul.bf16.gmra.mxu0 %v3934
    %v4871 = vpop.f32.mrf.mxu0
    %v4872 = vadd.f32 %v4851, %v4871
    %v4873 = vpop.f32.mrf.mxu0
    %v4874 = vadd.f32 %v4853, %v4873
    %4875 = vmatmul.bf16.gmra.mxu0 %v3938
    %v4876 = vpop.f32.mrf.mxu0
    %v4877 = vadd.f32 %v4856, %v4876
    %v4878 = vpop.f32.mrf.mxu0
    %4879 = vmatmul.bf16.gmra.mxu0 %v3966
    %v4880 = vpop.f32.mrf.mxu0
    %v4881 = vpop.f32.mrf.mxu0
    %4882 = vdwg.mxu0
    %4883 = vmatpush.bf16.msra.mxu0 %v4616
    %4884 = vmatpush.bf16.msra.mxu0 %v4614
    %4885 = vmatpush.bf16.msra.mxu0 %v4612
    %4886 = vmatpush.bf16.msra.mxu0 %v4610
    %4887 = vmatpush.bf16.msra.mxu0 %v4608
    %4888 = vmatpush.bf16.msra.mxu0 %v4606
    %4889 = vmatpush.bf16.msra.mxu0 %v4604
    %4890 = vmatpush.bf16.msra.mxu0 %v4602
    %4891 = vmatmul.bf16.gmra.mxu0 %v3935
    %v4892 = vpop.f32.mrf.mxu0
    %v4893 = vadd.f32 %v4872, %v4892
    %v4894 = vpop.f32.mrf.mxu0
    %v4895 = vadd.f32 %v4874, %v4894
    %4896 = vmatmul.bf16.gmra.mxu0 %v3939
    %v4897 = vpop.f32.mrf.mxu0
    %v4898 = vadd.f32 %v4877, %v4897
    %v4899 = vpop.f32.mrf.mxu0
    %4900 = vmatmul.bf16.gmra.mxu0 %v3970
    %v4901 = vpop.f32.mrf.mxu0
    %v4902 = vpop.f32.mrf.mxu0
    %4903 = vdwg.mxu0
    %4904 = vmatpush.bf16.msra.mxu0 %v4632
    %4905 = vmatpush.bf16.msra.mxu0 %v4630
    %4906 = vmatpush.bf16.msra.mxu0 %v4628
    %4907 = vmatpush.bf16.msra.mxu0 %v4626
    %4908 = vmatpush.bf16.msra.mxu0 %v4624
    %4909 = vmatpush.bf16.msra.mxu0 %v4622
    %4910 = vmatpush.bf16.msra.mxu0 %v4620
    %4911 = vmatpush.bf16.msra.mxu0 %v4618
    %4912 = vmatmul.bf16.gmra.mxu0 %v3936
    %v4913 = vpop.f32.mrf.mxu0
    %v4914 = vadd.f32 %v4893, %v4913
    %v4915 = vpop.f32.mrf.mxu0
    %v4916 = vadd.f32 %v4895, %v4915
    %4917 = vmatmul.bf16.gmra.mxu0 %v3940
    %v4918 = vpop.f32.mrf.mxu0
    %v4919 = vadd.f32 %v4898, %v4918
    %v4920 = vpop.f32.mrf.mxu0
    %4921 = vmatmul.bf16.gmra.mxu0 %v3974
    %v4922 = vpop.f32.mrf.mxu0
    %v4923 = vpop.f32.mrf.mxu0
    %4924 = vdwg.mxu0
    %4925 = vmatpush.bf16.msra.mxu0 %v4648
    %4926 = vmatpush.bf16.msra.mxu0 %v4646
    %4927 = vmatpush.bf16.msra.mxu0 %v4644
    %4928 = vmatpush.bf16.msra.mxu0 %v4642
    %4929 = vmatpush.bf16.msra.mxu0 %v4640
    %4930 = vmatpush.bf16.msra.mxu0 %v4638
    %4931 = vmatpush.bf16.msra.mxu0 %v4636
    %4932 = vmatpush.bf16.msra.mxu0 %v4634
    %4933 = vmatmul.bf16.gmra.mxu0 %v3937
    %v4934 = vpop.f32.mrf.mxu0
    %v4935 = vadd.f32 %v4914, %v4934
    %v4936 = vpop.f32.mrf.mxu0
    %v4937 = vadd.f32 %v4916, %v4936
    %4938 = vmatmul.bf16.gmra.mxu0 %v3941
    %v4939 = vpop.f32.mrf.mxu0
    %v4940 = vadd.f32 %v4919, %v4939
    %v4941 = vpop.f32.mrf.mxu0
    %4942 = vmatmul.bf16.gmra.mxu0 %v3978
    %v4943 = vpop.f32.mrf.mxu0
    %v4944 = vpop.f32.mrf.mxu0
    %4945 = vdwg.mxu0
    %4946 = vmatpush.bf16.msra.mxu0 %v4537
    %4947 = vmatpush.bf16.msra.mxu0 %v4535
    %4948 = vmatpush.bf16.msra.mxu0 %v4533
    %4949 = vmatpush.bf16.msra.mxu0 %v4531
    %4950 = vmatpush.bf16.msra.mxu0 %v4529
    %4951 = vmatpush.bf16.msra.mxu0 %v4527
    %4952 = vmatpush.bf16.msra.mxu0 %v4525
    %4953 = vmatpush.bf16.msra.mxu0 %v4523
    %4954 = vmatmul.bf16.gmra.mxu0 %v3980
    %v4955 = vpop.f32.mrf.mxu0
    %v4956 = vadd.f32 %v4135, %v4955
    %v4957 = vpop.f32.mrf.mxu0
    %v4958 = vadd.f32 %v4135, %v4957
    %4959 = vmatmul.bf16.gmra.mxu0 %v3984
    %v4960 = vpop.f32.mrf.mxu0
    %v4961 = vadd.f32 %v4135, %v4960
    %v4962 = vpop.f32.mrf.mxu0
    %4963 = vmatmul.bf16.gmra.mxu0 %v3988
    %v4964 = vpop.f32.mrf.mxu0
    %v4965 = vpop.f32.mrf.mxu0
    %4966 = vdwg.mxu0
    %4967 = vmatpush.bf16.msra.mxu0 %v4553
    %4968 = vmatpush.bf16.msra.mxu0 %v4551
    %4969 = vmatpush.bf16.msra.mxu0 %v4549
    %4970 = vmatpush.bf16.msra.mxu0 %v4547
    %4971 = vmatpush.bf16.msra.mxu0 %v4545
    %4972 = vmatpush.bf16.msra.mxu0 %v4543
    %4973 = vmatpush.bf16.msra.mxu0 %v4541
    %4974 = vmatpush.bf16.msra.mxu0 %v4539
    %4975 = vmatmul.bf16.gmra.mxu0 %v3981
    %v4976 = vpop.f32.mrf.mxu0
    %v4977 = vadd.f32 %v4956, %v4976
    %v4978 = vpop.f32.mrf.mxu0
    %v4979 = vadd.f32 %v4958, %v4978
    %4980 = vmatmul.bf16.gmra.mxu0 %v3985
    %v4981 = vpop.f32.mrf.mxu0
    %v4982 = vadd.f32 %v4961, %v4981
    %v4983 = vpop.f32.mrf.mxu0
    %4984 = vmatmul.bf16.gmra.mxu0 %v3989
    %v4985 = vpop.f32.mrf.mxu0
    %v4986 = vpop.f32.mrf.mxu0
    %4987 = vdwg.mxu0
    %4988 = vmatpush.bf16.msra.mxu0 %v4569
    %4989 = vmatpush.bf16.msra.mxu0 %v4567
    %4990 = vmatpush.bf16.msra.mxu0 %v4565
    %4991 = vmatpush.bf16.msra.mxu0 %v4563
    %4992 = vmatpush.bf16.msra.mxu0 %v4561
    %4993 = vmatpush.bf16.msra.mxu0 %v4559
    %4994 = vmatpush.bf16.msra.mxu0 %v4557
    %4995 = vmatpush.bf16.msra.mxu0 %v4555
    %4996 = vmatmul.bf16.gmra.mxu0 %v3982
    %v4997 = vpop.f32.mrf.mxu0
    %v4998 = vadd.f32 %v4977, %v4997
    %v4999 = vpop.f32.mrf.mxu0
    %v5000 = vadd.f32 %v4979, %v4999
    %5001 = vmatmul.bf16.gmra.mxu0 %v3986
    %v5002 = vpop.f32.mrf.mxu0
    %v5003 = vadd.f32 %v4982, %v5002
    %v5004 = vpop.f32.mrf.mxu0
    %5005 = vmatmul.bf16.gmra.mxu0 %v3990
    %v5006 = vpop.f32.mrf.mxu0
    %v5007 = vpop.f32.mrf.mxu0
    %5008 = vdwg.mxu0
    %5009 = vmatpush.bf16.msra.mxu0 %v4585
    %5010 = vmatpush.bf16.msra.mxu0 %v4583
    %5011 = vmatpush.bf16.msra.mxu0 %v4581
    %5012 = vmatpush.bf16.msra.mxu0 %v4579
    %5013 = vmatpush.bf16.msra.mxu0 %v4577
    %5014 = vmatpush.bf16.msra.mxu0 %v4575
    %5015 = vmatpush.bf16.msra.mxu0 %v4573
    %5016 = vmatpush.bf16.msra.mxu0 %v4571
    %5017 = vmatmul.bf16.gmra.mxu0 %v3983
    %v5018 = vpop.f32.mrf.mxu0
    %v5019 = vadd.f32 %v4998, %v5018
    %v5020 = vpop.f32.mrf.mxu0
    %v5021 = vadd.f32 %v5000, %v5020
    %5022 = vmatmul.bf16.gmra.mxu0 %v3987
    %v5023 = vpop.f32.mrf.mxu0
    %v5024 = vadd.f32 %v5003, %v5023
    %v5025 = vpop.f32.mrf.mxu0
    %5026 = vmatmul.bf16.gmra.mxu0 %v3991
    %v5027 = vpop.f32.mrf.mxu0
    %v5028 = vpop.f32.mrf.mxu0
    %5029 = vdwg.mxu0
    %5030 = vmatpush.bf16.msra.mxu0 %v4601
    %5031 = vmatpush.bf16.msra.mxu0 %v4599
    %5032 = vmatpush.bf16.msra.mxu0 %v4597
    %5033 = vmatpush.bf16.msra.mxu0 %v4595
    %5034 = vmatpush.bf16.msra.mxu0 %v4593
    %5035 = vmatpush.bf16.msra.mxu0 %v4591
    %5036 = vmatpush.bf16.msra.mxu0 %v4589
    %5037 = vmatpush.bf16.msra.mxu0 %v4587
    %5038 = vmatmul.bf16.gmra.mxu0 %v3934
    %v5039 = vpop.f32.mrf.mxu0
    %v5040 = vadd.f32 %v5019, %v5039
    %v5041 = vpop.f32.mrf.mxu0
    %v5042 = vadd.f32 %v5021, %v5041
    %5043 = vmatmul.bf16.gmra.mxu0 %v3938
    %v5044 = vpop.f32.mrf.mxu0
    %v5045 = vadd.f32 %v5024, %v5044
    %v5046 = vpop.f32.mrf.mxu0
    %5047 = vmatmul.bf16.gmra.mxu0 %v3966
    %v5048 = vpop.f32.mrf.mxu0
    %v5049 = vpop.f32.mrf.mxu0
    %5050 = vdwg.mxu0
    %5051 = vmatpush.bf16.msra.mxu0 %v4617
    %5052 = vmatpush.bf16.msra.mxu0 %v4615
    %5053 = vmatpush.bf16.msra.mxu0 %v4613
    %5054 = vmatpush.bf16.msra.mxu0 %v4611
    %5055 = vmatpush.bf16.msra.mxu0 %v4609
    %5056 = vmatpush.bf16.msra.mxu0 %v4607
    %5057 = vmatpush.bf16.msra.mxu0 %v4605
    %5058 = vmatpush.bf16.msra.mxu0 %v4603
    %5059 = vmatmul.bf16.gmra.mxu0 %v3935
    %v5060 = vpop.f32.mrf.mxu0
    %v5061 = vadd.f32 %v5040, %v5060
    %v5062 = vpop.f32.mrf.mxu0
    %v5063 = vadd.f32 %v5042, %v5062
    %5064 = vmatmul.bf16.gmra.mxu0 %v3939
    %v5065 = vpop.f32.mrf.mxu0
    %v5066 = vadd.f32 %v5045, %v5065
    %v5067 = vpop.f32.mrf.mxu0
    %5068 = vmatmul.bf16.gmra.mxu0 %v3970
    %v5069 = vpop.f32.mrf.mxu0
    %v5070 = vpop.f32.mrf.mxu0
    %5071 = vdwg.mxu0
    %5072 = vmatpush.bf16.msra.mxu0 %v4633
    %5073 = vmatpush.bf16.msra.mxu0 %v4631
    %5074 = vmatpush.bf16.msra.mxu0 %v4629
    %5075 = vmatpush.bf16.msra.mxu0 %v4627
    %5076 = vmatpush.bf16.msra.mxu0 %v4625
    %5077 = vmatpush.bf16.msra.mxu0 %v4623
    %5078 = vmatpush.bf16.msra.mxu0 %v4621
    %5079 = vmatpush.bf16.msra.mxu0 %v4619
    %5080 = vmatmul.bf16.gmra.mxu0 %v3936
    %v5081 = vpop.f32.mrf.mxu0
    %v5082 = vadd.f32 %v5061, %v5081
    %v5083 = vpop.f32.mrf.mxu0
    %v5084 = vadd.f32 %v5063, %v5083
    %5085 = vmatmul.bf16.gmra.mxu0 %v3940
    %v5086 = vpop.f32.mrf.mxu0
    %v5087 = vadd.f32 %v5066, %v5086
    %v5088 = vpop.f32.mrf.mxu0
    %5089 = vmatmul.bf16.gmra.mxu0 %v3974
    %v5090 = vpop.f32.mrf.mxu0
    %v5091 = vpop.f32.mrf.mxu0
    %5092 = vdwg.mxu0
    %5093 = vmatpush.bf16.msra.mxu0 %v4649
    %5094 = vmatpush.bf16.msra.mxu0 %v4647
    %5095 = vmatpush.bf16.msra.mxu0 %v4645
    %5096 = vmatpush.bf16.msra.mxu0 %v4643
    %5097 = vmatpush.bf16.msra.mxu0 %v4641
    %5098 = vmatpush.bf16.msra.mxu0 %v4639
    %5099 = vmatpush.bf16.msra.mxu0 %v4637
    %5100 = vmatpush.bf16.msra.mxu0 %v4635
    %5101 = vmatmul.bf16.gmra.mxu0 %v3937
    %v5102 = vpop.f32.mrf.mxu0
    %v5103 = vadd.f32 %v5082, %v5102
    %v5104 = vpop.f32.mrf.mxu0
    %v5105 = vadd.f32 %v5084, %v5104
    %5106 = vmatmul.bf16.gmra.mxu0 %v3941
    %v5107 = vpop.f32.mrf.mxu0
    %v5108 = vadd.f32 %v5087, %v5107
    %v5109 = vpop.f32.mrf.mxu0
    %5110 = vmatmul.bf16.gmra.mxu0 %v3978
    %v5111 = vpop.f32.mrf.mxu0
    %v5112 = vpop.f32.mrf.mxu0
    %5113 = vdwg.mxu0
    %v5114 = vmax.f32 %v4935, 0.0
    %v5115 = vmax.f32 %v5103, 0.0
    %v5116 = vmax.f32 %v4937, 0.0
    %v5117 = vmax.f32 %v5105, 0.0
    %v5118 = vmax.f32 %v4940, 0.0
    %v5119 = vmax.f32 %v5108, 0.0
    %v5120 = vpack.c.bf16 %v5115, %v5114
    %v5121 = vpack.c.bf16 %v5117, %v5116
    %v5122 = vpack.c.bf16 %v5119, %v5118
    %v5124 = vunpack.c.l.b16 %v5120
    %v5125 = vunpack.c.h.b16 %v5120
    %v5126 = vpack.c.b16 %v5124, %v5124
    %v5127 = vpack.c.b16 %v5125, %v5125
    %v5131 = vunpack.c.l.b16 %v5121
    %v5132 = vunpack.c.h.b16 %v5121
    %v5133 = vpack.c.b16 %v5131, %v5131
    %v5134 = vpack.c.b16 %v5132, %v5132
    %v5138 = vunpack.c.l.b16 %v5122
    %v5139 = vunpack.c.h.b16 %v5122
    %v5140 = vpack.c.b16 %v5138, %v5138
    %v5141 = vpack.c.b16 %v5139, %v5139
    %v5144 = vld [vmem:[#allocation6] sm:$0xf]
    %v5145 = vld [vmem:[#allocation6 + $0x4] sm:$0xf]
    %v5146 = vld [vmem:[#allocation6 + $0x8] sm:$0xf]
    %v5147 = vld [vmem:[#allocation6 + $0xc] sm:$0xf]
    %v5148 = vld [vmem:[#allocation6 + $0x10] sm:$0xf]
    %v5149 = vld [vmem:[#allocation6 + $0x14] sm:$0xf]
    %v5150 = vld [vmem:[#allocation6 + $0x18] sm:$0xf]
    %v5151 = vld [vmem:[#allocation6 + $0x1c] sm:$0xf]
    %v5152 = vld [vmem:[#allocation6 + $0x20] sm:$0xf]
    %v5153 = vld [vmem:[#allocation6 + $0x24] sm:$0xf]
    %v5154 = vld [vmem:[#allocation6 + $0x28] sm:$0xf]
    %v5155 = vld [vmem:[#allocation6 + $0x2c] sm:$0xf]
    %v5156 = vld [vmem:[#allocation6 + $0x30] sm:$0xf]
    %v5157 = vld [vmem:[#allocation6 + $0x34] sm:$0xf]
    %v5158 = vld [vmem:[#allocation6 + $0x38] sm:$0xf]
    %v5159 = vld [vmem:[#allocation6 + $0x3c] sm:$0xf]
    %v5160 = vld [vmem:[#allocation6 + $0x40] sm:$0xf]
    %v5161 = vld [vmem:[#allocation6 + $0x44] sm:$0xf]
    %v5162 = vld [vmem:[#allocation6 + $0x48] sm:$0xf]
    %v5163 = vld [vmem:[#allocation6 + $0x4c] sm:$0xf]
    %v5164 = vld [vmem:[#allocation6 + $0x50] sm:$0xf]
    %v5165 = vld [vmem:[#allocation6 + $0x54] sm:$0xf]
    %v5166 = vld [vmem:[#allocation6 + $0x58] sm:$0xf]
    %v5167 = vld [vmem:[#allocation6 + $0x5c] sm:$0xf]
    %v5168 = vld [vmem:[#allocation6 + $0x60] sm:$0xf]
    %v5169 = vld [vmem:[#allocation6 + $0x64] sm:$0xf]
    %v5170 = vld [vmem:[#allocation6 + $0x68] sm:$0xf]
    %v5171 = vld [vmem:[#allocation6 + $0x6c] sm:$0xf]
    %v5172 = vld [vmem:[#allocation6 + $0x70] sm:$0xf]
    %v5173 = vld [vmem:[#allocation6 + $0x74] sm:$0xf]
    %v5174 = vld [vmem:[#allocation6 + $0x78] sm:$0xf]
    %v5175 = vld [vmem:[#allocation6 + $0x7c] sm:$0xf]
    %v5176 = vld [vmem:[#allocation6 + $0x80] sm:$0xf]
    %v5177 = vld [vmem:[#allocation6 + $0x84] sm:$0xf]
    %v5178 = vld [vmem:[#allocation6 + $0x88] sm:$0xf]
    %v5179 = vld [vmem:[#allocation6 + $0x8c] sm:$0xf]
    %v5180 = vld [vmem:[#allocation6 + $0x90] sm:$0xf]
    %v5181 = vld [vmem:[#allocation6 + $0x94] sm:$0xf]
    %v5182 = vld [vmem:[#allocation6 + $0x98] sm:$0xf]
    %v5183 = vld [vmem:[#allocation6 + $0x9c] sm:$0xf]
    %v5184 = vld [vmem:[#allocation6 + $0xa0] sm:$0xf]
    %v5185 = vld [vmem:[#allocation6 + $0xa4] sm:$0xf]
    %v5186 = vld [vmem:[#allocation6 + $0xa8] sm:$0xf]
    %v5187 = vld [vmem:[#allocation6 + $0xac] sm:$0xf]
    %v5188 = vld [vmem:[#allocation6 + $0xb0] sm:$0xf]
    %v5189 = vld [vmem:[#allocation6 + $0xb4] sm:$0xf]
    %v5190 = vld [vmem:[#allocation6 + $0xb8] sm:$0xf]
    %v5191 = vld [vmem:[#allocation6 + $0xbc] sm:$0xf]
    %v5192 = vld [vmem:[#allocation6 + $0xc0] sm:$0xf]
    %v5193 = vld [vmem:[#allocation6 + $0xc4] sm:$0xf]
    %v5194 = vld [vmem:[#allocation6 + $0xc8] sm:$0xf]
    %v5195 = vld [vmem:[#allocation6 + $0xcc] sm:$0xf]
    %v5196 = vld [vmem:[#allocation6 + $0xd0] sm:$0xf]
    %v5197 = vld [vmem:[#allocation6 + $0xd4] sm:$0xf]
    %v5198 = vld [vmem:[#allocation6 + $0xd8] sm:$0xf]
    %v5199 = vld [vmem:[#allocation6 + $0xdc] sm:$0xf]
    %v5200 = vld [vmem:[#allocation6 + $0xe0] sm:$0xf]
    %v5201 = vld [vmem:[#allocation6 + $0xe4] sm:$0xf]
    %v5202 = vld [vmem:[#allocation6 + $0xe8] sm:$0xf]
    %v5203 = vld [vmem:[#allocation6 + $0xec] sm:$0xf]
    %v5204 = vld [vmem:[#allocation6 + $0xf0] sm:$0xf]
    %v5205 = vld [vmem:[#allocation6 + $0xf4] sm:$0xf]
    %v5206 = vld [vmem:[#allocation6 + $0xf8] sm:$0xf]
    %v5207 = vld [vmem:[#allocation6 + $0xfc] sm:$0xf]
    %v5208 = vld [vmem:[#allocation6 + $0x100] sm:$0xf]
    %v5209 = vld [vmem:[#allocation6 + $0x104] sm:$0xf]
    %v5210 = vld [vmem:[#allocation6 + $0x108] sm:$0xf]
    %v5211 = vld [vmem:[#allocation6 + $0x10c] sm:$0xf]
    %v5212 = vld [vmem:[#allocation6 + $0x110] sm:$0xf]
    %v5213 = vld [vmem:[#allocation6 + $0x114] sm:$0xf]
    %v5214 = vld [vmem:[#allocation6 + $0x118] sm:$0xf]
    %v5215 = vld [vmem:[#allocation6 + $0x11c] sm:$0xf]
    %v5216 = vld [vmem:[#allocation6 + $0x120] sm:$0xf]
    %v5217 = vld [vmem:[#allocation6 + $0x124] sm:$0xf]
    %v5218 = vld [vmem:[#allocation6 + $0x128] sm:$0xf]
    %v5219 = vld [vmem:[#allocation6 + $0x12c] sm:$0xf]
    %v5220 = vld [vmem:[#allocation6 + $0x130] sm:$0xf]
    %v5221 = vld [vmem:[#allocation6 + $0x134] sm:$0xf]
    %v5222 = vld [vmem:[#allocation6 + $0x138] sm:$0xf]
    %v5223 = vld [vmem:[#allocation6 + $0x13c] sm:$0xf]
    %v5224 = vld [vmem:[#allocation6 + $0x140] sm:$0xf]
    %v5225 = vld [vmem:[#allocation6 + $0x144] sm:$0xf]
    %v5226 = vld [vmem:[#allocation6 + $0x148] sm:$0xf]
    %v5227 = vld [vmem:[#allocation6 + $0x14c] sm:$0xf]
    %v5228 = vld [vmem:[#allocation6 + $0x150] sm:$0xf]
    %v5229 = vld [vmem:[#allocation6 + $0x154] sm:$0xf]
    %v5230 = vld [vmem:[#allocation6 + $0x158] sm:$0xf]
    %v5231 = vld [vmem:[#allocation6 + $0x15c] sm:$0xf]
    %v5232 = vld [vmem:[#allocation6 + $0x160] sm:$0xf]
    %v5233 = vld [vmem:[#allocation6 + $0x164] sm:$0xf]
    %v5234 = vld [vmem:[#allocation6 + $0x168] sm:$0xf]
    %v5235 = vld [vmem:[#allocation6 + $0x16c] sm:$0xf]
    %v5236 = vld [vmem:[#allocation6 + $0x170] sm:$0xf]
    %v5237 = vld [vmem:[#allocation6 + $0x174] sm:$0xf]
    %v5238 = vld [vmem:[#allocation6 + $0x178] sm:$0xf]
    %v5239 = vld [vmem:[#allocation6 + $0x17c] sm:$0xf]
    %v5240 = vld [vmem:[%s9] sm:$0x1]
    %v5242 = vperm.slane %v5240, 0
    %v5340 = vunpack.c.l.b16 %v5144
    %v5341 = vunpack.c.l.b16 %v5145
    %v5342 = vunpack.c.l.b16 %v5146
    %v5343 = vunpack.c.l.b16 %v5147
    %v5344 = vunpack.c.l.b16 %v5148
    %v5345 = vunpack.c.l.b16 %v5149
    %v5346 = vunpack.c.l.b16 %v5150
    %v5347 = vunpack.c.l.b16 %v5151
    %v5348 = vunpack.c.l.b16 %v5152
    %v5349 = vunpack.c.l.b16 %v5153
    %v5350 = vunpack.c.l.b16 %v5154
    %v5351 = vunpack.c.l.b16 %v5155
    %v5352 = vunpack.c.l.b16 %v5156
    %v5353 = vunpack.c.l.b16 %v5157
    %v5354 = vunpack.c.l.b16 %v5158
    %v5355 = vunpack.c.l.b16 %v5159
    %v5356 = vunpack.c.l.b16 %v5160
    %v5357 = vunpack.c.l.b16 %v5161
    %v5358 = vunpack.c.l.b16 %v5162
    %v5359 = vunpack.c.l.b16 %v5163
    %v5360 = vunpack.c.l.b16 %v5164
    %v5361 = vunpack.c.l.b16 %v5165
    %v5362 = vunpack.c.l.b16 %v5166
    %v5363 = vunpack.c.l.b16 %v5167
    %v5364 = vunpack.c.l.b16 %v5168
    %v5365 = vunpack.c.l.b16 %v5169
    %v5366 = vunpack.c.l.b16 %v5170
    %v5367 = vunpack.c.l.b16 %v5171
    %v5368 = vunpack.c.l.b16 %v5172
    %v5369 = vunpack.c.l.b16 %v5173
    %v5370 = vunpack.c.l.b16 %v5174
    %v5371 = vunpack.c.l.b16 %v5175
    %v5372 = vunpack.c.l.b16 %v5176
    %v5373 = vunpack.c.l.b16 %v5177
    %v5374 = vunpack.c.l.b16 %v5178
    %v5375 = vunpack.c.l.b16 %v5179
    %v5376 = vunpack.c.l.b16 %v5180
    %v5377 = vunpack.c.l.b16 %v5181
    %v5378 = vunpack.c.l.b16 %v5182
    %v5379 = vunpack.c.l.b16 %v5183
    %v5380 = vunpack.c.l.b16 %v5184
    %v5381 = vunpack.c.l.b16 %v5185
    %v5382 = vunpack.c.l.b16 %v5186
    %v5383 = vunpack.c.l.b16 %v5187
    %v5384 = vunpack.c.l.b16 %v5188
    %v5385 = vunpack.c.l.b16 %v5189
    %v5386 = vunpack.c.l.b16 %v5190
    %v5387 = vunpack.c.l.b16 %v5191
    %v5388 = vunpack.c.l.b16 %v5192
    %v5389 = vunpack.c.l.b16 %v5193
    %v5390 = vunpack.c.l.b16 %v5194
    %v5391 = vunpack.c.l.b16 %v5195
    %v5392 = vunpack.c.l.b16 %v5196
    %v5393 = vunpack.c.l.b16 %v5197
    %v5394 = vunpack.c.l.b16 %v5198
    %v5395 = vunpack.c.l.b16 %v5199
    %v5396 = vunpack.c.l.b16 %v5200
    %v5397 = vunpack.c.l.b16 %v5201
    %v5398 = vunpack.c.l.b16 %v5202
    %v5399 = vunpack.c.l.b16 %v5203
    %v5400 = vunpack.c.l.b16 %v5204
    %v5401 = vunpack.c.l.b16 %v5205
    %v5402 = vunpack.c.l.b16 %v5206
    %v5403 = vunpack.c.l.b16 %v5207
    %v5404 = vunpack.c.l.b16 %v5208
    %v5405 = vunpack.c.l.b16 %v5209
    %v5406 = vunpack.c.l.b16 %v5210
    %v5407 = vunpack.c.l.b16 %v5211
    %v5408 = vunpack.c.l.b16 %v5212
    %v5409 = vunpack.c.l.b16 %v5213
    %v5410 = vunpack.c.l.b16 %v5214
    %v5411 = vunpack.c.l.b16 %v5215
    %v5412 = vunpack.c.l.b16 %v5216
    %v5413 = vunpack.c.l.b16 %v5217
    %v5414 = vunpack.c.l.b16 %v5218
    %v5415 = vunpack.c.l.b16 %v5219
    %v5416 = vunpack.c.l.b16 %v5220
    %v5417 = vunpack.c.l.b16 %v5221
    %v5418 = vunpack.c.l.b16 %v5222
    %v5419 = vunpack.c.l.b16 %v5223
    %v5420 = vunpack.c.l.b16 %v5224
    %v5421 = vunpack.c.l.b16 %v5225
    %v5422 = vunpack.c.l.b16 %v5226
    %v5423 = vunpack.c.l.b16 %v5227
    %v5424 = vunpack.c.l.b16 %v5228
    %v5425 = vunpack.c.l.b16 %v5229
    %v5426 = vunpack.c.l.b16 %v5230
    %v5427 = vunpack.c.l.b16 %v5231
    %v5428 = vunpack.c.l.b16 %v5232
    %v5429 = vunpack.c.l.b16 %v5233
    %v5430 = vunpack.c.l.b16 %v5234
    %v5431 = vunpack.c.l.b16 %v5235
    %v5432 = vunpack.c.l.b16 %v5236
    %v5433 = vunpack.c.l.b16 %v5237
    %v5434 = vunpack.c.l.b16 %v5238
    %v5435 = vunpack.c.l.b16 %v5239
    %v5436 = vpack.c.b16 %v5341, %v5340
    %v5437 = vpack.c.b16 %v5343, %v5342
    %v5438 = vpack.c.b16 %v5345, %v5344
    %v5439 = vpack.c.b16 %v5347, %v5346
    %v5440 = vpack.c.b16 %v5349, %v5348
    %v5441 = vpack.c.b16 %v5351, %v5350
    %v5442 = vpack.c.b16 %v5353, %v5352
    %v5443 = vpack.c.b16 %v5355, %v5354
    %v5444 = vpack.c.b16 %v5357, %v5356
    %v5445 = vpack.c.b16 %v5359, %v5358
    %v5446 = vpack.c.b16 %v5361, %v5360
    %v5447 = vpack.c.b16 %v5363, %v5362
    %v5448 = vpack.c.b16 %v5365, %v5364
    %v5449 = vpack.c.b16 %v5367, %v5366
    %v5450 = vpack.c.b16 %v5369, %v5368
    %v5451 = vpack.c.b16 %v5371, %v5370
    %v5452 = vpack.c.b16 %v5373, %v5372
    %v5453 = vpack.c.b16 %v5375, %v5374
    %v5454 = vpack.c.b16 %v5377, %v5376
    %v5455 = vpack.c.b16 %v5379, %v5378
    %v5456 = vpack.c.b16 %v5381, %v5380
    %v5457 = vpack.c.b16 %v5383, %v5382
    %v5458 = vpack.c.b16 %v5385, %v5384
    %v5459 = vpack.c.b16 %v5387, %v5386
    %v5460 = vpack.c.b16 %v5389, %v5388
    %v5461 = vpack.c.b16 %v5391, %v5390
    %v5462 = vpack.c.b16 %v5393, %v5392
    %v5463 = vpack.c.b16 %v5395, %v5394
    %v5464 = vpack.c.b16 %v5397, %v5396
    %v5465 = vpack.c.b16 %v5399, %v5398
    %v5466 = vpack.c.b16 %v5401, %v5400
    %v5467 = vpack.c.b16 %v5403, %v5402
    %v5468 = vpack.c.b16 %v5405, %v5404
    %v5469 = vpack.c.b16 %v5407, %v5406
    %v5470 = vpack.c.b16 %v5409, %v5408
    %v5471 = vpack.c.b16 %v5411, %v5410
    %v5472 = vpack.c.b16 %v5413, %v5412
    %v5473 = vpack.c.b16 %v5415, %v5414
    %v5474 = vpack.c.b16 %v5417, %v5416
    %v5475 = vpack.c.b16 %v5419, %v5418
    %v5476 = vpack.c.b16 %v5421, %v5420
    %v5477 = vpack.c.b16 %v5423, %v5422
    %v5478 = vpack.c.b16 %v5425, %v5424
    %v5479 = vpack.c.b16 %v5427, %v5426
    %v5480 = vpack.c.b16 %v5429, %v5428
    %v5481 = vpack.c.b16 %v5431, %v5430
    %v5482 = vpack.c.b16 %v5433, %v5432
    %v5483 = vpack.c.b16 %v5435, %v5434
    %5532 = vmatpush.bf16.msra.mxu0 %v5443
    %5533 = vmatpush.bf16.msra.mxu0 %v5442
    %5534 = vmatpush.bf16.msra.mxu0 %v5441
    %5535 = vmatpush.bf16.msra.mxu0 %v5440
    %5536 = vmatpush.bf16.msra.mxu0 %v5439
    %5537 = vmatpush.bf16.msra.mxu0 %v5438
    %5538 = vmatpush.bf16.msra.mxu0 %v5437
    %5539 = vmatpush.bf16.msra.mxu0 %v5436
    %5540 = vmatmul.bf16.gmra.mxu0 %v5126
    %v5541 = vpop.f32.mrf.mxu0
    %v5542 = vadd.f32 %v5242, %v5541
    %v5543 = vpop.f32.mrf.mxu0
    %5544 = vdwg.mxu0
    %5545 = vmatpush.bf16.msra.mxu0 %v5451
    %5546 = vmatpush.bf16.msra.mxu0 %v5450
    %5547 = vmatpush.bf16.msra.mxu0 %v5449
    %5548 = vmatpush.bf16.msra.mxu0 %v5448
    %5549 = vmatpush.bf16.msra.mxu0 %v5447
    %5550 = vmatpush.bf16.msra.mxu0 %v5446
    %5551 = vmatpush.bf16.msra.mxu0 %v5445
    %5552 = vmatpush.bf16.msra.mxu0 %v5444
    %5553 = vmatmul.bf16.gmra.mxu0 %v5127
    %v5554 = vpop.f32.mrf.mxu0
    %v5555 = vadd.f32 %v5542, %v5554
    %v5556 = vpop.f32.mrf.mxu0
    %5557 = vdwg.mxu0
    %5558 = vmatpush.bf16.msra.mxu0 %v5459
    %5559 = vmatpush.bf16.msra.mxu0 %v5458
    %5560 = vmatpush.bf16.msra.mxu0 %v5457
    %5561 = vmatpush.bf16.msra.mxu0 %v5456
    %5562 = vmatpush.bf16.msra.mxu0 %v5455
    %5563 = vmatpush.bf16.msra.mxu0 %v5454
    %5564 = vmatpush.bf16.msra.mxu0 %v5453
    %5565 = vmatpush.bf16.msra.mxu0 %v5452
    %5566 = vmatmul.bf16.gmra.mxu0 %v5133
    %v5567 = vpop.f32.mrf.mxu0
    %v5568 = vadd.f32 %v5555, %v5567
    %v5569 = vpop.f32.mrf.mxu0
    %5570 = vdwg.mxu0
    %5571 = vmatpush.bf16.msra.mxu0 %v5467
    %5572 = vmatpush.bf16.msra.mxu0 %v5466
    %5573 = vmatpush.bf16.msra.mxu0 %v5465
    %5574 = vmatpush.bf16.msra.mxu0 %v5464
    %5575 = vmatpush.bf16.msra.mxu0 %v5463
    %5576 = vmatpush.bf16.msra.mxu0 %v5462
    %5577 = vmatpush.bf16.msra.mxu0 %v5461
    %5578 = vmatpush.bf16.msra.mxu0 %v5460
    %5579 = vmatmul.bf16.gmra.mxu0 %v5134
    %v5580 = vpop.f32.mrf.mxu0
    %v5581 = vadd.f32 %v5568, %v5580
    %v5582 = vpop.f32.mrf.mxu0
    %5583 = vdwg.mxu0
    %5584 = vmatpush.bf16.msra.mxu0 %v5475
    %5585 = vmatpush.bf16.msra.mxu0 %v5474
    %5586 = vmatpush.bf16.msra.mxu0 %v5473
    %5587 = vmatpush.bf16.msra.mxu0 %v5472
    %5588 = vmatpush.bf16.msra.mxu0 %v5471
    %5589 = vmatpush.bf16.msra.mxu0 %v5470
    %5590 = vmatpush.bf16.msra.mxu0 %v5469
    %5591 = vmatpush.bf16.msra.mxu0 %v5468
    %5592 = vmatmul.bf16.gmra.mxu0 %v5140
    %v5593 = vpop.f32.mrf.mxu0
    %v5594 = vadd.f32 %v5581, %v5593
    %v5595 = vpop.f32.mrf.mxu0
    %5596 = vdwg.mxu0
    %5597 = vmatpush.bf16.msra.mxu0 %v5483
    %5598 = vmatpush.bf16.msra.mxu0 %v5482
    %5599 = vmatpush.bf16.msra.mxu0 %v5481
    %5600 = vmatpush.bf16.msra.mxu0 %v5480
    %5601 = vmatpush.bf16.msra.mxu0 %v5479
    %5602 = vmatpush.bf16.msra.mxu0 %v5478
    %5603 = vmatpush.bf16.msra.mxu0 %v5477
    %5604 = vmatpush.bf16.msra.mxu0 %v5476
    %5605 = vmatmul.bf16.gmra.mxu0 %v5141
    %v5606 = vpop.f32.mrf.mxu0
    %v5607 = vadd.f32 %v5594, %v5606
    %v5608 = vpop.f32.mrf.mxu0
    %5609 = vdwg.mxu0
    %v5610 = vmax.f32 %v5607, 0.0
    %v5611 = vpack.c.bf16 %v5610, %v5610
    %v5612 = vld [vmem:[#allocation7] sm:$0xff]
    %v5613 = vld [vmem:[#allocation7 + $0x8] sm:$0xff]
    %v5614 = vld [vmem:[#allocation7 + $0x10] sm:$0xff]
    %v5615 = vld [vmem:[#allocation7 + $0x18] sm:$0xff]
    %v5616 = vld [vmem:[#allocation7 + $0x20] sm:$0xff]
    %v5617 = vld [vmem:[#allocation7 + $0x28] sm:$0xff]
    %v5618 = vld [vmem:[#allocation7 + $0x30] sm:$0xff]
    %v5619 = vld [vmem:[#allocation7 + $0x38] sm:$0xff]
    %v5620 = vld [vmem:[#allocation7 + $0x40] sm:$0xff]
    %v5621 = vld [vmem:[#allocation7 + $0x48] sm:$0xff]
    %v5622 = vld [vmem:[#allocation7 + $0x50] sm:$0xff]
    %v5623 = vld [vmem:[#allocation7 + $0x58] sm:$0xff]
    %v5624 = vld [vmem:[#allocation7 + $0x60] sm:$0xff]
    %v5625 = vld [vmem:[#allocation7 + $0x68] sm:$0xff]
    %v5626 = vld [vmem:[#allocation7 + $0x70] sm:$0xff]
    %v5627 = vld [vmem:[#allocation7 + $0x78] sm:$0xff]
    %v5628 = vld [vmem:[%s11] sm:$0x3]
    %v5630 = vperm.slane %v5628, 0
    %v5631 = vperm.slane %v5628, 1
    %v5650 = vunpack.c.l.b16 %v5612
    %v5651 = vunpack.c.h.b16 %v5612
    %v5652 = vunpack.c.l.b16 %v5613
    %v5653 = vunpack.c.h.b16 %v5613
    %v5654 = vunpack.c.l.b16 %v5614
    %v5655 = vunpack.c.h.b16 %v5614
    %v5656 = vunpack.c.l.b16 %v5615
    %v5657 = vunpack.c.h.b16 %v5615
    %v5658 = vunpack.c.l.b16 %v5616
    %v5659 = vunpack.c.h.b16 %v5616
    %v5660 = vunpack.c.l.b16 %v5617
    %v5661 = vunpack.c.h.b16 %v5617
    %v5662 = vunpack.c.l.b16 %v5618
    %v5663 = vunpack.c.h.b16 %v5618
    %v5664 = vunpack.c.l.b16 %v5619
    %v5665 = vunpack.c.h.b16 %v5619
    %v5666 = vunpack.c.l.b16 %v5620
    %v5667 = vunpack.c.h.b16 %v5620
    %v5668 = vunpack.c.l.b16 %v5621
    %v5669 = vunpack.c.h.b16 %v5621
    %v5670 = vunpack.c.l.b16 %v5622
    %v5671 = vunpack.c.h.b16 %v5622
    %v5672 = vunpack.c.l.b16 %v5623
    %v5673 = vunpack.c.h.b16 %v5623
    %v5674 = vunpack.c.l.b16 %v5624
    %v5675 = vunpack.c.h.b16 %v5624
    %v5676 = vunpack.c.l.b16 %v5625
    %v5677 = vunpack.c.h.b16 %v5625
    %v5678 = vunpack.c.l.b16 %v5626
    %v5679 = vunpack.c.h.b16 %v5626
    %v5680 = vunpack.c.l.b16 %v5627
    %v5681 = vunpack.c.h.b16 %v5627
    %v5682 = vpack.c.b16 %v5652, %v5650
    %v5683 = vpack.c.b16 %v5653, %v5651
    %v5684 = vpack.c.b16 %v5656, %v5654
    %v5685 = vpack.c.b16 %v5657, %v5655
    %v5686 = vpack.c.b16 %v5660, %v5658
    %v5687 = vpack.c.b16 %v5661, %v5659
    %v5688 = vpack.c.b16 %v5664, %v5662
    %v5689 = vpack.c.b16 %v5665, %v5663
    %v5690 = vpack.c.b16 %v5668, %v5666
    %v5691 = vpack.c.b16 %v5669, %v5667
    %v5692 = vpack.c.b16 %v5672, %v5670
    %v5693 = vpack.c.b16 %v5673, %v5671
    %v5694 = vpack.c.b16 %v5676, %v5674
    %v5695 = vpack.c.b16 %v5677, %v5675
    %v5696 = vpack.c.b16 %v5680, %v5678
    %v5697 = vpack.c.b16 %v5681, %v5679
    %5714 = vmatpush.bf16.msra.mxu0 %v5696
    %5715 = vmatpush.bf16.msra.mxu0 %v5694
    %5716 = vmatpush.bf16.msra.mxu0 %v5692
    %5717 = vmatpush.bf16.msra.mxu0 %v5690
    %5718 = vmatpush.bf16.msra.mxu0 %v5688
    %5719 = vmatpush.bf16.msra.mxu0 %v5686
    %5720 = vmatpush.bf16.msra.mxu0 %v5684
    %5721 = vmatpush.bf16.msra.mxu0 %v5682
    %5722 = vmatmul.bf16.gmra.mxu0 %v5611
    %v5723 = vpop.f32.mrf.mxu0
    %v5724 = vadd.f32 %v5630, %v5723
    %v5725 = vpop.f32.mrf.mxu0
    %5726 = vdwg.mxu0
    %5727 = vmatpush.bf16.msra.mxu0 %v5697
    %5728 = vmatpush.bf16.msra.mxu0 %v5695
    %5729 = vmatpush.bf16.msra.mxu0 %v5693
    %5730 = vmatpush.bf16.msra.mxu0 %v5691
    %5731 = vmatpush.bf16.msra.mxu0 %v5689
    %5732 = vmatpush.bf16.msra.mxu0 %v5687
    %5733 = vmatpush.bf16.msra.mxu0 %v5685
    %5734 = vmatpush.bf16.msra.mxu0 %v5683
    %5735 = vmatmul.bf16.gmra.mxu0 %v5611
    %v5736 = vpop.f32.mrf.mxu0
    %v5737 = vadd.f32 %v5631, %v5736
    %v5738 = vpop.f32.mrf.mxu0
    %5739 = vdwg.mxu0
    %5740 = vst [vmem:[%s22] sm:$0xff] %v5724
    %5741 = vst [vmem:[%s22 + $0x8] sm:$0xff] %v5737
    %v5742 = vld [vmem:[%s1] sm:$0xff]
    %v5743 = vmul.f32 %v5737, 0.5
    %v5744 = vmul.f32 %v5743, 1.442695
    %v5745 = vpow.pop %v5744
    %v5746 = vmul.f32 %v5742, %v5745
    %v5747 = vadd.f32 %v5724, %v5746
    %v5748 = vpack.c.bf16 %v5747, %v5747
    %v5749 = vld [vmem:[%s12] sm:$0xff]
    %v5750 = vld [vmem:[%s12 + $0x8] sm:$0xff]
    %v5751 = vld [vmem:[%s12 + $0x10] sm:$0xff]
    %v5752 = vld [vmem:[%s12 + $0x18] sm:$0xf]
    %v5753 = vld [vmem:[%s12 + $0x1c] sm:$0xff]
    %v5754 = vld [vmem:[%s12 + $0x24] sm:$0xff]
    %v5755 = vld [vmem:[%s12 + $0x2c] sm:$0xff]
    %v5756 = vld [vmem:[%s12 + $0x34] sm:$0xf]
    %v5757 = vld [vmem:[%s12 + $0x38] sm:$0xff]
    %v5758 = vld [vmem:[%s12 + $0x40] sm:$0xff]
    %v5759 = vld [vmem:[%s12 + $0x48] sm:$0xff]
    %v5760 = vld [vmem:[%s12 + $0x50] sm:$0xf]
    %v5761 = vld [vmem:[%s12 + $0x54] sm:$0xff]
    %v5762 = vld [vmem:[%s12 + $0x5c] sm:$0xff]
    %v5763 = vld [vmem:[%s12 + $0x64] sm:$0xff]
    %v5764 = vld [vmem:[%s12 + $0x6c] sm:$0xf]
    %v5765 = vld [vmem:[%s12 + $0x70] sm:$0xff]
    %v5766 = vld [vmem:[%s12 + $0x78] sm:$0xff]
    %v5767 = vld [vmem:[%s12 + $0x80] sm:$0xff]
    %v5768 = vld [vmem:[%s12 + $0x88] sm:$0xf]
    %v5769 = vld [vmem:[%s12 + $0x8c] sm:$0xff]
    %v5770 = vld [vmem:[%s12 + $0x94] sm:$0xff]
    %v5771 = vld [vmem:[%s12 + $0x9c] sm:$0xff]
    %v5772 = vld [vmem:[%s12 + $0xa4] sm:$0xf]
    %v5773 = vld [vmem:[%s12 + $0xa8] sm:$0xff]
    %v5774 = vld [vmem:[%s12 + $0xb0] sm:$0xff]
    %v5775 = vld [vmem:[%s12 + $0xb8] sm:$0xff]
    %v5776 = vld [vmem:[%s12 + $0xc0] sm:$0xf]
    %v5777 = vld [vmem:[%s12 + $0xc4] sm:$0xff]
    %v5778 = vld [vmem:[%s12 + $0xcc] sm:$0xff]
    %v5779 = vld [vmem:[%s12 + $0xd4] sm:$0xff]
    %v5780 = vld [vmem:[%s12 + $0xdc] sm:$0xf]
    %v5781 = vld [vmem:[%s12 + $0xe0] sm:$0xff]
    %v5782 = vld [vmem:[%s12 + $0xe8] sm:$0xff]
    %v5783 = vld [vmem:[%s12 + $0xf0] sm:$0xff]
    %v5784 = vld [vmem:[%s12 + $0xf8] sm:$0xf]
    %v5785 = vld [vmem:[%s12 + $0xfc] sm:$0xff]
    %v5786 = vld [vmem:[%s12 + $0x104] sm:$0xff]
    %v5787 = vld [vmem:[%s12 + $0x10c] sm:$0xff]
    %v5788 = vld [vmem:[%s12 + $0x114] sm:$0xf]
    %v5789 = vld [vmem:[%s12 + $0x118] sm:$0xff]
    %v5790 = vld [vmem:[%s12 + $0x120] sm:$0xff]
    %v5791 = vld [vmem:[%s12 + $0x128] sm:$0xff]
    %v5792 = vld [vmem:[%s12 + $0x130] sm:$0xf]
    %v5793 = vld [vmem:[%s12 + $0x134] sm:$0xff]
    %v5794 = vld [vmem:[%s12 + $0x13c] sm:$0xff]
    %v5795 = vld [vmem:[%s12 + $0x144] sm:$0xff]
    %v5796 = vld [vmem:[%s12 + $0x14c] sm:$0xf]
    %v5797 = vld [vmem:[%s12 + $0x150] sm:$0xff]
    %v5798 = vld [vmem:[%s12 + $0x158] sm:$0xff]
    %v5799 = vld [vmem:[%s12 + $0x160] sm:$0xff]
    %v5800 = vld [vmem:[%s12 + $0x168] sm:$0xf]
    %v5801 = vld [vmem:[%s12 + $0x16c] sm:$0xff]
    %v5802 = vld [vmem:[%s12 + $0x174] sm:$0xff]
    %v5803 = vld [vmem:[%s12 + $0x17c] sm:$0xff]
    %v5804 = vld [vmem:[%s12 + $0x184] sm:$0xf]
    %v5805 = vld [vmem:[%s12 + $0x188] sm:$0xff]
    %v5806 = vld [vmem:[%s12 + $0x190] sm:$0xff]
    %v5807 = vld [vmem:[%s12 + $0x198] sm:$0xff]
    %v5808 = vld [vmem:[%s12 + $0x1a0] sm:$0xf]
    %v5809 = vld [vmem:[%s12 + $0x1a4] sm:$0xff]
    %v5810 = vld [vmem:[%s12 + $0x1ac] sm:$0xff]
    %v5811 = vld [vmem:[%s12 + $0x1b4] sm:$0xff]
    %v5812 = vld [vmem:[%s12 + $0x1bc] sm:$0xf]
    %v5813 = vld [vmem:[%s13] sm:$0x7f]
    %v5815 = vperm.slane %v5813, 0
    %v5816 = vperm.slane %v5813, 1
    %v5817 = vperm.slane %v5813, 2
    %v5818 = vperm.slane %v5813, 3
    %v5819 = vperm.slane %v5813, 4
    %v5820 = vperm.slane %v5813, 5
    %v5821 = vperm.slane %v5813, 6
    %v5893 = vunpack.c.l.b16 %v5749
    %v5894 = vunpack.c.h.b16 %v5749
    %v5895 = vunpack.c.l.b16 %v5750
    %v5896 = vunpack.c.h.b16 %v5750
    %v5897 = vunpack.c.l.b16 %v5751
    %v5898 = vunpack.c.h.b16 %v5751
    %v5899 = vunpack.c.l.b16 %v5752
    %v5900 = vunpack.c.l.b16 %v5753
    %v5901 = vunpack.c.h.b16 %v5753
    %v5902 = vunpack.c.l.b16 %v5754
    %v5903 = vunpack.c.h.b16 %v5754
    %v5904 = vunpack.c.l.b16 %v5755
    %v5905 = vunpack.c.h.b16 %v5755
    %v5906 = vunpack.c.l.b16 %v5756
    %v5907 = vunpack.c.l.b16 %v5757
    %v5908 = vunpack.c.h.b16 %v5757
    %v5909 = vunpack.c.l.b16 %v5758
    %v5910 = vunpack.c.h.b16 %v5758
    %v5911 = vunpack.c.l.b16 %v5759
    %v5912 = vunpack.c.h.b16 %v5759
    %v5913 = vunpack.c.l.b16 %v5760
    %v5914 = vunpack.c.l.b16 %v5761
    %v5915 = vunpack.c.h.b16 %v5761
    %v5916 = vunpack.c.l.b16 %v5762
    %v5917 = vunpack.c.h.b16 %v5762
    %v5918 = vunpack.c.l.b16 %v5763
    %v5919 = vunpack.c.h.b16 %v5763
    %v5920 = vunpack.c.l.b16 %v5764
    %v5921 = vunpack.c.l.b16 %v5765
    %v5922 = vunpack.c.h.b16 %v5765
    %v5923 = vunpack.c.l.b16 %v5766
    %v5924 = vunpack.c.h.b16 %v5766
    %v5925 = vunpack.c.l.b16 %v5767
    %v5926 = vunpack.c.h.b16 %v5767
    %v5927 = vunpack.c.l.b16 %v5768
    %v5928 = vunpack.c.l.b16 %v5769
    %v5929 = vunpack.c.h.b16 %v5769
    %v5930 = vunpack.c.l.b16 %v5770
    %v5931 = vunpack.c.h.b16 %v5770
    %v5932 = vunpack.c.l.b16 %v5771
    %v5933 = vunpack.c.h.b16 %v5771
    %v5934 = vunpack.c.l.b16 %v5772
    %v5935 = vunpack.c.l.b16 %v5773
    %v5936 = vunpack.c.h.b16 %v5773
    %v5937 = vunpack.c.l.b16 %v5774
    %v5938 = vunpack.c.h.b16 %v5774
    %v5939 = vunpack.c.l.b16 %v5775
    %v5940 = vunpack.c.h.b16 %v5775
    %v5941 = vunpack.c.l.b16 %v5776
    %v5942 = vunpack.c.l.b16 %v5777
    %v5943 = vunpack.c.h.b16 %v5777
    %v5944 = vunpack.c.l.b16 %v5778
    %v5945 = vunpack.c.h.b16 %v5778
    %v5946 = vunpack.c.l.b16 %v5779
    %v5947 = vunpack.c.h.b16 %v5779
    %v5948 = vunpack.c.l.b16 %v5780
    %v5949 = vunpack.c.l.b16 %v5781
    %v5950 = vunpack.c.h.b16 %v5781
    %v5951 = vunpack.c.l.b16 %v5782
    %v5952 = vunpack.c.h.b16 %v5782
    %v5953 = vunpack.c.l.b16 %v5783
    %v5954 = vunpack.c.h.b16 %v5783
    %v5955 = vunpack.c.l.b16 %v5784
    %v5956 = vunpack.c.l.b16 %v5785
    %v5957 = vunpack.c.h.b16 %v5785
    %v5958 = vunpack.c.l.b16 %v5786
    %v5959 = vunpack.c.h.b16 %v5786
    %v5960 = vunpack.c.l.b16 %v5787
    %v5961 = vunpack.c.h.b16 %v5787
    %v5962 = vunpack.c.l.b16 %v5788
    %v5963 = vunpack.c.l.b16 %v5789
    %v5964 = vunpack.c.h.b16 %v5789
    %v5965 = vunpack.c.l.b16 %v5790
    %v5966 = vunpack.c.h.b16 %v5790
    %v5967 = vunpack.c.l.b16 %v5791
    %v5968 = vunpack.c.h.b16 %v5791
    %v5969 = vunpack.c.l.b16 %v5792
    %v5970 = vunpack.c.l.b16 %v5793
    %v5971 = vunpack.c.h.b16 %v5793
    %v5972 = vunpack.c.l.b16 %v5794
    %v5973 = vunpack.c.h.b16 %v5794
    %v5974 = vunpack.c.l.b16 %v5795
    %v5975 = vunpack.c.h.b16 %v5795
    %v5976 = vunpack.c.l.b16 %v5796
    %v5977 = vunpack.c.l.b16 %v5797
    %v5978 = vunpack.c.h.b16 %v5797
    %v5979 = vunpack.c.l.b16 %v5798
    %v5980 = vunpack.c.h.b16 %v5798
    %v5981 = vunpack.c.l.b16 %v5799
    %v5982 = vunpack.c.h.b16 %v5799
    %v5983 = vunpack.c.l.b16 %v5800
    %v5984 = vunpack.c.l.b16 %v5801
    %v5985 = vunpack.c.h.b16 %v5801
    %v5986 = vunpack.c.l.b16 %v5802
    %v5987 = vunpack.c.h.b16 %v5802
    %v5988 = vunpack.c.l.b16 %v5803
    %v5989 = vunpack.c.h.b16 %v5803
    %v5990 = vunpack.c.l.b16 %v5804
    %v5991 = vunpack.c.l.b16 %v5805
    %v5992 = vunpack.c.h.b16 %v5805
    %v5993 = vunpack.c.l.b16 %v5806
    %v5994 = vunpack.c.h.b16 %v5806
    %v5995 = vunpack.c.l.b16 %v5807
    %v5996 = vunpack.c.h.b16 %v5807
    %v5997 = vunpack.c.l.b16 %v5808
    %v5998 = vunpack.c.l.b16 %v5809
    %v5999 = vunpack.c.h.b16 %v5809
    %v6000 = vunpack.c.l.b16 %v5810
    %v6001 = vunpack.c.h.b16 %v5810
    %v6002 = vunpack.c.l.b16 %v5811
    %v6003 = vunpack.c.h.b16 %v5811
    %v6004 = vunpack.c.l.b16 %v5812
    %v6005 = vpack.c.b16 %v5900, %v5893
    %v6006 = vpack.c.b16 %v5901, %v5894
    %v6007 = vpack.c.b16 %v5902, %v5895
    %v6008 = vpack.c.b16 %v5903, %v5896
    %v6009 = vpack.c.b16 %v5904, %v5897
    %v6010 = vpack.c.b16 %v5905, %v5898
    %v6011 = vpack.c.b16 %v5906, %v5899
    %v6012 = vpack.c.b16 %v5914, %v5907
    %v6013 = vpack.c.b16 %v5915, %v5908
    %v6014 = vpack.c.b16 %v5916, %v5909
    %v6015 = vpack.c.b16 %v5917, %v5910
    %v6016 = vpack.c.b16 %v5918, %v5911
    %v6017 = vpack.c.b16 %v5919, %v5912
    %v6018 = vpack.c.b16 %v5920, %v5913
    %v6019 = vpack.c.b16 %v5928, %v5921
    %v6020 = vpack.c.b16 %v5929, %v5922
    %v6021 = vpack.c.b16 %v5930, %v5923
    %v6022 = vpack.c.b16 %v5931, %v5924
    %v6023 = vpack.c.b16 %v5932, %v5925
    %v6024 = vpack.c.b16 %v5933, %v5926
    %v6025 = vpack.c.b16 %v5934, %v5927
    %v6026 = vpack.c.b16 %v5942, %v5935
    %v6027 = vpack.c.b16 %v5943, %v5936
    %v6028 = vpack.c.b16 %v5944, %v5937
    %v6029 = vpack.c.b16 %v5945, %v5938
    %v6030 = vpack.c.b16 %v5946, %v5939
    %v6031 = vpack.c.b16 %v5947, %v5940
    %v6032 = vpack.c.b16 %v5948, %v5941
    %v6033 = vpack.c.b16 %v5956, %v5949
    %v6034 = vpack.c.b16 %v5957, %v5950
    %v6035 = vpack.c.b16 %v5958, %v5951
    %v6036 = vpack.c.b16 %v5959, %v5952
    %v6037 = vpack.c.b16 %v5960, %v5953
    %v6038 = vpack.c.b16 %v5961, %v5954
    %v6039 = vpack.c.b16 %v5962, %v5955
    %v6040 = vpack.c.b16 %v5970, %v5963
    %v6041 = vpack.c.b16 %v5971, %v5964
    %v6042 = vpack.c.b16 %v5972, %v5965
    %v6043 = vpack.c.b16 %v5973, %v5966
    %v6044 = vpack.c.b16 %v5974, %v5967
    %v6045 = vpack.c.b16 %v5975, %v5968
    %v6046 = vpack.c.b16 %v5976, %v5969
    %v6047 = vpack.c.b16 %v5984, %v5977
    %v6048 = vpack.c.b16 %v5985, %v5978
    %v6049 = vpack.c.b16 %v5986, %v5979
    %v6050 = vpack.c.b16 %v5987, %v5980
    %v6051 = vpack.c.b16 %v5988, %v5981
    %v6052 = vpack.c.b16 %v5989, %v5982
    %v6053 = vpack.c.b16 %v5990, %v5983
    %v6054 = vpack.c.b16 %v5998, %v5991
    %v6055 = vpack.c.b16 %v5999, %v5992
    %v6056 = vpack.c.b16 %v6000, %v5993
    %v6057 = vpack.c.b16 %v6001, %v5994
    %v6058 = vpack.c.b16 %v6002, %v5995
    %v6059 = vpack.c.b16 %v6003, %v5996
    %v6060 = vpack.c.b16 %v6004, %v5997
    %6117 = vmatpush.bf16.msra.mxu0 %v6054
    %6118 = vmatpush.bf16.msra.mxu0 %v6047
    %6119 = vmatpush.bf16.msra.mxu0 %v6040
    %6120 = vmatpush.bf16.msra.mxu0 %v6033
    %6121 = vmatpush.bf16.msra.mxu0 %v6026
    %6122 = vmatpush.bf16.msra.mxu0 %v6019
    %6123 = vmatpush.bf16.msra.mxu0 %v6012
    %6124 = vmatpush.bf16.msra.mxu0 %v6005
    %6125 = vmatmul.bf16.gmra.mxu0 %v5748
    %v6126 = vpop.f32.mrf.mxu0
    %v6127 = vadd.f32 %v5815, %v6126
    %v6128 = vpop.f32.mrf.mxu0
    %6129 = vdwg.mxu0
    %6130 = vmatpush.bf16.msra.mxu0 %v6055
    %6131 = vmatpush.bf16.msra.mxu0 %v6048
    %6132 = vmatpush.bf16.msra.mxu0 %v6041
    %6133 = vmatpush.bf16.msra.mxu0 %v6034
    %6134 = vmatpush.bf16.msra.mxu0 %v6027
    %6135 = vmatpush.bf16.msra.mxu0 %v6020
    %6136 = vmatpush.bf16.msra.mxu0 %v6013
    %6137 = vmatpush.bf16.msra.mxu0 %v6006
    %6138 = vmatmul.bf16.gmra.mxu0 %v5748
    %v6139 = vpop.f32.mrf.mxu0
    %v6140 = vadd.f32 %v5816, %v6139
    %v6141 = vpop.f32.mrf.mxu0
    %6142 = vdwg.mxu0
    %6143 = vmatpush.bf16.msra.mxu0 %v6056
    %6144 = vmatpush.bf16.msra.mxu0 %v6049
    %6145 = vmatpush.bf16.msra.mxu0 %v6042
    %6146 = vmatpush.bf16.msra.mxu0 %v6035
    %6147 = vmatpush.bf16.msra.mxu0 %v6028
    %6148 = vmatpush.bf16.msra.mxu0 %v6021
    %6149 = vmatpush.bf16.msra.mxu0 %v6014
    %6150 = vmatpush.bf16.msra.mxu0 %v6007
    %6151 = vmatmul.bf16.gmra.mxu0 %v5748
    %v6152 = vpop.f32.mrf.mxu0
    %v6153 = vadd.f32 %v5817, %v6152
    %v6154 = vpop.f32.mrf.mxu0
    %6155 = vdwg.mxu0
    %6156 = vmatpush.bf16.msra.mxu0 %v6057
    %6157 = vmatpush.bf16.msra.mxu0 %v6050
    %6158 = vmatpush.bf16.msra.mxu0 %v6043
    %6159 = vmatpush.bf16.msra.mxu0 %v6036
    %6160 = vmatpush.bf16.msra.mxu0 %v6029
    %6161 = vmatpush.bf16.msra.mxu0 %v6022
    %6162 = vmatpush.bf16.msra.mxu0 %v6015
    %6163 = vmatpush.bf16.msra.mxu0 %v6008
    %6164 = vmatmul.bf16.gmra.mxu0 %v5748
    %v6165 = vpop.f32.mrf.mxu0
    %v6166 = vadd.f32 %v5818, %v6165
    %v6167 = vpop.f32.mrf.mxu0
    %6168 = vdwg.mxu0
    %6169 = vmatpush.bf16.msra.mxu0 %v6058
    %6170 = vmatpush.bf16.msra.mxu0 %v6051
    %6171 = vmatpush.bf16.msra.mxu0 %v6044
    %6172 = vmatpush.bf16.msra.mxu0 %v6037
    %6173 = vmatpush.bf16.msra.mxu0 %v6030
    %6174 = vmatpush.bf16.msra.mxu0 %v6023
    %6175 = vmatpush.bf16.msra.mxu0 %v6016
    %6176 = vmatpush.bf16.msra.mxu0 %v6009
    %6177 = vmatmul.bf16.gmra.mxu0 %v5748
    %v6178 = vpop.f32.mrf.mxu0
    %v6179 = vadd.f32 %v5819, %v6178
    %v6180 = vpop.f32.mrf.mxu0
    %6181 = vdwg.mxu0
    %6182 = vmatpush.bf16.msra.mxu0 %v6059
    %6183 = vmatpush.bf16.msra.mxu0 %v6052
    %6184 = vmatpush.bf16.msra.mxu0 %v6045
    %6185 = vmatpush.bf16.msra.mxu0 %v6038
    %6186 = vmatpush.bf16.msra.mxu0 %v6031
    %6187 = vmatpush.bf16.msra.mxu0 %v6024
    %6188 = vmatpush.bf16.msra.mxu0 %v6017
    %6189 = vmatpush.bf16.msra.mxu0 %v6010
    %6190 = vmatmul.bf16.gmra.mxu0 %v5748
    %v6191 = vpop.f32.mrf.mxu0
    %v6192 = vadd.f32 %v5820, %v6191
    %v6193 = vpop.f32.mrf.mxu0
    %6194 = vdwg.mxu0
    %6195 = vmatpush.bf16.msra.mxu0 %v6060
    %6196 = vmatpush.bf16.msra.mxu0 %v6053
    %6197 = vmatpush.bf16.msra.mxu0 %v6046
    %6198 = vmatpush.bf16.msra.mxu0 %v6039
    %6199 = vmatpush.bf16.msra.mxu0 %v6032
    %6200 = vmatpush.bf16.msra.mxu0 %v6025
    %6201 = vmatpush.bf16.msra.mxu0 %v6018
    %6202 = vmatpush.bf16.msra.mxu0 %v6011
    %6203 = vmatmul.bf16.gmra.mxu0 %v5748
    %v6204 = vpop.f32.mrf.mxu0
    %v6205 = vadd.f32 %v5821, %v6204
    %v6206 = vpop.f32.mrf.mxu0
    %6207 = vdwg.mxu0
    %v6208 = vmax.f32 %v6127, 0.0
    %v6209 = vmax.f32 %v6140, 0.0
    %v6210 = vmax.f32 %v6153, 0.0
    %v6211 = vmax.f32 %v6166, 0.0
    %v6212 = vmax.f32 %v6179, 0.0
    %v6213 = vmax.f32 %v6192, 0.0
    %v6214 = vmax.f32 %v6205, 0.0
    %v6215 = vpack.c.bf16 %v6209, %v6208
    %v6216 = vpack.c.bf16 %v6211, %v6210
    %v6217 = vpack.c.bf16 %v6213, %v6212
    %v6218 = vpack.c.bf16 %v6214, %v6214
    %v6220 = vunpack.c.l.b16 %v6215
    %v6221 = vpack.c.b16 %v6220, %v6220
    %6222 = vrot.lane.b32.xlu0 %v6221, 64
    %v6223 = vpop.permute.xlu0 %6222
    %v6224 = vunpack.c.h.b16 %v6215
    %v6225 = vpack.c.b16 %v6224, %v6224
    %6226 = vrot.lane.b32.xlu0 %v6225, 64
    %v6227 = vpop.permute.xlu0 %6226
    %v6229 = vunpack.c.l.b16 %v6216
    %v6230 = vpack.c.b16 %v6229, %v6229
    %6231 = vrot.lane.b32.xlu0 %v6230, 64
    %v6232 = vpop.permute.xlu0 %6231
    %v6233 = vunpack.c.h.b16 %v6216
    %v6234 = vpack.c.b16 %v6233, %v6233
    %6235 = vrot.lane.b32.xlu0 %v6234, 64
    %v6236 = vpop.permute.xlu0 %6235
    %v6238 = vunpack.c.l.b16 %v6217
    %v6239 = vpack.c.b16 %v6238, %v6238
    %6240 = vrot.lane.b32.xlu0 %v6239, 64
    %v6241 = vpop.permute.xlu0 %6240
    %v6242 = vunpack.c.h.b16 %v6217
    %v6243 = vpack.c.b16 %v6242, %v6242
    %6244 = vrot.lane.b32.xlu0 %v6243, 64
    %v6245 = vpop.permute.xlu0 %6244
    %v6247 = vunpack.c.l.b16 %v6218
    %v6248 = vpack.c.b16 %v6247, %v6247
    %v6251 = vsel %vm235, 0, %v6221
    %v6254 = vsel %vm235, %v6223, %v6225
    %v6257 = vsel %vm235, %v6227, %v6230
    %v6260 = vsel %vm235, %v6232, %v6234
    %v6263 = vsel %vm235, %v6236, %v6239
    %v6266 = vsel %vm235, %v6241, %v6243
    %v6269 = vsel %vm235, %v6245, %v6248
    %vm6278 = vcmask 1043456
    %v6279 = vrot.slane 0, 4
    %v6280 = vrot.slane %v6251, 4
    %v6281 = vsel %vm6278, %v6279, %v6280
    %v6282 = vrot.slane %v6254, 4
    %v6283 = vsel %vm6278, %v6280, %v6282
    %v6284 = vrot.slane %v6257, 4
    %v6285 = vsel %vm6278, %v6282, %v6284
    %v6286 = vrot.slane %v6260, 4
    %v6287 = vsel %vm6278, %v6284, %v6286
    %v6288 = vrot.slane %v6263, 4
    %v6289 = vsel %vm6278, %v6286, %v6288
    %v6290 = vrot.slane %v6266, 4
    %v6291 = vsel %vm6278, %v6288, %v6290
    %v6292 = vrot.slane %v6269, 4
    %v6293 = vsel %vm6278, %v6290, %v6292
    %v6295 = vsel %vm235, 0, %v6279
    %v6296 = vsel %vm6278, %v6279, %v6279
    %v6297 = vsel %vm6278, %v6292, %v6279
    %6298 = vrot.lane.b32.xlu0 %v6296, 64
    %v6299 = vpop.permute.xlu0 %6298
    %6300 = vrot.lane.b32.xlu0 0, 64
    %v6301 = vpop.permute.xlu0 %6300
    %6302 = vrot.lane.b32.xlu0 %v6251, 64
    %v6303 = vpop.permute.xlu0 %6302
    %6304 = vrot.lane.b32.xlu0 %v6254, 64
    %v6305 = vpop.permute.xlu0 %6304
    %6306 = vrot.lane.b32.xlu0 %v6257, 64
    %v6307 = vpop.permute.xlu0 %6306
    %6308 = vrot.lane.b32.xlu0 %v6260, 64
    %v6309 = vpop.permute.xlu0 %6308
    %6310 = vrot.lane.b32.xlu0 %v6263, 64
    %v6311 = vpop.permute.xlu0 %6310
    %6312 = vrot.lane.b32.xlu0 %v6266, 64
    %v6313 = vpop.permute.xlu0 %6312
    %6314 = vrot.lane.b32.xlu0 %v6269, 64
    %v6315 = vpop.permute.xlu0 %6314
    %vm6316 = vcmask 523264
    %v6318 = vsel %vm6316, 0, %v6299
    %v6321 = vsel %vm6316, %v6295, %v6301
    %v6325 = vsel %vm6316, %v6281, %v6303
    %v6329 = vsel %vm6316, %v6283, %v6305
    %v6333 = vsel %vm6316, %v6285, %v6307
    %v6337 = vsel %vm6316, %v6287, %v6309
    %v6341 = vsel %vm6316, %v6289, %v6311
    %v6345 = vsel %vm6316, %v6291, %v6313
    %v6349 = vsel %vm6316, %v6293, %v6315
    %v6352 = vsel %vm6316, %v6292, %v6301
    %v6355 = vsel %vm6316, %v6297, %v6301
    %v6357 = vsel %vm6316, %v6279, %v6301
    %v6359 = vld [vmem:[#allocation9] sm:$0xf]
    %v6360 = vld [vmem:[#allocation9 + $0x4] sm:$0xf]
    %v6361 = vld [vmem:[#allocation9 + $0x8] sm:$0xf]
    %v6362 = vld [vmem:[#allocation9 + $0xc] sm:$0xf]
    %v6363 = vld [vmem:[#allocation9 + $0x10] sm:$0xf]
    %v6364 = vld [vmem:[#allocation9 + $0x14] sm:$0xf]
    %v6365 = vld [vmem:[#allocation9 + $0x18] sm:$0xf]
    %v6366 = vld [vmem:[#allocation9 + $0x1c] sm:$0xf]
    %v6367 = vld [vmem:[#allocation9 + $0x20] sm:$0xf]
    %v6368 = vld [vmem:[#allocation9 + $0x24] sm:$0xf]
    %v6369 = vld [vmem:[#allocation9 + $0x28] sm:$0xf]
    %v6370 = vld [vmem:[#allocation9 + $0x2c] sm:$0xf]
    %v6371 = vld [vmem:[#allocation9 + $0x30] sm:$0xf]
    %v6372 = vld [vmem:[#allocation9 + $0x34] sm:$0xf]
    %v6373 = vld [vmem:[#allocation9 + $0x38] sm:$0xf]
    %v6374 = vld [vmem:[#allocation9 + $0x3c] sm:$0xf]
    %v6375 = vld [vmem:[#allocation9 + $0x40] sm:$0xf]
    %v6376 = vld [vmem:[#allocation9 + $0x44] sm:$0xf]
    %v6377 = vld [vmem:[#allocation9 + $0x48] sm:$0xf]
    %v6378 = vld [vmem:[#allocation9 + $0x4c] sm:$0xf]
    %v6379 = vld [vmem:[#allocation9 + $0x50] sm:$0xf]
    %v6380 = vld [vmem:[#allocation9 + $0x54] sm:$0xf]
    %v6381 = vld [vmem:[#allocation9 + $0x58] sm:$0xf]
    %v6382 = vld [vmem:[#allocation9 + $0x5c] sm:$0xf]
    %v6383 = vld [vmem:[#allocation9 + $0x60] sm:$0xf]
    %v6384 = vld [vmem:[#allocation9 + $0x64] sm:$0xf]
    %v6385 = vld [vmem:[#allocation9 + $0x68] sm:$0xf]
    %v6386 = vld [vmem:[#allocation9 + $0x6c] sm:$0xf]
    %v6387 = vld [vmem:[#allocation9 + $0x70] sm:$0xf]
    %v6388 = vld [vmem:[#allocation9 + $0x74] sm:$0xf]
    %v6389 = vld [vmem:[#allocation9 + $0x78] sm:$0xf]
    %v6390 = vld [vmem:[#allocation9 + $0x7c] sm:$0xf]
    %v6391 = vld [vmem:[%s15] sm:$0x1]
    %v6393 = vperm.slane %v6391, 0
    %v6427 = vunpack.c.l.b16 %v6359
    %v6428 = vunpack.c.l.b16 %v6360
    %v6429 = vunpack.c.l.b16 %v6361
    %v6430 = vunpack.c.l.b16 %v6362
    %v6431 = vunpack.c.l.b16 %v6363
    %v6432 = vunpack.c.l.b16 %v6364
    %v6433 = vunpack.c.l.b16 %v6365
    %v6434 = vunpack.c.l.b16 %v6366
    %v6435 = vunpack.c.l.b16 %v6367
    %v6436 = vunpack.c.l.b16 %v6368
    %v6437 = vunpack.c.l.b16 %v6369
    %v6438 = vunpack.c.l.b16 %v6370
    %v6439 = vunpack.c.l.b16 %v6371
    %v6440 = vunpack.c.l.b16 %v6372
    %v6441 = vunpack.c.l.b16 %v6373
    %v6442 = vunpack.c.l.b16 %v6374
    %v6443 = vunpack.c.l.b16 %v6375
    %v6444 = vunpack.c.l.b16 %v6376
    %v6445 = vunpack.c.l.b16 %v6377
    %v6446 = vunpack.c.l.b16 %v6378
    %v6447 = vunpack.c.l.b16 %v6379
    %v6448 = vunpack.c.l.b16 %v6380
    %v6449 = vunpack.c.l.b16 %v6381
    %v6450 = vunpack.c.l.b16 %v6382
    %v6451 = vunpack.c.l.b16 %v6383
    %v6452 = vunpack.c.l.b16 %v6384
    %v6453 = vunpack.c.l.b16 %v6385
    %v6454 = vunpack.c.l.b16 %v6386
    %v6455 = vunpack.c.l.b16 %v6387
    %v6456 = vunpack.c.l.b16 %v6388
    %v6457 = vunpack.c.l.b16 %v6389
    %v6458 = vunpack.c.l.b16 %v6390
    %v6459 = vpack.c.b16 %v6428, %v6427
    %v6460 = vpack.c.b16 %v6430, %v6429
    %v6461 = vpack.c.b16 %v6432, %v6431
    %v6462 = vpack.c.b16 %v6434, %v6433
    %v6463 = vpack.c.b16 %v6436, %v6435
    %v6464 = vpack.c.b16 %v6438, %v6437
    %v6465 = vpack.c.b16 %v6440, %v6439
    %v6466 = vpack.c.b16 %v6442, %v6441
    %v6467 = vpack.c.b16 %v6444, %v6443
    %v6468 = vpack.c.b16 %v6446, %v6445
    %v6469 = vpack.c.b16 %v6448, %v6447
    %v6470 = vpack.c.b16 %v6450, %v6449
    %v6471 = vpack.c.b16 %v6452, %v6451
    %v6472 = vpack.c.b16 %v6454, %v6453
    %v6473 = vpack.c.b16 %v6456, %v6455
    %v6474 = vpack.c.b16 %v6458, %v6457
    %6491 = vmatpush.bf16.msra.mxu0 %v6466
    %6492 = vmatpush.bf16.msra.mxu0 %v6465
    %6493 = vmatpush.bf16.msra.mxu0 %v6464
    %6494 = vmatpush.bf16.msra.mxu0 %v6463
    %6495 = vmatpush.bf16.msra.mxu0 %v6462
    %6496 = vmatpush.bf16.msra.mxu0 %v6461
    %6497 = vmatpush.bf16.msra.mxu0 %v6460
    %6498 = vmatpush.bf16.msra.mxu0 %v6459
    %6499 = vmatmul.bf16.gmra.mxu0 %v6318
    %v6500 = vpop.f32.mrf.mxu0
    %v6501 = vadd.f32 %v6393, %v6500
    %v6502 = vpop.f32.mrf.mxu0
    %v6503 = vadd.f32 %v6393, %v6502
    %6504 = vmatmul.bf16.gmra.mxu0 %v6321
    %v6505 = vpop.f32.mrf.mxu0
    %v6506 = vadd.f32 %v6393, %v6505
    %v6507 = vpop.f32.mrf.mxu0
    %v6508 = vadd.f32 %v6393, %v6507
    %6509 = vmatmul.bf16.gmra.mxu0 %v6325
    %v6510 = vpop.f32.mrf.mxu0
    %v6511 = vadd.f32 %v6393, %v6510
    %v6512 = vpop.f32.mrf.mxu0
    %v6513 = vadd.f32 %v6393, %v6512
    %6514 = vmatmul.bf16.gmra.mxu0 %v6329
    %v6515 = vpop.f32.mrf.mxu0
    %v6516 = vadd.f32 %v6393, %v6515
    %v6517 = vpop.f32.mrf.mxu0
    %v6518 = vadd.f32 %v6393, %v6517
    %6519 = vmatmul.bf16.gmra.mxu0 %v6333
    %v6520 = vpop.f32.mrf.mxu0
    %v6521 = vadd.f32 %v6393, %v6520
    %v6522 = vpop.f32.mrf.mxu0
    %v6523 = vadd.f32 %v6393, %v6522
    %6524 = vmatmul.bf16.gmra.mxu0 %v6337
    %v6525 = vpop.f32.mrf.mxu0
    %v6526 = vadd.f32 %v6393, %v6525
    %v6527 = vpop.f32.mrf.mxu0
    %v6528 = vadd.f32 %v6393, %v6527
    %6529 = vmatmul.bf16.gmra.mxu0 %v6341
    %v6530 = vpop.f32.mrf.mxu0
    %v6531 = vadd.f32 %v6393, %v6530
    %v6532 = vpop.f32.mrf.mxu0
    %v6533 = vadd.f32 %v6393, %v6532
    %6534 = vmatmul.bf16.gmra.mxu0 %v6345
    %v6535 = vpop.f32.mrf.mxu0
    %v6536 = vadd.f32 %v6393, %v6535
    %v6537 = vpop.f32.mrf.mxu0
    %v6538 = vadd.f32 %v6393, %v6537
    %6539 = vmatmul.bf16.gmra.mxu0 %v6349
    %v6540 = vpop.f32.mrf.mxu0
    %v6541 = vadd.f32 %v6393, %v6540
    %v6542 = vpop.f32.mrf.mxu0
    %v6543 = vadd.f32 %v6393, %v6542
    %6544 = vmatmul.bf16.gmra.mxu0 %v6352
    %v6545 = vpop.f32.mrf.mxu0
    %v6546 = vadd.f32 %v6393, %v6545
    %v6547 = vpop.f32.mrf.mxu0
    %6548 = vdwg.mxu0
    %6549 = vmatpush.bf16.msra.mxu0 %v6474
    %6550 = vmatpush.bf16.msra.mxu0 %v6473
    %6551 = vmatpush.bf16.msra.mxu0 %v6472
    %6552 = vmatpush.bf16.msra.mxu0 %v6471
    %6553 = vmatpush.bf16.msra.mxu0 %v6470
    %6554 = vmatpush.bf16.msra.mxu0 %v6469
    %6555 = vmatpush.bf16.msra.mxu0 %v6468
    %6556 = vmatpush.bf16.msra.mxu0 %v6467
    %6557 = vmatmul.bf16.gmra.mxu0 %v6321
    %v6558 = vpop.f32.mrf.mxu0
    %v6559 = vadd.f32 %v6501, %v6558
    %v6560 = vpop.f32.mrf.mxu0
    %v6561 = vadd.f32 %v6503, %v6560
    %6562 = vmatmul.bf16.gmra.mxu0 %v6325
    %v6563 = vpop.f32.mrf.mxu0
    %v6564 = vadd.f32 %v6506, %v6563
    %v6565 = vpop.f32.mrf.mxu0
    %v6566 = vadd.f32 %v6508, %v6565
    %6567 = vmatmul.bf16.gmra.mxu0 %v6329
    %v6568 = vpop.f32.mrf.mxu0
    %v6569 = vadd.f32 %v6511, %v6568
    %v6570 = vpop.f32.mrf.mxu0
    %v6571 = vadd.f32 %v6513, %v6570
    %6572 = vmatmul.bf16.gmra.mxu0 %v6333
    %v6573 = vpop.f32.mrf.mxu0
    %v6574 = vadd.f32 %v6516, %v6573
    %v6575 = vpop.f32.mrf.mxu0
    %v6576 = vadd.f32 %v6518, %v6575
    %6577 = vmatmul.bf16.gmra.mxu0 %v6337
    %v6578 = vpop.f32.mrf.mxu0
    %v6579 = vadd.f32 %v6521, %v6578
    %v6580 = vpop.f32.mrf.mxu0
    %v6581 = vadd.f32 %v6523, %v6580
    %6582 = vmatmul.bf16.gmra.mxu0 %v6341
    %v6583 = vpop.f32.mrf.mxu0
    %v6584 = vadd.f32 %v6526, %v6583
    %v6585 = vpop.f32.mrf.mxu0
    %v6586 = vadd.f32 %v6528, %v6585
    %6587 = vmatmul.bf16.gmra.mxu0 %v6345
    %v6588 = vpop.f32.mrf.mxu0
    %v6589 = vadd.f32 %v6531, %v6588
    %v6590 = vpop.f32.mrf.mxu0
    %v6591 = vadd.f32 %v6533, %v6590
    %6592 = vmatmul.bf16.gmra.mxu0 %v6349
    %v6593 = vpop.f32.mrf.mxu0
    %v6594 = vadd.f32 %v6536, %v6593
    %v6595 = vpop.f32.mrf.mxu0
    %v6596 = vadd.f32 %v6538, %v6595
    %6597 = vmatmul.bf16.gmra.mxu0 %v6355
    %v6598 = vpop.f32.mrf.mxu0
    %v6599 = vadd.f32 %v6541, %v6598
    %v6600 = vpop.f32.mrf.mxu0
    %v6601 = vadd.f32 %v6543, %v6600
    %6602 = vmatmul.bf16.gmra.mxu0 %v6357
    %v6603 = vpop.f32.mrf.mxu0
    %v6604 = vadd.f32 %v6546, %v6603
    %v6605 = vpop.f32.mrf.mxu0
    %6606 = vdwg.mxu0
    %v6607 = vmax.f32 %v6559, 0.0
    %v6608 = vmax.f32 %v6561, 0.0
    %v6609 = vmax.f32 %v6564, 0.0
    %v6610 = vmax.f32 %v6566, 0.0
    %v6611 = vmax.f32 %v6569, 0.0
    %v6612 = vmax.f32 %v6571, 0.0
    %v6613 = vmax.f32 %v6574, 0.0
    %v6614 = vmax.f32 %v6576, 0.0
    %v6615 = vmax.f32 %v6579, 0.0
    %v6616 = vmax.f32 %v6581, 0.0
    %v6617 = vmax.f32 %v6584, 0.0
    %v6618 = vmax.f32 %v6586, 0.0
    %v6619 = vmax.f32 %v6589, 0.0
    %v6620 = vmax.f32 %v6591, 0.0
    %v6621 = vmax.f32 %v6594, 0.0
    %v6622 = vmax.f32 %v6596, 0.0
    %v6623 = vmax.f32 %v6599, 0.0
    %v6624 = vmax.f32 %v6601, 0.0
    %v6625 = vmax.f32 %v6604, 0.0
    %v6626 = vld [vmem:[#allocation10] sm:$0xff]
    %v6627 = vld [vmem:[#allocation10 + $0x8] sm:$0xff]
    %v6628 = vld [vmem:[#allocation10 + $0x10] sm:$0xff]
    %v6629 = vld [vmem:[#allocation10 + $0x18] sm:$0xff]
    %v6630 = vld [vmem:[#allocation10 + $0x20] sm:$0xff]
    %v6631 = vld [vmem:[#allocation10 + $0x28] sm:$0xff]
    %v6632 = vld [vmem:[#allocation10 + $0x30] sm:$0xff]
    %v6633 = vld [vmem:[#allocation10 + $0x38] sm:$0xff]
    %v6634 = vld [vmem:[#allocation10 + $0x40] sm:$0xff]
    %v6635 = vld [vmem:[#allocation10 + $0x48] sm:$0xff]
    %v6636 = vld [vmem:[#allocation10 + $0x50] sm:$0xff]
    %v6637 = vld [vmem:[#allocation10 + $0x58] sm:$0xff]
    %v6638 = vld [vmem:[#allocation10 + $0x60] sm:$0xff]
    %v6639 = vld [vmem:[#allocation10 + $0x68] sm:$0xff]
    %v6640 = vld [vmem:[#allocation10 + $0x70] sm:$0xff]
    %v6641 = vld [vmem:[#allocation10 + $0x78] sm:$0xff]
    %v6642 = vld [vmem:[#allocation10 + $0x80] sm:$0xff]
    %v6643 = vld [vmem:[#allocation10 + $0x88] sm:$0xff]
    %v6644 = vld [vmem:[#allocation10 + $0x90] sm:$0xff]
    %v6645 = vmul.f32 %v6607, %v6626
    %v6646 = vmul.f32 %v6608, %v6627
    %v6647 = vmul.f32 %v6609, %v6628
    %v6648 = vmul.f32 %v6610, %v6629
    %v6649 = vmul.f32 %v6611, %v6630
    %v6650 = vmul.f32 %v6612, %v6631
    %v6651 = vmul.f32 %v6613, %v6632
    %v6652 = vmul.f32 %v6614, %v6633
    %v6653 = vmul.f32 %v6615, %v6634
    %v6654 = vmul.f32 %v6616, %v6635
    %v6655 = vmul.f32 %v6617, %v6636
    %v6656 = vmul.f32 %v6618, %v6637
    %v6657 = vmul.f32 %v6619, %v6638
    %v6658 = vmul.f32 %v6620, %v6639
    %v6659 = vmul.f32 %v6621, %v6640
    %v6660 = vmul.f32 %v6622, %v6641
    %v6661 = vmul.f32 %v6623, %v6642
    %v6662 = vmul.f32 %v6624, %v6643
    %v6663 = vmul.f32 %v6625, %v6644
    %v6664 = vpack.c.bf16 %v6645, %v6645
    %v6665 = vpack.c.bf16 %v6646, %v6646
    %v6666 = vpack.c.bf16 %v6647, %v6647
    %v6667 = vpack.c.bf16 %v6648, %v6648
    %v6668 = vpack.c.bf16 %v6649, %v6649
    %v6669 = vpack.c.bf16 %v6650, %v6650
    %v6670 = vpack.c.bf16 %v6651, %v6651
    %v6671 = vpack.c.bf16 %v6652, %v6652
    %v6672 = vpack.c.bf16 %v6653, %v6653
    %v6673 = vpack.c.bf16 %v6654, %v6654
    %v6674 = vpack.c.bf16 %v6655, %v6655
    %v6675 = vpack.c.bf16 %v6656, %v6656
    %v6676 = vpack.c.bf16 %v6657, %v6657
    %v6677 = vpack.c.bf16 %v6658, %v6658
    %v6678 = vpack.c.bf16 %v6659, %v6659
    %v6679 = vpack.c.bf16 %v6660, %v6660
    %v6680 = vpack.c.bf16 %v6661, %v6661
    %v6681 = vpack.c.bf16 %v6662, %v6662
    %v6682 = vpack.c.bf16 %v6663, %v6663
    %v6701 = vunpack.c.l.b16 %v6664
    %v6702 = vunpack.c.l.b16 %v6665
    %v6703 = vunpack.c.l.b16 %v6666
    %v6704 = vunpack.c.l.b16 %v6667
    %v6705 = vunpack.c.l.b16 %v6668
    %v6706 = vunpack.c.l.b16 %v6669
    %v6707 = vunpack.c.l.b16 %v6670
    %v6708 = vunpack.c.l.b16 %v6671
    %v6709 = vunpack.c.l.b16 %v6672
    %v6710 = vunpack.c.l.b16 %v6673
    %v6711 = vunpack.c.l.b16 %v6674
    %v6712 = vunpack.c.l.b16 %v6675
    %v6713 = vunpack.c.l.b16 %v6676
    %v6714 = vunpack.c.l.b16 %v6677
    %v6715 = vunpack.c.l.b16 %v6678
    %v6716 = vunpack.c.l.b16 %v6679
    %v6717 = vunpack.c.l.b16 %v6680
    %v6718 = vunpack.c.l.b16 %v6681
    %v6719 = vpack.c.b16 %v6701, %v6701
    %v6720 = vpack.c.b16 %v6703, %v6702
    %v6721 = vpack.c.b16 %v6705, %v6704
    %v6722 = vpack.c.b16 %v6707, %v6706
    %v6723 = vpack.c.b16 %v6709, %v6708
    %v6724 = vpack.c.b16 %v6711, %v6710
    %v6725 = vpack.c.b16 %v6713, %v6712
    %v6726 = vpack.c.b16 %v6715, %v6714
    %v6727 = vpack.c.b16 %v6717, %v6716
    %v6728 = vpack.c.b16 %v6718, %v6718
    %v6740 = vsel %vm235, %v6682, %v6719
    %v6743 = vunpack.c.l.b16 %v6682
    %v6744 = vpack.c.b16 %v6702, %v6701
    %v6745 = vpack.c.b16 %v6704, %v6703
    %v6746 = vpack.c.b16 %v6706, %v6705
    %v6747 = vpack.c.b16 %v6708, %v6707
    %v6748 = vpack.c.b16 %v6710, %v6709
    %v6749 = vpack.c.b16 %v6712, %v6711
    %v6750 = vpack.c.b16 %v6714, %v6713
    %v6751 = vpack.c.b16 %v6716, %v6715
    %v6752 = vpack.c.b16 %v6718, %v6717
    %v6753 = vpack.c.b16 %v6743, %v6743
    %v6764 = vld [vmem:[#allocation12] sm:$0xf]
    %v6765 = vld [vmem:[#allocation12 + $0x4] sm:$0xf]
    %v6766 = vld [vmem:[#allocation12 + $0x8] sm:$0xf]
    %v6767 = vld [vmem:[#allocation12 + $0xc] sm:$0xf]
    %v6768 = vld [vmem:[#allocation12 + $0x10] sm:$0xf]
    %v6769 = vld [vmem:[#allocation12 + $0x14] sm:$0xf]
    %v6770 = vld [vmem:[#allocation12 + $0x18] sm:$0xf]
    %v6771 = vld [vmem:[#allocation12 + $0x1c] sm:$0xf]
    %v6772 = vld [vmem:[#allocation12 + $0x20] sm:$0xf]
    %v6773 = vld [vmem:[#allocation12 + $0x24] sm:$0xf]
    %v6774 = vld [vmem:[#allocation12 + $0x28] sm:$0xf]
    %v6775 = vld [vmem:[#allocation12 + $0x2c] sm:$0xf]
    %v6776 = vld [vmem:[#allocation12 + $0x30] sm:$0xf]
    %v6777 = vld [vmem:[#allocation12 + $0x34] sm:$0xf]
    %v6778 = vld [vmem:[#allocation12 + $0x38] sm:$0xf]
    %v6779 = vld [vmem:[#allocation12 + $0x3c] sm:$0xf]
    %v6780 = vld [vmem:[#allocation12 + $0x40] sm:$0xf]
    %v6781 = vld [vmem:[#allocation12 + $0x44] sm:$0xf]
    %v6782 = vld [vmem:[#allocation12 + $0x48] sm:$0xf]
    %v6783 = vld [vmem:[#allocation12 + $0x4c] sm:$0xf]
    %v6784 = vld [vmem:[#allocation12 + $0x50] sm:$0xf]
    %v6785 = vld [vmem:[#allocation12 + $0x54] sm:$0xf]
    %v6786 = vld [vmem:[#allocation12 + $0x58] sm:$0xf]
    %v6787 = vld [vmem:[#allocation12 + $0x5c] sm:$0xf]
    %v6788 = vld [vmem:[#allocation12 + $0x60] sm:$0xf]
    %v6789 = vld [vmem:[#allocation12 + $0x64] sm:$0xf]
    %v6790 = vld [vmem:[#allocation12 + $0x68] sm:$0xf]
    %v6791 = vld [vmem:[#allocation12 + $0x6c] sm:$0xf]
    %v6792 = vld [vmem:[#allocation12 + $0x70] sm:$0xf]
    %v6793 = vld [vmem:[#allocation12 + $0x74] sm:$0xf]
    %v6794 = vld [vmem:[#allocation12 + $0x78] sm:$0xf]
    %v6795 = vld [vmem:[#allocation12 + $0x7c] sm:$0xf]
    %v6796 = vld [vmem:[%s18] sm:$0x1]
    %v6798 = vperm.slane %v6796, 0
    %v6832 = vunpack.c.l.b16 %v6764
    %v6833 = vunpack.c.l.b16 %v6765
    %v6834 = vunpack.c.l.b16 %v6766
    %v6835 = vunpack.c.l.b16 %v6767
    %v6836 = vunpack.c.l.b16 %v6768
    %v6837 = vunpack.c.l.b16 %v6769
    %v6838 = vunpack.c.l.b16 %v6770
    %v6839 = vunpack.c.l.b16 %v6771
    %v6840 = vunpack.c.l.b16 %v6772
    %v6841 = vunpack.c.l.b16 %v6773
    %v6842 = vunpack.c.l.b16 %v6774
    %v6843 = vunpack.c.l.b16 %v6775
    %v6844 = vunpack.c.l.b16 %v6776
    %v6845 = vunpack.c.l.b16 %v6777
    %v6846 = vunpack.c.l.b16 %v6778
    %v6847 = vunpack.c.l.b16 %v6779
    %v6848 = vunpack.c.l.b16 %v6780
    %v6849 = vunpack.c.l.b16 %v6781
    %v6850 = vunpack.c.l.b16 %v6782
    %v6851 = vunpack.c.l.b16 %v6783
    %v6852 = vunpack.c.l.b16 %v6784
    %v6853 = vunpack.c.l.b16 %v6785
    %v6854 = vunpack.c.l.b16 %v6786
    %v6855 = vunpack.c.l.b16 %v6787
    %v6856 = vunpack.c.l.b16 %v6788
    %v6857 = vunpack.c.l.b16 %v6789
    %v6858 = vunpack.c.l.b16 %v6790
    %v6859 = vunpack.c.l.b16 %v6791
    %v6860 = vunpack.c.l.b16 %v6792
    %v6861 = vunpack.c.l.b16 %v6793
    %v6862 = vunpack.c.l.b16 %v6794
    %v6863 = vunpack.c.l.b16 %v6795
    %v6864 = vpack.c.b16 %v6833, %v6832
    %v6865 = vpack.c.b16 %v6835, %v6834
    %v6866 = vpack.c.b16 %v6837, %v6836
    %v6867 = vpack.c.b16 %v6839, %v6838
    %v6868 = vpack.c.b16 %v6841, %v6840
    %v6869 = vpack.c.b16 %v6843, %v6842
    %v6870 = vpack.c.b16 %v6845, %v6844
    %v6871 = vpack.c.b16 %v6847, %v6846
    %v6872 = vpack.c.b16 %v6849, %v6848
    %v6873 = vpack.c.b16 %v6851, %v6850
    %v6874 = vpack.c.b16 %v6853, %v6852
    %v6875 = vpack.c.b16 %v6855, %v6854
    %v6876 = vpack.c.b16 %v6857, %v6856
    %v6877 = vpack.c.b16 %v6859, %v6858
    %v6878 = vpack.c.b16 %v6861, %v6860
    %v6879 = vpack.c.b16 %v6863, %v6862
    %6896 = vmatpush.bf16.msra.mxu0 %v6871
    %6897 = vmatpush.bf16.msra.mxu0 %v6870
    %6898 = vmatpush.bf16.msra.mxu0 %v6869
    %6899 = vmatpush.bf16.msra.mxu0 %v6868
    %6900 = vmatpush.bf16.msra.mxu0 %v6867
    %6901 = vmatpush.bf16.msra.mxu0 %v6866
    %6902 = vmatpush.bf16.msra.mxu0 %v6865
    %6903 = vmatpush.bf16.msra.mxu0 %v6864
    %6904 = vmatmul.bf16.gmra.mxu0 %v6740
    %v6905 = vpop.f32.mrf.mxu0
    %v6906 = vadd.f32 %v6798, %v6905
    %v6907 = vpop.f32.mrf.mxu0
    %v6908 = vadd.f32 %v6798, %v6907
    %6909 = vmatmul.bf16.gmra.mxu0 %v6720
    %v6910 = vpop.f32.mrf.mxu0
    %v6911 = vadd.f32 %v6798, %v6910
    %v6912 = vpop.f32.mrf.mxu0
    %v6913 = vadd.f32 %v6798, %v6912
    %6914 = vmatmul.bf16.gmra.mxu0 %v6721
    %v6915 = vpop.f32.mrf.mxu0
    %v6916 = vadd.f32 %v6798, %v6915
    %v6917 = vpop.f32.mrf.mxu0
    %v6918 = vadd.f32 %v6798, %v6917
    %6919 = vmatmul.bf16.gmra.mxu0 %v6722
    %v6920 = vpop.f32.mrf.mxu0
    %v6921 = vadd.f32 %v6798, %v6920
    %v6922 = vpop.f32.mrf.mxu0
    %v6923 = vadd.f32 %v6798, %v6922
    %6924 = vmatmul.bf16.gmra.mxu0 %v6723
    %v6925 = vpop.f32.mrf.mxu0
    %v6926 = vadd.f32 %v6798, %v6925
    %v6927 = vpop.f32.mrf.mxu0
    %v6928 = vadd.f32 %v6798, %v6927
    %6929 = vmatmul.bf16.gmra.mxu0 %v6724
    %v6930 = vpop.f32.mrf.mxu0
    %v6931 = vadd.f32 %v6798, %v6930
    %v6932 = vpop.f32.mrf.mxu0
    %v6933 = vadd.f32 %v6798, %v6932
    %6934 = vmatmul.bf16.gmra.mxu0 %v6725
    %v6935 = vpop.f32.mrf.mxu0
    %v6936 = vadd.f32 %v6798, %v6935
    %v6937 = vpop.f32.mrf.mxu0
    %v6938 = vadd.f32 %v6798, %v6937
    %6939 = vmatmul.bf16.gmra.mxu0 %v6726
    %v6940 = vpop.f32.mrf.mxu0
    %v6941 = vadd.f32 %v6798, %v6940
    %v6942 = vpop.f32.mrf.mxu0
    %v6943 = vadd.f32 %v6798, %v6942
    %6944 = vmatmul.bf16.gmra.mxu0 %v6727
    %v6945 = vpop.f32.mrf.mxu0
    %v6946 = vadd.f32 %v6798, %v6945
    %v6947 = vpop.f32.mrf.mxu0
    %v6948 = vadd.f32 %v6798, %v6947
    %6949 = vmatmul.bf16.gmra.mxu0 %v6728
    %v6950 = vpop.f32.mrf.mxu0
    %v6951 = vadd.f32 %v6798, %v6950
    %v6952 = vpop.f32.mrf.mxu0
    %6953 = vdwg.mxu0
    %6954 = vmatpush.bf16.msra.mxu0 %v6879
    %6955 = vmatpush.bf16.msra.mxu0 %v6878
    %6956 = vmatpush.bf16.msra.mxu0 %v6877
    %6957 = vmatpush.bf16.msra.mxu0 %v6876
    %6958 = vmatpush.bf16.msra.mxu0 %v6875
    %6959 = vmatpush.bf16.msra.mxu0 %v6874
    %6960 = vmatpush.bf16.msra.mxu0 %v6873
    %6961 = vmatpush.bf16.msra.mxu0 %v6872
    %6962 = vmatmul.bf16.gmra.mxu0 %v6744
    %v6963 = vpop.f32.mrf.mxu0
    %v6964 = vadd.f32 %v6906, %v6963
    %v6965 = vpop.f32.mrf.mxu0
    %v6966 = vadd.f32 %v6908, %v6965
    %6967 = vmatmul.bf16.gmra.mxu0 %v6745
    %v6968 = vpop.f32.mrf.mxu0
    %v6969 = vadd.f32 %v6911, %v6968
    %v6970 = vpop.f32.mrf.mxu0
    %v6971 = vadd.f32 %v6913, %v6970
    %6972 = vmatmul.bf16.gmra.mxu0 %v6746
    %v6973 = vpop.f32.mrf.mxu0
    %v6974 = vadd.f32 %v6916, %v6973
    %v6975 = vpop.f32.mrf.mxu0
    %v6976 = vadd.f32 %v6918, %v6975
    %6977 = vmatmul.bf16.gmra.mxu0 %v6747
    %v6978 = vpop.f32.mrf.mxu0
    %v6979 = vadd.f32 %v6921, %v6978
    %v6980 = vpop.f32.mrf.mxu0
    %v6981 = vadd.f32 %v6923, %v6980
    %6982 = vmatmul.bf16.gmra.mxu0 %v6748
    %v6983 = vpop.f32.mrf.mxu0
    %v6984 = vadd.f32 %v6926, %v6983
    %v6985 = vpop.f32.mrf.mxu0
    %v6986 = vadd.f32 %v6928, %v6985
    %6987 = vmatmul.bf16.gmra.mxu0 %v6749
    %v6988 = vpop.f32.mrf.mxu0
    %v6989 = vadd.f32 %v6931, %v6988
    %v6990 = vpop.f32.mrf.mxu0
    %v6991 = vadd.f32 %v6933, %v6990
    %6992 = vmatmul.bf16.gmra.mxu0 %v6750
    %v6993 = vpop.f32.mrf.mxu0
    %v6994 = vadd.f32 %v6936, %v6993
    %v6995 = vpop.f32.mrf.mxu0
    %v6996 = vadd.f32 %v6938, %v6995
    %6997 = vmatmul.bf16.gmra.mxu0 %v6751
    %v6998 = vpop.f32.mrf.mxu0
    %v6999 = vadd.f32 %v6941, %v6998
    %v7000 = vpop.f32.mrf.mxu0
    %v7001 = vadd.f32 %v6943, %v7000
    %7002 = vmatmul.bf16.gmra.mxu0 %v6752
    %v7003 = vpop.f32.mrf.mxu0
    %v7004 = vadd.f32 %v6946, %v7003
    %v7005 = vpop.f32.mrf.mxu0
    %v7006 = vadd.f32 %v6948, %v7005
    %7007 = vmatmul.bf16.gmra.mxu0 %v6753
    %v7008 = vpop.f32.mrf.mxu0
    %v7009 = vadd.f32 %v6951, %v7008
    %v7010 = vpop.f32.mrf.mxu0
    %7011 = vdwg.mxu0
    %v7012 = vmax.f32 %v6964, 0.0
    %v7013 = vmax.f32 %v6966, 0.0
    %v7014 = vmax.f32 %v6969, 0.0
    %v7015 = vmax.f32 %v6971, 0.0
    %v7016 = vmax.f32 %v6974, 0.0
    %v7017 = vmax.f32 %v6976, 0.0
    %v7018 = vmax.f32 %v6979, 0.0
    %v7019 = vmax.f32 %v6981, 0.0
    %v7020 = vmax.f32 %v6984, 0.0
    %v7021 = vmax.f32 %v6986, 0.0
    %v7022 = vmax.f32 %v6989, 0.0
    %v7023 = vmax.f32 %v6991, 0.0
    %v7024 = vmax.f32 %v6994, 0.0
    %v7025 = vmax.f32 %v6996, 0.0
    %v7026 = vmax.f32 %v6999, 0.0
    %v7027 = vmax.f32 %v7001, 0.0
    %v7028 = vmax.f32 %v7004, 0.0
    %v7029 = vmax.f32 %v7006, 0.0
    %v7030 = vmax.f32 %v7009, 0.0
    %v7031 = vld [vmem:[#allocation13] sm:$0xff]
    %v7032 = vld [vmem:[#allocation13 + $0x8] sm:$0xff]
    %v7033 = vld [vmem:[#allocation13 + $0x10] sm:$0xff]
    %v7034 = vld [vmem:[#allocation13 + $0x18] sm:$0xff]
    %v7035 = vld [vmem:[#allocation13 + $0x20] sm:$0xff]
    %v7036 = vld [vmem:[#allocation13 + $0x28] sm:$0xff]
    %v7037 = vld [vmem:[#allocation13 + $0x30] sm:$0xff]
    %v7038 = vld [vmem:[#allocation13 + $0x38] sm:$0xff]
    %v7039 = vld [vmem:[#allocation13 + $0x40] sm:$0xff]
    %v7040 = vld [vmem:[#allocation13 + $0x48] sm:$0xff]
    %v7041 = vld [vmem:[#allocation13 + $0x50] sm:$0xff]
    %v7042 = vld [vmem:[#allocation13 + $0x58] sm:$0xff]
    %v7043 = vld [vmem:[#allocation13 + $0x60] sm:$0xff]
    %v7044 = vld [vmem:[#allocation13 + $0x68] sm:$0xff]
    %v7045 = vld [vmem:[#allocation13 + $0x70] sm:$0xff]
    %v7046 = vld [vmem:[#allocation13 + $0x78] sm:$0xff]
    %v7047 = vld [vmem:[#allocation13 + $0x80] sm:$0xff]
    %v7048 = vld [vmem:[#allocation13 + $0x88] sm:$0xff]
    %v7049 = vld [vmem:[#allocation13 + $0x90] sm:$0xff]
    %v7050 = vmul.f32 %v7012, %v7031
    %v7051 = vmul.f32 %v7013, %v7032
    %v7052 = vmul.f32 %v7014, %v7033
    %v7053 = vmul.f32 %v7015, %v7034
    %v7054 = vmul.f32 %v7016, %v7035
    %v7055 = vmul.f32 %v7017, %v7036
    %v7056 = vmul.f32 %v7018, %v7037
    %v7057 = vmul.f32 %v7019, %v7038
    %v7058 = vmul.f32 %v7020, %v7039
    %v7059 = vmul.f32 %v7021, %v7040
    %v7060 = vmul.f32 %v7022, %v7041
    %v7061 = vmul.f32 %v7023, %v7042
    %v7062 = vmul.f32 %v7024, %v7043
    %v7063 = vmul.f32 %v7025, %v7044
    %v7064 = vmul.f32 %v7026, %v7045
    %v7065 = vmul.f32 %v7027, %v7046
    %v7066 = vmul.f32 %v7028, %v7047
    %v7067 = vmul.f32 %v7029, %v7048
    %v7068 = vmul.f32 %v7030, %v7049
    %v7069 = vpack.c.bf16 %v7050, %v7050
    %v7070 = vpack.c.bf16 %v7051, %v7051
    %v7071 = vpack.c.bf16 %v7052, %v7052
    %v7072 = vpack.c.bf16 %v7053, %v7053
    %v7073 = vpack.c.bf16 %v7054, %v7054
    %v7074 = vpack.c.bf16 %v7055, %v7055
    %v7075 = vpack.c.bf16 %v7056, %v7056
    %v7076 = vpack.c.bf16 %v7057, %v7057
    %v7077 = vpack.c.bf16 %v7058, %v7058
    %v7078 = vpack.c.bf16 %v7059, %v7059
    %v7079 = vpack.c.bf16 %v7060, %v7060
    %v7080 = vpack.c.bf16 %v7061, %v7061
    %v7081 = vpack.c.bf16 %v7062, %v7062
    %v7082 = vpack.c.bf16 %v7063, %v7063
    %v7083 = vpack.c.bf16 %v7064, %v7064
    %v7084 = vpack.c.bf16 %v7065, %v7065
    %v7085 = vpack.c.bf16 %v7066, %v7066
    %v7086 = vpack.c.bf16 %v7067, %v7067
    %v7087 = vpack.c.bf16 %v7068, %v7068
    %v7106 = vunpack.c.l.b16 %v7069
    %v7107 = vunpack.c.l.b16 %v7070
    %v7108 = vunpack.c.l.b16 %v7071
    %v7109 = vunpack.c.l.b16 %v7072
    %v7110 = vunpack.c.l.b16 %v7073
    %v7111 = vunpack.c.l.b16 %v7074
    %v7112 = vunpack.c.l.b16 %v7075
    %v7113 = vunpack.c.l.b16 %v7076
    %v7114 = vunpack.c.l.b16 %v7077
    %v7115 = vunpack.c.l.b16 %v7078
    %v7116 = vunpack.c.l.b16 %v7079
    %v7117 = vunpack.c.l.b16 %v7080
    %v7118 = vunpack.c.l.b16 %v7081
    %v7119 = vunpack.c.l.b16 %v7082
    %v7120 = vunpack.c.l.b16 %v7083
    %v7121 = vunpack.c.l.b16 %v7084
    %v7122 = vunpack.c.l.b16 %v7085
    %v7123 = vunpack.c.l.b16 %v7086
    %v7124 = vpack.c.b16 %v7106, %v7106
    %v7125 = vpack.c.b16 %v7108, %v7107
    %v7126 = vpack.c.b16 %v7110, %v7109
    %v7127 = vpack.c.b16 %v7112, %v7111
    %v7128 = vpack.c.b16 %v7114, %v7113
    %v7129 = vpack.c.b16 %v7116, %v7115
    %v7130 = vpack.c.b16 %v7118, %v7117
    %v7131 = vpack.c.b16 %v7120, %v7119
    %v7132 = vpack.c.b16 %v7122, %v7121
    %v7133 = vpack.c.b16 %v7123, %v7123
    %v7145 = vsel %vm235, %v7087, %v7124
    %v7148 = vunpack.c.l.b16 %v7087
    %v7149 = vpack.c.b16 %v7107, %v7106
    %v7150 = vpack.c.b16 %v7109, %v7108
    %v7151 = vpack.c.b16 %v7111, %v7110
    %v7152 = vpack.c.b16 %v7113, %v7112
    %v7153 = vpack.c.b16 %v7115, %v7114
    %v7154 = vpack.c.b16 %v7117, %v7116
    %v7155 = vpack.c.b16 %v7119, %v7118
    %v7156 = vpack.c.b16 %v7121, %v7120
    %v7157 = vpack.c.b16 %v7123, %v7122
    %v7158 = vpack.c.b16 %v7148, %v7148
    %v7169 = vld [vmem:[%s20] sm:$0xf]
    %v7170 = vld [vmem:[%s20 + $0x4] sm:$0xf]
    %v7171 = vld [vmem:[%s20 + $0x8] sm:$0xf]
    %v7172 = vld [vmem:[%s20 + $0xc] sm:$0xf]
    %v7173 = vld [vmem:[%s20 + $0x10] sm:$0xf]
    %v7174 = vld [vmem:[%s20 + $0x14] sm:$0xf]
    %v7175 = vld [vmem:[%s20 + $0x18] sm:$0xf]
    %v7176 = vld [vmem:[%s20 + $0x1c] sm:$0xf]
    %v7177 = vld [vmem:[%s20 + $0x20] sm:$0xf]
    %v7178 = vld [vmem:[%s20 + $0x24] sm:$0xf]
    %v7179 = vld [vmem:[%s20 + $0x28] sm:$0xf]
    %v7180 = vld [vmem:[%s20 + $0x2c] sm:$0xf]
    %v7181 = vld [vmem:[%s20 + $0x30] sm:$0xf]
    %v7182 = vld [vmem:[%s20 + $0x34] sm:$0xf]
    %v7183 = vld [vmem:[%s20 + $0x38] sm:$0xf]
    %v7184 = vld [vmem:[%s20 + $0x3c] sm:$0xf]
    %v7185 = vld [vmem:[%s20 + $0x40] sm:$0xf]
    %v7186 = vld [vmem:[%s20 + $0x44] sm:$0xf]
    %v7187 = vld [vmem:[%s20 + $0x48] sm:$0xf]
    %v7188 = vld [vmem:[%s20 + $0x4c] sm:$0xf]
    %v7189 = vld [vmem:[%s20 + $0x50] sm:$0xf]
    %v7190 = vld [vmem:[%s20 + $0x54] sm:$0xf]
    %v7191 = vld [vmem:[%s20 + $0x58] sm:$0xf]
    %v7192 = vld [vmem:[%s20 + $0x5c] sm:$0xf]
    %v7193 = vld [vmem:[%s20 + $0x60] sm:$0xf]
    %v7194 = vld [vmem:[%s20 + $0x64] sm:$0xf]
    %v7195 = vld [vmem:[%s20 + $0x68] sm:$0xf]
    %v7196 = vld [vmem:[%s20 + $0x6c] sm:$0xf]
    %v7197 = vld [vmem:[%s20 + $0x70] sm:$0xf]
    %v7198 = vld [vmem:[%s20 + $0x74] sm:$0xf]
    %v7199 = vld [vmem:[%s20 + $0x78] sm:$0xf]
    %v7200 = vld [vmem:[%s20 + $0x7c] sm:$0xf]
    %v7201 = vld [vmem:[%s21] sm:$0x1]
    %v7203 = vperm.slane %v7201, 0
    %v7237 = vunpack.c.l.b16 %v7169
    %v7238 = vunpack.c.l.b16 %v7170
    %v7239 = vunpack.c.l.b16 %v7171
    %v7240 = vunpack.c.l.b16 %v7172
    %v7241 = vunpack.c.l.b16 %v7173
    %v7242 = vunpack.c.l.b16 %v7174
    %v7243 = vunpack.c.l.b16 %v7175
    %v7244 = vunpack.c.l.b16 %v7176
    %v7245 = vunpack.c.l.b16 %v7177
    %v7246 = vunpack.c.l.b16 %v7178
    %v7247 = vunpack.c.l.b16 %v7179
    %v7248 = vunpack.c.l.b16 %v7180
    %v7249 = vunpack.c.l.b16 %v7181
    %v7250 = vunpack.c.l.b16 %v7182
    %v7251 = vunpack.c.l.b16 %v7183
    %v7252 = vunpack.c.l.b16 %v7184
    %v7253 = vunpack.c.l.b16 %v7185
    %v7254 = vunpack.c.l.b16 %v7186
    %v7255 = vunpack.c.l.b16 %v7187
    %v7256 = vunpack.c.l.b16 %v7188
    %v7257 = vunpack.c.l.b16 %v7189
    %v7258 = vunpack.c.l.b16 %v7190
    %v7259 = vunpack.c.l.b16 %v7191
    %v7260 = vunpack.c.l.b16 %v7192
    %v7261 = vunpack.c.l.b16 %v7193
    %v7262 = vunpack.c.l.b16 %v7194
    %v7263 = vunpack.c.l.b16 %v7195
    %v7264 = vunpack.c.l.b16 %v7196
    %v7265 = vunpack.c.l.b16 %v7197
    %v7266 = vunpack.c.l.b16 %v7198
    %v7267 = vunpack.c.l.b16 %v7199
    %v7268 = vunpack.c.l.b16 %v7200
    %v7269 = vpack.c.b16 %v7238, %v7237
    %v7270 = vpack.c.b16 %v7240, %v7239
    %v7271 = vpack.c.b16 %v7242, %v7241
    %v7272 = vpack.c.b16 %v7244, %v7243
    %v7273 = vpack.c.b16 %v7246, %v7245
    %v7274 = vpack.c.b16 %v7248, %v7247
    %v7275 = vpack.c.b16 %v7250, %v7249
    %v7276 = vpack.c.b16 %v7252, %v7251
    %v7277 = vpack.c.b16 %v7254, %v7253
    %v7278 = vpack.c.b16 %v7256, %v7255
    %v7279 = vpack.c.b16 %v7258, %v7257
    %v7280 = vpack.c.b16 %v7260, %v7259
    %v7281 = vpack.c.b16 %v7262, %v7261
    %v7282 = vpack.c.b16 %v7264, %v7263
    %v7283 = vpack.c.b16 %v7266, %v7265
    %v7284 = vpack.c.b16 %v7268, %v7267
    %7301 = vmatpush.bf16.msra.mxu0 %v7276
    %7302 = vmatpush.bf16.msra.mxu0 %v7275
    %7303 = vmatpush.bf16.msra.mxu0 %v7274
    %7304 = vmatpush.bf16.msra.mxu0 %v7273
    %7305 = vmatpush.bf16.msra.mxu0 %v7272
    %7306 = vmatpush.bf16.msra.mxu0 %v7271
    %7307 = vmatpush.bf16.msra.mxu0 %v7270
    %7308 = vmatpush.bf16.msra.mxu0 %v7269
    %7309 = vmatmul.bf16.gmra.mxu0 %v7145
    %v7310 = vpop.f32.mrf.mxu0
    %v7311 = vadd.f32 %v7203, %v7310
    %v7312 = vpop.f32.mrf.mxu0
    %v7313 = vadd.f32 %v7203, %v7312
    %7314 = vmatmul.bf16.gmra.mxu0 %v7125
    %v7315 = vpop.f32.mrf.mxu0
    %v7316 = vadd.f32 %v7203, %v7315
    %v7317 = vpop.f32.mrf.mxu0
    %v7318 = vadd.f32 %v7203, %v7317
    %7319 = vmatmul.bf16.gmra.mxu0 %v7126
    %v7320 = vpop.f32.mrf.mxu0
    %v7321 = vadd.f32 %v7203, %v7320
    %v7322 = vpop.f32.mrf.mxu0
    %v7323 = vadd.f32 %v7203, %v7322
    %7324 = vmatmul.bf16.gmra.mxu0 %v7127
    %v7325 = vpop.f32.mrf.mxu0
    %v7326 = vadd.f32 %v7203, %v7325
    %v7327 = vpop.f32.mrf.mxu0
    %v7328 = vadd.f32 %v7203, %v7327
    %7329 = vmatmul.bf16.gmra.mxu0 %v7128
    %v7330 = vpop.f32.mrf.mxu0
    %v7331 = vadd.f32 %v7203, %v7330
    %v7332 = vpop.f32.mrf.mxu0
    %v7333 = vadd.f32 %v7203, %v7332
    %7334 = vmatmul.bf16.gmra.mxu0 %v7129
    %v7335 = vpop.f32.mrf.mxu0
    %v7336 = vadd.f32 %v7203, %v7335
    %v7337 = vpop.f32.mrf.mxu0
    %v7338 = vadd.f32 %v7203, %v7337
    %7339 = vmatmul.bf16.gmra.mxu0 %v7130
    %v7340 = vpop.f32.mrf.mxu0
    %v7341 = vadd.f32 %v7203, %v7340
    %v7342 = vpop.f32.mrf.mxu0
    %v7343 = vadd.f32 %v7203, %v7342
    %7344 = vmatmul.bf16.gmra.mxu0 %v7131
    %v7345 = vpop.f32.mrf.mxu0
    %v7346 = vadd.f32 %v7203, %v7345
    %v7347 = vpop.f32.mrf.mxu0
    %v7348 = vadd.f32 %v7203, %v7347
    %7349 = vmatmul.bf16.gmra.mxu0 %v7132
    %v7350 = vpop.f32.mrf.mxu0
    %v7351 = vadd.f32 %v7203, %v7350
    %v7352 = vpop.f32.mrf.mxu0
    %v7353 = vadd.f32 %v7203, %v7352
    %7354 = vmatmul.bf16.gmra.mxu0 %v7133
    %v7355 = vpop.f32.mrf.mxu0
    %v7356 = vadd.f32 %v7203, %v7355
    %v7357 = vpop.f32.mrf.mxu0
    %7358 = vdwg.mxu0
    %7359 = vmatpush.bf16.msra.mxu0 %v7284
    %7360 = vmatpush.bf16.msra.mxu0 %v7283
    %7361 = vmatpush.bf16.msra.mxu0 %v7282
    %7362 = vmatpush.bf16.msra.mxu0 %v7281
    %7363 = vmatpush.bf16.msra.mxu0 %v7280
    %7364 = vmatpush.bf16.msra.mxu0 %v7279
    %7365 = vmatpush.bf16.msra.mxu0 %v7278
    %7366 = vmatpush.bf16.msra.mxu0 %v7277
    %7367 = vmatmul.bf16.gmra.mxu0 %v7149
    %v7368 = vpop.f32.mrf.mxu0
    %v7369 = vadd.f32 %v7311, %v7368
    %v7370 = vpop.f32.mrf.mxu0
    %v7371 = vadd.f32 %v7313, %v7370
    %7372 = vmatmul.bf16.gmra.mxu0 %v7150
    %v7373 = vpop.f32.mrf.mxu0
    %v7374 = vadd.f32 %v7316, %v7373
    %v7375 = vpop.f32.mrf.mxu0
    %v7376 = vadd.f32 %v7318, %v7375
    %7377 = vmatmul.bf16.gmra.mxu0 %v7151
    %v7378 = vpop.f32.mrf.mxu0
    %v7379 = vadd.f32 %v7321, %v7378
    %v7380 = vpop.f32.mrf.mxu0
    %v7381 = vadd.f32 %v7323, %v7380
    %7382 = vmatmul.bf16.gmra.mxu0 %v7152
    %v7383 = vpop.f32.mrf.mxu0
    %v7384 = vadd.f32 %v7326, %v7383
    %v7385 = vpop.f32.mrf.mxu0
    %v7386 = vadd.f32 %v7328, %v7385
    %7387 = vmatmul.bf16.gmra.mxu0 %v7153
    %v7388 = vpop.f32.mrf.mxu0
    %v7389 = vadd.f32 %v7331, %v7388
    %v7390 = vpop.f32.mrf.mxu0
    %v7391 = vadd.f32 %v7333, %v7390
    %7392 = vmatmul.bf16.gmra.mxu0 %v7154
    %v7393 = vpop.f32.mrf.mxu0
    %v7394 = vadd.f32 %v7336, %v7393
    %v7395 = vpop.f32.mrf.mxu0
    %v7396 = vadd.f32 %v7338, %v7395
    %7397 = vmatmul.bf16.gmra.mxu0 %v7155
    %v7398 = vpop.f32.mrf.mxu0
    %v7399 = vadd.f32 %v7341, %v7398
    %v7400 = vpop.f32.mrf.mxu0
    %v7401 = vadd.f32 %v7343, %v7400
    %7402 = vmatmul.bf16.gmra.mxu0 %v7156
    %v7403 = vpop.f32.mrf.mxu0
    %v7404 = vadd.f32 %v7346, %v7403
    %v7405 = vpop.f32.mrf.mxu0
    %v7406 = vadd.f32 %v7348, %v7405
    %7407 = vmatmul.bf16.gmra.mxu0 %v7157
    %v7408 = vpop.f32.mrf.mxu0
    %v7409 = vadd.f32 %v7351, %v7408
    %v7410 = vpop.f32.mrf.mxu0
    %v7411 = vadd.f32 %v7353, %v7410
    %7412 = vmatmul.bf16.gmra.mxu0 %v7158
    %v7413 = vpop.f32.mrf.mxu0
    %v7414 = vadd.f32 %v7356, %v7413
    %v7415 = vpop.f32.mrf.mxu0
    %7416 = vdwg.mxu0
    %v7417 = vxor.u32 %v7369, 2147483648
    %v7418 = vxor.u32 %v7371, 2147483648
    %v7419 = vxor.u32 %v7374, 2147483648
    %v7420 = vxor.u32 %v7376, 2147483648
    %v7421 = vxor.u32 %v7379, 2147483648
    %v7422 = vxor.u32 %v7381, 2147483648
    %v7423 = vxor.u32 %v7384, 2147483648
    %v7424 = vxor.u32 %v7386, 2147483648
    %v7425 = vxor.u32 %v7389, 2147483648
    %v7426 = vxor.u32 %v7391, 2147483648
    %v7427 = vxor.u32 %v7394, 2147483648
    %v7428 = vxor.u32 %v7396, 2147483648
    %v7429 = vxor.u32 %v7399, 2147483648
    %v7430 = vxor.u32 %v7401, 2147483648
    %v7431 = vxor.u32 %v7404, 2147483648
    %v7432 = vxor.u32 %v7406, 2147483648
    %v7433 = vxor.u32 %v7409, 2147483648
    %v7434 = vxor.u32 %v7411, 2147483648
    %v7435 = vxor.u32 %v7414, 2147483648
    %v7436 = vmul.f32 %v7417, 1.442695
    %v7437 = vpow.pop %v7436
    %v7438 = vmul.f32 %v7418, 1.442695
    %v7439 = vpow.pop %v7438
    %v7440 = vmul.f32 %v7419, 1.442695
    %v7441 = vpow.pop %v7440
    %v7442 = vmul.f32 %v7420, 1.442695
    %v7443 = vpow.pop %v7442
    %v7444 = vmul.f32 %v7421, 1.442695
    %v7445 = vpow.pop %v7444
    %v7446 = vmul.f32 %v7422, 1.442695
    %v7447 = vpow.pop %v7446
    %v7448 = vmul.f32 %v7423, 1.442695
    %v7449 = vpow.pop %v7448
    %v7450 = vmul.f32 %v7424, 1.442695
    %v7451 = vpow.pop %v7450
    %v7452 = vmul.f32 %v7425, 1.442695
    %v7453 = vpow.pop %v7452
    %v7454 = vmul.f32 %v7426, 1.442695
    %v7455 = vpow.pop %v7454
    %v7456 = vmul.f32 %v7427, 1.442695
    %v7457 = vpow.pop %v7456
    %v7458 = vmul.f32 %v7428, 1.442695
    %v7459 = vpow.pop %v7458
    %v7460 = vmul.f32 %v7429, 1.442695
    %v7461 = vpow.pop %v7460
    %v7462 = vmul.f32 %v7430, 1.442695
    %v7463 = vpow.pop %v7462
    %v7464 = vmul.f32 %v7431, 1.442695
    %v7465 = vpow.pop %v7464
    %v7466 = vmul.f32 %v7432, 1.442695
    %v7467 = vpow.pop %v7466
    %v7468 = vmul.f32 %v7433, 1.442695
    %v7469 = vpow.pop %v7468
    %v7470 = vmul.f32 %v7434, 1.442695
    %v7471 = vpow.pop %v7470
    %v7472 = vmul.f32 %v7435, 1.442695
    %v7473 = vpow.pop %v7472
    %v7474 = vadd.f32 %v7437, 1.0
    %v7475 = vadd.f32 %v7439, 1.0
    %v7476 = vadd.f32 %v7441, 1.0
    %v7477 = vadd.f32 %v7443, 1.0
    %v7478 = vadd.f32 %v7445, 1.0
    %v7479 = vadd.f32 %v7447, 1.0
    %v7480 = vadd.f32 %v7449, 1.0
    %v7481 = vadd.f32 %v7451, 1.0
    %v7482 = vadd.f32 %v7453, 1.0
    %v7483 = vadd.f32 %v7455, 1.0
    %v7484 = vadd.f32 %v7457, 1.0
    %v7485 = vadd.f32 %v7459, 1.0
    %v7486 = vadd.f32 %v7461, 1.0
    %v7487 = vadd.f32 %v7463, 1.0
    %v7488 = vadd.f32 %v7465, 1.0
    %v7489 = vadd.f32 %v7467, 1.0
    %v7490 = vadd.f32 %v7469, 1.0
    %v7491 = vadd.f32 %v7471, 1.0
    %v7492 = vadd.f32 %v7473, 1.0
    %v7493 = vrcp.pop %v7474
    %v7494 = vmul.f32 %v7474, %v7493
    %v7495 = vsub.f32 1.0, %v7494
    %v7496 = vmul.f32 %v7493, %v7495
    %v7497 = vadd.f32 %v7493, %v7496
    %vm7498 = vweird.f32 %v7474
    %vm7499 = vweird.f32 %v7493
    %vm7500 = vmor %vm7498, %vm7499
    %v7501 = vsel %vm7500, %v7493, %v7497
    %v7502 = vand.u32 2147483647, %v7474
    %vm7503 = vcmp.eq.f32.partialorder %v7502, 8.507059e+37
    %v7504 = vand.u32 %v7474, 2147483648
    %v7505 = vor.u32 1.1754944e-38, %v7504
    %v7506 = vsel %vm7503, %v7505, %v7501
    %v7507 = vmul.f32 1.0, %v7506
    %v7508 = vrcp.pop %v7475
    %v7509 = vmul.f32 %v7475, %v7508
    %v7510 = vsub.f32 1.0, %v7509
    %v7511 = vmul.f32 %v7508, %v7510
    %v7512 = vadd.f32 %v7508, %v7511
    %vm7513 = vweird.f32 %v7475
    %vm7514 = vweird.f32 %v7508
    %vm7515 = vmor %vm7513, %vm7514
    %v7516 = vsel %vm7515, %v7508, %v7512
    %v7517 = vand.u32 2147483647, %v7475
    %vm7518 = vcmp.eq.f32.partialorder %v7517, 8.507059e+37
    %v7519 = vand.u32 %v7475, 2147483648
    %v7520 = vor.u32 1.1754944e-38, %v7519
    %v7521 = vsel %vm7518, %v7520, %v7516
    %v7522 = vmul.f32 1.0, %v7521
    %v7523 = vrcp.pop %v7476
    %v7524 = vmul.f32 %v7476, %v7523
    %v7525 = vsub.f32 1.0, %v7524
    %v7526 = vmul.f32 %v7523, %v7525
    %v7527 = vadd.f32 %v7523, %v7526
    %vm7528 = vweird.f32 %v7476
    %vm7529 = vweird.f32 %v7523
    %vm7530 = vmor %vm7528, %vm7529
    %v7531 = vsel %vm7530, %v7523, %v7527
    %v7532 = vand.u32 2147483647, %v7476
    %vm7533 = vcmp.eq.f32.partialorder %v7532, 8.507059e+37
    %v7534 = vand.u32 %v7476, 2147483648
    %v7535 = vor.u32 1.1754944e-38, %v7534
    %v7536 = vsel %vm7533, %v7535, %v7531
    %v7537 = vmul.f32 1.0, %v7536
    %v7538 = vrcp.pop %v7477
    %v7539 = vmul.f32 %v7477, %v7538
    %v7540 = vsub.f32 1.0, %v7539
    %v7541 = vmul.f32 %v7538, %v7540
    %v7542 = vadd.f32 %v7538, %v7541
    %vm7543 = vweird.f32 %v7477
    %vm7544 = vweird.f32 %v7538
    %vm7545 = vmor %vm7543, %vm7544
    %v7546 = vsel %vm7545, %v7538, %v7542
    %v7547 = vand.u32 2147483647, %v7477
    %vm7548 = vcmp.eq.f32.partialorder %v7547, 8.507059e+37
    %v7549 = vand.u32 %v7477, 2147483648
    %v7550 = vor.u32 1.1754944e-38, %v7549
    %v7551 = vsel %vm7548, %v7550, %v7546
    %v7552 = vmul.f32 1.0, %v7551
    %v7553 = vrcp.pop %v7478
    %v7554 = vmul.f32 %v7478, %v7553
    %v7555 = vsub.f32 1.0, %v7554
    %v7556 = vmul.f32 %v7553, %v7555
    %v7557 = vadd.f32 %v7553, %v7556
    %vm7558 = vweird.f32 %v7478
    %vm7559 = vweird.f32 %v7553
    %vm7560 = vmor %vm7558, %vm7559
    %v7561 = vsel %vm7560, %v7553, %v7557
    %v7562 = vand.u32 2147483647, %v7478
    %vm7563 = vcmp.eq.f32.partialorder %v7562, 8.507059e+37
    %v7564 = vand.u32 %v7478, 2147483648
    %v7565 = vor.u32 1.1754944e-38, %v7564
    %v7566 = vsel %vm7563, %v7565, %v7561
    %v7567 = vmul.f32 1.0, %v7566
    %v7568 = vrcp.pop %v7479
    %v7569 = vmul.f32 %v7479, %v7568
    %v7570 = vsub.f32 1.0, %v7569
    %v7571 = vmul.f32 %v7568, %v7570
    %v7572 = vadd.f32 %v7568, %v7571
    %vm7573 = vweird.f32 %v7479
    %vm7574 = vweird.f32 %v7568
    %vm7575 = vmor %vm7573, %vm7574
    %v7576 = vsel %vm7575, %v7568, %v7572
    %v7577 = vand.u32 2147483647, %v7479
    %vm7578 = vcmp.eq.f32.partialorder %v7577, 8.507059e+37
    %v7579 = vand.u32 %v7479, 2147483648
    %v7580 = vor.u32 1.1754944e-38, %v7579
    %v7581 = vsel %vm7578, %v7580, %v7576
    %v7582 = vmul.f32 1.0, %v7581
    %v7583 = vrcp.pop %v7480
    %v7584 = vmul.f32 %v7480, %v7583
    %v7585 = vsub.f32 1.0, %v7584
    %v7586 = vmul.f32 %v7583, %v7585
    %v7587 = vadd.f32 %v7583, %v7586
    %vm7588 = vweird.f32 %v7480
    %vm7589 = vweird.f32 %v7583
    %vm7590 = vmor %vm7588, %vm7589
    %v7591 = vsel %vm7590, %v7583, %v7587
    %v7592 = vand.u32 2147483647, %v7480
    %vm7593 = vcmp.eq.f32.partialorder %v7592, 8.507059e+37
    %v7594 = vand.u32 %v7480, 2147483648
    %v7595 = vor.u32 1.1754944e-38, %v7594
    %v7596 = vsel %vm7593, %v7595, %v7591
    %v7597 = vmul.f32 1.0, %v7596
    %v7598 = vrcp.pop %v7481
    %v7599 = vmul.f32 %v7481, %v7598
    %v7600 = vsub.f32 1.0, %v7599
    %v7601 = vmul.f32 %v7598, %v7600
    %v7602 = vadd.f32 %v7598, %v7601
    %vm7603 = vweird.f32 %v7481
    %vm7604 = vweird.f32 %v7598
    %vm7605 = vmor %vm7603, %vm7604
    %v7606 = vsel %vm7605, %v7598, %v7602
    %v7607 = vand.u32 2147483647, %v7481
    %vm7608 = vcmp.eq.f32.partialorder %v7607, 8.507059e+37
    %v7609 = vand.u32 %v7481, 2147483648
    %v7610 = vor.u32 1.1754944e-38, %v7609
    %v7611 = vsel %vm7608, %v7610, %v7606
    %v7612 = vmul.f32 1.0, %v7611
    %v7613 = vrcp.pop %v7482
    %v7614 = vmul.f32 %v7482, %v7613
    %v7615 = vsub.f32 1.0, %v7614
    %v7616 = vmul.f32 %v7613, %v7615
    %v7617 = vadd.f32 %v7613, %v7616
    %vm7618 = vweird.f32 %v7482
    %vm7619 = vweird.f32 %v7613
    %vm7620 = vmor %vm7618, %vm7619
    %v7621 = vsel %vm7620, %v7613, %v7617
    %v7622 = vand.u32 2147483647, %v7482
    %vm7623 = vcmp.eq.f32.partialorder %v7622, 8.507059e+37
    %v7624 = vand.u32 %v7482, 2147483648
    %v7625 = vor.u32 1.1754944e-38, %v7624
    %v7626 = vsel %vm7623, %v7625, %v7621
    %v7627 = vmul.f32 1.0, %v7626
    %v7628 = vrcp.pop %v7483
    %v7629 = vmul.f32 %v7483, %v7628
    %v7630 = vsub.f32 1.0, %v7629
    %v7631 = vmul.f32 %v7628, %v7630
    %v7632 = vadd.f32 %v7628, %v7631
    %vm7633 = vweird.f32 %v7483
    %vm7634 = vweird.f32 %v7628
    %vm7635 = vmor %vm7633, %vm7634
    %v7636 = vsel %vm7635, %v7628, %v7632
    %v7637 = vand.u32 2147483647, %v7483
    %vm7638 = vcmp.eq.f32.partialorder %v7637, 8.507059e+37
    %v7639 = vand.u32 %v7483, 2147483648
    %v7640 = vor.u32 1.1754944e-38, %v7639
    %v7641 = vsel %vm7638, %v7640, %v7636
    %v7642 = vmul.f32 1.0, %v7641
    %v7643 = vrcp.pop %v7484
    %v7644 = vmul.f32 %v7484, %v7643
    %v7645 = vsub.f32 1.0, %v7644
    %v7646 = vmul.f32 %v7643, %v7645
    %v7647 = vadd.f32 %v7643, %v7646
    %vm7648 = vweird.f32 %v7484
    %vm7649 = vweird.f32 %v7643
    %vm7650 = vmor %vm7648, %vm7649
    %v7651 = vsel %vm7650, %v7643, %v7647
    %v7652 = vand.u32 2147483647, %v7484
    %vm7653 = vcmp.eq.f32.partialorder %v7652, 8.507059e+37
    %v7654 = vand.u32 %v7484, 2147483648
    %v7655 = vor.u32 1.1754944e-38, %v7654
    %v7656 = vsel %vm7653, %v7655, %v7651
    %v7657 = vmul.f32 1.0, %v7656
    %v7658 = vrcp.pop %v7485
    %v7659 = vmul.f32 %v7485, %v7658
    %v7660 = vsub.f32 1.0, %v7659
    %v7661 = vmul.f32 %v7658, %v7660
    %v7662 = vadd.f32 %v7658, %v7661
    %vm7663 = vweird.f32 %v7485
    %vm7664 = vweird.f32 %v7658
    %vm7665 = vmor %vm7663, %vm7664
    %v7666 = vsel %vm7665, %v7658, %v7662
    %v7667 = vand.u32 2147483647, %v7485
    %vm7668 = vcmp.eq.f32.partialorder %v7667, 8.507059e+37
    %v7669 = vand.u32 %v7485, 2147483648
    %v7670 = vor.u32 1.1754944e-38, %v7669
    %v7671 = vsel %vm7668, %v7670, %v7666
    %v7672 = vmul.f32 1.0, %v7671
    %v7673 = vrcp.pop %v7486
    %v7674 = vmul.f32 %v7486, %v7673
    %v7675 = vsub.f32 1.0, %v7674
    %v7676 = vmul.f32 %v7673, %v7675
    %v7677 = vadd.f32 %v7673, %v7676
    %vm7678 = vweird.f32 %v7486
    %vm7679 = vweird.f32 %v7673
    %vm7680 = vmor %vm7678, %vm7679
    %v7681 = vsel %vm7680, %v7673, %v7677
    %v7682 = vand.u32 2147483647, %v7486
    %vm7683 = vcmp.eq.f32.partialorder %v7682, 8.507059e+37
    %v7684 = vand.u32 %v7486, 2147483648
    %v7685 = vor.u32 1.1754944e-38, %v7684
    %v7686 = vsel %vm7683, %v7685, %v7681
    %v7687 = vmul.f32 1.0, %v7686
    %v7688 = vrcp.pop %v7487
    %v7689 = vmul.f32 %v7487, %v7688
    %v7690 = vsub.f32 1.0, %v7689
    %v7691 = vmul.f32 %v7688, %v7690
    %v7692 = vadd.f32 %v7688, %v7691
    %vm7693 = vweird.f32 %v7487
    %vm7694 = vweird.f32 %v7688
    %vm7695 = vmor %vm7693, %vm7694
    %v7696 = vsel %vm7695, %v7688, %v7692
    %v7697 = vand.u32 2147483647, %v7487
    %vm7698 = vcmp.eq.f32.partialorder %v7697, 8.507059e+37
    %v7699 = vand.u32 %v7487, 2147483648
    %v7700 = vor.u32 1.1754944e-38, %v7699
    %v7701 = vsel %vm7698, %v7700, %v7696
    %v7702 = vmul.f32 1.0, %v7701
    %v7703 = vrcp.pop %v7488
    %v7704 = vmul.f32 %v7488, %v7703
    %v7705 = vsub.f32 1.0, %v7704
    %v7706 = vmul.f32 %v7703, %v7705
    %v7707 = vadd.f32 %v7703, %v7706
    %vm7708 = vweird.f32 %v7488
    %vm7709 = vweird.f32 %v7703
    %vm7710 = vmor %vm7708, %vm7709
    %v7711 = vsel %vm7710, %v7703, %v7707
    %v7712 = vand.u32 2147483647, %v7488
    %vm7713 = vcmp.eq.f32.partialorder %v7712, 8.507059e+37
    %v7714 = vand.u32 %v7488, 2147483648
    %v7715 = vor.u32 1.1754944e-38, %v7714
    %v7716 = vsel %vm7713, %v7715, %v7711
    %v7717 = vmul.f32 1.0, %v7716
    %v7718 = vrcp.pop %v7489
    %v7719 = vmul.f32 %v7489, %v7718
    %v7720 = vsub.f32 1.0, %v7719
    %v7721 = vmul.f32 %v7718, %v7720
    %v7722 = vadd.f32 %v7718, %v7721
    %vm7723 = vweird.f32 %v7489
    %vm7724 = vweird.f32 %v7718
    %vm7725 = vmor %vm7723, %vm7724
    %v7726 = vsel %vm7725, %v7718, %v7722
    %v7727 = vand.u32 2147483647, %v7489
    %vm7728 = vcmp.eq.f32.partialorder %v7727, 8.507059e+37
    %v7729 = vand.u32 %v7489, 2147483648
    %v7730 = vor.u32 1.1754944e-38, %v7729
    %v7731 = vsel %vm7728, %v7730, %v7726
    %v7732 = vmul.f32 1.0, %v7731
    %v7733 = vrcp.pop %v7490
    %v7734 = vmul.f32 %v7490, %v7733
    %v7735 = vsub.f32 1.0, %v7734
    %v7736 = vmul.f32 %v7733, %v7735
    %v7737 = vadd.f32 %v7733, %v7736
    %vm7738 = vweird.f32 %v7490
    %vm7739 = vweird.f32 %v7733
    %vm7740 = vmor %vm7738, %vm7739
    %v7741 = vsel %vm7740, %v7733, %v7737
    %v7742 = vand.u32 2147483647, %v7490
    %vm7743 = vcmp.eq.f32.partialorder %v7742, 8.507059e+37
    %v7744 = vand.u32 %v7490, 2147483648
    %v7745 = vor.u32 1.1754944e-38, %v7744
    %v7746 = vsel %vm7743, %v7745, %v7741
    %v7747 = vmul.f32 1.0, %v7746
    %v7748 = vrcp.pop %v7491
    %v7749 = vmul.f32 %v7491, %v7748
    %v7750 = vsub.f32 1.0, %v7749
    %v7751 = vmul.f32 %v7748, %v7750
    %v7752 = vadd.f32 %v7748, %v7751
    %vm7753 = vweird.f32 %v7491
    %vm7754 = vweird.f32 %v7748
    %vm7755 = vmor %vm7753, %vm7754
    %v7756 = vsel %vm7755, %v7748, %v7752
    %v7757 = vand.u32 2147483647, %v7491
    %vm7758 = vcmp.eq.f32.partialorder %v7757, 8.507059e+37
    %v7759 = vand.u32 %v7491, 2147483648
    %v7760 = vor.u32 1.1754944e-38, %v7759
    %v7761 = vsel %vm7758, %v7760, %v7756
    %v7762 = vmul.f32 1.0, %v7761
    %v7763 = vrcp.pop %v7492
    %v7764 = vmul.f32 %v7492, %v7763
    %v7765 = vsub.f32 1.0, %v7764
    %v7766 = vmul.f32 %v7763, %v7765
    %v7767 = vadd.f32 %v7763, %v7766
    %vm7768 = vweird.f32 %v7492
    %vm7769 = vweird.f32 %v7763
    %vm7770 = vmor %vm7768, %vm7769
    %v7771 = vsel %vm7770, %v7763, %v7767
    %v7772 = vand.u32 2147483647, %v7492
    %vm7773 = vcmp.eq.f32.partialorder %v7772, 8.507059e+37
    %v7774 = vand.u32 %v7492, 2147483648
    %v7775 = vor.u32 1.1754944e-38, %v7774
    %v7776 = vsel %vm7773, %v7775, %v7771
    %v7777 = vmul.f32 1.0, %v7776
    %7778 = vst.msk [vmem:[%s23] sm:$0xff] %vm6316, %v7507
    %7779 = vst.msk [vmem:[%s23 + $0x8] sm:$0xff] %vm6316, %v7522
    %7780 = vst.msk [vmem:[%s23 + $0x10] sm:$0xff] %vm6316, %v7537
    %7781 = vst.msk [vmem:[%s23 + $0x18] sm:$0xff] %vm6316, %v7552
    %7782 = vst.msk [vmem:[%s23 + $0x20] sm:$0xff] %vm6316, %v7567
    %7783 = vst.msk [vmem:[%s23 + $0x28] sm:$0xff] %vm6316, %v7582
    %7784 = vst.msk [vmem:[%s23 + $0x30] sm:$0xff] %vm6316, %v7597
    %7785 = vst.msk [vmem:[%s23 + $0x38] sm:$0xff] %vm6316, %v7612
    %7786 = vst.msk [vmem:[%s23 + $0x40] sm:$0xff] %vm6316, %v7627
    %7787 = vst.msk [vmem:[%s23 + $0x48] sm:$0xff] %vm6316, %v7642
    %7788 = vst.msk [vmem:[%s23 + $0x50] sm:$0xff] %vm6316, %v7657
    %7789 = vst.msk [vmem:[%s23 + $0x58] sm:$0xff] %vm6316, %v7672
    %7790 = vst.msk [vmem:[%s23 + $0x60] sm:$0xff] %vm6316, %v7687
    %7791 = vst.msk [vmem:[%s23 + $0x68] sm:$0xff] %vm6316, %v7702
    %7792 = vst.msk [vmem:[%s23 + $0x70] sm:$0xff] %vm6316, %v7717
    %7793 = vst.msk [vmem:[%s23 + $0x78] sm:$0xff] %vm6316, %v7732
    %7794 = vst.msk [vmem:[%s23 + $0x80] sm:$0xff] %vm6316, %v7747
    %7795 = vst.msk [vmem:[%s23 + $0x88] sm:$0xff] %vm6316, %v7762
    %7796 = vst.msk [vmem:[%s23 + $0x90] sm:$0xff] %vm6316, %v7777
    // Predicated region
    $region122: #{vae_forward.1} parent=1 // pred_check
      _
    $region123: #{vae_forward.1} parent=1 // pred_check_branch
      %7798 = sbr.rel (0) target = $region125
    $region124: #{vae_forward.1} parent=1 // pred_region
      _
    $region125: #{vae_forward.1} parent=1 // pred_fallthru
      _
    // Predicated region
    $region126: #{vae_forward.1} parent=1 // pred_check
      _
    $region127: #{vae_forward.1} parent=1 // pred_check_branch
      %7800 = sbr.rel (0) target = $region129
    $region128: #{vae_forward.1} parent=1 // pred_region
      _
    $region129: #{vae_forward.1} parent=1 // pred_fallthru
      _
    // Predicated region
    $region130: #{vae_forward.1} parent=1 // pred_check
      _
    $region131: #{vae_forward.1} parent=1 // pred_check_branch
      %7802 = sbr.rel (0) target = $region133
    $region132: #{vae_forward.1} parent=1 // pred_region
      _
    $region133: #{vae_forward.1} parent=1 // pred_fallthru
      _
    // Predicated region
    $region134: #{vae_forward.1} parent=1 // pred_check
      _
    $region135: #{vae_forward.1} parent=1 // pred_check_branch
      %7804 = sbr.rel (0) target = $region137
    $region136: #{vae_forward.1} parent=1 // pred_region
      _
    $region137: #{vae_forward.1} parent=1 // pred_fallthru
      _
    %7805 = vsyncpa [#allocation3], 1
    %7806 = vsyncpa [#allocation5], 1
    %7807 = vsyncpa [#allocation8], 1
    %7808 = vsyncpa [#allocation11], 1
    %7809 = vsyncpa [#allocation14], 1

</llo_original>
